<compile_context>
chip_gen: v7x
topology: tpu7x:2x2x1
jax: 0.10.0
libtpu: 0.0.40
codegen_flags: <defaults>
</compile_context>

<pallas_src>
import jax
import jax.numpy as jnp
import numpy as np
from jax.experimental import pallas as pl
from jax.experimental.pallas import tpu as pltpu

_BN_EPS = 1e-5


# --------------------------------------------------------------------------
# Fused Pallas kernel: conv1+BN+ReLU -> conv2 -> conv3 -> Linear+Tanh
# --------------------------------------------------------------------------
def _discriminator_kernel(p1_ref, w1_ref, g1_ref, b1_ref,
                          G2_ref, w2_ref, g2_ref, b2_ref,
                          G3_ref, w3_ref, g3_ref, b3_ref,
                          wf_ref, fb_ref, o_ref):
    f32 = jnp.float32
    bf16 = jnp.bfloat16

    def bn_relu(y, gamma, beta):
        # Training-mode BatchNorm (biased variance), folded into one FMA.
        n = y.shape[0]
        s1 = jnp.sum(y, axis=0, keepdims=True)
        s2 = jnp.sum(y * y, axis=0, keepdims=True)
        mean = s1 * (1.0 / n)
        var = s2 * (1.0 / n) - mean * mean
        scale = gamma * jax.lax.rsqrt(var + _BN_EPS)        # EUP rsqrt
        shift = beta - mean * scale
        return jnp.maximum(y * scale + shift, 0.0)

    def conv_layer(a_prev_bf16, G_ref, w_ref, gamma, beta):
        # stride-2 3x3 conv as 9 (gather-matmul, weight-matmul) tap pairs.
        # G_ref[t] : [rows_out, rows_in] 0/1 matrix (zero rows = zero padding)
        # w_ref[t] : [Cin, Cout]
        taps = G_ref.shape[0]
        rows = jnp.dot(G_ref[0], a_prev_bf16, preferred_element_type=f32)
        acc = jnp.dot(rows.astype(bf16), w_ref[0], preferred_element_type=f32)
        for t in range(1, taps):
            rows = jnp.dot(G_ref[t], a_prev_bf16, preferred_element_type=f32)
            acc = acc + jnp.dot(rows.astype(bf16), w_ref[t],
                                preferred_element_type=f32)
        return bn_relu(acc, gamma, beta)

    # ---- Layer 1: im2col done in glue; fused matmul + BN + ReLU ----
    y1 = jnp.dot(p1_ref[...], w1_ref[...], preferred_element_type=f32)
    a1 = bn_relu(y1, g1_ref[...], b1_ref[...])              # [B*16*16, 64]

    # ---- Layers 2 & 3: fully in-kernel, activations stay in VMEM ----
    a2 = conv_layer(a1.astype(bf16), G2_ref, w2_ref,
                    g2_ref[...], b2_ref[...])               # [B*8*8, 128]  rows (b,i,j)
    a3 = conv_layer(a2.astype(bf16), G3_ref, w3_ref,
                    g3_ref[...], b3_ref[...])               # [16*B, 256]   rows (i,j,b)

    # ---- Final Linear + Tanh ----
    # a3 rows are spatial-major, so each spatial position's batch rows are a
    # contiguous slice; wf_ref[s] is the FC weight block for position s
    # (permuted at init to preserve PyTorch's NCHW .view() flatten order).
    B = o_ref.shape[0]
    nblk = wf_ref.shape[0]
    out = jnp.dot(a3[0:B, :].astype(bf16), wf_ref[0], preferred_element_type=f32)
    for s in range(1, nblk):
        out = out + jnp.dot(a3[s * B:(s + 1) * B, :].astype(bf16), wf_ref[s],
                            preferred_element_type=f32)
    o_ref[...] = jnp.tanh(out + fb_ref[...])


# --------------------------------------------------------------------------
# Glue: layer-1 im2col (only XLA work besides the pallas_call)
# --------------------------------------------------------------------------
def _layer1_patches(x):
    """x: [B, C, H, W] (NCHW) -> [B*Ho*Wo, C*9]; feature order (c, kh, kw)."""
    B, C, H, W = x.shape
    Ho, Wo = H // 2, W // 2
    xp = jnp.pad(x, ((0, 0), (0, 0), (1, 1), (1, 1)))
    cols = []
    for di in range(3):
        for dj in range(3):
            cols.append(xp[:, :, di:di + 2 * Ho:2, dj:dj + 2 * Wo:2])  # [B,C,Ho,Wo]
    p = jnp.stack(cols, axis=2)                       # [B, C, 9, Ho, Wo]
    p = p.reshape(B, C * 9, Ho, Wo).transpose(0, 2, 3, 1)
    return p.reshape(B * Ho * Wo, C * 9)


# --------------------------------------------------------------------------
# One-time parameter preparation (weight re-layout, gather matrices)
# --------------------------------------------------------------------------
def _build_conv_gather(B, Hi, Wi, Ho, Wo, out_order):
    """[9, B*Ho*Wo, B*Hi*Wi] 0/1 gather for a 3x3 stride-2 pad-1 conv.
    Zero rows encode zero padding.  NOTE: grows with B^2 -- sized for small B;
    for large batch, tile rows with a grid and use batch-independent gathers."""
    G = np.zeros((9, B * Ho * Wo, B * Hi * Wi), np.float32)
    for di in range(3):
        for dj in range(3):
            t = di * 3 + dj
            for io in range(Ho):
                ii = 2 * io + di - 1
                if not (0 <= ii < Hi):
                    continue
                for jo in range(Wo):
                    ji = 2 * jo + dj - 1
                    if not (0 <= ji < Wi):
                        continue
                    for b in range(B):
                        if out_order == "bij":
                            r = b * Ho * Wo + io * Wo + jo
                        else:  # "ijb" (spatial-major, for the FC hand-off)
                            r = (io * Wo + jo) * B + b
                        c = b * Hi * Wi + ii * Wi + ji
                        G[t, r, c] = 1.0
    return G


def prepare_params(params, B):
    (w1, _b1, g1, be1), (w2, _b2, g2, be2), (w3, _b3, g3, be3) = params["convs"]
    # Conv biases (_b*) are dropped: a bias added right before training-mode
    # BatchNorm is exactly cancelled by the mean subtraction.
    bf16 = jnp.bfloat16
    kp = {}
    c1o = w1.shape[0]
    kp["w1"] = jnp.asarray(w1.reshape(c1o, -1).T, bf16)                     # [Cin*9, 64]
    kp["w2"] = jnp.asarray(w2.transpose(2, 3, 1, 0).reshape(9, w2.shape[1], w2.shape[0]), bf16)
    kp["w3"] = jnp.asarray(w3.transpose(2, 3, 1, 0).reshape(9, w3.shape[1], w3.shape[0]), bf16)
    kp["g1"], kp["b1"] = g1.reshape(1, -1), be1.reshape(1, -1)
    kp["g2"], kp["b2"] = g2.reshape(1, -1), be2.reshape(1, -1)
    kp["g3"], kp["b3"] = g3.reshape(1, -1), be3.reshape(1, -1)
    kp["G2"] = jnp.asarray(_build_conv_gather(B, 16, 16, 8, 8, "bij"), bf16)   # [9,128,512]
    kp["G3"] = jnp.asarray(_build_conv_gather(B, 8, 8, 4, 4, "ijb"), bf16)     # [9, 32,128]
    fcw = params["fc_w"]                               # [L, 256*4*4], features (c,i,j)
    L = fcw.shape[0]
    c3 = w3.shape[0]
    kp["wf"] = jnp.asarray(
        fcw.reshape(L, c3, 4, 4).transpose(2, 3, 1, 0).reshape(16, c3, L), bf16)
    kp["fb"] = params["fc_b"].reshape(1, L).astype(jnp.float32)
    return kp


# --------------------------------------------------------------------------
# Forward: one pallas_call for the whole network
# --------------------------------------------------------------------------
@jax.jit
def discriminator_forward(x, kp):
    B = x.shape[0]
    L = kp["fb"].shape[1]
    p1 = _layer1_patches(x).astype(jnp.bfloat16)
    return pl.pallas_call(
        _discriminator_kernel,
        out_shape=jax.ShapeDtypeStruct((B, L), jnp.float32),
        in_specs=[pl.BlockSpec(memory_space=pltpu.MemorySpace.VMEM)] * 14,
        out_specs=pl.BlockSpec(memory_space=pltpu.MemorySpace.VMEM),
    )(p1, kp["w1"], kp["g1"], kp["b1"],
      kp["G2"], kp["w2"], kp["g2"], kp["b2"],
      kp["G3"], kp["w3"], kp["g3"], kp["b3"],
      kp["wf"], kp["fb"])


# --------------------------------------------------------------------------
# Parameter init (deterministic, synthetic — shapes match the nn.Module)
# --------------------------------------------------------------------------
def init_params(key, input_size, latent_size):
    ks = jax.random.split(key, 8)
    chans = [input_size, 64, 128, 256]
    params = {"convs": []}
    for i in range(3):
        cin, cout = chans[i], chans[i + 1]
        w = 0.05 * jax.random.normal(ks[2 * i], (cout, cin, 3, 3), jnp.float32)
        b = 0.01 * jax.random.normal(ks[2 * i + 1], (cout,), jnp.float32)
        gamma = jnp.ones((cout,), jnp.float32)   # BatchNorm2d default weight
        beta = jnp.zeros((cout,), jnp.float32)   # BatchNorm2d default bias
        params["convs"].append((w, b, gamma, beta))
    fin = 256 * 4 * 4
    params["fc_w"] = 0.02 * jax.random.normal(ks[6], (latent_size, fin), jnp.float32)
    params["fc_b"] = 0.01 * jax.random.normal(ks[7], (latent_size,), jnp.float32)
    return params


# --------------------------------------------------------------------------
# Pure-JAX reference (XLA convs), weights rounded to bf16 like the kernel
# --------------------------------------------------------------------------
def _ref_forward(x, params):
    q = lambda a: a.astype(jnp.bfloat16).astype(jnp.float32)
    out = q(x)
    for (w, b, gamma, beta) in params["convs"]:
        y = jax.lax.conv_general_dilated(
            out, q(w), window_strides=(2, 2), padding=((1, 1), (1, 1)),
            dimension_numbers=("NCHW", "OIHW", "NCHW"))
        y = y + b.reshape(1, -1, 1, 1)       # bias kept here: cancelled by BN
        mean = jnp.mean(y, axis=(0, 2, 3), keepdims=True)
        var = jnp.mean((y - mean) ** 2, axis=(0, 2, 3), keepdims=True)
        yhat = (y - mean) * jax.lax.rsqrt(var + _BN_EPS)
        out = jnp.maximum(yhat * gamma.reshape(1, -1, 1, 1)
                          + beta.reshape(1, -1, 1, 1), 0.0)
    flat = out.reshape(out.shape[0], -1)
    return jnp.tanh(flat @ q(params["fc_w"]).T + params["fc_b"].reshape(1, -1))


# --------------------------------------------------------------------------
if __name__ == "__main__":
    key = jax.random.PRNGKey(0)
    k_x, k_p = jax.random.split(key)

    # The module's Linear(256*4*4, latent) implies a 32x32 spatial input
    # (three stride-2 convs -> 4x4).  Keep batch / channels / latent small.
    B, Cin, H, W = 2, 4, 32, 32
    latent_size = 32

    x = jax.random.normal(k_x, (B, Cin, H, W), jnp.float32)
    params = init_params(k_p, Cin, latent_size)
    kparams = prepare_params(params, B)

    out = discriminator_forward(x, kparams)
    out = jax.block_until_ready(out)
    assert out.shape == (B, latent_size), out.shape
    assert bool(jnp.all(jnp.isfinite(out)))

    ref = _ref_forward(x, params)
    err = float(jnp.max(jnp.abs(out - ref)))
    assert err < 5e-2, f"mismatch vs reference: max abs err {err}"
    print("KERNEL_OK")
</pallas_src>

<mosaic_0001>
module attributes {stable_mosaic.version = 11 : i64} {
  func.func @_discriminator_kernel(%arg0: memref<512x36xbf16, #tpu.memory_space<vmem>>, %arg1: memref<36x64xbf16, #tpu.memory_space<vmem>>, %arg2: memref<1x64xf32, #tpu.memory_space<vmem>>, %arg3: memref<1x64xf32, #tpu.memory_space<vmem>>, %arg4: memref<9x128x512xbf16, #tpu.memory_space<vmem>>, %arg5: memref<9x64x128xbf16, #tpu.memory_space<vmem>>, %arg6: memref<1x128xf32, #tpu.memory_space<vmem>>, %arg7: memref<1x128xf32, #tpu.memory_space<vmem>>, %arg8: memref<9x32x128xbf16, #tpu.memory_space<vmem>>, %arg9: memref<9x128x256xbf16, #tpu.memory_space<vmem>>, %arg10: memref<1x256xf32, #tpu.memory_space<vmem>>, %arg11: memref<1x256xf32, #tpu.memory_space<vmem>>, %arg12: memref<16x256x32xbf16, #tpu.memory_space<vmem>>, %arg13: memref<1x32xf32, #tpu.memory_space<vmem>>, %arg14: memref<2x32xf32, #tpu.memory_space<vmem>>) attributes {dimension_semantics = [], scalar_prefetch = 0 : i64, scratch_operands = 0 : i64, tpu.core_type = #tpu.core_type<tc>} {
    %c0 = arith.constant 0 : index
    %c0_0 = arith.constant 0 : index
    %0 = vector.load %arg0[%c0, %c0_0] : memref<512x36xbf16, #tpu.memory_space<vmem>>, vector<512x36xbf16>
    %c0_1 = arith.constant 0 : index
    %c0_2 = arith.constant 0 : index
    %1 = vector.load %arg1[%c0_1, %c0_2] : memref<36x64xbf16, #tpu.memory_space<vmem>>, vector<36x64xbf16>
    %cst = arith.constant dense<0.000000e+00> : vector<512x64xf32>
    %2 = tpu.matmul %0, %1, %cst {dimension_numbers = #tpu.dot_dimension_numbers<[1], [0], [0], [1], [0, 0, 1, 1], [], []>} : vector<512x36xbf16>, vector<36x64xbf16>, vector<512x64xf32> -> vector<512x64xf32>
    %c0_3 = arith.constant 0 : index
    %c0_4 = arith.constant 0 : index
    %3 = vector.load %arg2[%c0_3, %c0_4] : memref<1x64xf32, #tpu.memory_space<vmem>>, vector<1x64xf32>
    %c0_5 = arith.constant 0 : index
    %c0_6 = arith.constant 0 : index
    %4 = vector.load %arg3[%c0_5, %c0_6] : memref<1x64xf32, #tpu.memory_space<vmem>>, vector<1x64xf32>
    %cst_7 = arith.constant dense<0.000000e+00> : vector<64xf32>
    %5 = vector.multi_reduction <add>, %2, %cst_7 [0] : vector<512x64xf32> to vector<64xf32>
    %6 = vector.shape_cast %5 : vector<64xf32> to vector<1x64xf32>
    %7 = arith.mulf %2, %2 : vector<512x64xf32>
    %cst_8 = arith.constant dense<0.000000e+00> : vector<64xf32>
    %8 = vector.multi_reduction <add>, %7, %cst_8 [0] : vector<512x64xf32> to vector<64xf32>
    %9 = vector.shape_cast %8 : vector<64xf32> to vector<1x64xf32>
    %cst_9 = arith.constant 0.001953125 : f32
    %10 = vector.broadcast %cst_9 : f32 to vector<1x64xf32>
    %11 = arith.mulf %6, %10 : vector<1x64xf32>
    %cst_10 = arith.constant 0.001953125 : f32
    %12 = vector.broadcast %cst_10 : f32 to vector<1x64xf32>
    %13 = arith.mulf %9, %12 : vector<1x64xf32>
    %14 = arith.mulf %11, %11 : vector<1x64xf32>
    %15 = arith.subf %13, %14 : vector<1x64xf32>
    %cst_11 = arith.constant 9.99999974E-6 : f32
    %16 = vector.broadcast %cst_11 : f32 to vector<1x64xf32>
    %17 = arith.addf %15, %16 : vector<1x64xf32>
    %18 = math.rsqrt %17 : vector<1x64xf32>
    %19 = arith.mulf %3, %18 : vector<1x64xf32>
    %20 = arith.mulf %11, %19 : vector<1x64xf32>
    %21 = arith.subf %4, %20 : vector<1x64xf32>
    %22 = vector.broadcast %19 : vector<1x64xf32> to vector<512x64xf32>
    %23 = arith.mulf %2, %22 : vector<512x64xf32>
    %24 = vector.broadcast %21 : vector<1x64xf32> to vector<512x64xf32>
    %25 = arith.addf %23, %24 : vector<512x64xf32>
    %cst_12 = arith.constant 0.000000e+00 : f32
    %26 = vector.broadcast %cst_12 : f32 to vector<512x64xf32>
    %27 = arith.maximumf %25, %26 : vector<512x64xf32>
    %28 = arith.truncf %27 : vector<512x64xf32> to vector<512x64xbf16>
    %c0_13 = arith.constant 0 : index
    %c0_14 = arith.constant 0 : index
    %29 = vector.load %arg6[%c0_13, %c0_14] : memref<1x128xf32, #tpu.memory_space<vmem>>, vector<1x128xf32>
    %c0_15 = arith.constant 0 : index
    %c0_16 = arith.constant 0 : index
    %30 = vector.load %arg7[%c0_15, %c0_16] : memref<1x128xf32, #tpu.memory_space<vmem>>, vector<1x128xf32>
    %c0_17 = arith.constant 0 : index
    %c0_18 = arith.constant 0 : index
    %c0_19 = arith.constant 0 : index
    %31 = vector.load %arg4[%c0_17, %c0_18, %c0_19] : memref<9x128x512xbf16, #tpu.memory_space<vmem>>, vector<1x128x512xbf16>
    %32 = vector.shape_cast %31 : vector<1x128x512xbf16> to vector<128x512xbf16>
    %cst_20 = arith.constant dense<0.000000e+00> : vector<128x64xf32>
    %33 = tpu.matmul %32, %28, %cst_20 {dimension_numbers = #tpu.dot_dimension_numbers<[1], [0], [0], [1], [0, 0, 1, 1], [], []>} : vector<128x512xbf16>, vector<512x64xbf16>, vector<128x64xf32> -> vector<128x64xf32>
    %34 = arith.truncf %33 : vector<128x64xf32> to vector<128x64xbf16>
    %c0_21 = arith.constant 0 : index
    %c0_22 = arith.constant 0 : index
    %c0_23 = arith.constant 0 : index
    %35 = vector.load %arg5[%c0_21, %c0_22, %c0_23] : memref<9x64x128xbf16, #tpu.memory_space<vmem>>, vector<1x64x128xbf16>
    %36 = vector.shape_cast %35 : vector<1x64x128xbf16> to vector<64x128xbf16>
    %cst_24 = arith.constant dense<0.000000e+00> : vector<128x128xf32>
    %37 = tpu.matmul %34, %36, %cst_24 {dimension_numbers = #tpu.dot_dimension_numbers<[1], [0], [0], [1], [0, 0, 1, 1], [], []>} : vector<128x64xbf16>, vector<64x128xbf16>, vector<128x128xf32> -> vector<128x128xf32>
    %c1 = arith.constant 1 : index
    %c0_25 = arith.constant 0 : index
    %c0_26 = arith.constant 0 : index
    %38 = vector.load %arg4[%c1, %c0_25, %c0_26] : memref<9x128x512xbf16, #tpu.memory_space<vmem>>, vector<1x128x512xbf16>
    %39 = vector.shape_cast %38 : vector<1x128x512xbf16> to vector<128x512xbf16>
    %cst_27 = arith.constant dense<0.000000e+00> : vector<128x64xf32>
    %40 = tpu.matmul %39, %28, %cst_27 {dimension_numbers = #tpu.dot_dimension_numbers<[1], [0], [0], [1], [0, 0, 1, 1], [], []>} : vector<128x512xbf16>, vector<512x64xbf16>, vector<128x64xf32> -> vector<128x64xf32>
    %41 = arith.truncf %40 : vector<128x64xf32> to vector<128x64xbf16>
    %c1_28 = arith.constant 1 : index
    %c0_29 = arith.constant 0 : index
    %c0_30 = arith.constant 0 : index
    %42 = vector.load %arg5[%c1_28, %c0_29, %c0_30] : memref<9x64x128xbf16, #tpu.memory_space<vmem>>, vector<1x64x128xbf16>
    %43 = vector.shape_cast %42 : vector<1x64x128xbf16> to vector<64x128xbf16>
    %cst_31 = arith.constant dense<0.000000e+00> : vector<128x128xf32>
    %44 = tpu.matmul %41, %43, %cst_31 {dimension_numbers = #tpu.dot_dimension_numbers<[1], [0], [0], [1], [0, 0, 1, 1], [], []>} : vector<128x64xbf16>, vector<64x128xbf16>, vector<128x128xf32> -> vector<128x128xf32>
    %45 = arith.addf %37, %44 : vector<128x128xf32>
    %c2 = arith.constant 2 : index
    %c0_32 = arith.constant 0 : index
    %c0_33 = arith.constant 0 : index
    %46 = vector.load %arg4[%c2, %c0_32, %c0_33] : memref<9x128x512xbf16, #tpu.memory_space<vmem>>, vector<1x128x512xbf16>
    %47 = vector.shape_cast %46 : vector<1x128x512xbf16> to vector<128x512xbf16>
    %cst_34 = arith.constant dense<0.000000e+00> : vector<128x64xf32>
    %48 = tpu.matmul %47, %28, %cst_34 {dimension_numbers = #tpu.dot_dimension_numbers<[1], [0], [0], [1], [0, 0, 1, 1], [], []>} : vector<128x512xbf16>, vector<512x64xbf16>, vector<128x64xf32> -> vector<128x64xf32>
    %49 = arith.truncf %48 : vector<128x64xf32> to vector<128x64xbf16>
    %c2_35 = arith.constant 2 : index
    %c0_36 = arith.constant 0 : index
    %c0_37 = arith.constant 0 : index
    %50 = vector.load %arg5[%c2_35, %c0_36, %c0_37] : memref<9x64x128xbf16, #tpu.memory_space<vmem>>, vector<1x64x128xbf16>
    %51 = vector.shape_cast %50 : vector<1x64x128xbf16> to vector<64x128xbf16>
    %cst_38 = arith.constant dense<0.000000e+00> : vector<128x128xf32>
    %52 = tpu.matmul %49, %51, %cst_38 {dimension_numbers = #tpu.dot_dimension_numbers<[1], [0], [0], [1], [0, 0, 1, 1], [], []>} : vector<128x64xbf16>, vector<64x128xbf16>, vector<128x128xf32> -> vector<128x128xf32>
    %53 = arith.addf %45, %52 : vector<128x128xf32>
    %c3 = arith.constant 3 : index
    %c0_39 = arith.constant 0 : index
    %c0_40 = arith.constant 0 : index
    %54 = vector.load %arg4[%c3, %c0_39, %c0_40] : memref<9x128x512xbf16, #tpu.memory_space<vmem>>, vector<1x128x512xbf16>
    %55 = vector.shape_cast %54 : vector<1x128x512xbf16> to vector<128x512xbf16>
    %cst_41 = arith.constant dense<0.000000e+00> : vector<128x64xf32>
    %56 = tpu.matmul %55, %28, %cst_41 {dimension_numbers = #tpu.dot_dimension_numbers<[1], [0], [0], [1], [0, 0, 1, 1], [], []>} : vector<128x512xbf16>, vector<512x64xbf16>, vector<128x64xf32> -> vector<128x64xf32>
    %57 = arith.truncf %56 : vector<128x64xf32> to vector<128x64xbf16>
    %c3_42 = arith.constant 3 : index
    %c0_43 = arith.constant 0 : index
    %c0_44 = arith.constant 0 : index
    %58 = vector.load %arg5[%c3_42, %c0_43, %c0_44] : memref<9x64x128xbf16, #tpu.memory_space<vmem>>, vector<1x64x128xbf16>
    %59 = vector.shape_cast %58 : vector<1x64x128xbf16> to vector<64x128xbf16>
    %cst_45 = arith.constant dense<0.000000e+00> : vector<128x128xf32>
    %60 = tpu.matmul %57, %59, %cst_45 {dimension_numbers = #tpu.dot_dimension_numbers<[1], [0], [0], [1], [0, 0, 1, 1], [], []>} : vector<128x64xbf16>, vector<64x128xbf16>, vector<128x128xf32> -> vector<128x128xf32>
    %61 = arith.addf %53, %60 : vector<128x128xf32>
    %c4 = arith.constant 4 : index
    %c0_46 = arith.constant 0 : index
    %c0_47 = arith.constant 0 : index
    %62 = vector.load %arg4[%c4, %c0_46, %c0_47] : memref<9x128x512xbf16, #tpu.memory_space<vmem>>, vector<1x128x512xbf16>
    %63 = vector.shape_cast %62 : vector<1x128x512xbf16> to vector<128x512xbf16>
    %cst_48 = arith.constant dense<0.000000e+00> : vector<128x64xf32>
    %64 = tpu.matmul %63, %28, %cst_48 {dimension_numbers = #tpu.dot_dimension_numbers<[1], [0], [0], [1], [0, 0, 1, 1], [], []>} : vector<128x512xbf16>, vector<512x64xbf16>, vector<128x64xf32> -> vector<128x64xf32>
    %65 = arith.truncf %64 : vector<128x64xf32> to vector<128x64xbf16>
    %c4_49 = arith.constant 4 : index
    %c0_50 = arith.constant 0 : index
    %c0_51 = arith.constant 0 : index
    %66 = vector.load %arg5[%c4_49, %c0_50, %c0_51] : memref<9x64x128xbf16, #tpu.memory_space<vmem>>, vector<1x64x128xbf16>
    %67 = vector.shape_cast %66 : vector<1x64x128xbf16> to vector<64x128xbf16>
    %cst_52 = arith.constant dense<0.000000e+00> : vector<128x128xf32>
    %68 = tpu.matmul %65, %67, %cst_52 {dimension_numbers = #tpu.dot_dimension_numbers<[1], [0], [0], [1], [0, 0, 1, 1], [], []>} : vector<128x64xbf16>, vector<64x128xbf16>, vector<128x128xf32> -> vector<128x128xf32>
    %69 = arith.addf %61, %68 : vector<128x128xf32>
    %c5 = arith.constant 5 : index
    %c0_53 = arith.constant 0 : index
    %c0_54 = arith.constant 0 : index
    %70 = vector.load %arg4[%c5, %c0_53, %c0_54] : memref<9x128x512xbf16, #tpu.memory_space<vmem>>, vector<1x128x512xbf16>
    %71 = vector.shape_cast %70 : vector<1x128x512xbf16> to vector<128x512xbf16>
    %cst_55 = arith.constant dense<0.000000e+00> : vector<128x64xf32>
    %72 = tpu.matmul %71, %28, %cst_55 {dimension_numbers = #tpu.dot_dimension_numbers<[1], [0], [0], [1], [0, 0, 1, 1], [], []>} : vector<128x512xbf16>, vector<512x64xbf16>, vector<128x64xf32> -> vector<128x64xf32>
    %73 = arith.truncf %72 : vector<128x64xf32> to vector<128x64xbf16>
    %c5_56 = arith.constant 5 : index
    %c0_57 = arith.constant 0 : index
    %c0_58 = arith.constant 0 : index
    %74 = vector.load %arg5[%c5_56, %c0_57, %c0_58] : memref<9x64x128xbf16, #tpu.memory_space<vmem>>, vector<1x64x128xbf16>
    %75 = vector.shape_cast %74 : vector<1x64x128xbf16> to vector<64x128xbf16>
    %cst_59 = arith.constant dense<0.000000e+00> : vector<128x128xf32>
    %76 = tpu.matmul %73, %75, %cst_59 {dimension_numbers = #tpu.dot_dimension_numbers<[1], [0], [0], [1], [0, 0, 1, 1], [], []>} : vector<128x64xbf16>, vector<64x128xbf16>, vector<128x128xf32> -> vector<128x128xf32>
    %77 = arith.addf %69, %76 : vector<128x128xf32>
    %c6 = arith.constant 6 : index
    %c0_60 = arith.constant 0 : index
    %c0_61 = arith.constant 0 : index
    %78 = vector.load %arg4[%c6, %c0_60, %c0_61] : memref<9x128x512xbf16, #tpu.memory_space<vmem>>, vector<1x128x512xbf16>
    %79 = vector.shape_cast %78 : vector<1x128x512xbf16> to vector<128x512xbf16>
    %cst_62 = arith.constant dense<0.000000e+00> : vector<128x64xf32>
    %80 = tpu.matmul %79, %28, %cst_62 {dimension_numbers = #tpu.dot_dimension_numbers<[1], [0], [0], [1], [0, 0, 1, 1], [], []>} : vector<128x512xbf16>, vector<512x64xbf16>, vector<128x64xf32> -> vector<128x64xf32>
    %81 = arith.truncf %80 : vector<128x64xf32> to vector<128x64xbf16>
    %c6_63 = arith.constant 6 : index
    %c0_64 = arith.constant 0 : index
    %c0_65 = arith.constant 0 : index
    %82 = vector.load %arg5[%c6_63, %c0_64, %c0_65] : memref<9x64x128xbf16, #tpu.memory_space<vmem>>, vector<1x64x128xbf16>
    %83 = vector.shape_cast %82 : vector<1x64x128xbf16> to vector<64x128xbf16>
    %cst_66 = arith.constant dense<0.000000e+00> : vector<128x128xf32>
    %84 = tpu.matmul %81, %83, %cst_66 {dimension_numbers = #tpu.dot_dimension_numbers<[1], [0], [0], [1], [0, 0, 1, 1], [], []>} : vector<128x64xbf16>, vector<64x128xbf16>, vector<128x128xf32> -> vector<128x128xf32>
    %85 = arith.addf %77, %84 : vector<128x128xf32>
    %c7 = arith.constant 7 : index
    %c0_67 = arith.constant 0 : index
    %c0_68 = arith.constant 0 : index
    %86 = vector.load %arg4[%c7, %c0_67, %c0_68] : memref<9x128x512xbf16, #tpu.memory_space<vmem>>, vector<1x128x512xbf16>
    %87 = vector.shape_cast %86 : vector<1x128x512xbf16> to vector<128x512xbf16>
    %cst_69 = arith.constant dense<0.000000e+00> : vector<128x64xf32>
    %88 = tpu.matmul %87, %28, %cst_69 {dimension_numbers = #tpu.dot_dimension_numbers<[1], [0], [0], [1], [0, 0, 1, 1], [], []>} : vector<128x512xbf16>, vector<512x64xbf16>, vector<128x64xf32> -> vector<128x64xf32>
    %89 = arith.truncf %88 : vector<128x64xf32> to vector<128x64xbf16>
    %c7_70 = arith.constant 7 : index
    %c0_71 = arith.constant 0 : index
    %c0_72 = arith.constant 0 : index
    %90 = vector.load %arg5[%c7_70, %c0_71, %c0_72] : memref<9x64x128xbf16, #tpu.memory_space<vmem>>, vector<1x64x128xbf16>
    %91 = vector.shape_cast %90 : vector<1x64x128xbf16> to vector<64x128xbf16>
    %cst_73 = arith.constant dense<0.000000e+00> : vector<128x128xf32>
    %92 = tpu.matmul %89, %91, %cst_73 {dimension_numbers = #tpu.dot_dimension_numbers<[1], [0], [0], [1], [0, 0, 1, 1], [], []>} : vector<128x64xbf16>, vector<64x128xbf16>, vector<128x128xf32> -> vector<128x128xf32>
    %93 = arith.addf %85, %92 : vector<128x128xf32>
    %c8 = arith.constant 8 : index
    %c0_74 = arith.constant 0 : index
    %c0_75 = arith.constant 0 : index
    %94 = vector.load %arg4[%c8, %c0_74, %c0_75] : memref<9x128x512xbf16, #tpu.memory_space<vmem>>, vector<1x128x512xbf16>
    %95 = vector.shape_cast %94 : vector<1x128x512xbf16> to vector<128x512xbf16>
    %cst_76 = arith.constant dense<0.000000e+00> : vector<128x64xf32>
    %96 = tpu.matmul %95, %28, %cst_76 {dimension_numbers = #tpu.dot_dimension_numbers<[1], [0], [0], [1], [0, 0, 1, 1], [], []>} : vector<128x512xbf16>, vector<512x64xbf16>, vector<128x64xf32> -> vector<128x64xf32>
    %97 = arith.truncf %96 : vector<128x64xf32> to vector<128x64xbf16>
    %c8_77 = arith.constant 8 : index
    %c0_78 = arith.constant 0 : index
    %c0_79 = arith.constant 0 : index
    %98 = vector.load %arg5[%c8_77, %c0_78, %c0_79] : memref<9x64x128xbf16, #tpu.memory_space<vmem>>, vector<1x64x128xbf16>
    %99 = vector.shape_cast %98 : vector<1x64x128xbf16> to vector<64x128xbf16>
    %cst_80 = arith.constant dense<0.000000e+00> : vector<128x128xf32>
    %100 = tpu.matmul %97, %99, %cst_80 {dimension_numbers = #tpu.dot_dimension_numbers<[1], [0], [0], [1], [0, 0, 1, 1], [], []>} : vector<128x64xbf16>, vector<64x128xbf16>, vector<128x128xf32> -> vector<128x128xf32>
    %101 = arith.addf %93, %100 : vector<128x128xf32>
    %cst_81 = arith.constant dense<0.000000e+00> : vector<128xf32>
    %102 = vector.multi_reduction <add>, %101, %cst_81 [0] : vector<128x128xf32> to vector<128xf32>
    %103 = vector.shape_cast %102 : vector<128xf32> to vector<1x128xf32>
    %104 = arith.mulf %101, %101 : vector<128x128xf32>
    %cst_82 = arith.constant dense<0.000000e+00> : vector<128xf32>
    %105 = vector.multi_reduction <add>, %104, %cst_82 [0] : vector<128x128xf32> to vector<128xf32>
    %106 = vector.shape_cast %105 : vector<128xf32> to vector<1x128xf32>
    %cst_83 = arith.constant 7.812500e-03 : f32
    %107 = vector.broadcast %cst_83 : f32 to vector<1x128xf32>
    %108 = arith.mulf %103, %107 : vector<1x128xf32>
    %cst_84 = arith.constant 7.812500e-03 : f32
    %109 = vector.broadcast %cst_84 : f32 to vector<1x128xf32>
    %110 = arith.mulf %106, %109 : vector<1x128xf32>
    %111 = arith.mulf %108, %108 : vector<1x128xf32>
    %112 = arith.subf %110, %111 : vector<1x128xf32>
    %cst_85 = arith.constant 9.99999974E-6 : f32
    %113 = vector.broadcast %cst_85 : f32 to vector<1x128xf32>
    %114 = arith.addf %112, %113 : vector<1x128xf32>
    %115 = math.rsqrt %114 : vector<1x128xf32>
    %116 = arith.mulf %29, %115 : vector<1x128xf32>
    %117 = arith.mulf %108, %116 : vector<1x128xf32>
    %118 = arith.subf %30, %117 : vector<1x128xf32>
    %119 = vector.broadcast %116 : vector<1x128xf32> to vector<128x128xf32>
    %120 = arith.mulf %101, %119 : vector<128x128xf32>
    %121 = vector.broadcast %118 : vector<1x128xf32> to vector<128x128xf32>
    %122 = arith.addf %120, %121 : vector<128x128xf32>
    %cst_86 = arith.constant 0.000000e+00 : f32
    %123 = vector.broadcast %cst_86 : f32 to vector<128x128xf32>
    %124 = arith.maximumf %122, %123 : vector<128x128xf32>
    %125 = arith.truncf %124 : vector<128x128xf32> to vector<128x128xbf16>
    %c0_87 = arith.constant 0 : index
    %c0_88 = arith.constant 0 : index
    %126 = vector.load %arg10[%c0_87, %c0_88] : memref<1x256xf32, #tpu.memory_space<vmem>>, vector<1x256xf32>
    %c0_89 = arith.constant 0 : index
    %c0_90 = arith.constant 0 : index
    %127 = vector.load %arg11[%c0_89, %c0_90] : memref<1x256xf32, #tpu.memory_space<vmem>>, vector<1x256xf32>
    %c0_91 = arith.constant 0 : index
    %c0_92 = arith.constant 0 : index
    %c0_93 = arith.constant 0 : index
    %128 = vector.load %arg8[%c0_91, %c0_92, %c0_93] : memref<9x32x128xbf16, #tpu.memory_space<vmem>>, vector<1x32x128xbf16>
    %129 = vector.shape_cast %128 : vector<1x32x128xbf16> to vector<32x128xbf16>
    %cst_94 = arith.constant dense<0.000000e+00> : vector<32x128xf32>
    %130 = tpu.matmul %129, %125, %cst_94 {dimension_numbers = #tpu.dot_dimension_numbers<[1], [0], [0], [1], [0, 0, 1, 1], [], []>} : vector<32x128xbf16>, vector<128x128xbf16>, vector<32x128xf32> -> vector<32x128xf32>
    %131 = arith.truncf %130 : vector<32x128xf32> to vector<32x128xbf16>
    %c0_95 = arith.constant 0 : index
    %c0_96 = arith.constant 0 : index
    %c0_97 = arith.constant 0 : index
    %132 = vector.load %arg9[%c0_95, %c0_96, %c0_97] : memref<9x128x256xbf16, #tpu.memory_space<vmem>>, vector<1x128x256xbf16>
    %133 = vector.shape_cast %132 : vector<1x128x256xbf16> to vector<128x256xbf16>
    %cst_98 = arith.constant dense<0.000000e+00> : vector<32x256xf32>
    %134 = tpu.matmul %131, %133, %cst_98 {dimension_numbers = #tpu.dot_dimension_numbers<[1], [0], [0], [1], [0, 0, 1, 1], [], []>} : vector<32x128xbf16>, vector<128x256xbf16>, vector<32x256xf32> -> vector<32x256xf32>
    %c1_99 = arith.constant 1 : index
    %c0_100 = arith.constant 0 : index
    %c0_101 = arith.constant 0 : index
    %135 = vector.load %arg8[%c1_99, %c0_100, %c0_101] : memref<9x32x128xbf16, #tpu.memory_space<vmem>>, vector<1x32x128xbf16>
    %136 = vector.shape_cast %135 : vector<1x32x128xbf16> to vector<32x128xbf16>
    %cst_102 = arith.constant dense<0.000000e+00> : vector<32x128xf32>
    %137 = tpu.matmul %136, %125, %cst_102 {dimension_numbers = #tpu.dot_dimension_numbers<[1], [0], [0], [1], [0, 0, 1, 1], [], []>} : vector<32x128xbf16>, vector<128x128xbf16>, vector<32x128xf32> -> vector<32x128xf32>
    %138 = arith.truncf %137 : vector<32x128xf32> to vector<32x128xbf16>
    %c1_103 = arith.constant 1 : index
    %c0_104 = arith.constant 0 : index
    %c0_105 = arith.constant 0 : index
    %139 = vector.load %arg9[%c1_103, %c0_104, %c0_105] : memref<9x128x256xbf16, #tpu.memory_space<vmem>>, vector<1x128x256xbf16>
    %140 = vector.shape_cast %139 : vector<1x128x256xbf16> to vector<128x256xbf16>
    %cst_106 = arith.constant dense<0.000000e+00> : vector<32x256xf32>
    %141 = tpu.matmul %138, %140, %cst_106 {dimension_numbers = #tpu.dot_dimension_numbers<[1], [0], [0], [1], [0, 0, 1, 1], [], []>} : vector<32x128xbf16>, vector<128x256xbf16>, vector<32x256xf32> -> vector<32x256xf32>
    %142 = arith.addf %134, %141 : vector<32x256xf32>
    %c2_107 = arith.constant 2 : index
    %c0_108 = arith.constant 0 : index
    %c0_109 = arith.constant 0 : index
    %143 = vector.load %arg8[%c2_107, %c0_108, %c0_109] : memref<9x32x128xbf16, #tpu.memory_space<vmem>>, vector<1x32x128xbf16>
    %144 = vector.shape_cast %143 : vector<1x32x128xbf16> to vector<32x128xbf16>
    %cst_110 = arith.constant dense<0.000000e+00> : vector<32x128xf32>
    %145 = tpu.matmul %144, %125, %cst_110 {dimension_numbers = #tpu.dot_dimension_numbers<[1], [0], [0], [1], [0, 0, 1, 1], [], []>} : vector<32x128xbf16>, vector<128x128xbf16>, vector<32x128xf32> -> vector<32x128xf32>
    %146 = arith.truncf %145 : vector<32x128xf32> to vector<32x128xbf16>
    %c2_111 = arith.constant 2 : index
    %c0_112 = arith.constant 0 : index
    %c0_113 = arith.constant 0 : index
    %147 = vector.load %arg9[%c2_111, %c0_112, %c0_113] : memref<9x128x256xbf16, #tpu.memory_space<vmem>>, vector<1x128x256xbf16>
    %148 = vector.shape_cast %147 : vector<1x128x256xbf16> to vector<128x256xbf16>
    %cst_114 = arith.constant dense<0.000000e+00> : vector<32x256xf32>
    %149 = tpu.matmul %146, %148, %cst_114 {dimension_numbers = #tpu.dot_dimension_numbers<[1], [0], [0], [1], [0, 0, 1, 1], [], []>} : vector<32x128xbf16>, vector<128x256xbf16>, vector<32x256xf32> -> vector<32x256xf32>
    %150 = arith.addf %142, %149 : vector<32x256xf32>
    %c3_115 = arith.constant 3 : index
    %c0_116 = arith.constant 0 : index
    %c0_117 = arith.constant 0 : index
    %151 = vector.load %arg8[%c3_115, %c0_116, %c0_117] : memref<9x32x128xbf16, #tpu.memory_space<vmem>>, vector<1x32x128xbf16>
    %152 = vector.shape_cast %151 : vector<1x32x128xbf16> to vector<32x128xbf16>
    %cst_118 = arith.constant dense<0.000000e+00> : vector<32x128xf32>
    %153 = tpu.matmul %152, %125, %cst_118 {dimension_numbers = #tpu.dot_dimension_numbers<[1], [0], [0], [1], [0, 0, 1, 1], [], []>} : vector<32x128xbf16>, vector<128x128xbf16>, vector<32x128xf32> -> vector<32x128xf32>
    %154 = arith.truncf %153 : vector<32x128xf32> to vector<32x128xbf16>
    %c3_119 = arith.constant 3 : index
    %c0_120 = arith.constant 0 : index
    %c0_121 = arith.constant 0 : index
    %155 = vector.load %arg9[%c3_119, %c0_120, %c0_121] : memref<9x128x256xbf16, #tpu.memory_space<vmem>>, vector<1x128x256xbf16>
    %156 = vector.shape_cast %155 : vector<1x128x256xbf16> to vector<128x256xbf16>
    %cst_122 = arith.constant dense<0.000000e+00> : vector<32x256xf32>
    %157 = tpu.matmul %154, %156, %cst_122 {dimension_numbers = #tpu.dot_dimension_numbers<[1], [0], [0], [1], [0, 0, 1, 1], [], []>} : vector<32x128xbf16>, vector<128x256xbf16>, vector<32x256xf32> -> vector<32x256xf32>
    %158 = arith.addf %150, %157 : vector<32x256xf32>
    %c4_123 = arith.constant 4 : index
    %c0_124 = arith.constant 0 : index
    %c0_125 = arith.constant 0 : index
    %159 = vector.load %arg8[%c4_123, %c0_124, %c0_125] : memref<9x32x128xbf16, #tpu.memory_space<vmem>>, vector<1x32x128xbf16>
    %160 = vector.shape_cast %159 : vector<1x32x128xbf16> to vector<32x128xbf16>
    %cst_126 = arith.constant dense<0.000000e+00> : vector<32x128xf32>
    %161 = tpu.matmul %160, %125, %cst_126 {dimension_numbers = #tpu.dot_dimension_numbers<[1], [0], [0], [1], [0, 0, 1, 1], [], []>} : vector<32x128xbf16>, vector<128x128xbf16>, vector<32x128xf32> -> vector<32x128xf32>
    %162 = arith.truncf %161 : vector<32x128xf32> to vector<32x128xbf16>
    %c4_127 = arith.constant 4 : index
    %c0_128 = arith.constant 0 : index
    %c0_129 = arith.constant 0 : index
    %163 = vector.load %arg9[%c4_127, %c0_128, %c0_129] : memref<9x128x256xbf16, #tpu.memory_space<vmem>>, vector<1x128x256xbf16>
    %164 = vector.shape_cast %163 : vector<1x128x256xbf16> to vector<128x256xbf16>
    %cst_130 = arith.constant dense<0.000000e+00> : vector<32x256xf32>
    %165 = tpu.matmul %162, %164, %cst_130 {dimension_numbers = #tpu.dot_dimension_numbers<[1], [0], [0], [1], [0, 0, 1, 1], [], []>} : vector<32x128xbf16>, vector<128x256xbf16>, vector<32x256xf32> -> vector<32x256xf32>
    %166 = arith.addf %158, %165 : vector<32x256xf32>
    %c5_131 = arith.constant 5 : index
    %c0_132 = arith.constant 0 : index
    %c0_133 = arith.constant 0 : index
    %167 = vector.load %arg8[%c5_131, %c0_132, %c0_133] : memref<9x32x128xbf16, #tpu.memory_space<vmem>>, vector<1x32x128xbf16>
    %168 = vector.shape_cast %167 : vector<1x32x128xbf16> to vector<32x128xbf16>
    %cst_134 = arith.constant dense<0.000000e+00> : vector<32x128xf32>
    %169 = tpu.matmul %168, %125, %cst_134 {dimension_numbers = #tpu.dot_dimension_numbers<[1], [0], [0], [1], [0, 0, 1, 1], [], []>} : vector<32x128xbf16>, vector<128x128xbf16>, vector<32x128xf32> -> vector<32x128xf32>
    %170 = arith.truncf %169 : vector<32x128xf32> to vector<32x128xbf16>
    %c5_135 = arith.constant 5 : index
    %c0_136 = arith.constant 0 : index
    %c0_137 = arith.constant 0 : index
    %171 = vector.load %arg9[%c5_135, %c0_136, %c0_137] : memref<9x128x256xbf16, #tpu.memory_space<vmem>>, vector<1x128x256xbf16>
    %172 = vector.shape_cast %171 : vector<1x128x256xbf16> to vector<128x256xbf16>
    %cst_138 = arith.constant dense<0.000000e+00> : vector<32x256xf32>
    %173 = tpu.matmul %170, %172, %cst_138 {dimension_numbers = #tpu.dot_dimension_numbers<[1], [0], [0], [1], [0, 0, 1, 1], [], []>} : vector<32x128xbf16>, vector<128x256xbf16>, vector<32x256xf32> -> vector<32x256xf32>
    %174 = arith.addf %166, %173 : vector<32x256xf32>
    %c6_139 = arith.constant 6 : index
    %c0_140 = arith.constant 0 : index
    %c0_141 = arith.constant 0 : index
    %175 = vector.load %arg8[%c6_139, %c0_140, %c0_141] : memref<9x32x128xbf16, #tpu.memory_space<vmem>>, vector<1x32x128xbf16>
    %176 = vector.shape_cast %175 : vector<1x32x128xbf16> to vector<32x128xbf16>
    %cst_142 = arith.constant dense<0.000000e+00> : vector<32x128xf32>
    %177 = tpu.matmul %176, %125, %cst_142 {dimension_numbers = #tpu.dot_dimension_numbers<[1], [0], [0], [1], [0, 0, 1, 1], [], []>} : vector<32x128xbf16>, vector<128x128xbf16>, vector<32x128xf32> -> vector<32x128xf32>
    %178 = arith.truncf %177 : vector<32x128xf32> to vector<32x128xbf16>
    %c6_143 = arith.constant 6 : index
    %c0_144 = arith.constant 0 : index
    %c0_145 = arith.constant 0 : index
    %179 = vector.load %arg9[%c6_143, %c0_144, %c0_145] : memref<9x128x256xbf16, #tpu.memory_space<vmem>>, vector<1x128x256xbf16>
    %180 = vector.shape_cast %179 : vector<1x128x256xbf16> to vector<128x256xbf16>
    %cst_146 = arith.constant dense<0.000000e+00> : vector<32x256xf32>
    %181 = tpu.matmul %178, %180, %cst_146 {dimension_numbers = #tpu.dot_dimension_numbers<[1], [0], [0], [1], [0, 0, 1, 1], [], []>} : vector<32x128xbf16>, vector<128x256xbf16>, vector<32x256xf32> -> vector<32x256xf32>
    %182 = arith.addf %174, %181 : vector<32x256xf32>
    %c7_147 = arith.constant 7 : index
    %c0_148 = arith.constant 0 : index
    %c0_149 = arith.constant 0 : index
    %183 = vector.load %arg8[%c7_147, %c0_148, %c0_149] : memref<9x32x128xbf16, #tpu.memory_space<vmem>>, vector<1x32x128xbf16>
    %184 = vector.shape_cast %183 : vector<1x32x128xbf16> to vector<32x128xbf16>
    %cst_150 = arith.constant dense<0.000000e+00> : vector<32x128xf32>
    %185 = tpu.matmul %184, %125, %cst_150 {dimension_numbers = #tpu.dot_dimension_numbers<[1], [0], [0], [1], [0, 0, 1, 1], [], []>} : vector<32x128xbf16>, vector<128x128xbf16>, vector<32x128xf32> -> vector<32x128xf32>
    %186 = arith.truncf %185 : vector<32x128xf32> to vector<32x128xbf16>
    %c7_151 = arith.constant 7 : index
    %c0_152 = arith.constant 0 : index
    %c0_153 = arith.constant 0 : index
    %187 = vector.load %arg9[%c7_151, %c0_152, %c0_153] : memref<9x128x256xbf16, #tpu.memory_space<vmem>>, vector<1x128x256xbf16>
    %188 = vector.shape_cast %187 : vector<1x128x256xbf16> to vector<128x256xbf16>
    %cst_154 = arith.constant dense<0.000000e+00> : vector<32x256xf32>
    %189 = tpu.matmul %186, %188, %cst_154 {dimension_numbers = #tpu.dot_dimension_numbers<[1], [0], [0], [1], [0, 0, 1, 1], [], []>} : vector<32x128xbf16>, vector<128x256xbf16>, vector<32x256xf32> -> vector<32x256xf32>
    %190 = arith.addf %182, %189 : vector<32x256xf32>
    %c8_155 = arith.constant 8 : index
    %c0_156 = arith.constant 0 : index
    %c0_157 = arith.constant 0 : index
    %191 = vector.load %arg8[%c8_155, %c0_156, %c0_157] : memref<9x32x128xbf16, #tpu.memory_space<vmem>>, vector<1x32x128xbf16>
    %192 = vector.shape_cast %191 : vector<1x32x128xbf16> to vector<32x128xbf16>
    %cst_158 = arith.constant dense<0.000000e+00> : vector<32x128xf32>
    %193 = tpu.matmul %192, %125, %cst_158 {dimension_numbers = #tpu.dot_dimension_numbers<[1], [0], [0], [1], [0, 0, 1, 1], [], []>} : vector<32x128xbf16>, vector<128x128xbf16>, vector<32x128xf32> -> vector<32x128xf32>
    %194 = arith.truncf %193 : vector<32x128xf32> to vector<32x128xbf16>
    %c8_159 = arith.constant 8 : index
    %c0_160 = arith.constant 0 : index
    %c0_161 = arith.constant 0 : index
    %195 = vector.load %arg9[%c8_159, %c0_160, %c0_161] : memref<9x128x256xbf16, #tpu.memory_space<vmem>>, vector<1x128x256xbf16>
    %196 = vector.shape_cast %195 : vector<1x128x256xbf16> to vector<128x256xbf16>
    %cst_162 = arith.constant dense<0.000000e+00> : vector<32x256xf32>
    %197 = tpu.matmul %194, %196, %cst_162 {dimension_numbers = #tpu.dot_dimension_numbers<[1], [0], [0], [1], [0, 0, 1, 1], [], []>} : vector<32x128xbf16>, vector<128x256xbf16>, vector<32x256xf32> -> vector<32x256xf32>
    %198 = arith.addf %190, %197 : vector<32x256xf32>
    %cst_163 = arith.constant dense<0.000000e+00> : vector<256xf32>
    %199 = vector.multi_reduction <add>, %198, %cst_163 [0] : vector<32x256xf32> to vector<256xf32>
    %200 = vector.shape_cast %199 : vector<256xf32> to vector<1x256xf32>
    %201 = arith.mulf %198, %198 : vector<32x256xf32>
    %cst_164 = arith.constant dense<0.000000e+00> : vector<256xf32>
    %202 = vector.multi_reduction <add>, %201, %cst_164 [0] : vector<32x256xf32> to vector<256xf32>
    %203 = vector.shape_cast %202 : vector<256xf32> to vector<1x256xf32>
    %cst_165 = arith.constant 3.125000e-02 : f32
    %204 = vector.broadcast %cst_165 : f32 to vector<1x256xf32>
    %205 = arith.mulf %200, %204 : vector<1x256xf32>
    %cst_166 = arith.constant 3.125000e-02 : f32
    %206 = vector.broadcast %cst_166 : f32 to vector<1x256xf32>
    %207 = arith.mulf %203, %206 : vector<1x256xf32>
    %208 = arith.mulf %205, %205 : vector<1x256xf32>
    %209 = arith.subf %207, %208 : vector<1x256xf32>
    %cst_167 = arith.constant 9.99999974E-6 : f32
    %210 = vector.broadcast %cst_167 : f32 to vector<1x256xf32>
    %211 = arith.addf %209, %210 : vector<1x256xf32>
    %212 = math.rsqrt %211 : vector<1x256xf32>
    %213 = arith.mulf %126, %212 : vector<1x256xf32>
    %214 = arith.mulf %205, %213 : vector<1x256xf32>
    %215 = arith.subf %127, %214 : vector<1x256xf32>
    %216 = vector.broadcast %213 : vector<1x256xf32> to vector<32x256xf32>
    %217 = arith.mulf %198, %216 : vector<32x256xf32>
    %218 = vector.broadcast %215 : vector<1x256xf32> to vector<32x256xf32>
    %219 = arith.addf %217, %218 : vector<32x256xf32>
    %cst_168 = arith.constant 0.000000e+00 : f32
    %220 = vector.broadcast %cst_168 : f32 to vector<32x256xf32>
    %221 = arith.maximumf %219, %220 : vector<32x256xf32>
    %222 = vector.extract_strided_slice %221 {offsets = [0, 0], sizes = [2, 256], strides = [1, 1]} : vector<32x256xf32> to vector<2x256xf32>
    %223 = arith.truncf %222 : vector<2x256xf32> to vector<2x256xbf16>
    %c0_169 = arith.constant 0 : index
    %c0_170 = arith.constant 0 : index
    %c0_171 = arith.constant 0 : index
    %224 = vector.load %arg12[%c0_169, %c0_170, %c0_171] : memref<16x256x32xbf16, #tpu.memory_space<vmem>>, vector<1x256x32xbf16>
    %225 = vector.shape_cast %224 : vector<1x256x32xbf16> to vector<256x32xbf16>
    %cst_172 = arith.constant dense<0.000000e+00> : vector<2x32xf32>
    %226 = tpu.matmul %223, %225, %cst_172 {dimension_numbers = #tpu.dot_dimension_numbers<[1], [0], [0], [1], [0, 0, 1, 1], [], []>} : vector<2x256xbf16>, vector<256x32xbf16>, vector<2x32xf32> -> vector<2x32xf32>
    %227 = vector.extract_strided_slice %221 {offsets = [2, 0], sizes = [2, 256], strides = [1, 1]} : vector<32x256xf32> to vector<2x256xf32>
    %228 = arith.truncf %227 : vector<2x256xf32> to vector<2x256xbf16>
    %c1_173 = arith.constant 1 : index
    %c0_174 = arith.constant 0 : index
    %c0_175 = arith.constant 0 : index
    %229 = vector.load %arg12[%c1_173, %c0_174, %c0_175] : memref<16x256x32xbf16, #tpu.memory_space<vmem>>, vector<1x256x32xbf16>
    %230 = vector.shape_cast %229 : vector<1x256x32xbf16> to vector<256x32xbf16>
    %cst_176 = arith.constant dense<0.000000e+00> : vector<2x32xf32>
    %231 = tpu.matmul %228, %230, %cst_176 {dimension_numbers = #tpu.dot_dimension_numbers<[1], [0], [0], [1], [0, 0, 1, 1], [], []>} : vector<2x256xbf16>, vector<256x32xbf16>, vector<2x32xf32> -> vector<2x32xf32>
    %232 = arith.addf %226, %231 : vector<2x32xf32>
    %233 = vector.extract_strided_slice %221 {offsets = [4, 0], sizes = [2, 256], strides = [1, 1]} : vector<32x256xf32> to vector<2x256xf32>
    %234 = arith.truncf %233 : vector<2x256xf32> to vector<2x256xbf16>
    %c2_177 = arith.constant 2 : index
    %c0_178 = arith.constant 0 : index
    %c0_179 = arith.constant 0 : index
    %235 = vector.load %arg12[%c2_177, %c0_178, %c0_179] : memref<16x256x32xbf16, #tpu.memory_space<vmem>>, vector<1x256x32xbf16>
    %236 = vector.shape_cast %235 : vector<1x256x32xbf16> to vector<256x32xbf16>
    %cst_180 = arith.constant dense<0.000000e+00> : vector<2x32xf32>
    %237 = tpu.matmul %234, %236, %cst_180 {dimension_numbers = #tpu.dot_dimension_numbers<[1], [0], [0], [1], [0, 0, 1, 1], [], []>} : vector<2x256xbf16>, vector<256x32xbf16>, vector<2x32xf32> -> vector<2x32xf32>
    %238 = arith.addf %232, %237 : vector<2x32xf32>
    %239 = vector.extract_strided_slice %221 {offsets = [6, 0], sizes = [2, 256], strides = [1, 1]} : vector<32x256xf32> to vector<2x256xf32>
    %240 = arith.truncf %239 : vector<2x256xf32> to vector<2x256xbf16>
    %c3_181 = arith.constant 3 : index
    %c0_182 = arith.constant 0 : index
    %c0_183 = arith.constant 0 : index
    %241 = vector.load %arg12[%c3_181, %c0_182, %c0_183] : memref<16x256x32xbf16, #tpu.memory_space<vmem>>, vector<1x256x32xbf16>
    %242 = vector.shape_cast %241 : vector<1x256x32xbf16> to vector<256x32xbf16>
    %cst_184 = arith.constant dense<0.000000e+00> : vector<2x32xf32>
    %243 = tpu.matmul %240, %242, %cst_184 {dimension_numbers = #tpu.dot_dimension_numbers<[1], [0], [0], [1], [0, 0, 1, 1], [], []>} : vector<2x256xbf16>, vector<256x32xbf16>, vector<2x32xf32> -> vector<2x32xf32>
    %244 = arith.addf %238, %243 : vector<2x32xf32>
    %245 = vector.extract_strided_slice %221 {offsets = [8, 0], sizes = [2, 256], strides = [1, 1]} : vector<32x256xf32> to vector<2x256xf32>
    %246 = arith.truncf %245 : vector<2x256xf32> to vector<2x256xbf16>
    %c4_185 = arith.constant 4 : index
    %c0_186 = arith.constant 0 : index
    %c0_187 = arith.constant 0 : index
    %247 = vector.load %arg12[%c4_185, %c0_186, %c0_187] : memref<16x256x32xbf16, #tpu.memory_space<vmem>>, vector<1x256x32xbf16>
    %248 = vector.shape_cast %247 : vector<1x256x32xbf16> to vector<256x32xbf16>
    %cst_188 = arith.constant dense<0.000000e+00> : vector<2x32xf32>
    %249 = tpu.matmul %246, %248, %cst_188 {dimension_numbers = #tpu.dot_dimension_numbers<[1], [0], [0], [1], [0, 0, 1, 1], [], []>} : vector<2x256xbf16>, vector<256x32xbf16>, vector<2x32xf32> -> vector<2x32xf32>
    %250 = arith.addf %244, %249 : vector<2x32xf32>
    %251 = vector.extract_strided_slice %221 {offsets = [10, 0], sizes = [2, 256], strides = [1, 1]} : vector<32x256xf32> to vector<2x256xf32>
    %252 = arith.truncf %251 : vector<2x256xf32> to vector<2x256xbf16>
    %c5_189 = arith.constant 5 : index
    %c0_190 = arith.constant 0 : index
    %c0_191 = arith.constant 0 : index
    %253 = vector.load %arg12[%c5_189, %c0_190, %c0_191] : memref<16x256x32xbf16, #tpu.memory_space<vmem>>, vector<1x256x32xbf16>
    %254 = vector.shape_cast %253 : vector<1x256x32xbf16> to vector<256x32xbf16>
    %cst_192 = arith.constant dense<0.000000e+00> : vector<2x32xf32>
    %255 = tpu.matmul %252, %254, %cst_192 {dimension_numbers = #tpu.dot_dimension_numbers<[1], [0], [0], [1], [0, 0, 1, 1], [], []>} : vector<2x256xbf16>, vector<256x32xbf16>, vector<2x32xf32> -> vector<2x32xf32>
    %256 = arith.addf %250, %255 : vector<2x32xf32>
    %257 = vector.extract_strided_slice %221 {offsets = [12, 0], sizes = [2, 256], strides = [1, 1]} : vector<32x256xf32> to vector<2x256xf32>
    %258 = arith.truncf %257 : vector<2x256xf32> to vector<2x256xbf16>
    %c6_193 = arith.constant 6 : index
    %c0_194 = arith.constant 0 : index
    %c0_195 = arith.constant 0 : index
    %259 = vector.load %arg12[%c6_193, %c0_194, %c0_195] : memref<16x256x32xbf16, #tpu.memory_space<vmem>>, vector<1x256x32xbf16>
    %260 = vector.shape_cast %259 : vector<1x256x32xbf16> to vector<256x32xbf16>
    %cst_196 = arith.constant dense<0.000000e+00> : vector<2x32xf32>
    %261 = tpu.matmul %258, %260, %cst_196 {dimension_numbers = #tpu.dot_dimension_numbers<[1], [0], [0], [1], [0, 0, 1, 1], [], []>} : vector<2x256xbf16>, vector<256x32xbf16>, vector<2x32xf32> -> vector<2x32xf32>
    %262 = arith.addf %256, %261 : vector<2x32xf32>
    %263 = vector.extract_strided_slice %221 {offsets = [14, 0], sizes = [2, 256], strides = [1, 1]} : vector<32x256xf32> to vector<2x256xf32>
    %264 = arith.truncf %263 : vector<2x256xf32> to vector<2x256xbf16>
    %c7_197 = arith.constant 7 : index
    %c0_198 = arith.constant 0 : index
    %c0_199 = arith.constant 0 : index
    %265 = vector.load %arg12[%c7_197, %c0_198, %c0_199] : memref<16x256x32xbf16, #tpu.memory_space<vmem>>, vector<1x256x32xbf16>
    %266 = vector.shape_cast %265 : vector<1x256x32xbf16> to vector<256x32xbf16>
    %cst_200 = arith.constant dense<0.000000e+00> : vector<2x32xf32>
    %267 = tpu.matmul %264, %266, %cst_200 {dimension_numbers = #tpu.dot_dimension_numbers<[1], [0], [0], [1], [0, 0, 1, 1], [], []>} : vector<2x256xbf16>, vector<256x32xbf16>, vector<2x32xf32> -> vector<2x32xf32>
    %268 = arith.addf %262, %267 : vector<2x32xf32>
    %269 = vector.extract_strided_slice %221 {offsets = [16, 0], sizes = [2, 256], strides = [1, 1]} : vector<32x256xf32> to vector<2x256xf32>
    %270 = arith.truncf %269 : vector<2x256xf32> to vector<2x256xbf16>
    %c8_201 = arith.constant 8 : index
    %c0_202 = arith.constant 0 : index
    %c0_203 = arith.constant 0 : index
    %271 = vector.load %arg12[%c8_201, %c0_202, %c0_203] : memref<16x256x32xbf16, #tpu.memory_space<vmem>>, vector<1x256x32xbf16>
    %272 = vector.shape_cast %271 : vector<1x256x32xbf16> to vector<256x32xbf16>
    %cst_204 = arith.constant dense<0.000000e+00> : vector<2x32xf32>
    %273 = tpu.matmul %270, %272, %cst_204 {dimension_numbers = #tpu.dot_dimension_numbers<[1], [0], [0], [1], [0, 0, 1, 1], [], []>} : vector<2x256xbf16>, vector<256x32xbf16>, vector<2x32xf32> -> vector<2x32xf32>
    %274 = arith.addf %268, %273 : vector<2x32xf32>
    %275 = vector.extract_strided_slice %221 {offsets = [18, 0], sizes = [2, 256], strides = [1, 1]} : vector<32x256xf32> to vector<2x256xf32>
    %276 = arith.truncf %275 : vector<2x256xf32> to vector<2x256xbf16>
    %c9 = arith.constant 9 : index
    %c0_205 = arith.constant 0 : index
    %c0_206 = arith.constant 0 : index
    %277 = vector.load %arg12[%c9, %c0_205, %c0_206] : memref<16x256x32xbf16, #tpu.memory_space<vmem>>, vector<1x256x32xbf16>
    %278 = vector.shape_cast %277 : vector<1x256x32xbf16> to vector<256x32xbf16>
    %cst_207 = arith.constant dense<0.000000e+00> : vector<2x32xf32>
    %279 = tpu.matmul %276, %278, %cst_207 {dimension_numbers = #tpu.dot_dimension_numbers<[1], [0], [0], [1], [0, 0, 1, 1], [], []>} : vector<2x256xbf16>, vector<256x32xbf16>, vector<2x32xf32> -> vector<2x32xf32>
    %280 = arith.addf %274, %279 : vector<2x32xf32>
    %281 = vector.extract_strided_slice %221 {offsets = [20, 0], sizes = [2, 256], strides = [1, 1]} : vector<32x256xf32> to vector<2x256xf32>
    %282 = arith.truncf %281 : vector<2x256xf32> to vector<2x256xbf16>
    %c10 = arith.constant 10 : index
    %c0_208 = arith.constant 0 : index
    %c0_209 = arith.constant 0 : index
    %283 = vector.load %arg12[%c10, %c0_208, %c0_209] : memref<16x256x32xbf16, #tpu.memory_space<vmem>>, vector<1x256x32xbf16>
    %284 = vector.shape_cast %283 : vector<1x256x32xbf16> to vector<256x32xbf16>
    %cst_210 = arith.constant dense<0.000000e+00> : vector<2x32xf32>
    %285 = tpu.matmul %282, %284, %cst_210 {dimension_numbers = #tpu.dot_dimension_numbers<[1], [0], [0], [1], [0, 0, 1, 1], [], []>} : vector<2x256xbf16>, vector<256x32xbf16>, vector<2x32xf32> -> vector<2x32xf32>
    %286 = arith.addf %280, %285 : vector<2x32xf32>
    %287 = vector.extract_strided_slice %221 {offsets = [22, 0], sizes = [2, 256], strides = [1, 1]} : vector<32x256xf32> to vector<2x256xf32>
    %288 = arith.truncf %287 : vector<2x256xf32> to vector<2x256xbf16>
    %c11 = arith.constant 11 : index
    %c0_211 = arith.constant 0 : index
    %c0_212 = arith.constant 0 : index
    %289 = vector.load %arg12[%c11, %c0_211, %c0_212] : memref<16x256x32xbf16, #tpu.memory_space<vmem>>, vector<1x256x32xbf16>
    %290 = vector.shape_cast %289 : vector<1x256x32xbf16> to vector<256x32xbf16>
    %cst_213 = arith.constant dense<0.000000e+00> : vector<2x32xf32>
    %291 = tpu.matmul %288, %290, %cst_213 {dimension_numbers = #tpu.dot_dimension_numbers<[1], [0], [0], [1], [0, 0, 1, 1], [], []>} : vector<2x256xbf16>, vector<256x32xbf16>, vector<2x32xf32> -> vector<2x32xf32>
    %292 = arith.addf %286, %291 : vector<2x32xf32>
    %293 = vector.extract_strided_slice %221 {offsets = [24, 0], sizes = [2, 256], strides = [1, 1]} : vector<32x256xf32> to vector<2x256xf32>
    %294 = arith.truncf %293 : vector<2x256xf32> to vector<2x256xbf16>
    %c12 = arith.constant 12 : index
    %c0_214 = arith.constant 0 : index
    %c0_215 = arith.constant 0 : index
    %295 = vector.load %arg12[%c12, %c0_214, %c0_215] : memref<16x256x32xbf16, #tpu.memory_space<vmem>>, vector<1x256x32xbf16>
    %296 = vector.shape_cast %295 : vector<1x256x32xbf16> to vector<256x32xbf16>
    %cst_216 = arith.constant dense<0.000000e+00> : vector<2x32xf32>
    %297 = tpu.matmul %294, %296, %cst_216 {dimension_numbers = #tpu.dot_dimension_numbers<[1], [0], [0], [1], [0, 0, 1, 1], [], []>} : vector<2x256xbf16>, vector<256x32xbf16>, vector<2x32xf32> -> vector<2x32xf32>
    %298 = arith.addf %292, %297 : vector<2x32xf32>
    %299 = vector.extract_strided_slice %221 {offsets = [26, 0], sizes = [2, 256], strides = [1, 1]} : vector<32x256xf32> to vector<2x256xf32>
    %300 = arith.truncf %299 : vector<2x256xf32> to vector<2x256xbf16>
    %c13 = arith.constant 13 : index
    %c0_217 = arith.constant 0 : index
    %c0_218 = arith.constant 0 : index
    %301 = vector.load %arg12[%c13, %c0_217, %c0_218] : memref<16x256x32xbf16, #tpu.memory_space<vmem>>, vector<1x256x32xbf16>
    %302 = vector.shape_cast %301 : vector<1x256x32xbf16> to vector<256x32xbf16>
    %cst_219 = arith.constant dense<0.000000e+00> : vector<2x32xf32>
    %303 = tpu.matmul %300, %302, %cst_219 {dimension_numbers = #tpu.dot_dimension_numbers<[1], [0], [0], [1], [0, 0, 1, 1], [], []>} : vector<2x256xbf16>, vector<256x32xbf16>, vector<2x32xf32> -> vector<2x32xf32>
    %304 = arith.addf %298, %303 : vector<2x32xf32>
    %305 = vector.extract_strided_slice %221 {offsets = [28, 0], sizes = [2, 256], strides = [1, 1]} : vector<32x256xf32> to vector<2x256xf32>
    %306 = arith.truncf %305 : vector<2x256xf32> to vector<2x256xbf16>
    %c14 = arith.constant 14 : index
    %c0_220 = arith.constant 0 : index
    %c0_221 = arith.constant 0 : index
    %307 = vector.load %arg12[%c14, %c0_220, %c0_221] : memref<16x256x32xbf16, #tpu.memory_space<vmem>>, vector<1x256x32xbf16>
    %308 = vector.shape_cast %307 : vector<1x256x32xbf16> to vector<256x32xbf16>
    %cst_222 = arith.constant dense<0.000000e+00> : vector<2x32xf32>
    %309 = tpu.matmul %306, %308, %cst_222 {dimension_numbers = #tpu.dot_dimension_numbers<[1], [0], [0], [1], [0, 0, 1, 1], [], []>} : vector<2x256xbf16>, vector<256x32xbf16>, vector<2x32xf32> -> vector<2x32xf32>
    %310 = arith.addf %304, %309 : vector<2x32xf32>
    %311 = vector.extract_strided_slice %221 {offsets = [30, 0], sizes = [2, 256], strides = [1, 1]} : vector<32x256xf32> to vector<2x256xf32>
    %312 = arith.truncf %311 : vector<2x256xf32> to vector<2x256xbf16>
    %c15 = arith.constant 15 : index
    %c0_223 = arith.constant 0 : index
    %c0_224 = arith.constant 0 : index
    %313 = vector.load %arg12[%c15, %c0_223, %c0_224] : memref<16x256x32xbf16, #tpu.memory_space<vmem>>, vector<1x256x32xbf16>
    %314 = vector.shape_cast %313 : vector<1x256x32xbf16> to vector<256x32xbf16>
    %cst_225 = arith.constant dense<0.000000e+00> : vector<2x32xf32>
    %315 = tpu.matmul %312, %314, %cst_225 {dimension_numbers = #tpu.dot_dimension_numbers<[1], [0], [0], [1], [0, 0, 1, 1], [], []>} : vector<2x256xbf16>, vector<256x32xbf16>, vector<2x32xf32> -> vector<2x32xf32>
    %316 = arith.addf %310, %315 : vector<2x32xf32>
    %c0_226 = arith.constant 0 : index
    %c0_227 = arith.constant 0 : index
    %317 = vector.load %arg13[%c0_226, %c0_227] : memref<1x32xf32, #tpu.memory_space<vmem>>, vector<1x32xf32>
    %318 = vector.broadcast %317 : vector<1x32xf32> to vector<2x32xf32>
    %319 = arith.addf %316, %318 : vector<2x32xf32>
    %320 = math.tanh %319 : vector<2x32xf32>
    %c0_228 = arith.constant 0 : index
    %c0_229 = arith.constant 0 : index
    %321 = vector.load %arg14[%c0_228, %c0_229] : memref<2x32xf32, #tpu.memory_space<vmem>>, vector<2x32xf32>
    tpu.vector_store %arg14[%c0_228, %c0_229], %320 {strides = array<i32>} : memref<2x32xf32, #tpu.memory_space<vmem>>, vector<2x32xf32>,
    return
  }
}

</mosaic_0001>

<llo_original>
// kernel: discriminator_forward.1
$region0: #{discriminator_forward.1}
  #allocation0 [shape = 'u32[]', space=smem, size = 0x4, offset = 0x4, fixed_abs, tag = 'smem constant byte address 0x4 - core index']
  #allocation1 [shape = 'u32[144,128]{1,0:T(1,128)}', space=vmem, size = 0x12000, scoped, tag = 'internal scratch']
  %s0 = inlined_call_operand.vmem [shape: bf16[512,36], index: 0, kind: input, shape index: {}]
  %s1 = inlined_call_operand.vmem [shape: bf16[36,64], index: 1, kind: input, shape index: {}]
  %s2 = inlined_call_operand.vmem [shape: f32[1,64], index: 2, kind: input, shape index: {}]
  %s3 = inlined_call_operand.vmem [shape: f32[1,64], index: 3, kind: input, shape index: {}]
  %s4 = inlined_call_operand.vmem [shape: bf16[9,128,512], index: 4, kind: input, shape index: {}]
  %s5 = inlined_call_operand.vmem [shape: bf16[9,64,128], index: 5, kind: input, shape index: {}]
  %s6 = inlined_call_operand.vmem [shape: f32[1,128], index: 6, kind: input, shape index: {}]
  %s7 = inlined_call_operand.vmem [shape: f32[1,128], index: 7, kind: input, shape index: {}]
  %s8 = inlined_call_operand.vmem [shape: bf16[9,32,128], index: 8, kind: input, shape index: {}]
  %s9 = inlined_call_operand.vmem [shape: bf16[9,128,256], index: 9, kind: input, shape index: {}]
  %s10 = inlined_call_operand.vmem [shape: f32[1,256], index: 10, kind: input, shape index: {}]
  %s11 = inlined_call_operand.vmem [shape: f32[1,256], index: 11, kind: input, shape index: {}]
  %s12 = inlined_call_operand.vmem [shape: bf16[16,256,32], index: 12, kind: input, shape index: {}]
  %s13 = inlined_call_operand.vmem [shape: f32[1,32], index: 13, kind: input, shape index: {}]
  %s14 = inlined_call_operand.hbm [shape: f32[2,32], index: 14, kind: output, shape index: {}]
  %s15 = sld [smem:[#allocation0]]
  $region66: #{discriminator_forward.1} parent=0
    _
  %s17 = ssub.s32 1, %s15
  %s18 = scalar_select 0, %s17, %s15
  $region1: #{discriminator_forward.1} parent=0
    #allocation2 [shape = 'u8[1024]{0}', space=vmem, size = 0x400, scoped, tag = 'output window, operand 0, single buffered']
    #allocation3 [shape = 's32[1]{0}', space=sflag, size = 0x4, scoped, tag = 'scoped memory for discriminator_forward.1']
    %19 = vsyncpa [#allocation3], 0
    // Predicated region
    $region2: #{discriminator_forward.1} parent=1 // pred_check
      _
    $region3: #{discriminator_forward.1} parent=1 // pred_check_branch
      %21 = sbr.rel (0) target = $region5
    $region4: #{discriminator_forward.1} parent=1 // pred_region
      _
    $region5: #{discriminator_forward.1} parent=1 // pred_fallthru
      _
    // Predicated region
    $region6: #{discriminator_forward.1} parent=1 // pred_check
      _
    $region7: #{discriminator_forward.1} parent=1 // pred_check_branch
      %23 = sbr.rel (0) target = $region9
    $region8: #{discriminator_forward.1} parent=1 // pred_region
      _
    $region9: #{discriminator_forward.1} parent=1 // pred_fallthru
      _
    // Predicated region
    $region10: #{discriminator_forward.1} parent=1 // pred_check
      _
    $region11: #{discriminator_forward.1} parent=1 // pred_check_branch
      %25 = sbr.rel (0) target = $region13
    $region12: #{discriminator_forward.1} parent=1 // pred_region
      _
    $region13: #{discriminator_forward.1} parent=1 // pred_fallthru
      _
    // Predicated region
    $region14: #{discriminator_forward.1} parent=1 // pred_check
      _
    $region15: #{discriminator_forward.1} parent=1 // pred_check_branch
      %27 = sbr.rel (0) target = $region17
    $region16: #{discriminator_forward.1} parent=1 // pred_region
      _
    $region17: #{discriminator_forward.1} parent=1 // pred_fallthru
      _
    // Predicated region
    $region18: #{discriminator_forward.1} parent=1 // pred_check
      _
    $region19: #{discriminator_forward.1} parent=1 // pred_check_branch
      %29 = sbr.rel (0) target = $region21
    $region20: #{discriminator_forward.1} parent=1 // pred_region
      _
    $region21: #{discriminator_forward.1} parent=1 // pred_fallthru
      _
    // Predicated region
    $region22: #{discriminator_forward.1} parent=1 // pred_check
      _
    $region23: #{discriminator_forward.1} parent=1 // pred_check_branch
      %31 = sbr.rel (0) target = $region25
    $region24: #{discriminator_forward.1} parent=1 // pred_region
      _
    $region25: #{discriminator_forward.1} parent=1 // pred_fallthru
      _
    // Predicated region
    $region26: #{discriminator_forward.1} parent=1 // pred_check
      _
    $region27: #{discriminator_forward.1} parent=1 // pred_check_branch
      %33 = sbr.rel (0) target = $region29
    $region28: #{discriminator_forward.1} parent=1 // pred_region
      _
    $region29: #{discriminator_forward.1} parent=1 // pred_fallthru
      _
    // Predicated region
    $region30: #{discriminator_forward.1} parent=1 // pred_check
      _
    $region31: #{discriminator_forward.1} parent=1 // pred_check_branch
      %35 = sbr.rel (0) target = $region33
    $region32: #{discriminator_forward.1} parent=1 // pred_region
      _
    $region33: #{discriminator_forward.1} parent=1 // pred_fallthru
      _
    // Predicated region
    $region34: #{discriminator_forward.1} parent=1 // pred_check
      _
    $region35: #{discriminator_forward.1} parent=1 // pred_check_branch
      %37 = sbr.rel (0) target = $region37
    $region36: #{discriminator_forward.1} parent=1 // pred_region
      _
    $region37: #{discriminator_forward.1} parent=1 // pred_fallthru
      _
    // Predicated region
    $region38: #{discriminator_forward.1} parent=1 // pred_check
      _
    $region39: #{discriminator_forward.1} parent=1 // pred_check_branch
      %39 = sbr.rel (0) target = $region41
    $region40: #{discriminator_forward.1} parent=1 // pred_region
      _
    $region41: #{discriminator_forward.1} parent=1 // pred_fallthru
      _
    // Predicated region
    $region42: #{discriminator_forward.1} parent=1 // pred_check
      _
    $region43: #{discriminator_forward.1} parent=1 // pred_check_branch
      %41 = sbr.rel (0) target = $region45
    $region44: #{discriminator_forward.1} parent=1 // pred_region
      _
    $region45: #{discriminator_forward.1} parent=1 // pred_fallthru
      _
    // Predicated region
    $region46: #{discriminator_forward.1} parent=1 // pred_check
      _
    $region47: #{discriminator_forward.1} parent=1 // pred_check_branch
      %43 = sbr.rel (0) target = $region49
    $region48: #{discriminator_forward.1} parent=1 // pred_region
      _
    $region49: #{discriminator_forward.1} parent=1 // pred_fallthru
      _
    // Predicated region
    $region50: #{discriminator_forward.1} parent=1 // pred_check
      _
    $region51: #{discriminator_forward.1} parent=1 // pred_check_branch
      %45 = sbr.rel (0) target = $region53
    $region52: #{discriminator_forward.1} parent=1 // pred_region
      _
    $region53: #{discriminator_forward.1} parent=1 // pred_fallthru
      _
    // Predicated region
    $region54: #{discriminator_forward.1} parent=1 // pred_check
      _
    $region55: #{discriminator_forward.1} parent=1 // pred_check_branch
      %47 = sbr.rel (0) target = $region57
    $region56: #{discriminator_forward.1} parent=1 // pred_region
      _
    $region57: #{discriminator_forward.1} parent=1 // pred_fallthru
      _
    %v49 = vld [vmem:[%s0] sm:$0xf]
    %v50 = vld [vmem:[%s0 + $0x4] sm:$0xf]
    %v51 = vld [vmem:[%s0 + $0x8] sm:$0xf]
    %v52 = vld [vmem:[%s0 + $0xc] sm:$0xf]
    %v53 = vld [vmem:[%s0 + $0x10] sm:$0xf]
    %v54 = vld [vmem:[%s0 + $0x14] sm:$0xf]
    %v55 = vld [vmem:[%s0 + $0x18] sm:$0xf]
    %v56 = vld [vmem:[%s0 + $0x1c] sm:$0xf]
    %v57 = vld [vmem:[%s0 + $0x20] sm:$0xf]
    %v58 = vld [vmem:[%s0 + $0x24] sm:$0xf]
    %v59 = vld [vmem:[%s0 + $0x28] sm:$0xf]
    %v60 = vld [vmem:[%s0 + $0x2c] sm:$0xf]
    %v61 = vld [vmem:[%s0 + $0x30] sm:$0xf]
    %v62 = vld [vmem:[%s0 + $0x34] sm:$0xf]
    %v63 = vld [vmem:[%s0 + $0x38] sm:$0xf]
    %v64 = vld [vmem:[%s0 + $0x3c] sm:$0xf]
    %v65 = vld [vmem:[%s0 + $0x40] sm:$0xf]
    %v66 = vld [vmem:[%s0 + $0x44] sm:$0xf]
    %v67 = vld [vmem:[%s0 + $0x48] sm:$0xf]
    %v68 = vld [vmem:[%s0 + $0x4c] sm:$0xf]
    %v69 = vld [vmem:[%s0 + $0x50] sm:$0xf]
    %v70 = vld [vmem:[%s0 + $0x54] sm:$0xf]
    %v71 = vld [vmem:[%s0 + $0x58] sm:$0xf]
    %v72 = vld [vmem:[%s0 + $0x5c] sm:$0xf]
    %v73 = vld [vmem:[%s0 + $0x60] sm:$0xf]
    %v74 = vld [vmem:[%s0 + $0x64] sm:$0xf]
    %v75 = vld [vmem:[%s0 + $0x68] sm:$0xf]
    %v76 = vld [vmem:[%s0 + $0x6c] sm:$0xf]
    %v77 = vld [vmem:[%s0 + $0x70] sm:$0xf]
    %v78 = vld [vmem:[%s0 + $0x74] sm:$0xf]
    %v79 = vld [vmem:[%s0 + $0x78] sm:$0xf]
    %v80 = vld [vmem:[%s0 + $0x7c] sm:$0xf]
    %v81 = vld [vmem:[%s0 + $0x80] sm:$0xf]
    %v82 = vld [vmem:[%s0 + $0x84] sm:$0xf]
    %v83 = vld [vmem:[%s0 + $0x88] sm:$0xf]
    %v84 = vld [vmem:[%s0 + $0x8c] sm:$0xf]
    %v85 = vld [vmem:[%s0 + $0x90] sm:$0xf]
    %v86 = vld [vmem:[%s0 + $0x94] sm:$0xf]
    %v87 = vld [vmem:[%s0 + $0x98] sm:$0xf]
    %v88 = vld [vmem:[%s0 + $0x9c] sm:$0xf]
    %v89 = vld [vmem:[%s0 + $0xa0] sm:$0xf]
    %v90 = vld [vmem:[%s0 + $0xa4] sm:$0xf]
    %v91 = vld [vmem:[%s0 + $0xa8] sm:$0xf]
    %v92 = vld [vmem:[%s0 + $0xac] sm:$0xf]
    %v93 = vld [vmem:[%s0 + $0xb0] sm:$0xf]
    %v94 = vld [vmem:[%s0 + $0xb4] sm:$0xf]
    %v95 = vld [vmem:[%s0 + $0xb8] sm:$0xf]
    %v96 = vld [vmem:[%s0 + $0xbc] sm:$0xf]
    %v97 = vld [vmem:[%s0 + $0xc0] sm:$0xf]
    %v98 = vld [vmem:[%s0 + $0xc4] sm:$0xf]
    %v99 = vld [vmem:[%s0 + $0xc8] sm:$0xf]
    %v100 = vld [vmem:[%s0 + $0xcc] sm:$0xf]
    %v101 = vld [vmem:[%s0 + $0xd0] sm:$0xf]
    %v102 = vld [vmem:[%s0 + $0xd4] sm:$0xf]
    %v103 = vld [vmem:[%s0 + $0xd8] sm:$0xf]
    %v104 = vld [vmem:[%s0 + $0xdc] sm:$0xf]
    %v105 = vld [vmem:[%s0 + $0xe0] sm:$0xf]
    %v106 = vld [vmem:[%s0 + $0xe4] sm:$0xf]
    %v107 = vld [vmem:[%s0 + $0xe8] sm:$0xf]
    %v108 = vld [vmem:[%s0 + $0xec] sm:$0xf]
    %v109 = vld [vmem:[%s0 + $0xf0] sm:$0xf]
    %v110 = vld [vmem:[%s0 + $0xf4] sm:$0xf]
    %v111 = vld [vmem:[%s0 + $0xf8] sm:$0xf]
    %v112 = vld [vmem:[%s0 + $0xfc] sm:$0xf]
    %v113 = vld [vmem:[%s1] sm:$0xf]
    %v114 = vld [vmem:[%s1 + $0x4] sm:$0xf]
    %v115 = vld [vmem:[%s1 + $0x8] sm:$0xf]
    %v116 = vld [vmem:[%s1 + $0xc] sm:$0xf]
    %v117 = vld [vmem:[%s1 + $0x10] sm:$0x3]
    %v182 = vunpack.c.l.b16 %v49
    %v183 = vunpack.c.l.b16 %v50
    %v184 = vunpack.c.l.b16 %v51
    %v185 = vunpack.c.l.b16 %v52
    %v186 = vunpack.c.l.b16 %v53
    %v187 = vunpack.c.l.b16 %v54
    %v188 = vunpack.c.l.b16 %v55
    %v189 = vunpack.c.l.b16 %v56
    %v190 = vunpack.c.l.b16 %v57
    %v191 = vunpack.c.l.b16 %v58
    %v192 = vunpack.c.l.b16 %v59
    %v193 = vunpack.c.l.b16 %v60
    %v194 = vunpack.c.l.b16 %v61
    %v195 = vunpack.c.l.b16 %v62
    %v196 = vunpack.c.l.b16 %v63
    %v197 = vunpack.c.l.b16 %v64
    %v198 = vunpack.c.l.b16 %v65
    %v199 = vunpack.c.l.b16 %v66
    %v200 = vunpack.c.l.b16 %v67
    %v201 = vunpack.c.l.b16 %v68
    %v202 = vunpack.c.l.b16 %v69
    %v203 = vunpack.c.l.b16 %v70
    %v204 = vunpack.c.l.b16 %v71
    %v205 = vunpack.c.l.b16 %v72
    %v206 = vunpack.c.l.b16 %v73
    %v207 = vunpack.c.l.b16 %v74
    %v208 = vunpack.c.l.b16 %v75
    %v209 = vunpack.c.l.b16 %v76
    %v210 = vunpack.c.l.b16 %v77
    %v211 = vunpack.c.l.b16 %v78
    %v212 = vunpack.c.l.b16 %v79
    %v213 = vunpack.c.l.b16 %v80
    %v214 = vunpack.c.l.b16 %v81
    %v215 = vunpack.c.l.b16 %v82
    %v216 = vunpack.c.l.b16 %v83
    %v217 = vunpack.c.l.b16 %v84
    %v218 = vunpack.c.l.b16 %v85
    %v219 = vunpack.c.l.b16 %v86
    %v220 = vunpack.c.l.b16 %v87
    %v221 = vunpack.c.l.b16 %v88
    %v222 = vunpack.c.l.b16 %v89
    %v223 = vunpack.c.l.b16 %v90
    %v224 = vunpack.c.l.b16 %v91
    %v225 = vunpack.c.l.b16 %v92
    %v226 = vunpack.c.l.b16 %v93
    %v227 = vunpack.c.l.b16 %v94
    %v228 = vunpack.c.l.b16 %v95
    %v229 = vunpack.c.l.b16 %v96
    %v230 = vunpack.c.l.b16 %v97
    %v231 = vunpack.c.l.b16 %v98
    %v232 = vunpack.c.l.b16 %v99
    %v233 = vunpack.c.l.b16 %v100
    %v234 = vunpack.c.l.b16 %v101
    %v235 = vunpack.c.l.b16 %v102
    %v236 = vunpack.c.l.b16 %v103
    %v237 = vunpack.c.l.b16 %v104
    %v238 = vunpack.c.l.b16 %v105
    %v239 = vunpack.c.l.b16 %v106
    %v240 = vunpack.c.l.b16 %v107
    %v241 = vunpack.c.l.b16 %v108
    %v242 = vunpack.c.l.b16 %v109
    %v243 = vunpack.c.l.b16 %v110
    %v244 = vunpack.c.l.b16 %v111
    %v245 = vunpack.c.l.b16 %v112
    %v246 = vpack.c.b16 %v183, %v182
    %v247 = vpack.c.b16 %v185, %v184
    %v248 = vpack.c.b16 %v187, %v186
    %v249 = vpack.c.b16 %v189, %v188
    %v250 = vpack.c.b16 %v191, %v190
    %v251 = vpack.c.b16 %v193, %v192
    %v252 = vpack.c.b16 %v195, %v194
    %v253 = vpack.c.b16 %v197, %v196
    %v254 = vpack.c.b16 %v199, %v198
    %v255 = vpack.c.b16 %v201, %v200
    %v256 = vpack.c.b16 %v203, %v202
    %v257 = vpack.c.b16 %v205, %v204
    %v258 = vpack.c.b16 %v207, %v206
    %v259 = vpack.c.b16 %v209, %v208
    %v260 = vpack.c.b16 %v211, %v210
    %v261 = vpack.c.b16 %v213, %v212
    %v262 = vpack.c.b16 %v215, %v214
    %v263 = vpack.c.b16 %v217, %v216
    %v264 = vpack.c.b16 %v219, %v218
    %v265 = vpack.c.b16 %v221, %v220
    %v266 = vpack.c.b16 %v223, %v222
    %v267 = vpack.c.b16 %v225, %v224
    %v268 = vpack.c.b16 %v227, %v226
    %v269 = vpack.c.b16 %v229, %v228
    %v270 = vpack.c.b16 %v231, %v230
    %v271 = vpack.c.b16 %v233, %v232
    %v272 = vpack.c.b16 %v235, %v234
    %v273 = vpack.c.b16 %v237, %v236
    %v274 = vpack.c.b16 %v239, %v238
    %v275 = vpack.c.b16 %v241, %v240
    %v276 = vpack.c.b16 %v243, %v242
    %v277 = vpack.c.b16 %v245, %v244
    %v283 = vunpack.c.l.b16 %v113
    %v284 = vunpack.c.l.b16 %v114
    %v285 = vunpack.c.l.b16 %v115
    %v286 = vunpack.c.l.b16 %v116
    %v287 = vunpack.c.l.b16 %v117
    %v288 = vpack.c.b16 %v284, %v283
    %v289 = vpack.c.b16 %v286, %v285
    %v290 = vpack.c.b16 %v287, %v287
    %vm293 = vcmask 293888
    %v295 = vsel %vm293, %v246, 0
    %v298 = vsel %vm293, %v247, 0
    %v301 = vsel %vm293, %v248, 0
    %v304 = vsel %vm293, %v249, 0
    %v307 = vsel %vm293, %v250, 0
    %v310 = vsel %vm293, %v251, 0
    %v313 = vsel %vm293, %v252, 0
    %v316 = vsel %vm293, %v253, 0
    %v319 = vsel %vm293, %v254, 0
    %v322 = vsel %vm293, %v255, 0
    %v325 = vsel %vm293, %v256, 0
    %v328 = vsel %vm293, %v257, 0
    %v331 = vsel %vm293, %v258, 0
    %v334 = vsel %vm293, %v259, 0
    %v337 = vsel %vm293, %v260, 0
    %v340 = vsel %vm293, %v261, 0
    %v343 = vsel %vm293, %v262, 0
    %v346 = vsel %vm293, %v263, 0
    %v349 = vsel %vm293, %v264, 0
    %v352 = vsel %vm293, %v265, 0
    %v355 = vsel %vm293, %v266, 0
    %v358 = vsel %vm293, %v267, 0
    %v361 = vsel %vm293, %v268, 0
    %v364 = vsel %vm293, %v269, 0
    %v367 = vsel %vm293, %v270, 0
    %v370 = vsel %vm293, %v271, 0
    %v373 = vsel %vm293, %v272, 0
    %v376 = vsel %vm293, %v273, 0
    %v379 = vsel %vm293, %v274, 0
    %v382 = vsel %vm293, %v275, 0
    %v385 = vsel %vm293, %v276, 0
    %v388 = vsel %vm293, %v277, 0
    %vm390 = vcmask 1041408
    %v392 = vsel %vm390, %v290, 0
    %394 = vmatprep.subr.bf16.mxu0 0
    %395 = vmatpush1.bf16.msra.mxu0 %v288
    %396 = vmatprep.subr.bf16.mxu0 0
    %397 = vmatpush1.bf16.msra.mxu0 %v289
    %398 = vmatprep.subr.bf16.mxu0 0
    %399 = vmatpush1.bf16.msra.mxu0 %v392
    %400 = vmatprep.subr.bf16.mxu0 0
    %401 = vmatpush1.bf16.msra.mxu0 0
    %402 = vmatprep.subr.bf16.mxu0 0
    %403 = vmatpush1.bf16.msra.mxu0 0
    %404 = vmatprep.subr.bf16.mxu0 0
    %405 = vmatpush1.bf16.msra.mxu0 0
    %406 = vmatprep.subr.bf16.mxu0 0
    %407 = vmatpush1.bf16.msra.mxu0 0
    %408 = vmatprep.subr.bf16.mxu0 0
    %409 = vmatpush1.bf16.msra.mxu0 0
    %410 = vmatprep.subr.bf16.mxu0 0
    %411 = vmatpush1.bf16.msra.mxu0 0
    %412 = vmatprep.subr.bf16.mxu0 0
    %413 = vmatpush1.bf16.msra.mxu0 0
    %414 = vmatprep.subr.bf16.mxu0 0
    %415 = vmatpush1.bf16.msra.mxu0 0
    %416 = vmatprep.subr.bf16.mxu0 0
    %417 = vmatpush1.bf16.msra.mxu0 0
    %418 = vmatprep.subr.bf16.mxu0 0
    %419 = vmatpush1.bf16.msra.mxu0 0
    %420 = vmatprep.subr.bf16.mxu0 0
    %421 = vmatpush1.bf16.msra.mxu0 0
    %422 = vmatprep.subr.bf16.mxu0 0
    %423 = vmatpush1.bf16.msra.mxu0 0
    %424 = vmatprep.subr.bf16.mxu0 0
    %425 = vmatpush1.bf16.msra.mxu0 0
    %426 = vmatprep.mubr.bf16.mxu0 0
    %427 = vmatmul.mubr.bf16.gmra.mrb[0].mxu0 %v295
    %v428 = vpop.f32.mrb[0].mxu0
    %v429 = vadd.f32 0.0, %v428
    %v430 = vpop.f32.mrb[0].mxu0
    %v431 = vpop.f32.mrb[0].mxu0
    %v432 = vadd.f32 0.0, %v431
    %v433 = vpop.f32.mrb[0].mxu0
    %434 = vmatprep.mubr.bf16.mxu0 0
    %435 = vmatmul.mubr.bf16.gmra.mrb[0].mxu0 %v298
    %v436 = vpop.f32.mrb[0].mxu0
    %v437 = vadd.f32 0.0, %v436
    %v438 = vpop.f32.mrb[0].mxu0
    %v439 = vpop.f32.mrb[0].mxu0
    %v440 = vadd.f32 0.0, %v439
    %v441 = vpop.f32.mrb[0].mxu0
    %442 = vmatprep.mubr.bf16.mxu0 0
    %443 = vmatmul.mubr.bf16.gmra.mrb[0].mxu0 %v301
    %v444 = vpop.f32.mrb[0].mxu0
    %v445 = vadd.f32 0.0, %v444
    %v446 = vpop.f32.mrb[0].mxu0
    %v447 = vpop.f32.mrb[0].mxu0
    %v448 = vadd.f32 0.0, %v447
    %v449 = vpop.f32.mrb[0].mxu0
    %450 = vmatprep.mubr.bf16.mxu0 0
    %451 = vmatmul.mubr.bf16.gmra.mrb[0].mxu0 %v304
    %v452 = vpop.f32.mrb[0].mxu0
    %v453 = vadd.f32 0.0, %v452
    %v454 = vpop.f32.mrb[0].mxu0
    %v455 = vpop.f32.mrb[0].mxu0
    %v456 = vadd.f32 0.0, %v455
    %v457 = vpop.f32.mrb[0].mxu0
    %458 = vmatprep.mubr.bf16.mxu0 0
    %459 = vmatmul.mubr.bf16.gmra.mrb[0].mxu0 %v307
    %v460 = vpop.f32.mrb[0].mxu0
    %v461 = vadd.f32 0.0, %v460
    %v462 = vpop.f32.mrb[0].mxu0
    %v463 = vpop.f32.mrb[0].mxu0
    %v464 = vadd.f32 0.0, %v463
    %v465 = vpop.f32.mrb[0].mxu0
    %466 = vmatprep.mubr.bf16.mxu0 0
    %467 = vmatmul.mubr.bf16.gmra.mrb[0].mxu0 %v310
    %v468 = vpop.f32.mrb[0].mxu0
    %v469 = vadd.f32 0.0, %v468
    %v470 = vpop.f32.mrb[0].mxu0
    %v471 = vpop.f32.mrb[0].mxu0
    %v472 = vadd.f32 0.0, %v471
    %v473 = vpop.f32.mrb[0].mxu0
    %474 = vmatprep.mubr.bf16.mxu0 0
    %475 = vmatmul.mubr.bf16.gmra.mrb[0].mxu0 %v313
    %v476 = vpop.f32.mrb[0].mxu0
    %v477 = vadd.f32 0.0, %v476
    %v478 = vpop.f32.mrb[0].mxu0
    %v479 = vpop.f32.mrb[0].mxu0
    %v480 = vadd.f32 0.0, %v479
    %v481 = vpop.f32.mrb[0].mxu0
    %482 = vmatprep.mubr.bf16.mxu0 0
    %483 = vmatmul.mubr.bf16.gmra.mrb[0].mxu0 %v316
    %v484 = vpop.f32.mrb[0].mxu0
    %v485 = vadd.f32 0.0, %v484
    %v486 = vpop.f32.mrb[0].mxu0
    %v487 = vpop.f32.mrb[0].mxu0
    %v488 = vadd.f32 0.0, %v487
    %v489 = vpop.f32.mrb[0].mxu0
    %490 = vmatprep.mubr.bf16.mxu0 0
    %491 = vmatmul.mubr.bf16.gmra.mrb[0].mxu0 %v319
    %v492 = vpop.f32.mrb[0].mxu0
    %v493 = vadd.f32 0.0, %v492
    %v494 = vpop.f32.mrb[0].mxu0
    %v495 = vpop.f32.mrb[0].mxu0
    %v496 = vadd.f32 0.0, %v495
    %v497 = vpop.f32.mrb[0].mxu0
    %498 = vmatprep.mubr.bf16.mxu0 0
    %499 = vmatmul.mubr.bf16.gmra.mrb[0].mxu0 %v322
    %v500 = vpop.f32.mrb[0].mxu0
    %v501 = vadd.f32 0.0, %v500
    %v502 = vpop.f32.mrb[0].mxu0
    %v503 = vpop.f32.mrb[0].mxu0
    %v504 = vadd.f32 0.0, %v503
    %v505 = vpop.f32.mrb[0].mxu0
    %506 = vmatprep.mubr.bf16.mxu0 0
    %507 = vmatmul.mubr.bf16.gmra.mrb[0].mxu0 %v325
    %v508 = vpop.f32.mrb[0].mxu0
    %v509 = vadd.f32 0.0, %v508
    %v510 = vpop.f32.mrb[0].mxu0
    %v511 = vpop.f32.mrb[0].mxu0
    %v512 = vadd.f32 0.0, %v511
    %v513 = vpop.f32.mrb[0].mxu0
    %514 = vmatprep.mubr.bf16.mxu0 0
    %515 = vmatmul.mubr.bf16.gmra.mrb[0].mxu0 %v328
    %v516 = vpop.f32.mrb[0].mxu0
    %v517 = vadd.f32 0.0, %v516
    %v518 = vpop.f32.mrb[0].mxu0
    %v519 = vpop.f32.mrb[0].mxu0
    %v520 = vadd.f32 0.0, %v519
    %v521 = vpop.f32.mrb[0].mxu0
    %522 = vmatprep.mubr.bf16.mxu0 0
    %523 = vmatmul.mubr.bf16.gmra.mrb[0].mxu0 %v331
    %v524 = vpop.f32.mrb[0].mxu0
    %v525 = vadd.f32 0.0, %v524
    %v526 = vpop.f32.mrb[0].mxu0
    %v527 = vpop.f32.mrb[0].mxu0
    %v528 = vadd.f32 0.0, %v527
    %v529 = vpop.f32.mrb[0].mxu0
    %530 = vmatprep.mubr.bf16.mxu0 0
    %531 = vmatmul.mubr.bf16.gmra.mrb[0].mxu0 %v334
    %v532 = vpop.f32.mrb[0].mxu0
    %v533 = vadd.f32 0.0, %v532
    %v534 = vpop.f32.mrb[0].mxu0
    %v535 = vpop.f32.mrb[0].mxu0
    %v536 = vadd.f32 0.0, %v535
    %v537 = vpop.f32.mrb[0].mxu0
    %538 = vmatprep.mubr.bf16.mxu0 0
    %539 = vmatmul.mubr.bf16.gmra.mrb[0].mxu0 %v337
    %v540 = vpop.f32.mrb[0].mxu0
    %v541 = vadd.f32 0.0, %v540
    %v542 = vpop.f32.mrb[0].mxu0
    %v543 = vpop.f32.mrb[0].mxu0
    %v544 = vadd.f32 0.0, %v543
    %v545 = vpop.f32.mrb[0].mxu0
    %546 = vmatprep.mubr.bf16.mxu0 0
    %547 = vmatmul.mubr.bf16.gmra.mrb[0].mxu0 %v340
    %v548 = vpop.f32.mrb[0].mxu0
    %v549 = vadd.f32 0.0, %v548
    %v550 = vpop.f32.mrb[0].mxu0
    %v551 = vpop.f32.mrb[0].mxu0
    %v552 = vadd.f32 0.0, %v551
    %v553 = vpop.f32.mrb[0].mxu0
    %554 = vmatprep.mubr.bf16.mxu0 0
    %555 = vmatmul.mubr.bf16.gmra.mrb[0].mxu0 %v343
    %v556 = vpop.f32.mrb[0].mxu0
    %v557 = vadd.f32 0.0, %v556
    %v558 = vpop.f32.mrb[0].mxu0
    %v559 = vpop.f32.mrb[0].mxu0
    %v560 = vadd.f32 0.0, %v559
    %v561 = vpop.f32.mrb[0].mxu0
    %562 = vmatprep.mubr.bf16.mxu0 0
    %563 = vmatmul.mubr.bf16.gmra.mrb[0].mxu0 %v346
    %v564 = vpop.f32.mrb[0].mxu0
    %v565 = vadd.f32 0.0, %v564
    %v566 = vpop.f32.mrb[0].mxu0
    %v567 = vpop.f32.mrb[0].mxu0
    %v568 = vadd.f32 0.0, %v567
    %v569 = vpop.f32.mrb[0].mxu0
    %570 = vmatprep.mubr.bf16.mxu0 0
    %571 = vmatmul.mubr.bf16.gmra.mrb[0].mxu0 %v349
    %v572 = vpop.f32.mrb[0].mxu0
    %v573 = vadd.f32 0.0, %v572
    %v574 = vpop.f32.mrb[0].mxu0
    %v575 = vpop.f32.mrb[0].mxu0
    %v576 = vadd.f32 0.0, %v575
    %v577 = vpop.f32.mrb[0].mxu0
    %578 = vmatprep.mubr.bf16.mxu0 0
    %579 = vmatmul.mubr.bf16.gmra.mrb[0].mxu0 %v352
    %v580 = vpop.f32.mrb[0].mxu0
    %v581 = vadd.f32 0.0, %v580
    %v582 = vpop.f32.mrb[0].mxu0
    %v583 = vpop.f32.mrb[0].mxu0
    %v584 = vadd.f32 0.0, %v583
    %v585 = vpop.f32.mrb[0].mxu0
    %586 = vmatprep.mubr.bf16.mxu0 0
    %587 = vmatmul.mubr.bf16.gmra.mrb[0].mxu0 %v355
    %v588 = vpop.f32.mrb[0].mxu0
    %v589 = vadd.f32 0.0, %v588
    %v590 = vpop.f32.mrb[0].mxu0
    %v591 = vpop.f32.mrb[0].mxu0
    %v592 = vadd.f32 0.0, %v591
    %v593 = vpop.f32.mrb[0].mxu0
    %594 = vmatprep.mubr.bf16.mxu0 0
    %595 = vmatmul.mubr.bf16.gmra.mrb[0].mxu0 %v358
    %v596 = vpop.f32.mrb[0].mxu0
    %v597 = vadd.f32 0.0, %v596
    %v598 = vpop.f32.mrb[0].mxu0
    %v599 = vpop.f32.mrb[0].mxu0
    %v600 = vadd.f32 0.0, %v599
    %v601 = vpop.f32.mrb[0].mxu0
    %602 = vmatprep.mubr.bf16.mxu0 0
    %603 = vmatmul.mubr.bf16.gmra.mrb[0].mxu0 %v361
    %v604 = vpop.f32.mrb[0].mxu0
    %v605 = vadd.f32 0.0, %v604
    %v606 = vpop.f32.mrb[0].mxu0
    %v607 = vpop.f32.mrb[0].mxu0
    %v608 = vadd.f32 0.0, %v607
    %v609 = vpop.f32.mrb[0].mxu0
    %610 = vmatprep.mubr.bf16.mxu0 0
    %611 = vmatmul.mubr.bf16.gmra.mrb[0].mxu0 %v364
    %v612 = vpop.f32.mrb[0].mxu0
    %v613 = vadd.f32 0.0, %v612
    %v614 = vpop.f32.mrb[0].mxu0
    %v615 = vpop.f32.mrb[0].mxu0
    %v616 = vadd.f32 0.0, %v615
    %v617 = vpop.f32.mrb[0].mxu0
    %618 = vmatprep.mubr.bf16.mxu0 0
    %619 = vmatmul.mubr.bf16.gmra.mrb[0].mxu0 %v367
    %v620 = vpop.f32.mrb[0].mxu0
    %v621 = vadd.f32 0.0, %v620
    %v622 = vpop.f32.mrb[0].mxu0
    %v623 = vpop.f32.mrb[0].mxu0
    %v624 = vadd.f32 0.0, %v623
    %v625 = vpop.f32.mrb[0].mxu0
    %626 = vmatprep.mubr.bf16.mxu0 0
    %627 = vmatmul.mubr.bf16.gmra.mrb[0].mxu0 %v370
    %v628 = vpop.f32.mrb[0].mxu0
    %v629 = vadd.f32 0.0, %v628
    %v630 = vpop.f32.mrb[0].mxu0
    %v631 = vpop.f32.mrb[0].mxu0
    %v632 = vadd.f32 0.0, %v631
    %v633 = vpop.f32.mrb[0].mxu0
    %634 = vmatprep.mubr.bf16.mxu0 0
    %635 = vmatmul.mubr.bf16.gmra.mrb[0].mxu0 %v373
    %v636 = vpop.f32.mrb[0].mxu0
    %v637 = vadd.f32 0.0, %v636
    %v638 = vpop.f32.mrb[0].mxu0
    %v639 = vpop.f32.mrb[0].mxu0
    %v640 = vadd.f32 0.0, %v639
    %v641 = vpop.f32.mrb[0].mxu0
    %642 = vmatprep.mubr.bf16.mxu0 0
    %643 = vmatmul.mubr.bf16.gmra.mrb[0].mxu0 %v376
    %v644 = vpop.f32.mrb[0].mxu0
    %v645 = vadd.f32 0.0, %v644
    %v646 = vpop.f32.mrb[0].mxu0
    %v647 = vpop.f32.mrb[0].mxu0
    %v648 = vadd.f32 0.0, %v647
    %v649 = vpop.f32.mrb[0].mxu0
    %650 = vmatprep.mubr.bf16.mxu0 0
    %651 = vmatmul.mubr.bf16.gmra.mrb[0].mxu0 %v379
    %v652 = vpop.f32.mrb[0].mxu0
    %v653 = vadd.f32 0.0, %v652
    %v654 = vpop.f32.mrb[0].mxu0
    %v655 = vpop.f32.mrb[0].mxu0
    %v656 = vadd.f32 0.0, %v655
    %v657 = vpop.f32.mrb[0].mxu0
    %658 = vmatprep.mubr.bf16.mxu0 0
    %659 = vmatmul.mubr.bf16.gmra.mrb[0].mxu0 %v382
    %v660 = vpop.f32.mrb[0].mxu0
    %v661 = vadd.f32 0.0, %v660
    %v662 = vpop.f32.mrb[0].mxu0
    %v663 = vpop.f32.mrb[0].mxu0
    %v664 = vadd.f32 0.0, %v663
    %v665 = vpop.f32.mrb[0].mxu0
    %666 = vmatprep.mubr.bf16.mxu0 0
    %667 = vmatmul.mubr.bf16.gmra.mrb[0].mxu0 %v385
    %v668 = vpop.f32.mrb[0].mxu0
    %v669 = vadd.f32 0.0, %v668
    %v670 = vpop.f32.mrb[0].mxu0
    %v671 = vpop.f32.mrb[0].mxu0
    %v672 = vadd.f32 0.0, %v671
    %v673 = vpop.f32.mrb[0].mxu0
    %674 = vmatprep.mubr.bf16.mxu0 0
    %675 = vmatmul.mubr.bf16.gmra.mrb[0].mxu0 %v388
    %v676 = vpop.f32.mrb[0].mxu0
    %v677 = vadd.f32 0.0, %v676
    %v678 = vpop.f32.mrb[0].mxu0
    %v679 = vpop.f32.mrb[0].mxu0
    %v680 = vadd.f32 0.0, %v679
    %v681 = vpop.f32.mrb[0].mxu0
    %682 = vdwg.mxu0
    %v683 = vld [vmem:[%s2] sm:$0x1]
    %v684 = vld [vmem:[%s3] sm:$0x1]
    %vm685 = vcmask 523264
    %v686 = vsel %vm685, %v429, 0.0
    %v687 = vsel %vm685, %v432, 0.0
    %v688 = vadd.f32 %v686, %v687
    %v689 = vsel %vm685, %v437, 0.0
    %v690 = vadd.f32 %v688, %v689
    %v691 = vsel %vm685, %v440, 0.0
    %v692 = vadd.f32 %v690, %v691
    %v693 = vsel %vm685, %v445, 0.0
    %v694 = vadd.f32 %v692, %v693
    %v695 = vsel %vm685, %v448, 0.0
    %v696 = vadd.f32 %v694, %v695
    %v697 = vsel %vm685, %v453, 0.0
    %v698 = vadd.f32 %v696, %v697
    %v699 = vsel %vm685, %v456, 0.0
    %v700 = vadd.f32 %v698, %v699
    %v701 = vsel %vm685, %v461, 0.0
    %v702 = vadd.f32 %v700, %v701
    %v703 = vsel %vm685, %v464, 0.0
    %v704 = vadd.f32 %v702, %v703
    %v705 = vsel %vm685, %v469, 0.0
    %v706 = vadd.f32 %v704, %v705
    %v707 = vsel %vm685, %v472, 0.0
    %v708 = vadd.f32 %v706, %v707
    %v709 = vsel %vm685, %v477, 0.0
    %v710 = vadd.f32 %v708, %v709
    %v711 = vsel %vm685, %v480, 0.0
    %v712 = vadd.f32 %v710, %v711
    %v713 = vsel %vm685, %v485, 0.0
    %v714 = vadd.f32 %v712, %v713
    %v715 = vsel %vm685, %v488, 0.0
    %v716 = vadd.f32 %v714, %v715
    %v717 = vsel %vm685, %v493, 0.0
    %v718 = vadd.f32 %v716, %v717
    %v719 = vsel %vm685, %v496, 0.0
    %v720 = vadd.f32 %v718, %v719
    %v721 = vsel %vm685, %v501, 0.0
    %v722 = vadd.f32 %v720, %v721
    %v723 = vsel %vm685, %v504, 0.0
    %v724 = vadd.f32 %v722, %v723
    %v725 = vsel %vm685, %v509, 0.0
    %v726 = vadd.f32 %v724, %v725
    %v727 = vsel %vm685, %v512, 0.0
    %v728 = vadd.f32 %v726, %v727
    %v729 = vsel %vm685, %v517, 0.0
    %v730 = vadd.f32 %v728, %v729
    %v731 = vsel %vm685, %v520, 0.0
    %v732 = vadd.f32 %v730, %v731
    %v733 = vsel %vm685, %v525, 0.0
    %v734 = vadd.f32 %v732, %v733
    %v735 = vsel %vm685, %v528, 0.0
    %v736 = vadd.f32 %v734, %v735
    %v737 = vsel %vm685, %v533, 0.0
    %v738 = vadd.f32 %v736, %v737
    %v739 = vsel %vm685, %v536, 0.0
    %v740 = vadd.f32 %v738, %v739
    %v741 = vsel %vm685, %v541, 0.0
    %v742 = vadd.f32 %v740, %v741
    %v743 = vsel %vm685, %v544, 0.0
    %v744 = vadd.f32 %v742, %v743
    %v745 = vsel %vm685, %v549, 0.0
    %v746 = vadd.f32 %v744, %v745
    %v747 = vsel %vm685, %v552, 0.0
    %v748 = vadd.f32 %v746, %v747
    %v749 = vsel %vm685, %v557, 0.0
    %v750 = vadd.f32 %v748, %v749
    %v751 = vsel %vm685, %v560, 0.0
    %v752 = vadd.f32 %v750, %v751
    %v753 = vsel %vm685, %v565, 0.0
    %v754 = vadd.f32 %v752, %v753
    %v755 = vsel %vm685, %v568, 0.0
    %v756 = vadd.f32 %v754, %v755
    %v757 = vsel %vm685, %v573, 0.0
    %v758 = vadd.f32 %v756, %v757
    %v759 = vsel %vm685, %v576, 0.0
    %v760 = vadd.f32 %v758, %v759
    %v761 = vsel %vm685, %v581, 0.0
    %v762 = vadd.f32 %v760, %v761
    %v763 = vsel %vm685, %v584, 0.0
    %v764 = vadd.f32 %v762, %v763
    %v765 = vsel %vm685, %v589, 0.0
    %v766 = vadd.f32 %v764, %v765
    %v767 = vsel %vm685, %v592, 0.0
    %v768 = vadd.f32 %v766, %v767
    %v769 = vsel %vm685, %v597, 0.0
    %v770 = vadd.f32 %v768, %v769
    %v771 = vsel %vm685, %v600, 0.0
    %v772 = vadd.f32 %v770, %v771
    %v773 = vsel %vm685, %v605, 0.0
    %v774 = vadd.f32 %v772, %v773
    %v775 = vsel %vm685, %v608, 0.0
    %v776 = vadd.f32 %v774, %v775
    %v777 = vsel %vm685, %v613, 0.0
    %v778 = vadd.f32 %v776, %v777
    %v779 = vsel %vm685, %v616, 0.0
    %v780 = vadd.f32 %v778, %v779
    %v781 = vsel %vm685, %v621, 0.0
    %v782 = vadd.f32 %v780, %v781
    %v783 = vsel %vm685, %v624, 0.0
    %v784 = vadd.f32 %v782, %v783
    %v785 = vsel %vm685, %v629, 0.0
    %v786 = vadd.f32 %v784, %v785
    %v787 = vsel %vm685, %v632, 0.0
    %v788 = vadd.f32 %v786, %v787
    %v789 = vsel %vm685, %v637, 0.0
    %v790 = vadd.f32 %v788, %v789
    %v791 = vsel %vm685, %v640, 0.0
    %v792 = vadd.f32 %v790, %v791
    %v793 = vsel %vm685, %v645, 0.0
    %v794 = vadd.f32 %v792, %v793
    %v795 = vsel %vm685, %v648, 0.0
    %v796 = vadd.f32 %v794, %v795
    %v797 = vsel %vm685, %v653, 0.0
    %v798 = vadd.f32 %v796, %v797
    %v799 = vsel %vm685, %v656, 0.0
    %v800 = vadd.f32 %v798, %v799
    %v801 = vsel %vm685, %v661, 0.0
    %v802 = vadd.f32 %v800, %v801
    %v803 = vsel %vm685, %v664, 0.0
    %v804 = vadd.f32 %v802, %v803
    %v805 = vsel %vm685, %v669, 0.0
    %v806 = vadd.f32 %v804, %v805
    %v807 = vsel %vm685, %v672, 0.0
    %v808 = vadd.f32 %v806, %v807
    %v809 = vsel %vm685, %v677, 0.0
    %v810 = vadd.f32 %v808, %v809
    %v811 = vsel %vm685, %v680, 0.0
    %v812 = vadd.f32 %v810, %v811
    %v813 = vrot.slane %v812, 4
    %v814 = vadd.f32 %v812, %v813
    %v815 = vrot.slane %v814, 2
    %v816 = vadd.f32 %v814, %v815
    %v817 = vrot.slane %v816, 1
    %v818 = vadd.f32 %v816, %v817
    %v819 = vmul.f32 %v429, %v429
    %v820 = vmul.f32 %v432, %v432
    %v821 = vmul.f32 %v437, %v437
    %v822 = vmul.f32 %v440, %v440
    %v823 = vmul.f32 %v445, %v445
    %v824 = vmul.f32 %v448, %v448
    %v825 = vmul.f32 %v453, %v453
    %v826 = vmul.f32 %v456, %v456
    %v827 = vmul.f32 %v461, %v461
    %v828 = vmul.f32 %v464, %v464
    %v829 = vmul.f32 %v469, %v469
    %v830 = vmul.f32 %v472, %v472
    %v831 = vmul.f32 %v477, %v477
    %v832 = vmul.f32 %v480, %v480
    %v833 = vmul.f32 %v485, %v485
    %v834 = vmul.f32 %v488, %v488
    %v835 = vmul.f32 %v493, %v493
    %v836 = vmul.f32 %v496, %v496
    %v837 = vmul.f32 %v501, %v501
    %v838 = vmul.f32 %v504, %v504
    %v839 = vmul.f32 %v509, %v509
    %v840 = vmul.f32 %v512, %v512
    %v841 = vmul.f32 %v517, %v517
    %v842 = vmul.f32 %v520, %v520
    %v843 = vmul.f32 %v525, %v525
    %v844 = vmul.f32 %v528, %v528
    %v845 = vmul.f32 %v533, %v533
    %v846 = vmul.f32 %v536, %v536
    %v847 = vmul.f32 %v541, %v541
    %v848 = vmul.f32 %v544, %v544
    %v849 = vmul.f32 %v549, %v549
    %v850 = vmul.f32 %v552, %v552
    %v851 = vmul.f32 %v557, %v557
    %v852 = vmul.f32 %v560, %v560
    %v853 = vmul.f32 %v565, %v565
    %v854 = vmul.f32 %v568, %v568
    %v855 = vmul.f32 %v573, %v573
    %v856 = vmul.f32 %v576, %v576
    %v857 = vmul.f32 %v581, %v581
    %v858 = vmul.f32 %v584, %v584
    %v859 = vmul.f32 %v589, %v589
    %v860 = vmul.f32 %v592, %v592
    %v861 = vmul.f32 %v597, %v597
    %v862 = vmul.f32 %v600, %v600
    %v863 = vmul.f32 %v605, %v605
    %v864 = vmul.f32 %v608, %v608
    %v865 = vmul.f32 %v613, %v613
    %v866 = vmul.f32 %v616, %v616
    %v867 = vmul.f32 %v621, %v621
    %v868 = vmul.f32 %v624, %v624
    %v869 = vmul.f32 %v629, %v629
    %v870 = vmul.f32 %v632, %v632
    %v871 = vmul.f32 %v637, %v637
    %v872 = vmul.f32 %v640, %v640
    %v873 = vmul.f32 %v645, %v645
    %v874 = vmul.f32 %v648, %v648
    %v875 = vmul.f32 %v653, %v653
    %v876 = vmul.f32 %v656, %v656
    %v877 = vmul.f32 %v661, %v661
    %v878 = vmul.f32 %v664, %v664
    %v879 = vmul.f32 %v669, %v669
    %v880 = vmul.f32 %v672, %v672
    %v881 = vmul.f32 %v677, %v677
    %v882 = vmul.f32 %v680, %v680
    %v883 = vsel %vm685, %v819, 0.0
    %v884 = vsel %vm685, %v820, 0.0
    %v885 = vadd.f32 %v883, %v884
    %v886 = vsel %vm685, %v821, 0.0
    %v887 = vadd.f32 %v885, %v886
    %v888 = vsel %vm685, %v822, 0.0
    %v889 = vadd.f32 %v887, %v888
    %v890 = vsel %vm685, %v823, 0.0
    %v891 = vadd.f32 %v889, %v890
    %v892 = vsel %vm685, %v824, 0.0
    %v893 = vadd.f32 %v891, %v892
    %v894 = vsel %vm685, %v825, 0.0
    %v895 = vadd.f32 %v893, %v894
    %v896 = vsel %vm685, %v826, 0.0
    %v897 = vadd.f32 %v895, %v896
    %v898 = vsel %vm685, %v827, 0.0
    %v899 = vadd.f32 %v897, %v898
    %v900 = vsel %vm685, %v828, 0.0
    %v901 = vadd.f32 %v899, %v900
    %v902 = vsel %vm685, %v829, 0.0
    %v903 = vadd.f32 %v901, %v902
    %v904 = vsel %vm685, %v830, 0.0
    %v905 = vadd.f32 %v903, %v904
    %v906 = vsel %vm685, %v831, 0.0
    %v907 = vadd.f32 %v905, %v906
    %v908 = vsel %vm685, %v832, 0.0
    %v909 = vadd.f32 %v907, %v908
    %v910 = vsel %vm685, %v833, 0.0
    %v911 = vadd.f32 %v909, %v910
    %v912 = vsel %vm685, %v834, 0.0
    %v913 = vadd.f32 %v911, %v912
    %v914 = vsel %vm685, %v835, 0.0
    %v915 = vadd.f32 %v913, %v914
    %v916 = vsel %vm685, %v836, 0.0
    %v917 = vadd.f32 %v915, %v916
    %v918 = vsel %vm685, %v837, 0.0
    %v919 = vadd.f32 %v917, %v918
    %v920 = vsel %vm685, %v838, 0.0
    %v921 = vadd.f32 %v919, %v920
    %v922 = vsel %vm685, %v839, 0.0
    %v923 = vadd.f32 %v921, %v922
    %v924 = vsel %vm685, %v840, 0.0
    %v925 = vadd.f32 %v923, %v924
    %v926 = vsel %vm685, %v841, 0.0
    %v927 = vadd.f32 %v925, %v926
    %v928 = vsel %vm685, %v842, 0.0
    %v929 = vadd.f32 %v927, %v928
    %v930 = vsel %vm685, %v843, 0.0
    %v931 = vadd.f32 %v929, %v930
    %v932 = vsel %vm685, %v844, 0.0
    %v933 = vadd.f32 %v931, %v932
    %v934 = vsel %vm685, %v845, 0.0
    %v935 = vadd.f32 %v933, %v934
    %v936 = vsel %vm685, %v846, 0.0
    %v937 = vadd.f32 %v935, %v936
    %v938 = vsel %vm685, %v847, 0.0
    %v939 = vadd.f32 %v937, %v938
    %v940 = vsel %vm685, %v848, 0.0
    %v941 = vadd.f32 %v939, %v940
    %v942 = vsel %vm685, %v849, 0.0
    %v943 = vadd.f32 %v941, %v942
    %v944 = vsel %vm685, %v850, 0.0
    %v945 = vadd.f32 %v943, %v944
    %v946 = vsel %vm685, %v851, 0.0
    %v947 = vadd.f32 %v945, %v946
    %v948 = vsel %vm685, %v852, 0.0
    %v949 = vadd.f32 %v947, %v948
    %v950 = vsel %vm685, %v853, 0.0
    %v951 = vadd.f32 %v949, %v950
    %v952 = vsel %vm685, %v854, 0.0
    %v953 = vadd.f32 %v951, %v952
    %v954 = vsel %vm685, %v855, 0.0
    %v955 = vadd.f32 %v953, %v954
    %v956 = vsel %vm685, %v856, 0.0
    %v957 = vadd.f32 %v955, %v956
    %v958 = vsel %vm685, %v857, 0.0
    %v959 = vadd.f32 %v957, %v958
    %v960 = vsel %vm685, %v858, 0.0
    %v961 = vadd.f32 %v959, %v960
    %v962 = vsel %vm685, %v859, 0.0
    %v963 = vadd.f32 %v961, %v962
    %v964 = vsel %vm685, %v860, 0.0
    %v965 = vadd.f32 %v963, %v964
    %v966 = vsel %vm685, %v861, 0.0
    %v967 = vadd.f32 %v965, %v966
    %v968 = vsel %vm685, %v862, 0.0
    %v969 = vadd.f32 %v967, %v968
    %v970 = vsel %vm685, %v863, 0.0
    %v971 = vadd.f32 %v969, %v970
    %v972 = vsel %vm685, %v864, 0.0
    %v973 = vadd.f32 %v971, %v972
    %v974 = vsel %vm685, %v865, 0.0
    %v975 = vadd.f32 %v973, %v974
    %v976 = vsel %vm685, %v866, 0.0
    %v977 = vadd.f32 %v975, %v976
    %v978 = vsel %vm685, %v867, 0.0
    %v979 = vadd.f32 %v977, %v978
    %v980 = vsel %vm685, %v868, 0.0
    %v981 = vadd.f32 %v979, %v980
    %v982 = vsel %vm685, %v869, 0.0
    %v983 = vadd.f32 %v981, %v982
    %v984 = vsel %vm685, %v870, 0.0
    %v985 = vadd.f32 %v983, %v984
    %v986 = vsel %vm685, %v871, 0.0
    %v987 = vadd.f32 %v985, %v986
    %v988 = vsel %vm685, %v872, 0.0
    %v989 = vadd.f32 %v987, %v988
    %v990 = vsel %vm685, %v873, 0.0
    %v991 = vadd.f32 %v989, %v990
    %v992 = vsel %vm685, %v874, 0.0
    %v993 = vadd.f32 %v991, %v992
    %v994 = vsel %vm685, %v875, 0.0
    %v995 = vadd.f32 %v993, %v994
    %v996 = vsel %vm685, %v876, 0.0
    %v997 = vadd.f32 %v995, %v996
    %v998 = vsel %vm685, %v877, 0.0
    %v999 = vadd.f32 %v997, %v998
    %v1000 = vsel %vm685, %v878, 0.0
    %v1001 = vadd.f32 %v999, %v1000
    %v1002 = vsel %vm685, %v879, 0.0
    %v1003 = vadd.f32 %v1001, %v1002
    %v1004 = vsel %vm685, %v880, 0.0
    %v1005 = vadd.f32 %v1003, %v1004
    %v1006 = vsel %vm685, %v881, 0.0
    %v1007 = vadd.f32 %v1005, %v1006
    %v1008 = vsel %vm685, %v882, 0.0
    %v1009 = vadd.f32 %v1007, %v1008
    %v1010 = vrot.slane %v1009, 4
    %v1011 = vadd.f32 %v1009, %v1010
    %v1012 = vrot.slane %v1011, 2
    %v1013 = vadd.f32 %v1011, %v1012
    %v1014 = vrot.slane %v1013, 1
    %v1015 = vadd.f32 %v1013, %v1014
    %v1016 = vmul.f32 %v818, 0.001953125
    %v1017 = vmul.f32 %v1015, 0.001953125
    %v1018 = vmul.f32 %v1016, %v1016
    %v1019 = vsub.f32 %v1017, %v1018
    %v1020 = vadd.f32 %v1019, 1e-05
    %v1021 = vrsqrt.pop %v1020
    %v1022 = vmul.f32 %v683, %v1021
    %v1023 = vmul.f32 %v1016, %v1022
    %v1024 = vsub.f32 %v684, %v1023
    %v1026 = vlaneseq
    %v1027 = vshrl.u32 %v1026, 7
    %v1028 = vsub.s32 0, %v1027
    %v1029 = vrot.slane %v1022, %v1028
    %v1031 = vmul.f32 %v429, %v1029
    %v1032 = vmul.f32 %v432, %v1029
    %v1033 = vmul.f32 %v437, %v1029
    %v1034 = vmul.f32 %v440, %v1029
    %v1035 = vmul.f32 %v445, %v1029
    %v1036 = vmul.f32 %v448, %v1029
    %v1037 = vmul.f32 %v453, %v1029
    %v1038 = vmul.f32 %v456, %v1029
    %v1039 = vmul.f32 %v461, %v1029
    %v1040 = vmul.f32 %v464, %v1029
    %v1041 = vmul.f32 %v469, %v1029
    %v1042 = vmul.f32 %v472, %v1029
    %v1043 = vmul.f32 %v477, %v1029
    %v1044 = vmul.f32 %v480, %v1029
    %v1045 = vmul.f32 %v485, %v1029
    %v1046 = vmul.f32 %v488, %v1029
    %v1047 = vmul.f32 %v493, %v1029
    %v1048 = vmul.f32 %v496, %v1029
    %v1049 = vmul.f32 %v501, %v1029
    %v1050 = vmul.f32 %v504, %v1029
    %v1051 = vmul.f32 %v509, %v1029
    %v1052 = vmul.f32 %v512, %v1029
    %v1053 = vmul.f32 %v517, %v1029
    %v1054 = vmul.f32 %v520, %v1029
    %v1055 = vmul.f32 %v525, %v1029
    %v1056 = vmul.f32 %v528, %v1029
    %v1057 = vmul.f32 %v533, %v1029
    %v1058 = vmul.f32 %v536, %v1029
    %v1059 = vmul.f32 %v541, %v1029
    %v1060 = vmul.f32 %v544, %v1029
    %v1061 = vmul.f32 %v549, %v1029
    %v1062 = vmul.f32 %v552, %v1029
    %v1063 = vmul.f32 %v557, %v1029
    %v1064 = vmul.f32 %v560, %v1029
    %v1065 = vmul.f32 %v565, %v1029
    %v1066 = vmul.f32 %v568, %v1029
    %v1067 = vmul.f32 %v573, %v1029
    %v1068 = vmul.f32 %v576, %v1029
    %v1069 = vmul.f32 %v581, %v1029
    %v1070 = vmul.f32 %v584, %v1029
    %v1071 = vmul.f32 %v589, %v1029
    %v1072 = vmul.f32 %v592, %v1029
    %v1073 = vmul.f32 %v597, %v1029
    %v1074 = vmul.f32 %v600, %v1029
    %v1075 = vmul.f32 %v605, %v1029
    %v1076 = vmul.f32 %v608, %v1029
    %v1077 = vmul.f32 %v613, %v1029
    %v1078 = vmul.f32 %v616, %v1029
    %v1079 = vmul.f32 %v621, %v1029
    %v1080 = vmul.f32 %v624, %v1029
    %v1081 = vmul.f32 %v629, %v1029
    %v1082 = vmul.f32 %v632, %v1029
    %v1083 = vmul.f32 %v637, %v1029
    %v1084 = vmul.f32 %v640, %v1029
    %v1085 = vmul.f32 %v645, %v1029
    %v1086 = vmul.f32 %v648, %v1029
    %v1087 = vmul.f32 %v653, %v1029
    %v1088 = vmul.f32 %v656, %v1029
    %v1089 = vmul.f32 %v661, %v1029
    %v1090 = vmul.f32 %v664, %v1029
    %v1091 = vmul.f32 %v669, %v1029
    %v1092 = vmul.f32 %v672, %v1029
    %v1093 = vmul.f32 %v677, %v1029
    %v1094 = vmul.f32 %v680, %v1029
    %v1096 = vlaneseq
    %v1097 = vshrl.u32 %v1096, 7
    %v1098 = vsub.s32 0, %v1097
    %v1099 = vrot.slane %v1024, %v1098
    %v1101 = vadd.f32 %v1031, %v1099
    %v1102 = vadd.f32 %v1032, %v1099
    %v1103 = vadd.f32 %v1033, %v1099
    %v1104 = vadd.f32 %v1034, %v1099
    %v1105 = vadd.f32 %v1035, %v1099
    %v1106 = vadd.f32 %v1036, %v1099
    %v1107 = vadd.f32 %v1037, %v1099
    %v1108 = vadd.f32 %v1038, %v1099
    %v1109 = vadd.f32 %v1039, %v1099
    %v1110 = vadd.f32 %v1040, %v1099
    %v1111 = vadd.f32 %v1041, %v1099
    %v1112 = vadd.f32 %v1042, %v1099
    %v1113 = vadd.f32 %v1043, %v1099
    %v1114 = vadd.f32 %v1044, %v1099
    %v1115 = vadd.f32 %v1045, %v1099
    %v1116 = vadd.f32 %v1046, %v1099
    %v1117 = vadd.f32 %v1047, %v1099
    %v1118 = vadd.f32 %v1048, %v1099
    %v1119 = vadd.f32 %v1049, %v1099
    %v1120 = vadd.f32 %v1050, %v1099
    %v1121 = vadd.f32 %v1051, %v1099
    %v1122 = vadd.f32 %v1052, %v1099
    %v1123 = vadd.f32 %v1053, %v1099
    %v1124 = vadd.f32 %v1054, %v1099
    %v1125 = vadd.f32 %v1055, %v1099
    %v1126 = vadd.f32 %v1056, %v1099
    %v1127 = vadd.f32 %v1057, %v1099
    %v1128 = vadd.f32 %v1058, %v1099
    %v1129 = vadd.f32 %v1059, %v1099
    %v1130 = vadd.f32 %v1060, %v1099
    %v1131 = vadd.f32 %v1061, %v1099
    %v1132 = vadd.f32 %v1062, %v1099
    %v1133 = vadd.f32 %v1063, %v1099
    %v1134 = vadd.f32 %v1064, %v1099
    %v1135 = vadd.f32 %v1065, %v1099
    %v1136 = vadd.f32 %v1066, %v1099
    %v1137 = vadd.f32 %v1067, %v1099
    %v1138 = vadd.f32 %v1068, %v1099
    %v1139 = vadd.f32 %v1069, %v1099
    %v1140 = vadd.f32 %v1070, %v1099
    %v1141 = vadd.f32 %v1071, %v1099
    %v1142 = vadd.f32 %v1072, %v1099
    %v1143 = vadd.f32 %v1073, %v1099
    %v1144 = vadd.f32 %v1074, %v1099
    %v1145 = vadd.f32 %v1075, %v1099
    %v1146 = vadd.f32 %v1076, %v1099
    %v1147 = vadd.f32 %v1077, %v1099
    %v1148 = vadd.f32 %v1078, %v1099
    %v1149 = vadd.f32 %v1079, %v1099
    %v1150 = vadd.f32 %v1080, %v1099
    %v1151 = vadd.f32 %v1081, %v1099
    %v1152 = vadd.f32 %v1082, %v1099
    %v1153 = vadd.f32 %v1083, %v1099
    %v1154 = vadd.f32 %v1084, %v1099
    %v1155 = vadd.f32 %v1085, %v1099
    %v1156 = vadd.f32 %v1086, %v1099
    %v1157 = vadd.f32 %v1087, %v1099
    %v1158 = vadd.f32 %v1088, %v1099
    %v1159 = vadd.f32 %v1089, %v1099
    %v1160 = vadd.f32 %v1090, %v1099
    %v1161 = vadd.f32 %v1091, %v1099
    %v1162 = vadd.f32 %v1092, %v1099
    %v1163 = vadd.f32 %v1093, %v1099
    %v1164 = vadd.f32 %v1094, %v1099
    %v1165 = vmax.f32 %v1101, 0.0
    %v1166 = vmax.f32 %v1102, 0.0
    %v1167 = vmax.f32 %v1103, 0.0
    %v1168 = vmax.f32 %v1104, 0.0
    %v1169 = vmax.f32 %v1105, 0.0
    %v1170 = vmax.f32 %v1106, 0.0
    %v1171 = vmax.f32 %v1107, 0.0
    %v1172 = vmax.f32 %v1108, 0.0
    %v1173 = vmax.f32 %v1109, 0.0
    %v1174 = vmax.f32 %v1110, 0.0
    %v1175 = vmax.f32 %v1111, 0.0
    %v1176 = vmax.f32 %v1112, 0.0
    %v1177 = vmax.f32 %v1113, 0.0
    %v1178 = vmax.f32 %v1114, 0.0
    %v1179 = vmax.f32 %v1115, 0.0
    %v1180 = vmax.f32 %v1116, 0.0
    %v1181 = vmax.f32 %v1117, 0.0
    %v1182 = vmax.f32 %v1118, 0.0
    %v1183 = vmax.f32 %v1119, 0.0
    %v1184 = vmax.f32 %v1120, 0.0
    %v1185 = vmax.f32 %v1121, 0.0
    %v1186 = vmax.f32 %v1122, 0.0
    %v1187 = vmax.f32 %v1123, 0.0
    %v1188 = vmax.f32 %v1124, 0.0
    %v1189 = vmax.f32 %v1125, 0.0
    %v1190 = vmax.f32 %v1126, 0.0
    %v1191 = vmax.f32 %v1127, 0.0
    %v1192 = vmax.f32 %v1128, 0.0
    %v1193 = vmax.f32 %v1129, 0.0
    %v1194 = vmax.f32 %v1130, 0.0
    %v1195 = vmax.f32 %v1131, 0.0
    %v1196 = vmax.f32 %v1132, 0.0
    %v1197 = vmax.f32 %v1133, 0.0
    %v1198 = vmax.f32 %v1134, 0.0
    %v1199 = vmax.f32 %v1135, 0.0
    %v1200 = vmax.f32 %v1136, 0.0
    %v1201 = vmax.f32 %v1137, 0.0
    %v1202 = vmax.f32 %v1138, 0.0
    %v1203 = vmax.f32 %v1139, 0.0
    %v1204 = vmax.f32 %v1140, 0.0
    %v1205 = vmax.f32 %v1141, 0.0
    %v1206 = vmax.f32 %v1142, 0.0
    %v1207 = vmax.f32 %v1143, 0.0
    %v1208 = vmax.f32 %v1144, 0.0
    %v1209 = vmax.f32 %v1145, 0.0
    %v1210 = vmax.f32 %v1146, 0.0
    %v1211 = vmax.f32 %v1147, 0.0
    %v1212 = vmax.f32 %v1148, 0.0
    %v1213 = vmax.f32 %v1149, 0.0
    %v1214 = vmax.f32 %v1150, 0.0
    %v1215 = vmax.f32 %v1151, 0.0
    %v1216 = vmax.f32 %v1152, 0.0
    %v1217 = vmax.f32 %v1153, 0.0
    %v1218 = vmax.f32 %v1154, 0.0
    %v1219 = vmax.f32 %v1155, 0.0
    %v1220 = vmax.f32 %v1156, 0.0
    %v1221 = vmax.f32 %v1157, 0.0
    %v1222 = vmax.f32 %v1158, 0.0
    %v1223 = vmax.f32 %v1159, 0.0
    %v1224 = vmax.f32 %v1160, 0.0
    %v1225 = vmax.f32 %v1161, 0.0
    %v1226 = vmax.f32 %v1162, 0.0
    %v1227 = vmax.f32 %v1163, 0.0
    %v1228 = vmax.f32 %v1164, 0.0
    %v1229 = vpack.c.bf16 %v1166, %v1165
    %v1230 = vpack.c.bf16 %v1168, %v1167
    %v1231 = vpack.c.bf16 %v1170, %v1169
    %v1232 = vpack.c.bf16 %v1172, %v1171
    %v1233 = vpack.c.bf16 %v1174, %v1173
    %v1234 = vpack.c.bf16 %v1176, %v1175
    %v1235 = vpack.c.bf16 %v1178, %v1177
    %v1236 = vpack.c.bf16 %v1180, %v1179
    %v1237 = vpack.c.bf16 %v1182, %v1181
    %v1238 = vpack.c.bf16 %v1184, %v1183
    %v1239 = vpack.c.bf16 %v1186, %v1185
    %v1240 = vpack.c.bf16 %v1188, %v1187
    %v1241 = vpack.c.bf16 %v1190, %v1189
    %v1242 = vpack.c.bf16 %v1192, %v1191
    %v1243 = vpack.c.bf16 %v1194, %v1193
    %v1244 = vpack.c.bf16 %v1196, %v1195
    %v1245 = vpack.c.bf16 %v1198, %v1197
    %v1246 = vpack.c.bf16 %v1200, %v1199
    %v1247 = vpack.c.bf16 %v1202, %v1201
    %v1248 = vpack.c.bf16 %v1204, %v1203
    %v1249 = vpack.c.bf16 %v1206, %v1205
    %v1250 = vpack.c.bf16 %v1208, %v1207
    %v1251 = vpack.c.bf16 %v1210, %v1209
    %v1252 = vpack.c.bf16 %v1212, %v1211
    %v1253 = vpack.c.bf16 %v1214, %v1213
    %v1254 = vpack.c.bf16 %v1216, %v1215
    %v1255 = vpack.c.bf16 %v1218, %v1217
    %v1256 = vpack.c.bf16 %v1220, %v1219
    %v1257 = vpack.c.bf16 %v1222, %v1221
    %v1258 = vpack.c.bf16 %v1224, %v1223
    %v1259 = vpack.c.bf16 %v1226, %v1225
    %v1260 = vpack.c.bf16 %v1228, %v1227
    %v1261 = vld [vmem:[%s6] sm:$0x1]
    %v1262 = vld [vmem:[%s7] sm:$0x1]
    %v1263 = vld [vmem:[%s4] sm:$0xff]
    %v1264 = vld [vmem:[%s4 + $0x8] sm:$0xff]
    %v1265 = vld [vmem:[%s4 + $0x10] sm:$0xff]
    %v1266 = vld [vmem:[%s4 + $0x18] sm:$0xff]
    %v1267 = vld [vmem:[%s4 + $0x20] sm:$0xff]
    %v1268 = vld [vmem:[%s4 + $0x28] sm:$0xff]
    %v1269 = vld [vmem:[%s4 + $0x30] sm:$0xff]
    %v1270 = vld [vmem:[%s4 + $0x38] sm:$0xff]
    %v1271 = vld [vmem:[%s4 + $0x40] sm:$0xff]
    %v1272 = vld [vmem:[%s4 + $0x48] sm:$0xff]
    %v1273 = vld [vmem:[%s4 + $0x50] sm:$0xff]
    %v1274 = vld [vmem:[%s4 + $0x58] sm:$0xff]
    %v1275 = vld [vmem:[%s4 + $0x60] sm:$0xff]
    %v1276 = vld [vmem:[%s4 + $0x68] sm:$0xff]
    %v1277 = vld [vmem:[%s4 + $0x70] sm:$0xff]
    %v1278 = vld [vmem:[%s4 + $0x78] sm:$0xff]
    %v1279 = vld [vmem:[%s4 + $0x80] sm:$0xff]
    %v1280 = vld [vmem:[%s4 + $0x88] sm:$0xff]
    %v1281 = vld [vmem:[%s4 + $0x90] sm:$0xff]
    %v1282 = vld [vmem:[%s4 + $0x98] sm:$0xff]
    %v1283 = vld [vmem:[%s4 + $0xa0] sm:$0xff]
    %v1284 = vld [vmem:[%s4 + $0xa8] sm:$0xff]
    %v1285 = vld [vmem:[%s4 + $0xb0] sm:$0xff]
    %v1286 = vld [vmem:[%s4 + $0xb8] sm:$0xff]
    %v1287 = vld [vmem:[%s4 + $0xc0] sm:$0xff]
    %v1288 = vld [vmem:[%s4 + $0xc8] sm:$0xff]
    %v1289 = vld [vmem:[%s4 + $0xd0] sm:$0xff]
    %v1290 = vld [vmem:[%s4 + $0xd8] sm:$0xff]
    %v1291 = vld [vmem:[%s4 + $0xe0] sm:$0xff]
    %v1292 = vld [vmem:[%s4 + $0xe8] sm:$0xff]
    %v1293 = vld [vmem:[%s4 + $0xf0] sm:$0xff]
    %v1294 = vld [vmem:[%s4 + $0xf8] sm:$0xff]
    %v1327 = vunpack.c.l.b16 %v1263
    %v1328 = vunpack.c.h.b16 %v1263
    %v1329 = vunpack.c.l.b16 %v1264
    %v1330 = vunpack.c.h.b16 %v1264
    %v1331 = vunpack.c.l.b16 %v1265
    %v1332 = vunpack.c.h.b16 %v1265
    %v1333 = vunpack.c.l.b16 %v1266
    %v1334 = vunpack.c.h.b16 %v1266
    %v1335 = vunpack.c.l.b16 %v1267
    %v1336 = vunpack.c.h.b16 %v1267
    %v1337 = vunpack.c.l.b16 %v1268
    %v1338 = vunpack.c.h.b16 %v1268
    %v1339 = vunpack.c.l.b16 %v1269
    %v1340 = vunpack.c.h.b16 %v1269
    %v1341 = vunpack.c.l.b16 %v1270
    %v1342 = vunpack.c.h.b16 %v1270
    %v1343 = vunpack.c.l.b16 %v1271
    %v1344 = vunpack.c.h.b16 %v1271
    %v1345 = vunpack.c.l.b16 %v1272
    %v1346 = vunpack.c.h.b16 %v1272
    %v1347 = vunpack.c.l.b16 %v1273
    %v1348 = vunpack.c.h.b16 %v1273
    %v1349 = vunpack.c.l.b16 %v1274
    %v1350 = vunpack.c.h.b16 %v1274
    %v1351 = vunpack.c.l.b16 %v1275
    %v1352 = vunpack.c.h.b16 %v1275
    %v1353 = vunpack.c.l.b16 %v1276
    %v1354 = vunpack.c.h.b16 %v1276
    %v1355 = vunpack.c.l.b16 %v1277
    %v1356 = vunpack.c.h.b16 %v1277
    %v1357 = vunpack.c.l.b16 %v1278
    %v1358 = vunpack.c.h.b16 %v1278
    %v1359 = vunpack.c.l.b16 %v1279
    %v1360 = vunpack.c.h.b16 %v1279
    %v1361 = vunpack.c.l.b16 %v1280
    %v1362 = vunpack.c.h.b16 %v1280
    %v1363 = vunpack.c.l.b16 %v1281
    %v1364 = vunpack.c.h.b16 %v1281
    %v1365 = vunpack.c.l.b16 %v1282
    %v1366 = vunpack.c.h.b16 %v1282
    %v1367 = vunpack.c.l.b16 %v1283
    %v1368 = vunpack.c.h.b16 %v1283
    %v1369 = vunpack.c.l.b16 %v1284
    %v1370 = vunpack.c.h.b16 %v1284
    %v1371 = vunpack.c.l.b16 %v1285
    %v1372 = vunpack.c.h.b16 %v1285
    %v1373 = vunpack.c.l.b16 %v1286
    %v1374 = vunpack.c.h.b16 %v1286
    %v1375 = vunpack.c.l.b16 %v1287
    %v1376 = vunpack.c.h.b16 %v1287
    %v1377 = vunpack.c.l.b16 %v1288
    %v1378 = vunpack.c.h.b16 %v1288
    %v1379 = vunpack.c.l.b16 %v1289
    %v1380 = vunpack.c.h.b16 %v1289
    %v1381 = vunpack.c.l.b16 %v1290
    %v1382 = vunpack.c.h.b16 %v1290
    %v1383 = vunpack.c.l.b16 %v1291
    %v1384 = vunpack.c.h.b16 %v1291
    %v1385 = vunpack.c.l.b16 %v1292
    %v1386 = vunpack.c.h.b16 %v1292
    %v1387 = vunpack.c.l.b16 %v1293
    %v1388 = vunpack.c.h.b16 %v1293
    %v1389 = vunpack.c.l.b16 %v1294
    %v1390 = vunpack.c.h.b16 %v1294
    %v1391 = vpack.c.b16 %v1331, %v1327
    %v1392 = vpack.c.b16 %v1332, %v1328
    %v1393 = vpack.c.b16 %v1333, %v1329
    %v1394 = vpack.c.b16 %v1334, %v1330
    %v1395 = vpack.c.b16 %v1339, %v1335
    %v1396 = vpack.c.b16 %v1340, %v1336
    %v1397 = vpack.c.b16 %v1341, %v1337
    %v1398 = vpack.c.b16 %v1342, %v1338
    %v1399 = vpack.c.b16 %v1347, %v1343
    %v1400 = vpack.c.b16 %v1348, %v1344
    %v1401 = vpack.c.b16 %v1349, %v1345
    %v1402 = vpack.c.b16 %v1350, %v1346
    %v1403 = vpack.c.b16 %v1355, %v1351
    %v1404 = vpack.c.b16 %v1356, %v1352
    %v1405 = vpack.c.b16 %v1357, %v1353
    %v1406 = vpack.c.b16 %v1358, %v1354
    %v1407 = vpack.c.b16 %v1363, %v1359
    %v1408 = vpack.c.b16 %v1364, %v1360
    %v1409 = vpack.c.b16 %v1365, %v1361
    %v1410 = vpack.c.b16 %v1366, %v1362
    %v1411 = vpack.c.b16 %v1371, %v1367
    %v1412 = vpack.c.b16 %v1372, %v1368
    %v1413 = vpack.c.b16 %v1373, %v1369
    %v1414 = vpack.c.b16 %v1374, %v1370
    %v1415 = vpack.c.b16 %v1379, %v1375
    %v1416 = vpack.c.b16 %v1380, %v1376
    %v1417 = vpack.c.b16 %v1381, %v1377
    %v1418 = vpack.c.b16 %v1382, %v1378
    %v1419 = vpack.c.b16 %v1387, %v1383
    %v1420 = vpack.c.b16 %v1388, %v1384
    %v1421 = vpack.c.b16 %v1389, %v1385
    %v1422 = vpack.c.b16 %v1390, %v1386
    %1455 = vmatprep.subr.bf16.mxu0 0
    %1456 = vmatpush1.bf16.msra.mxu0 %v1229
    %1457 = vmatprep.subr.bf16.mxu0 0
    %1458 = vmatpush1.bf16.msra.mxu0 %v1230
    %1459 = vmatprep.subr.bf16.mxu0 0
    %1460 = vmatpush1.bf16.msra.mxu0 %v1231
    %1461 = vmatprep.subr.bf16.mxu0 0
    %1462 = vmatpush1.bf16.msra.mxu0 %v1232
    %1463 = vmatprep.subr.bf16.mxu0 0
    %1464 = vmatpush1.bf16.msra.mxu0 %v1233
    %1465 = vmatprep.subr.bf16.mxu0 0
    %1466 = vmatpush1.bf16.msra.mxu0 %v1234
    %1467 = vmatprep.subr.bf16.mxu0 0
    %1468 = vmatpush1.bf16.msra.mxu0 %v1235
    %1469 = vmatprep.subr.bf16.mxu0 0
    %1470 = vmatpush1.bf16.msra.mxu0 %v1236
    %1471 = vmatprep.subr.bf16.mxu0 0
    %1472 = vmatpush1.bf16.msra.mxu0 %v1237
    %1473 = vmatprep.subr.bf16.mxu0 0
    %1474 = vmatpush1.bf16.msra.mxu0 %v1238
    %1475 = vmatprep.subr.bf16.mxu0 0
    %1476 = vmatpush1.bf16.msra.mxu0 %v1239
    %1477 = vmatprep.subr.bf16.mxu0 0
    %1478 = vmatpush1.bf16.msra.mxu0 %v1240
    %1479 = vmatprep.subr.bf16.mxu0 0
    %1480 = vmatpush1.bf16.msra.mxu0 %v1241
    %1481 = vmatprep.subr.bf16.mxu0 0
    %1482 = vmatpush1.bf16.msra.mxu0 %v1242
    %1483 = vmatprep.subr.bf16.mxu0 0
    %1484 = vmatpush1.bf16.msra.mxu0 %v1243
    %1485 = vmatprep.subr.bf16.mxu0 0
    %1486 = vmatpush1.bf16.msra.mxu0 %v1244
    %1487 = vmatprep.mubr.bf16.mxu0 %v1392
    %1488 = vmatmul.mubr.bf16.gmra.mrb[0].mxu0 %v1391
    %v1489 = vpop.f32.mrb[0].mxu0
    %v1490 = vadd.f32 0.0, %v1489
    %v1491 = vpop.f32.mrb[0].mxu0
    %v1492 = vpop.f32.mrb[0].mxu0
    %v1493 = vadd.f32 0.0, %v1492
    %v1494 = vpop.f32.mrb[0].mxu0
    %1495 = vmatprep.mubr.bf16.mxu0 %v1396
    %1496 = vmatmul.mubr.bf16.gmra.mrb[0].mxu0 %v1395
    %v1497 = vpop.f32.mrb[0].mxu0
    %v1498 = vadd.f32 0.0, %v1497
    %v1499 = vpop.f32.mrb[0].mxu0
    %v1500 = vpop.f32.mrb[0].mxu0
    %v1501 = vadd.f32 0.0, %v1500
    %v1502 = vpop.f32.mrb[0].mxu0
    %1503 = vmatprep.mubr.bf16.mxu0 %v1400
    %1504 = vmatmul.mubr.bf16.gmra.mrb[0].mxu0 %v1399
    %v1505 = vpop.f32.mrb[0].mxu0
    %v1506 = vadd.f32 0.0, %v1505
    %v1507 = vpop.f32.mrb[0].mxu0
    %v1508 = vpop.f32.mrb[0].mxu0
    %v1509 = vadd.f32 0.0, %v1508
    %v1510 = vpop.f32.mrb[0].mxu0
    %1511 = vmatprep.mubr.bf16.mxu0 %v1404
    %1512 = vmatmul.mubr.bf16.gmra.mrb[0].mxu0 %v1403
    %v1513 = vpop.f32.mrb[0].mxu0
    %v1514 = vadd.f32 0.0, %v1513
    %v1515 = vpop.f32.mrb[0].mxu0
    %v1516 = vpop.f32.mrb[0].mxu0
    %v1517 = vadd.f32 0.0, %v1516
    %v1518 = vpop.f32.mrb[0].mxu0
    %1519 = vmatprep.mubr.bf16.mxu0 %v1408
    %1520 = vmatmul.mubr.bf16.gmra.mrb[0].mxu0 %v1407
    %v1521 = vpop.f32.mrb[0].mxu0
    %v1522 = vadd.f32 0.0, %v1521
    %v1523 = vpop.f32.mrb[0].mxu0
    %v1524 = vpop.f32.mrb[0].mxu0
    %v1525 = vadd.f32 0.0, %v1524
    %v1526 = vpop.f32.mrb[0].mxu0
    %1527 = vmatprep.mubr.bf16.mxu0 %v1412
    %1528 = vmatmul.mubr.bf16.gmra.mrb[0].mxu0 %v1411
    %v1529 = vpop.f32.mrb[0].mxu0
    %v1530 = vadd.f32 0.0, %v1529
    %v1531 = vpop.f32.mrb[0].mxu0
    %v1532 = vpop.f32.mrb[0].mxu0
    %v1533 = vadd.f32 0.0, %v1532
    %v1534 = vpop.f32.mrb[0].mxu0
    %1535 = vmatprep.mubr.bf16.mxu0 %v1416
    %1536 = vmatmul.mubr.bf16.gmra.mrb[0].mxu0 %v1415
    %v1537 = vpop.f32.mrb[0].mxu0
    %v1538 = vadd.f32 0.0, %v1537
    %v1539 = vpop.f32.mrb[0].mxu0
    %v1540 = vpop.f32.mrb[0].mxu0
    %v1541 = vadd.f32 0.0, %v1540
    %v1542 = vpop.f32.mrb[0].mxu0
    %1543 = vmatprep.mubr.bf16.mxu0 %v1420
    %1544 = vmatmul.mubr.bf16.gmra.mrb[0].mxu0 %v1419
    %v1545 = vpop.f32.mrb[0].mxu0
    %v1546 = vadd.f32 0.0, %v1545
    %v1547 = vpop.f32.mrb[0].mxu0
    %v1548 = vpop.f32.mrb[0].mxu0
    %v1549 = vadd.f32 0.0, %v1548
    %v1550 = vpop.f32.mrb[0].mxu0
    %1551 = vdwg.mxu0
    %1552 = vmatprep.subr.bf16.mxu0 0
    %1553 = vmatpush1.bf16.msra.mxu0 %v1245
    %1554 = vmatprep.subr.bf16.mxu0 0
    %1555 = vmatpush1.bf16.msra.mxu0 %v1246
    %1556 = vmatprep.subr.bf16.mxu0 0
    %1557 = vmatpush1.bf16.msra.mxu0 %v1247
    %1558 = vmatprep.subr.bf16.mxu0 0
    %1559 = vmatpush1.bf16.msra.mxu0 %v1248
    %1560 = vmatprep.subr.bf16.mxu0 0
    %1561 = vmatpush1.bf16.msra.mxu0 %v1249
    %1562 = vmatprep.subr.bf16.mxu0 0
    %1563 = vmatpush1.bf16.msra.mxu0 %v1250
    %1564 = vmatprep.subr.bf16.mxu0 0
    %1565 = vmatpush1.bf16.msra.mxu0 %v1251
    %1566 = vmatprep.subr.bf16.mxu0 0
    %1567 = vmatpush1.bf16.msra.mxu0 %v1252
    %1568 = vmatprep.subr.bf16.mxu0 0
    %1569 = vmatpush1.bf16.msra.mxu0 %v1253
    %1570 = vmatprep.subr.bf16.mxu0 0
    %1571 = vmatpush1.bf16.msra.mxu0 %v1254
    %1572 = vmatprep.subr.bf16.mxu0 0
    %1573 = vmatpush1.bf16.msra.mxu0 %v1255
    %1574 = vmatprep.subr.bf16.mxu0 0
    %1575 = vmatpush1.bf16.msra.mxu0 %v1256
    %1576 = vmatprep.subr.bf16.mxu0 0
    %1577 = vmatpush1.bf16.msra.mxu0 %v1257
    %1578 = vmatprep.subr.bf16.mxu0 0
    %1579 = vmatpush1.bf16.msra.mxu0 %v1258
    %1580 = vmatprep.subr.bf16.mxu0 0
    %1581 = vmatpush1.bf16.msra.mxu0 %v1259
    %1582 = vmatprep.subr.bf16.mxu0 0
    %1583 = vmatpush1.bf16.msra.mxu0 %v1260
    %1584 = vmatprep.mubr.bf16.mxu0 %v1394
    %1585 = vmatmul.mubr.bf16.gmra.mrb[0].mxu0 %v1393
    %v1586 = vpop.f32.mrb[0].mxu0
    %v1587 = vadd.f32 %v1490, %v1586
    %v1588 = vpop.f32.mrb[0].mxu0
    %v1589 = vpop.f32.mrb[0].mxu0
    %v1590 = vadd.f32 %v1493, %v1589
    %v1591 = vpop.f32.mrb[0].mxu0
    %1592 = vmatprep.mubr.bf16.mxu0 %v1398
    %1593 = vmatmul.mubr.bf16.gmra.mrb[0].mxu0 %v1397
    %v1594 = vpop.f32.mrb[0].mxu0
    %v1595 = vadd.f32 %v1498, %v1594
    %v1596 = vpop.f32.mrb[0].mxu0
    %v1597 = vpop.f32.mrb[0].mxu0
    %v1598 = vadd.f32 %v1501, %v1597
    %v1599 = vpop.f32.mrb[0].mxu0
    %1600 = vmatprep.mubr.bf16.mxu0 %v1402
    %1601 = vmatmul.mubr.bf16.gmra.mrb[0].mxu0 %v1401
    %v1602 = vpop.f32.mrb[0].mxu0
    %v1603 = vadd.f32 %v1506, %v1602
    %v1604 = vpop.f32.mrb[0].mxu0
    %v1605 = vpop.f32.mrb[0].mxu0
    %v1606 = vadd.f32 %v1509, %v1605
    %v1607 = vpop.f32.mrb[0].mxu0
    %1608 = vmatprep.mubr.bf16.mxu0 %v1406
    %1609 = vmatmul.mubr.bf16.gmra.mrb[0].mxu0 %v1405
    %v1610 = vpop.f32.mrb[0].mxu0
    %v1611 = vadd.f32 %v1514, %v1610
    %v1612 = vpop.f32.mrb[0].mxu0
    %v1613 = vpop.f32.mrb[0].mxu0
    %v1614 = vadd.f32 %v1517, %v1613
    %v1615 = vpop.f32.mrb[0].mxu0
    %1616 = vmatprep.mubr.bf16.mxu0 %v1410
    %1617 = vmatmul.mubr.bf16.gmra.mrb[0].mxu0 %v1409
    %v1618 = vpop.f32.mrb[0].mxu0
    %v1619 = vadd.f32 %v1522, %v1618
    %v1620 = vpop.f32.mrb[0].mxu0
    %v1621 = vpop.f32.mrb[0].mxu0
    %v1622 = vadd.f32 %v1525, %v1621
    %v1623 = vpop.f32.mrb[0].mxu0
    %1624 = vmatprep.mubr.bf16.mxu0 %v1414
    %1625 = vmatmul.mubr.bf16.gmra.mrb[0].mxu0 %v1413
    %v1626 = vpop.f32.mrb[0].mxu0
    %v1627 = vadd.f32 %v1530, %v1626
    %v1628 = vpop.f32.mrb[0].mxu0
    %v1629 = vpop.f32.mrb[0].mxu0
    %v1630 = vadd.f32 %v1533, %v1629
    %v1631 = vpop.f32.mrb[0].mxu0
    %1632 = vmatprep.mubr.bf16.mxu0 %v1418
    %1633 = vmatmul.mubr.bf16.gmra.mrb[0].mxu0 %v1417
    %v1634 = vpop.f32.mrb[0].mxu0
    %v1635 = vadd.f32 %v1538, %v1634
    %v1636 = vpop.f32.mrb[0].mxu0
    %v1637 = vpop.f32.mrb[0].mxu0
    %v1638 = vadd.f32 %v1541, %v1637
    %v1639 = vpop.f32.mrb[0].mxu0
    %1640 = vmatprep.mubr.bf16.mxu0 %v1422
    %1641 = vmatmul.mubr.bf16.gmra.mrb[0].mxu0 %v1421
    %v1642 = vpop.f32.mrb[0].mxu0
    %v1643 = vadd.f32 %v1546, %v1642
    %v1644 = vpop.f32.mrb[0].mxu0
    %v1645 = vpop.f32.mrb[0].mxu0
    %v1646 = vadd.f32 %v1549, %v1645
    %v1647 = vpop.f32.mrb[0].mxu0
    %1648 = vdwg.mxu0
    %v1649 = vpack.c.bf16 %v1590, %v1587
    %v1650 = vpack.c.bf16 %v1598, %v1595
    %v1651 = vpack.c.bf16 %v1606, %v1603
    %v1652 = vpack.c.bf16 %v1614, %v1611
    %v1653 = vpack.c.bf16 %v1622, %v1619
    %v1654 = vpack.c.bf16 %v1630, %v1627
    %v1655 = vpack.c.bf16 %v1638, %v1635
    %v1656 = vpack.c.bf16 %v1646, %v1643
    %v1657 = vld [vmem:[%s5] sm:$0xf]
    %v1658 = vld [vmem:[%s5 + $0x4] sm:$0xf]
    %v1659 = vld [vmem:[%s5 + $0x8] sm:$0xf]
    %v1660 = vld [vmem:[%s5 + $0xc] sm:$0xf]
    %v1661 = vld [vmem:[%s5 + $0x10] sm:$0xf]
    %v1662 = vld [vmem:[%s5 + $0x14] sm:$0xf]
    %v1663 = vld [vmem:[%s5 + $0x18] sm:$0xf]
    %v1664 = vld [vmem:[%s5 + $0x1c] sm:$0xf]
    %s1665 = scalar_lea.vmem %s4, 256
    %v1666 = vld [vmem:[%s1665] sm:$0xff]
    %v1667 = vld [vmem:[%s1665 + $0x8] sm:$0xff]
    %v1668 = vld [vmem:[%s1665 + $0x10] sm:$0xff]
    %v1669 = vld [vmem:[%s1665 + $0x18] sm:$0xff]
    %v1670 = vld [vmem:[%s1665 + $0x20] sm:$0xff]
    %v1671 = vld [vmem:[%s1665 + $0x28] sm:$0xff]
    %v1672 = vld [vmem:[%s1665 + $0x30] sm:$0xff]
    %v1673 = vld [vmem:[%s1665 + $0x38] sm:$0xff]
    %v1674 = vld [vmem:[%s1665 + $0x40] sm:$0xff]
    %v1675 = vld [vmem:[%s1665 + $0x48] sm:$0xff]
    %v1676 = vld [vmem:[%s1665 + $0x50] sm:$0xff]
    %v1677 = vld [vmem:[%s1665 + $0x58] sm:$0xff]
    %v1678 = vld [vmem:[%s1665 + $0x60] sm:$0xff]
    %v1679 = vld [vmem:[%s1665 + $0x68] sm:$0xff]
    %v1680 = vld [vmem:[%s1665 + $0x70] sm:$0xff]
    %v1681 = vld [vmem:[%s1665 + $0x78] sm:$0xff]
    %v1682 = vld [vmem:[%s1665 + $0x80] sm:$0xff]
    %v1683 = vld [vmem:[%s1665 + $0x88] sm:$0xff]
    %v1684 = vld [vmem:[%s1665 + $0x90] sm:$0xff]
    %v1685 = vld [vmem:[%s1665 + $0x98] sm:$0xff]
    %v1686 = vld [vmem:[%s1665 + $0xa0] sm:$0xff]
    %v1687 = vld [vmem:[%s1665 + $0xa8] sm:$0xff]
    %v1688 = vld [vmem:[%s1665 + $0xb0] sm:$0xff]
    %v1689 = vld [vmem:[%s1665 + $0xb8] sm:$0xff]
    %v1690 = vld [vmem:[%s1665 + $0xc0] sm:$0xff]
    %v1691 = vld [vmem:[%s1665 + $0xc8] sm:$0xff]
    %v1692 = vld [vmem:[%s1665 + $0xd0] sm:$0xff]
    %v1693 = vld [vmem:[%s1665 + $0xd8] sm:$0xff]
    %v1694 = vld [vmem:[%s1665 + $0xe0] sm:$0xff]
    %v1695 = vld [vmem:[%s1665 + $0xe8] sm:$0xff]
    %v1696 = vld [vmem:[%s1665 + $0xf0] sm:$0xff]
    %v1697 = vld [vmem:[%s1665 + $0xf8] sm:$0xff]
    %v1730 = vunpack.c.l.b16 %v1666
    %v1731 = vunpack.c.h.b16 %v1666
    %v1732 = vunpack.c.l.b16 %v1667
    %v1733 = vunpack.c.h.b16 %v1667
    %v1734 = vunpack.c.l.b16 %v1668
    %v1735 = vunpack.c.h.b16 %v1668
    %v1736 = vunpack.c.l.b16 %v1669
    %v1737 = vunpack.c.h.b16 %v1669
    %v1738 = vunpack.c.l.b16 %v1670
    %v1739 = vunpack.c.h.b16 %v1670
    %v1740 = vunpack.c.l.b16 %v1671
    %v1741 = vunpack.c.h.b16 %v1671
    %v1742 = vunpack.c.l.b16 %v1672
    %v1743 = vunpack.c.h.b16 %v1672
    %v1744 = vunpack.c.l.b16 %v1673
    %v1745 = vunpack.c.h.b16 %v1673
    %v1746 = vunpack.c.l.b16 %v1674
    %v1747 = vunpack.c.h.b16 %v1674
    %v1748 = vunpack.c.l.b16 %v1675
    %v1749 = vunpack.c.h.b16 %v1675
    %v1750 = vunpack.c.l.b16 %v1676
    %v1751 = vunpack.c.h.b16 %v1676
    %v1752 = vunpack.c.l.b16 %v1677
    %v1753 = vunpack.c.h.b16 %v1677
    %v1754 = vunpack.c.l.b16 %v1678
    %v1755 = vunpack.c.h.b16 %v1678
    %v1756 = vunpack.c.l.b16 %v1679
    %v1757 = vunpack.c.h.b16 %v1679
    %v1758 = vunpack.c.l.b16 %v1680
    %v1759 = vunpack.c.h.b16 %v1680
    %v1760 = vunpack.c.l.b16 %v1681
    %v1761 = vunpack.c.h.b16 %v1681
    %v1762 = vunpack.c.l.b16 %v1682
    %v1763 = vunpack.c.h.b16 %v1682
    %v1764 = vunpack.c.l.b16 %v1683
    %v1765 = vunpack.c.h.b16 %v1683
    %v1766 = vunpack.c.l.b16 %v1684
    %v1767 = vunpack.c.h.b16 %v1684
    %v1768 = vunpack.c.l.b16 %v1685
    %v1769 = vunpack.c.h.b16 %v1685
    %v1770 = vunpack.c.l.b16 %v1686
    %v1771 = vunpack.c.h.b16 %v1686
    %v1772 = vunpack.c.l.b16 %v1687
    %v1773 = vunpack.c.h.b16 %v1687
    %v1774 = vunpack.c.l.b16 %v1688
    %v1775 = vunpack.c.h.b16 %v1688
    %v1776 = vunpack.c.l.b16 %v1689
    %v1777 = vunpack.c.h.b16 %v1689
    %v1778 = vunpack.c.l.b16 %v1690
    %v1779 = vunpack.c.h.b16 %v1690
    %v1780 = vunpack.c.l.b16 %v1691
    %v1781 = vunpack.c.h.b16 %v1691
    %v1782 = vunpack.c.l.b16 %v1692
    %v1783 = vunpack.c.h.b16 %v1692
    %v1784 = vunpack.c.l.b16 %v1693
    %v1785 = vunpack.c.h.b16 %v1693
    %v1786 = vunpack.c.l.b16 %v1694
    %v1787 = vunpack.c.h.b16 %v1694
    %v1788 = vunpack.c.l.b16 %v1695
    %v1789 = vunpack.c.h.b16 %v1695
    %v1790 = vunpack.c.l.b16 %v1696
    %v1791 = vunpack.c.h.b16 %v1696
    %v1792 = vunpack.c.l.b16 %v1697
    %v1793 = vunpack.c.h.b16 %v1697
    %v1794 = vpack.c.b16 %v1734, %v1730
    %v1795 = vpack.c.b16 %v1735, %v1731
    %v1796 = vpack.c.b16 %v1736, %v1732
    %v1797 = vpack.c.b16 %v1737, %v1733
    %v1798 = vpack.c.b16 %v1742, %v1738
    %v1799 = vpack.c.b16 %v1743, %v1739
    %v1800 = vpack.c.b16 %v1744, %v1740
    %v1801 = vpack.c.b16 %v1745, %v1741
    %v1802 = vpack.c.b16 %v1750, %v1746
    %v1803 = vpack.c.b16 %v1751, %v1747
    %v1804 = vpack.c.b16 %v1752, %v1748
    %v1805 = vpack.c.b16 %v1753, %v1749
    %v1806 = vpack.c.b16 %v1758, %v1754
    %v1807 = vpack.c.b16 %v1759, %v1755
    %v1808 = vpack.c.b16 %v1760, %v1756
    %v1809 = vpack.c.b16 %v1761, %v1757
    %v1810 = vpack.c.b16 %v1766, %v1762
    %v1811 = vpack.c.b16 %v1767, %v1763
    %v1812 = vpack.c.b16 %v1768, %v1764
    %v1813 = vpack.c.b16 %v1769, %v1765
    %v1814 = vpack.c.b16 %v1774, %v1770
    %v1815 = vpack.c.b16 %v1775, %v1771
    %v1816 = vpack.c.b16 %v1776, %v1772
    %v1817 = vpack.c.b16 %v1777, %v1773
    %v1818 = vpack.c.b16 %v1782, %v1778
    %v1819 = vpack.c.b16 %v1783, %v1779
    %v1820 = vpack.c.b16 %v1784, %v1780
    %v1821 = vpack.c.b16 %v1785, %v1781
    %v1822 = vpack.c.b16 %v1790, %v1786
    %v1823 = vpack.c.b16 %v1791, %v1787
    %v1824 = vpack.c.b16 %v1792, %v1788
    %v1825 = vpack.c.b16 %v1793, %v1789
    %1858 = vmatprep.subr.bf16.mxu0 0
    %1859 = vmatpush1.bf16.msra.mxu0 %v1229
    %1860 = vmatprep.subr.bf16.mxu0 0
    %1861 = vmatpush1.bf16.msra.mxu0 %v1230
    %1862 = vmatprep.subr.bf16.mxu0 0
    %1863 = vmatpush1.bf16.msra.mxu0 %v1231
    %1864 = vmatprep.subr.bf16.mxu0 0
    %1865 = vmatpush1.bf16.msra.mxu0 %v1232
    %1866 = vmatprep.subr.bf16.mxu0 0
    %1867 = vmatpush1.bf16.msra.mxu0 %v1233
    %1868 = vmatprep.subr.bf16.mxu0 0
    %1869 = vmatpush1.bf16.msra.mxu0 %v1234
    %1870 = vmatprep.subr.bf16.mxu0 0
    %1871 = vmatpush1.bf16.msra.mxu0 %v1235
    %1872 = vmatprep.subr.bf16.mxu0 0
    %1873 = vmatpush1.bf16.msra.mxu0 %v1236
    %1874 = vmatprep.subr.bf16.mxu0 0
    %1875 = vmatpush1.bf16.msra.mxu0 %v1237
    %1876 = vmatprep.subr.bf16.mxu0 0
    %1877 = vmatpush1.bf16.msra.mxu0 %v1238
    %1878 = vmatprep.subr.bf16.mxu0 0
    %1879 = vmatpush1.bf16.msra.mxu0 %v1239
    %1880 = vmatprep.subr.bf16.mxu0 0
    %1881 = vmatpush1.bf16.msra.mxu0 %v1240
    %1882 = vmatprep.subr.bf16.mxu0 0
    %1883 = vmatpush1.bf16.msra.mxu0 %v1241
    %1884 = vmatprep.subr.bf16.mxu0 0
    %1885 = vmatpush1.bf16.msra.mxu0 %v1242
    %1886 = vmatprep.subr.bf16.mxu0 0
    %1887 = vmatpush1.bf16.msra.mxu0 %v1243
    %1888 = vmatprep.subr.bf16.mxu0 0
    %1889 = vmatpush1.bf16.msra.mxu0 %v1244
    %1890 = vmatprep.mubr.bf16.mxu0 %v1795
    %1891 = vmatmul.mubr.bf16.gmra.mrb[0].mxu0 %v1794
    %v1892 = vpop.f32.mrb[0].mxu0
    %v1893 = vadd.f32 0.0, %v1892
    %v1894 = vpop.f32.mrb[0].mxu0
    %v1895 = vpop.f32.mrb[0].mxu0
    %v1896 = vadd.f32 0.0, %v1895
    %v1897 = vpop.f32.mrb[0].mxu0
    %1898 = vmatprep.mubr.bf16.mxu0 %v1799
    %1899 = vmatmul.mubr.bf16.gmra.mrb[0].mxu0 %v1798
    %v1900 = vpop.f32.mrb[0].mxu0
    %v1901 = vadd.f32 0.0, %v1900
    %v1902 = vpop.f32.mrb[0].mxu0
    %v1903 = vpop.f32.mrb[0].mxu0
    %v1904 = vadd.f32 0.0, %v1903
    %v1905 = vpop.f32.mrb[0].mxu0
    %1906 = vmatprep.mubr.bf16.mxu0 %v1803
    %1907 = vmatmul.mubr.bf16.gmra.mrb[0].mxu0 %v1802
    %v1908 = vpop.f32.mrb[0].mxu0
    %v1909 = vadd.f32 0.0, %v1908
    %v1910 = vpop.f32.mrb[0].mxu0
    %v1911 = vpop.f32.mrb[0].mxu0
    %v1912 = vadd.f32 0.0, %v1911
    %v1913 = vpop.f32.mrb[0].mxu0
    %1914 = vmatprep.mubr.bf16.mxu0 %v1807
    %1915 = vmatmul.mubr.bf16.gmra.mrb[0].mxu0 %v1806
    %v1916 = vpop.f32.mrb[0].mxu0
    %v1917 = vadd.f32 0.0, %v1916
    %v1918 = vpop.f32.mrb[0].mxu0
    %v1919 = vpop.f32.mrb[0].mxu0
    %v1920 = vadd.f32 0.0, %v1919
    %v1921 = vpop.f32.mrb[0].mxu0
    %1922 = vmatprep.mubr.bf16.mxu0 %v1811
    %1923 = vmatmul.mubr.bf16.gmra.mrb[0].mxu0 %v1810
    %v1924 = vpop.f32.mrb[0].mxu0
    %v1925 = vadd.f32 0.0, %v1924
    %v1926 = vpop.f32.mrb[0].mxu0
    %v1927 = vpop.f32.mrb[0].mxu0
    %v1928 = vadd.f32 0.0, %v1927
    %v1929 = vpop.f32.mrb[0].mxu0
    %1930 = vmatprep.mubr.bf16.mxu0 %v1815
    %1931 = vmatmul.mubr.bf16.gmra.mrb[0].mxu0 %v1814
    %v1932 = vpop.f32.mrb[0].mxu0
    %v1933 = vadd.f32 0.0, %v1932
    %v1934 = vpop.f32.mrb[0].mxu0
    %v1935 = vpop.f32.mrb[0].mxu0
    %v1936 = vadd.f32 0.0, %v1935
    %v1937 = vpop.f32.mrb[0].mxu0
    %1938 = vmatprep.mubr.bf16.mxu0 %v1819
    %1939 = vmatmul.mubr.bf16.gmra.mrb[0].mxu0 %v1818
    %v1940 = vpop.f32.mrb[0].mxu0
    %v1941 = vadd.f32 0.0, %v1940
    %v1942 = vpop.f32.mrb[0].mxu0
    %v1943 = vpop.f32.mrb[0].mxu0
    %v1944 = vadd.f32 0.0, %v1943
    %v1945 = vpop.f32.mrb[0].mxu0
    %1946 = vmatprep.mubr.bf16.mxu0 %v1823
    %1947 = vmatmul.mubr.bf16.gmra.mrb[0].mxu0 %v1822
    %v1948 = vpop.f32.mrb[0].mxu0
    %v1949 = vadd.f32 0.0, %v1948
    %v1950 = vpop.f32.mrb[0].mxu0
    %v1951 = vpop.f32.mrb[0].mxu0
    %v1952 = vadd.f32 0.0, %v1951
    %v1953 = vpop.f32.mrb[0].mxu0
    %1954 = vdwg.mxu0
    %1955 = vmatprep.subr.bf16.mxu0 0
    %1956 = vmatpush1.bf16.msra.mxu0 %v1245
    %1957 = vmatprep.subr.bf16.mxu0 0
    %1958 = vmatpush1.bf16.msra.mxu0 %v1246
    %1959 = vmatprep.subr.bf16.mxu0 0
    %1960 = vmatpush1.bf16.msra.mxu0 %v1247
    %1961 = vmatprep.subr.bf16.mxu0 0
    %1962 = vmatpush1.bf16.msra.mxu0 %v1248
    %1963 = vmatprep.subr.bf16.mxu0 0
    %1964 = vmatpush1.bf16.msra.mxu0 %v1249
    %1965 = vmatprep.subr.bf16.mxu0 0
    %1966 = vmatpush1.bf16.msra.mxu0 %v1250
    %1967 = vmatprep.subr.bf16.mxu0 0
    %1968 = vmatpush1.bf16.msra.mxu0 %v1251
    %1969 = vmatprep.subr.bf16.mxu0 0
    %1970 = vmatpush1.bf16.msra.mxu0 %v1252
    %1971 = vmatprep.subr.bf16.mxu0 0
    %1972 = vmatpush1.bf16.msra.mxu0 %v1253
    %1973 = vmatprep.subr.bf16.mxu0 0
    %1974 = vmatpush1.bf16.msra.mxu0 %v1254
    %1975 = vmatprep.subr.bf16.mxu0 0
    %1976 = vmatpush1.bf16.msra.mxu0 %v1255
    %1977 = vmatprep.subr.bf16.mxu0 0
    %1978 = vmatpush1.bf16.msra.mxu0 %v1256
    %1979 = vmatprep.subr.bf16.mxu0 0
    %1980 = vmatpush1.bf16.msra.mxu0 %v1257
    %1981 = vmatprep.subr.bf16.mxu0 0
    %1982 = vmatpush1.bf16.msra.mxu0 %v1258
    %1983 = vmatprep.subr.bf16.mxu0 0
    %1984 = vmatpush1.bf16.msra.mxu0 %v1259
    %1985 = vmatprep.subr.bf16.mxu0 0
    %1986 = vmatpush1.bf16.msra.mxu0 %v1260
    %1987 = vmatprep.mubr.bf16.mxu0 %v1797
    %1988 = vmatmul.mubr.bf16.gmra.mrb[0].mxu0 %v1796
    %v1989 = vpop.f32.mrb[0].mxu0
    %v1990 = vadd.f32 %v1893, %v1989
    %v1991 = vpop.f32.mrb[0].mxu0
    %v1992 = vpop.f32.mrb[0].mxu0
    %v1993 = vadd.f32 %v1896, %v1992
    %v1994 = vpop.f32.mrb[0].mxu0
    %1995 = vmatprep.mubr.bf16.mxu0 %v1801
    %1996 = vmatmul.mubr.bf16.gmra.mrb[0].mxu0 %v1800
    %v1997 = vpop.f32.mrb[0].mxu0
    %v1998 = vadd.f32 %v1901, %v1997
    %v1999 = vpop.f32.mrb[0].mxu0
    %v2000 = vpop.f32.mrb[0].mxu0
    %v2001 = vadd.f32 %v1904, %v2000
    %v2002 = vpop.f32.mrb[0].mxu0
    %2003 = vmatprep.mubr.bf16.mxu0 %v1805
    %2004 = vmatmul.mubr.bf16.gmra.mrb[0].mxu0 %v1804
    %v2005 = vpop.f32.mrb[0].mxu0
    %v2006 = vadd.f32 %v1909, %v2005
    %v2007 = vpop.f32.mrb[0].mxu0
    %v2008 = vpop.f32.mrb[0].mxu0
    %v2009 = vadd.f32 %v1912, %v2008
    %v2010 = vpop.f32.mrb[0].mxu0
    %2011 = vmatprep.mubr.bf16.mxu0 %v1809
    %2012 = vmatmul.mubr.bf16.gmra.mrb[0].mxu0 %v1808
    %v2013 = vpop.f32.mrb[0].mxu0
    %v2014 = vadd.f32 %v1917, %v2013
    %v2015 = vpop.f32.mrb[0].mxu0
    %v2016 = vpop.f32.mrb[0].mxu0
    %v2017 = vadd.f32 %v1920, %v2016
    %v2018 = vpop.f32.mrb[0].mxu0
    %2019 = vmatprep.mubr.bf16.mxu0 %v1813
    %2020 = vmatmul.mubr.bf16.gmra.mrb[0].mxu0 %v1812
    %v2021 = vpop.f32.mrb[0].mxu0
    %v2022 = vadd.f32 %v1925, %v2021
    %v2023 = vpop.f32.mrb[0].mxu0
    %v2024 = vpop.f32.mrb[0].mxu0
    %v2025 = vadd.f32 %v1928, %v2024
    %v2026 = vpop.f32.mrb[0].mxu0
    %2027 = vmatprep.mubr.bf16.mxu0 %v1817
    %2028 = vmatmul.mubr.bf16.gmra.mrb[0].mxu0 %v1816
    %v2029 = vpop.f32.mrb[0].mxu0
    %v2030 = vadd.f32 %v1933, %v2029
    %v2031 = vpop.f32.mrb[0].mxu0
    %v2032 = vpop.f32.mrb[0].mxu0
    %v2033 = vadd.f32 %v1936, %v2032
    %v2034 = vpop.f32.mrb[0].mxu0
    %2035 = vmatprep.mubr.bf16.mxu0 %v1821
    %2036 = vmatmul.mubr.bf16.gmra.mrb[0].mxu0 %v1820
    %v2037 = vpop.f32.mrb[0].mxu0
    %v2038 = vadd.f32 %v1941, %v2037
    %v2039 = vpop.f32.mrb[0].mxu0
    %v2040 = vpop.f32.mrb[0].mxu0
    %v2041 = vadd.f32 %v1944, %v2040
    %v2042 = vpop.f32.mrb[0].mxu0
    %2043 = vmatprep.mubr.bf16.mxu0 %v1825
    %2044 = vmatmul.mubr.bf16.gmra.mrb[0].mxu0 %v1824
    %v2045 = vpop.f32.mrb[0].mxu0
    %v2046 = vadd.f32 %v1949, %v2045
    %v2047 = vpop.f32.mrb[0].mxu0
    %v2048 = vpop.f32.mrb[0].mxu0
    %v2049 = vadd.f32 %v1952, %v2048
    %v2050 = vpop.f32.mrb[0].mxu0
    %2051 = vdwg.mxu0
    %v2052 = vpack.c.bf16 %v1993, %v1990
    %v2053 = vpack.c.bf16 %v2001, %v1998
    %v2054 = vpack.c.bf16 %v2009, %v2006
    %v2055 = vpack.c.bf16 %v2017, %v2014
    %v2056 = vpack.c.bf16 %v2025, %v2022
    %v2057 = vpack.c.bf16 %v2033, %v2030
    %v2058 = vpack.c.bf16 %v2041, %v2038
    %v2059 = vpack.c.bf16 %v2049, %v2046
    %s2060 = scalar_lea.vmem %s5, 32
    %v2061 = vld [vmem:[%s2060] sm:$0xf]
    %v2062 = vld [vmem:[%s2060 + $0x4] sm:$0xf]
    %v2063 = vld [vmem:[%s2060 + $0x8] sm:$0xf]
    %v2064 = vld [vmem:[%s2060 + $0xc] sm:$0xf]
    %v2065 = vld [vmem:[%s2060 + $0x10] sm:$0xf]
    %v2066 = vld [vmem:[%s2060 + $0x14] sm:$0xf]
    %v2067 = vld [vmem:[%s2060 + $0x18] sm:$0xf]
    %v2068 = vld [vmem:[%s2060 + $0x1c] sm:$0xf]
    %v2077 = vunpack.c.l.b16 %v2061
    %v2078 = vunpack.c.l.b16 %v2062
    %v2079 = vunpack.c.l.b16 %v2063
    %v2080 = vunpack.c.l.b16 %v2064
    %v2081 = vunpack.c.l.b16 %v2065
    %v2082 = vunpack.c.l.b16 %v2066
    %v2083 = vunpack.c.l.b16 %v2067
    %v2084 = vunpack.c.l.b16 %v2068
    %v2085 = vpack.c.b16 %v2078, %v2077
    %v2086 = vpack.c.b16 %v2080, %v2079
    %v2087 = vpack.c.b16 %v2082, %v2081
    %v2088 = vpack.c.b16 %v2084, %v2083
    %v2094 = vsel %vm685, %v2052, 0
    %v2097 = vsel %vm685, %v2053, 0
    %v2100 = vsel %vm685, %v2054, 0
    %v2103 = vsel %vm685, %v2055, 0
    %v2106 = vsel %vm685, %v2056, 0
    %v2109 = vsel %vm685, %v2057, 0
    %v2112 = vsel %vm685, %v2058, 0
    %v2115 = vsel %vm685, %v2059, 0
    %2117 = vmatprep.subr.bf16.mxu0 0
    %2118 = vmatpush1.bf16.msra.mxu0 %v2085
    %2119 = vmatprep.subr.bf16.mxu0 0
    %2120 = vmatpush1.bf16.msra.mxu0 %v2086
    %2121 = vmatprep.subr.bf16.mxu0 0
    %2122 = vmatpush1.bf16.msra.mxu0 %v2087
    %2123 = vmatprep.subr.bf16.mxu0 0
    %2124 = vmatpush1.bf16.msra.mxu0 %v2088
    %2125 = vmatprep.subr.bf16.mxu0 0
    %2126 = vmatpush1.bf16.msra.mxu0 0
    %2127 = vmatprep.subr.bf16.mxu0 0
    %2128 = vmatpush1.bf16.msra.mxu0 0
    %2129 = vmatprep.subr.bf16.mxu0 0
    %2130 = vmatpush1.bf16.msra.mxu0 0
    %2131 = vmatprep.subr.bf16.mxu0 0
    %2132 = vmatpush1.bf16.msra.mxu0 0
    %2133 = vmatprep.subr.bf16.mxu0 0
    %2134 = vmatpush1.bf16.msra.mxu0 0
    %2135 = vmatprep.subr.bf16.mxu0 0
    %2136 = vmatpush1.bf16.msra.mxu0 0
    %2137 = vmatprep.subr.bf16.mxu0 0
    %2138 = vmatpush1.bf16.msra.mxu0 0
    %2139 = vmatprep.subr.bf16.mxu0 0
    %2140 = vmatpush1.bf16.msra.mxu0 0
    %2141 = vmatprep.subr.bf16.mxu0 0
    %2142 = vmatpush1.bf16.msra.mxu0 0
    %2143 = vmatprep.subr.bf16.mxu0 0
    %2144 = vmatpush1.bf16.msra.mxu0 0
    %2145 = vmatprep.subr.bf16.mxu0 0
    %2146 = vmatpush1.bf16.msra.mxu0 0
    %2147 = vmatprep.subr.bf16.mxu0 0
    %2148 = vmatpush1.bf16.msra.mxu0 0
    %2149 = vmatprep.mubr.bf16.mxu0 0
    %2150 = vmatmul.mubr.bf16.gmra.mrb[0].mxu0 %v2094
    %v2151 = vpop.f32.mrb[0].mxu0
    %v2152 = vadd.f32 0.0, %v2151
    %v2153 = vpop.f32.mrb[0].mxu0
    %v2154 = vpop.f32.mrb[0].mxu0
    %v2155 = vadd.f32 0.0, %v2154
    %v2156 = vpop.f32.mrb[0].mxu0
    %2157 = vmatprep.mubr.bf16.mxu0 0
    %2158 = vmatmul.mubr.bf16.gmra.mrb[0].mxu0 %v2097
    %v2159 = vpop.f32.mrb[0].mxu0
    %v2160 = vadd.f32 0.0, %v2159
    %v2161 = vpop.f32.mrb[0].mxu0
    %v2162 = vpop.f32.mrb[0].mxu0
    %v2163 = vadd.f32 0.0, %v2162
    %v2164 = vpop.f32.mrb[0].mxu0
    %2165 = vmatprep.mubr.bf16.mxu0 0
    %2166 = vmatmul.mubr.bf16.gmra.mrb[0].mxu0 %v2100
    %v2167 = vpop.f32.mrb[0].mxu0
    %v2168 = vadd.f32 0.0, %v2167
    %v2169 = vpop.f32.mrb[0].mxu0
    %v2170 = vpop.f32.mrb[0].mxu0
    %v2171 = vadd.f32 0.0, %v2170
    %v2172 = vpop.f32.mrb[0].mxu0
    %2173 = vmatprep.mubr.bf16.mxu0 0
    %2174 = vmatmul.mubr.bf16.gmra.mrb[0].mxu0 %v2103
    %v2175 = vpop.f32.mrb[0].mxu0
    %v2176 = vadd.f32 0.0, %v2175
    %v2177 = vpop.f32.mrb[0].mxu0
    %v2178 = vpop.f32.mrb[0].mxu0
    %v2179 = vadd.f32 0.0, %v2178
    %v2180 = vpop.f32.mrb[0].mxu0
    %2181 = vmatprep.mubr.bf16.mxu0 0
    %2182 = vmatmul.mubr.bf16.gmra.mrb[0].mxu0 %v2106
    %v2183 = vpop.f32.mrb[0].mxu0
    %v2184 = vadd.f32 0.0, %v2183
    %v2185 = vpop.f32.mrb[0].mxu0
    %v2186 = vpop.f32.mrb[0].mxu0
    %v2187 = vadd.f32 0.0, %v2186
    %v2188 = vpop.f32.mrb[0].mxu0
    %2189 = vmatprep.mubr.bf16.mxu0 0
    %2190 = vmatmul.mubr.bf16.gmra.mrb[0].mxu0 %v2109
    %v2191 = vpop.f32.mrb[0].mxu0
    %v2192 = vadd.f32 0.0, %v2191
    %v2193 = vpop.f32.mrb[0].mxu0
    %v2194 = vpop.f32.mrb[0].mxu0
    %v2195 = vadd.f32 0.0, %v2194
    %v2196 = vpop.f32.mrb[0].mxu0
    %2197 = vmatprep.mubr.bf16.mxu0 0
    %2198 = vmatmul.mubr.bf16.gmra.mrb[0].mxu0 %v2112
    %v2199 = vpop.f32.mrb[0].mxu0
    %v2200 = vadd.f32 0.0, %v2199
    %v2201 = vpop.f32.mrb[0].mxu0
    %v2202 = vpop.f32.mrb[0].mxu0
    %v2203 = vadd.f32 0.0, %v2202
    %v2204 = vpop.f32.mrb[0].mxu0
    %2205 = vmatprep.mubr.bf16.mxu0 0
    %2206 = vmatmul.mubr.bf16.gmra.mrb[0].mxu0 %v2115
    %v2207 = vpop.f32.mrb[0].mxu0
    %v2208 = vadd.f32 0.0, %v2207
    %v2209 = vpop.f32.mrb[0].mxu0
    %v2210 = vpop.f32.mrb[0].mxu0
    %v2211 = vadd.f32 0.0, %v2210
    %v2212 = vpop.f32.mrb[0].mxu0
    %2213 = vdwg.mxu0
    %v2222 = vunpack.c.l.b16 %v1657
    %v2223 = vunpack.c.l.b16 %v1658
    %v2224 = vunpack.c.l.b16 %v1659
    %v2225 = vunpack.c.l.b16 %v1660
    %v2226 = vunpack.c.l.b16 %v1661
    %v2227 = vunpack.c.l.b16 %v1662
    %v2228 = vunpack.c.l.b16 %v1663
    %v2229 = vunpack.c.l.b16 %v1664
    %v2230 = vpack.c.b16 %v2223, %v2222
    %v2231 = vpack.c.b16 %v2225, %v2224
    %v2232 = vpack.c.b16 %v2227, %v2226
    %v2233 = vpack.c.b16 %v2229, %v2228
    %v2239 = vsel %vm685, %v1649, 0
    %v2242 = vsel %vm685, %v1650, 0
    %v2245 = vsel %vm685, %v1651, 0
    %v2248 = vsel %vm685, %v1652, 0
    %v2251 = vsel %vm685, %v1653, 0
    %v2254 = vsel %vm685, %v1654, 0
    %v2257 = vsel %vm685, %v1655, 0
    %v2260 = vsel %vm685, %v1656, 0
    %2262 = vmatprep.subr.bf16.mxu0 0
    %2263 = vmatpush1.bf16.msra.mxu0 %v2230
    %2264 = vmatprep.subr.bf16.mxu0 0
    %2265 = vmatpush1.bf16.msra.mxu0 %v2231
    %2266 = vmatprep.subr.bf16.mxu0 0
    %2267 = vmatpush1.bf16.msra.mxu0 %v2232
    %2268 = vmatprep.subr.bf16.mxu0 0
    %2269 = vmatpush1.bf16.msra.mxu0 %v2233
    %2270 = vmatprep.subr.bf16.mxu0 0
    %2271 = vmatpush1.bf16.msra.mxu0 0
    %2272 = vmatprep.subr.bf16.mxu0 0
    %2273 = vmatpush1.bf16.msra.mxu0 0
    %2274 = vmatprep.subr.bf16.mxu0 0
    %2275 = vmatpush1.bf16.msra.mxu0 0
    %2276 = vmatprep.subr.bf16.mxu0 0
    %2277 = vmatpush1.bf16.msra.mxu0 0
    %2278 = vmatprep.subr.bf16.mxu0 0
    %2279 = vmatpush1.bf16.msra.mxu0 0
    %2280 = vmatprep.subr.bf16.mxu0 0
    %2281 = vmatpush1.bf16.msra.mxu0 0
    %2282 = vmatprep.subr.bf16.mxu0 0
    %2283 = vmatpush1.bf16.msra.mxu0 0
    %2284 = vmatprep.subr.bf16.mxu0 0
    %2285 = vmatpush1.bf16.msra.mxu0 0
    %2286 = vmatprep.subr.bf16.mxu0 0
    %2287 = vmatpush1.bf16.msra.mxu0 0
    %2288 = vmatprep.subr.bf16.mxu0 0
    %2289 = vmatpush1.bf16.msra.mxu0 0
    %2290 = vmatprep.subr.bf16.mxu0 0
    %2291 = vmatpush1.bf16.msra.mxu0 0
    %2292 = vmatprep.subr.bf16.mxu0 0
    %2293 = vmatpush1.bf16.msra.mxu0 0
    %2294 = vmatprep.mubr.bf16.mxu0 0
    %2295 = vmatmul.mubr.bf16.gmra.mrb[0].mxu0 %v2239
    %v2296 = vpop.f32.mrb[0].mxu0
    %v2297 = vadd.f32 %v2152, %v2296
    %v2298 = vpop.f32.mrb[0].mxu0
    %v2299 = vpop.f32.mrb[0].mxu0
    %v2300 = vadd.f32 %v2155, %v2299
    %v2301 = vpop.f32.mrb[0].mxu0
    %2302 = vmatprep.mubr.bf16.mxu0 0
    %2303 = vmatmul.mubr.bf16.gmra.mrb[0].mxu0 %v2242
    %v2304 = vpop.f32.mrb[0].mxu0
    %v2305 = vadd.f32 %v2160, %v2304
    %v2306 = vpop.f32.mrb[0].mxu0
    %v2307 = vpop.f32.mrb[0].mxu0
    %v2308 = vadd.f32 %v2163, %v2307
    %v2309 = vpop.f32.mrb[0].mxu0
    %2310 = vmatprep.mubr.bf16.mxu0 0
    %2311 = vmatmul.mubr.bf16.gmra.mrb[0].mxu0 %v2245
    %v2312 = vpop.f32.mrb[0].mxu0
    %v2313 = vadd.f32 %v2168, %v2312
    %v2314 = vpop.f32.mrb[0].mxu0
    %v2315 = vpop.f32.mrb[0].mxu0
    %v2316 = vadd.f32 %v2171, %v2315
    %v2317 = vpop.f32.mrb[0].mxu0
    %2318 = vmatprep.mubr.bf16.mxu0 0
    %2319 = vmatmul.mubr.bf16.gmra.mrb[0].mxu0 %v2248
    %v2320 = vpop.f32.mrb[0].mxu0
    %v2321 = vadd.f32 %v2176, %v2320
    %v2322 = vpop.f32.mrb[0].mxu0
    %v2323 = vpop.f32.mrb[0].mxu0
    %v2324 = vadd.f32 %v2179, %v2323
    %v2325 = vpop.f32.mrb[0].mxu0
    %2326 = vmatprep.mubr.bf16.mxu0 0
    %2327 = vmatmul.mubr.bf16.gmra.mrb[0].mxu0 %v2251
    %v2328 = vpop.f32.mrb[0].mxu0
    %v2329 = vadd.f32 %v2184, %v2328
    %v2330 = vpop.f32.mrb[0].mxu0
    %v2331 = vpop.f32.mrb[0].mxu0
    %v2332 = vadd.f32 %v2187, %v2331
    %v2333 = vpop.f32.mrb[0].mxu0
    %2334 = vmatprep.mubr.bf16.mxu0 0
    %2335 = vmatmul.mubr.bf16.gmra.mrb[0].mxu0 %v2254
    %v2336 = vpop.f32.mrb[0].mxu0
    %v2337 = vadd.f32 %v2192, %v2336
    %v2338 = vpop.f32.mrb[0].mxu0
    %v2339 = vpop.f32.mrb[0].mxu0
    %v2340 = vadd.f32 %v2195, %v2339
    %v2341 = vpop.f32.mrb[0].mxu0
    %2342 = vmatprep.mubr.bf16.mxu0 0
    %2343 = vmatmul.mubr.bf16.gmra.mrb[0].mxu0 %v2257
    %v2344 = vpop.f32.mrb[0].mxu0
    %v2345 = vadd.f32 %v2200, %v2344
    %v2346 = vpop.f32.mrb[0].mxu0
    %v2347 = vpop.f32.mrb[0].mxu0
    %v2348 = vadd.f32 %v2203, %v2347
    %v2349 = vpop.f32.mrb[0].mxu0
    %2350 = vmatprep.mubr.bf16.mxu0 0
    %2351 = vmatmul.mubr.bf16.gmra.mrb[0].mxu0 %v2260
    %v2352 = vpop.f32.mrb[0].mxu0
    %v2353 = vadd.f32 %v2208, %v2352
    %v2354 = vpop.f32.mrb[0].mxu0
    %v2355 = vpop.f32.mrb[0].mxu0
    %v2356 = vadd.f32 %v2211, %v2355
    %v2357 = vpop.f32.mrb[0].mxu0
    %2358 = vdwg.mxu0
    %s2359 = scalar_lea.vmem %s4, 512
    %v2360 = vld [vmem:[%s2359] sm:$0xff]
    %v2361 = vld [vmem:[%s2359 + $0x8] sm:$0xff]
    %v2362 = vld [vmem:[%s2359 + $0x10] sm:$0xff]
    %v2363 = vld [vmem:[%s2359 + $0x18] sm:$0xff]
    %v2364 = vld [vmem:[%s2359 + $0x20] sm:$0xff]
    %v2365 = vld [vmem:[%s2359 + $0x28] sm:$0xff]
    %v2366 = vld [vmem:[%s2359 + $0x30] sm:$0xff]
    %v2367 = vld [vmem:[%s2359 + $0x38] sm:$0xff]
    %v2368 = vld [vmem:[%s2359 + $0x40] sm:$0xff]
    %v2369 = vld [vmem:[%s2359 + $0x48] sm:$0xff]
    %v2370 = vld [vmem:[%s2359 + $0x50] sm:$0xff]
    %v2371 = vld [vmem:[%s2359 + $0x58] sm:$0xff]
    %v2372 = vld [vmem:[%s2359 + $0x60] sm:$0xff]
    %v2373 = vld [vmem:[%s2359 + $0x68] sm:$0xff]
    %v2374 = vld [vmem:[%s2359 + $0x70] sm:$0xff]
    %v2375 = vld [vmem:[%s2359 + $0x78] sm:$0xff]
    %v2376 = vld [vmem:[%s2359 + $0x80] sm:$0xff]
    %v2377 = vld [vmem:[%s2359 + $0x88] sm:$0xff]
    %v2378 = vld [vmem:[%s2359 + $0x90] sm:$0xff]
    %v2379 = vld [vmem:[%s2359 + $0x98] sm:$0xff]
    %v2380 = vld [vmem:[%s2359 + $0xa0] sm:$0xff]
    %v2381 = vld [vmem:[%s2359 + $0xa8] sm:$0xff]
    %v2382 = vld [vmem:[%s2359 + $0xb0] sm:$0xff]
    %v2383 = vld [vmem:[%s2359 + $0xb8] sm:$0xff]
    %v2384 = vld [vmem:[%s2359 + $0xc0] sm:$0xff]
    %v2385 = vld [vmem:[%s2359 + $0xc8] sm:$0xff]
    %v2386 = vld [vmem:[%s2359 + $0xd0] sm:$0xff]
    %v2387 = vld [vmem:[%s2359 + $0xd8] sm:$0xff]
    %v2388 = vld [vmem:[%s2359 + $0xe0] sm:$0xff]
    %v2389 = vld [vmem:[%s2359 + $0xe8] sm:$0xff]
    %v2390 = vld [vmem:[%s2359 + $0xf0] sm:$0xff]
    %v2391 = vld [vmem:[%s2359 + $0xf8] sm:$0xff]
    %v2424 = vunpack.c.l.b16 %v2360
    %v2425 = vunpack.c.h.b16 %v2360
    %v2426 = vunpack.c.l.b16 %v2361
    %v2427 = vunpack.c.h.b16 %v2361
    %v2428 = vunpack.c.l.b16 %v2362
    %v2429 = vunpack.c.h.b16 %v2362
    %v2430 = vunpack.c.l.b16 %v2363
    %v2431 = vunpack.c.h.b16 %v2363
    %v2432 = vunpack.c.l.b16 %v2364
    %v2433 = vunpack.c.h.b16 %v2364
    %v2434 = vunpack.c.l.b16 %v2365
    %v2435 = vunpack.c.h.b16 %v2365
    %v2436 = vunpack.c.l.b16 %v2366
    %v2437 = vunpack.c.h.b16 %v2366
    %v2438 = vunpack.c.l.b16 %v2367
    %v2439 = vunpack.c.h.b16 %v2367
    %v2440 = vunpack.c.l.b16 %v2368
    %v2441 = vunpack.c.h.b16 %v2368
    %v2442 = vunpack.c.l.b16 %v2369
    %v2443 = vunpack.c.h.b16 %v2369
    %v2444 = vunpack.c.l.b16 %v2370
    %v2445 = vunpack.c.h.b16 %v2370
    %v2446 = vunpack.c.l.b16 %v2371
    %v2447 = vunpack.c.h.b16 %v2371
    %v2448 = vunpack.c.l.b16 %v2372
    %v2449 = vunpack.c.h.b16 %v2372
    %v2450 = vunpack.c.l.b16 %v2373
    %v2451 = vunpack.c.h.b16 %v2373
    %v2452 = vunpack.c.l.b16 %v2374
    %v2453 = vunpack.c.h.b16 %v2374
    %v2454 = vunpack.c.l.b16 %v2375
    %v2455 = vunpack.c.h.b16 %v2375
    %v2456 = vunpack.c.l.b16 %v2376
    %v2457 = vunpack.c.h.b16 %v2376
    %v2458 = vunpack.c.l.b16 %v2377
    %v2459 = vunpack.c.h.b16 %v2377
    %v2460 = vunpack.c.l.b16 %v2378
    %v2461 = vunpack.c.h.b16 %v2378
    %v2462 = vunpack.c.l.b16 %v2379
    %v2463 = vunpack.c.h.b16 %v2379
    %v2464 = vunpack.c.l.b16 %v2380
    %v2465 = vunpack.c.h.b16 %v2380
    %v2466 = vunpack.c.l.b16 %v2381
    %v2467 = vunpack.c.h.b16 %v2381
    %v2468 = vunpack.c.l.b16 %v2382
    %v2469 = vunpack.c.h.b16 %v2382
    %v2470 = vunpack.c.l.b16 %v2383
    %v2471 = vunpack.c.h.b16 %v2383
    %v2472 = vunpack.c.l.b16 %v2384
    %v2473 = vunpack.c.h.b16 %v2384
    %v2474 = vunpack.c.l.b16 %v2385
    %v2475 = vunpack.c.h.b16 %v2385
    %v2476 = vunpack.c.l.b16 %v2386
    %v2477 = vunpack.c.h.b16 %v2386
    %v2478 = vunpack.c.l.b16 %v2387
    %v2479 = vunpack.c.h.b16 %v2387
    %v2480 = vunpack.c.l.b16 %v2388
    %v2481 = vunpack.c.h.b16 %v2388
    %v2482 = vunpack.c.l.b16 %v2389
    %v2483 = vunpack.c.h.b16 %v2389
    %v2484 = vunpack.c.l.b16 %v2390
    %v2485 = vunpack.c.h.b16 %v2390
    %v2486 = vunpack.c.l.b16 %v2391
    %v2487 = vunpack.c.h.b16 %v2391
    %v2488 = vpack.c.b16 %v2428, %v2424
    %v2489 = vpack.c.b16 %v2429, %v2425
    %v2490 = vpack.c.b16 %v2430, %v2426
    %v2491 = vpack.c.b16 %v2431, %v2427
    %v2492 = vpack.c.b16 %v2436, %v2432
    %v2493 = vpack.c.b16 %v2437, %v2433
    %v2494 = vpack.c.b16 %v2438, %v2434
    %v2495 = vpack.c.b16 %v2439, %v2435
    %v2496 = vpack.c.b16 %v2444, %v2440
    %v2497 = vpack.c.b16 %v2445, %v2441
    %v2498 = vpack.c.b16 %v2446, %v2442
    %v2499 = vpack.c.b16 %v2447, %v2443
    %v2500 = vpack.c.b16 %v2452, %v2448
    %v2501 = vpack.c.b16 %v2453, %v2449
    %v2502 = vpack.c.b16 %v2454, %v2450
    %v2503 = vpack.c.b16 %v2455, %v2451
    %v2504 = vpack.c.b16 %v2460, %v2456
    %v2505 = vpack.c.b16 %v2461, %v2457
    %v2506 = vpack.c.b16 %v2462, %v2458
    %v2507 = vpack.c.b16 %v2463, %v2459
    %v2508 = vpack.c.b16 %v2468, %v2464
    %v2509 = vpack.c.b16 %v2469, %v2465
    %v2510 = vpack.c.b16 %v2470, %v2466
    %v2511 = vpack.c.b16 %v2471, %v2467
    %v2512 = vpack.c.b16 %v2476, %v2472
    %v2513 = vpack.c.b16 %v2477, %v2473
    %v2514 = vpack.c.b16 %v2478, %v2474
    %v2515 = vpack.c.b16 %v2479, %v2475
    %v2516 = vpack.c.b16 %v2484, %v2480
    %v2517 = vpack.c.b16 %v2485, %v2481
    %v2518 = vpack.c.b16 %v2486, %v2482
    %v2519 = vpack.c.b16 %v2487, %v2483
    %2552 = vmatprep.subr.bf16.mxu0 0
    %2553 = vmatpush1.bf16.msra.mxu0 %v1229
    %2554 = vmatprep.subr.bf16.mxu0 0
    %2555 = vmatpush1.bf16.msra.mxu0 %v1230
    %2556 = vmatprep.subr.bf16.mxu0 0
    %2557 = vmatpush1.bf16.msra.mxu0 %v1231
    %2558 = vmatprep.subr.bf16.mxu0 0
    %2559 = vmatpush1.bf16.msra.mxu0 %v1232
    %2560 = vmatprep.subr.bf16.mxu0 0
    %2561 = vmatpush1.bf16.msra.mxu0 %v1233
    %2562 = vmatprep.subr.bf16.mxu0 0
    %2563 = vmatpush1.bf16.msra.mxu0 %v1234
    %2564 = vmatprep.subr.bf16.mxu0 0
    %2565 = vmatpush1.bf16.msra.mxu0 %v1235
    %2566 = vmatprep.subr.bf16.mxu0 0
    %2567 = vmatpush1.bf16.msra.mxu0 %v1236
    %2568 = vmatprep.subr.bf16.mxu0 0
    %2569 = vmatpush1.bf16.msra.mxu0 %v1237
    %2570 = vmatprep.subr.bf16.mxu0 0
    %2571 = vmatpush1.bf16.msra.mxu0 %v1238
    %2572 = vmatprep.subr.bf16.mxu0 0
    %2573 = vmatpush1.bf16.msra.mxu0 %v1239
    %2574 = vmatprep.subr.bf16.mxu0 0
    %2575 = vmatpush1.bf16.msra.mxu0 %v1240
    %2576 = vmatprep.subr.bf16.mxu0 0
    %2577 = vmatpush1.bf16.msra.mxu0 %v1241
    %2578 = vmatprep.subr.bf16.mxu0 0
    %2579 = vmatpush1.bf16.msra.mxu0 %v1242
    %2580 = vmatprep.subr.bf16.mxu0 0
    %2581 = vmatpush1.bf16.msra.mxu0 %v1243
    %2582 = vmatprep.subr.bf16.mxu0 0
    %2583 = vmatpush1.bf16.msra.mxu0 %v1244
    %2584 = vmatprep.mubr.bf16.mxu0 %v2489
    %2585 = vmatmul.mubr.bf16.gmra.mrb[0].mxu0 %v2488
    %v2586 = vpop.f32.mrb[0].mxu0
    %v2587 = vadd.f32 0.0, %v2586
    %v2588 = vpop.f32.mrb[0].mxu0
    %v2589 = vpop.f32.mrb[0].mxu0
    %v2590 = vadd.f32 0.0, %v2589
    %v2591 = vpop.f32.mrb[0].mxu0
    %2592 = vmatprep.mubr.bf16.mxu0 %v2493
    %2593 = vmatmul.mubr.bf16.gmra.mrb[0].mxu0 %v2492
    %v2594 = vpop.f32.mrb[0].mxu0
    %v2595 = vadd.f32 0.0, %v2594
    %v2596 = vpop.f32.mrb[0].mxu0
    %v2597 = vpop.f32.mrb[0].mxu0
    %v2598 = vadd.f32 0.0, %v2597
    %v2599 = vpop.f32.mrb[0].mxu0
    %2600 = vmatprep.mubr.bf16.mxu0 %v2497
    %2601 = vmatmul.mubr.bf16.gmra.mrb[0].mxu0 %v2496
    %v2602 = vpop.f32.mrb[0].mxu0
    %v2603 = vadd.f32 0.0, %v2602
    %v2604 = vpop.f32.mrb[0].mxu0
    %v2605 = vpop.f32.mrb[0].mxu0
    %v2606 = vadd.f32 0.0, %v2605
    %v2607 = vpop.f32.mrb[0].mxu0
    %2608 = vmatprep.mubr.bf16.mxu0 %v2501
    %2609 = vmatmul.mubr.bf16.gmra.mrb[0].mxu0 %v2500
    %v2610 = vpop.f32.mrb[0].mxu0
    %v2611 = vadd.f32 0.0, %v2610
    %v2612 = vpop.f32.mrb[0].mxu0
    %v2613 = vpop.f32.mrb[0].mxu0
    %v2614 = vadd.f32 0.0, %v2613
    %v2615 = vpop.f32.mrb[0].mxu0
    %2616 = vmatprep.mubr.bf16.mxu0 %v2505
    %2617 = vmatmul.mubr.bf16.gmra.mrb[0].mxu0 %v2504
    %v2618 = vpop.f32.mrb[0].mxu0
    %v2619 = vadd.f32 0.0, %v2618
    %v2620 = vpop.f32.mrb[0].mxu0
    %v2621 = vpop.f32.mrb[0].mxu0
    %v2622 = vadd.f32 0.0, %v2621
    %v2623 = vpop.f32.mrb[0].mxu0
    %2624 = vmatprep.mubr.bf16.mxu0 %v2509
    %2625 = vmatmul.mubr.bf16.gmra.mrb[0].mxu0 %v2508
    %v2626 = vpop.f32.mrb[0].mxu0
    %v2627 = vadd.f32 0.0, %v2626
    %v2628 = vpop.f32.mrb[0].mxu0
    %v2629 = vpop.f32.mrb[0].mxu0
    %v2630 = vadd.f32 0.0, %v2629
    %v2631 = vpop.f32.mrb[0].mxu0
    %2632 = vmatprep.mubr.bf16.mxu0 %v2513
    %2633 = vmatmul.mubr.bf16.gmra.mrb[0].mxu0 %v2512
    %v2634 = vpop.f32.mrb[0].mxu0
    %v2635 = vadd.f32 0.0, %v2634
    %v2636 = vpop.f32.mrb[0].mxu0
    %v2637 = vpop.f32.mrb[0].mxu0
    %v2638 = vadd.f32 0.0, %v2637
    %v2639 = vpop.f32.mrb[0].mxu0
    %2640 = vmatprep.mubr.bf16.mxu0 %v2517
    %2641 = vmatmul.mubr.bf16.gmra.mrb[0].mxu0 %v2516
    %v2642 = vpop.f32.mrb[0].mxu0
    %v2643 = vadd.f32 0.0, %v2642
    %v2644 = vpop.f32.mrb[0].mxu0
    %v2645 = vpop.f32.mrb[0].mxu0
    %v2646 = vadd.f32 0.0, %v2645
    %v2647 = vpop.f32.mrb[0].mxu0
    %2648 = vdwg.mxu0
    %2649 = vmatprep.subr.bf16.mxu0 0
    %2650 = vmatpush1.bf16.msra.mxu0 %v1245
    %2651 = vmatprep.subr.bf16.mxu0 0
    %2652 = vmatpush1.bf16.msra.mxu0 %v1246
    %2653 = vmatprep.subr.bf16.mxu0 0
    %2654 = vmatpush1.bf16.msra.mxu0 %v1247
    %2655 = vmatprep.subr.bf16.mxu0 0
    %2656 = vmatpush1.bf16.msra.mxu0 %v1248
    %2657 = vmatprep.subr.bf16.mxu0 0
    %2658 = vmatpush1.bf16.msra.mxu0 %v1249
    %2659 = vmatprep.subr.bf16.mxu0 0
    %2660 = vmatpush1.bf16.msra.mxu0 %v1250
    %2661 = vmatprep.subr.bf16.mxu0 0
    %2662 = vmatpush1.bf16.msra.mxu0 %v1251
    %2663 = vmatprep.subr.bf16.mxu0 0
    %2664 = vmatpush1.bf16.msra.mxu0 %v1252
    %2665 = vmatprep.subr.bf16.mxu0 0
    %2666 = vmatpush1.bf16.msra.mxu0 %v1253
    %2667 = vmatprep.subr.bf16.mxu0 0
    %2668 = vmatpush1.bf16.msra.mxu0 %v1254
    %2669 = vmatprep.subr.bf16.mxu0 0
    %2670 = vmatpush1.bf16.msra.mxu0 %v1255
    %2671 = vmatprep.subr.bf16.mxu0 0
    %2672 = vmatpush1.bf16.msra.mxu0 %v1256
    %2673 = vmatprep.subr.bf16.mxu0 0
    %2674 = vmatpush1.bf16.msra.mxu0 %v1257
    %2675 = vmatprep.subr.bf16.mxu0 0
    %2676 = vmatpush1.bf16.msra.mxu0 %v1258
    %2677 = vmatprep.subr.bf16.mxu0 0
    %2678 = vmatpush1.bf16.msra.mxu0 %v1259
    %2679 = vmatprep.subr.bf16.mxu0 0
    %2680 = vmatpush1.bf16.msra.mxu0 %v1260
    %2681 = vmatprep.mubr.bf16.mxu0 %v2491
    %2682 = vmatmul.mubr.bf16.gmra.mrb[0].mxu0 %v2490
    %v2683 = vpop.f32.mrb[0].mxu0
    %v2684 = vadd.f32 %v2587, %v2683
    %v2685 = vpop.f32.mrb[0].mxu0
    %v2686 = vpop.f32.mrb[0].mxu0
    %v2687 = vadd.f32 %v2590, %v2686
    %v2688 = vpop.f32.mrb[0].mxu0
    %2689 = vmatprep.mubr.bf16.mxu0 %v2495
    %2690 = vmatmul.mubr.bf16.gmra.mrb[0].mxu0 %v2494
    %v2691 = vpop.f32.mrb[0].mxu0
    %v2692 = vadd.f32 %v2595, %v2691
    %v2693 = vpop.f32.mrb[0].mxu0
    %v2694 = vpop.f32.mrb[0].mxu0
    %v2695 = vadd.f32 %v2598, %v2694
    %v2696 = vpop.f32.mrb[0].mxu0
    %2697 = vmatprep.mubr.bf16.mxu0 %v2499
    %2698 = vmatmul.mubr.bf16.gmra.mrb[0].mxu0 %v2498
    %v2699 = vpop.f32.mrb[0].mxu0
    %v2700 = vadd.f32 %v2603, %v2699
    %v2701 = vpop.f32.mrb[0].mxu0
    %v2702 = vpop.f32.mrb[0].mxu0
    %v2703 = vadd.f32 %v2606, %v2702
    %v2704 = vpop.f32.mrb[0].mxu0
    %2705 = vmatprep.mubr.bf16.mxu0 %v2503
    %2706 = vmatmul.mubr.bf16.gmra.mrb[0].mxu0 %v2502
    %v2707 = vpop.f32.mrb[0].mxu0
    %v2708 = vadd.f32 %v2611, %v2707
    %v2709 = vpop.f32.mrb[0].mxu0
    %v2710 = vpop.f32.mrb[0].mxu0
    %v2711 = vadd.f32 %v2614, %v2710
    %v2712 = vpop.f32.mrb[0].mxu0
    %2713 = vmatprep.mubr.bf16.mxu0 %v2507
    %2714 = vmatmul.mubr.bf16.gmra.mrb[0].mxu0 %v2506
    %v2715 = vpop.f32.mrb[0].mxu0
    %v2716 = vadd.f32 %v2619, %v2715
    %v2717 = vpop.f32.mrb[0].mxu0
    %v2718 = vpop.f32.mrb[0].mxu0
    %v2719 = vadd.f32 %v2622, %v2718
    %v2720 = vpop.f32.mrb[0].mxu0
    %2721 = vmatprep.mubr.bf16.mxu0 %v2511
    %2722 = vmatmul.mubr.bf16.gmra.mrb[0].mxu0 %v2510
    %v2723 = vpop.f32.mrb[0].mxu0
    %v2724 = vadd.f32 %v2627, %v2723
    %v2725 = vpop.f32.mrb[0].mxu0
    %v2726 = vpop.f32.mrb[0].mxu0
    %v2727 = vadd.f32 %v2630, %v2726
    %v2728 = vpop.f32.mrb[0].mxu0
    %2729 = vmatprep.mubr.bf16.mxu0 %v2515
    %2730 = vmatmul.mubr.bf16.gmra.mrb[0].mxu0 %v2514
    %v2731 = vpop.f32.mrb[0].mxu0
    %v2732 = vadd.f32 %v2635, %v2731
    %v2733 = vpop.f32.mrb[0].mxu0
    %v2734 = vpop.f32.mrb[0].mxu0
    %v2735 = vadd.f32 %v2638, %v2734
    %v2736 = vpop.f32.mrb[0].mxu0
    %2737 = vmatprep.mubr.bf16.mxu0 %v2519
    %2738 = vmatmul.mubr.bf16.gmra.mrb[0].mxu0 %v2518
    %v2739 = vpop.f32.mrb[0].mxu0
    %v2740 = vadd.f32 %v2643, %v2739
    %v2741 = vpop.f32.mrb[0].mxu0
    %v2742 = vpop.f32.mrb[0].mxu0
    %v2743 = vadd.f32 %v2646, %v2742
    %v2744 = vpop.f32.mrb[0].mxu0
    %2745 = vdwg.mxu0
    %v2746 = vpack.c.bf16 %v2687, %v2684
    %v2747 = vpack.c.bf16 %v2695, %v2692
    %v2748 = vpack.c.bf16 %v2703, %v2700
    %v2749 = vpack.c.bf16 %v2711, %v2708
    %v2750 = vpack.c.bf16 %v2719, %v2716
    %v2751 = vpack.c.bf16 %v2727, %v2724
    %v2752 = vpack.c.bf16 %v2735, %v2732
    %v2753 = vpack.c.bf16 %v2743, %v2740
    %s2754 = scalar_lea.vmem %s5, 64
    %v2755 = vld [vmem:[%s2754] sm:$0xf]
    %v2756 = vld [vmem:[%s2754 + $0x4] sm:$0xf]
    %v2757 = vld [vmem:[%s2754 + $0x8] sm:$0xf]
    %v2758 = vld [vmem:[%s2754 + $0xc] sm:$0xf]
    %v2759 = vld [vmem:[%s2754 + $0x10] sm:$0xf]
    %v2760 = vld [vmem:[%s2754 + $0x14] sm:$0xf]
    %v2761 = vld [vmem:[%s2754 + $0x18] sm:$0xf]
    %v2762 = vld [vmem:[%s2754 + $0x1c] sm:$0xf]
    %v2771 = vunpack.c.l.b16 %v2755
    %v2772 = vunpack.c.l.b16 %v2756
    %v2773 = vunpack.c.l.b16 %v2757
    %v2774 = vunpack.c.l.b16 %v2758
    %v2775 = vunpack.c.l.b16 %v2759
    %v2776 = vunpack.c.l.b16 %v2760
    %v2777 = vunpack.c.l.b16 %v2761
    %v2778 = vunpack.c.l.b16 %v2762
    %v2779 = vpack.c.b16 %v2772, %v2771
    %v2780 = vpack.c.b16 %v2774, %v2773
    %v2781 = vpack.c.b16 %v2776, %v2775
    %v2782 = vpack.c.b16 %v2778, %v2777
    %v2788 = vsel %vm685, %v2746, 0
    %v2791 = vsel %vm685, %v2747, 0
    %v2794 = vsel %vm685, %v2748, 0
    %v2797 = vsel %vm685, %v2749, 0
    %v2800 = vsel %vm685, %v2750, 0
    %v2803 = vsel %vm685, %v2751, 0
    %v2806 = vsel %vm685, %v2752, 0
    %v2809 = vsel %vm685, %v2753, 0
    %2811 = vmatprep.subr.bf16.mxu0 0
    %2812 = vmatpush1.bf16.msra.mxu0 %v2779
    %2813 = vmatprep.subr.bf16.mxu0 0
    %2814 = vmatpush1.bf16.msra.mxu0 %v2780
    %2815 = vmatprep.subr.bf16.mxu0 0
    %2816 = vmatpush1.bf16.msra.mxu0 %v2781
    %2817 = vmatprep.subr.bf16.mxu0 0
    %2818 = vmatpush1.bf16.msra.mxu0 %v2782
    %2819 = vmatprep.subr.bf16.mxu0 0
    %2820 = vmatpush1.bf16.msra.mxu0 0
    %2821 = vmatprep.subr.bf16.mxu0 0
    %2822 = vmatpush1.bf16.msra.mxu0 0
    %2823 = vmatprep.subr.bf16.mxu0 0
    %2824 = vmatpush1.bf16.msra.mxu0 0
    %2825 = vmatprep.subr.bf16.mxu0 0
    %2826 = vmatpush1.bf16.msra.mxu0 0
    %2827 = vmatprep.subr.bf16.mxu0 0
    %2828 = vmatpush1.bf16.msra.mxu0 0
    %2829 = vmatprep.subr.bf16.mxu0 0
    %2830 = vmatpush1.bf16.msra.mxu0 0
    %2831 = vmatprep.subr.bf16.mxu0 0
    %2832 = vmatpush1.bf16.msra.mxu0 0
    %2833 = vmatprep.subr.bf16.mxu0 0
    %2834 = vmatpush1.bf16.msra.mxu0 0
    %2835 = vmatprep.subr.bf16.mxu0 0
    %2836 = vmatpush1.bf16.msra.mxu0 0
    %2837 = vmatprep.subr.bf16.mxu0 0
    %2838 = vmatpush1.bf16.msra.mxu0 0
    %2839 = vmatprep.subr.bf16.mxu0 0
    %2840 = vmatpush1.bf16.msra.mxu0 0
    %2841 = vmatprep.subr.bf16.mxu0 0
    %2842 = vmatpush1.bf16.msra.mxu0 0
    %2843 = vmatprep.mubr.bf16.mxu0 0
    %2844 = vmatmul.mubr.bf16.gmra.mrb[0].mxu0 %v2788
    %v2845 = vpop.f32.mrb[0].mxu0
    %v2846 = vadd.f32 0.0, %v2845
    %v2847 = vpop.f32.mrb[0].mxu0
    %v2848 = vpop.f32.mrb[0].mxu0
    %v2849 = vadd.f32 0.0, %v2848
    %v2850 = vpop.f32.mrb[0].mxu0
    %2851 = vmatprep.mubr.bf16.mxu0 0
    %2852 = vmatmul.mubr.bf16.gmra.mrb[0].mxu0 %v2791
    %v2853 = vpop.f32.mrb[0].mxu0
    %v2854 = vadd.f32 0.0, %v2853
    %v2855 = vpop.f32.mrb[0].mxu0
    %v2856 = vpop.f32.mrb[0].mxu0
    %v2857 = vadd.f32 0.0, %v2856
    %v2858 = vpop.f32.mrb[0].mxu0
    %2859 = vmatprep.mubr.bf16.mxu0 0
    %2860 = vmatmul.mubr.bf16.gmra.mrb[0].mxu0 %v2794
    %v2861 = vpop.f32.mrb[0].mxu0
    %v2862 = vadd.f32 0.0, %v2861
    %v2863 = vpop.f32.mrb[0].mxu0
    %v2864 = vpop.f32.mrb[0].mxu0
    %v2865 = vadd.f32 0.0, %v2864
    %v2866 = vpop.f32.mrb[0].mxu0
    %2867 = vmatprep.mubr.bf16.mxu0 0
    %2868 = vmatmul.mubr.bf16.gmra.mrb[0].mxu0 %v2797
    %v2869 = vpop.f32.mrb[0].mxu0
    %v2870 = vadd.f32 0.0, %v2869
    %v2871 = vpop.f32.mrb[0].mxu0
    %v2872 = vpop.f32.mrb[0].mxu0
    %v2873 = vadd.f32 0.0, %v2872
    %v2874 = vpop.f32.mrb[0].mxu0
    %2875 = vmatprep.mubr.bf16.mxu0 0
    %2876 = vmatmul.mubr.bf16.gmra.mrb[0].mxu0 %v2800
    %v2877 = vpop.f32.mrb[0].mxu0
    %v2878 = vadd.f32 0.0, %v2877
    %v2879 = vpop.f32.mrb[0].mxu0
    %v2880 = vpop.f32.mrb[0].mxu0
    %v2881 = vadd.f32 0.0, %v2880
    %v2882 = vpop.f32.mrb[0].mxu0
    %2883 = vmatprep.mubr.bf16.mxu0 0
    %2884 = vmatmul.mubr.bf16.gmra.mrb[0].mxu0 %v2803
    %v2885 = vpop.f32.mrb[0].mxu0
    %v2886 = vadd.f32 0.0, %v2885
    %v2887 = vpop.f32.mrb[0].mxu0
    %v2888 = vpop.f32.mrb[0].mxu0
    %v2889 = vadd.f32 0.0, %v2888
    %v2890 = vpop.f32.mrb[0].mxu0
    %2891 = vmatprep.mubr.bf16.mxu0 0
    %2892 = vmatmul.mubr.bf16.gmra.mrb[0].mxu0 %v2806
    %v2893 = vpop.f32.mrb[0].mxu0
    %v2894 = vadd.f32 0.0, %v2893
    %v2895 = vpop.f32.mrb[0].mxu0
    %v2896 = vpop.f32.mrb[0].mxu0
    %v2897 = vadd.f32 0.0, %v2896
    %v2898 = vpop.f32.mrb[0].mxu0
    %2899 = vmatprep.mubr.bf16.mxu0 0
    %2900 = vmatmul.mubr.bf16.gmra.mrb[0].mxu0 %v2809
    %v2901 = vpop.f32.mrb[0].mxu0
    %v2902 = vadd.f32 0.0, %v2901
    %v2903 = vpop.f32.mrb[0].mxu0
    %v2904 = vpop.f32.mrb[0].mxu0
    %v2905 = vadd.f32 0.0, %v2904
    %v2906 = vpop.f32.mrb[0].mxu0
    %2907 = vdwg.mxu0
    %v2908 = vadd.f32 %v2297, %v2846
    %v2909 = vadd.f32 %v2300, %v2849
    %v2910 = vadd.f32 %v2305, %v2854
    %v2911 = vadd.f32 %v2308, %v2857
    %v2912 = vadd.f32 %v2313, %v2862
    %v2913 = vadd.f32 %v2316, %v2865
    %v2914 = vadd.f32 %v2321, %v2870
    %v2915 = vadd.f32 %v2324, %v2873
    %v2916 = vadd.f32 %v2329, %v2878
    %v2917 = vadd.f32 %v2332, %v2881
    %v2918 = vadd.f32 %v2337, %v2886
    %v2919 = vadd.f32 %v2340, %v2889
    %v2920 = vadd.f32 %v2345, %v2894
    %v2921 = vadd.f32 %v2348, %v2897
    %v2922 = vadd.f32 %v2353, %v2902
    %v2923 = vadd.f32 %v2356, %v2905
    %s2924 = scalar_lea.vmem %s4, 768
    %v2925 = vld [vmem:[%s2924] sm:$0xff]
    %v2926 = vld [vmem:[%s2924 + $0x8] sm:$0xff]
    %v2927 = vld [vmem:[%s2924 + $0x10] sm:$0xff]
    %v2928 = vld [vmem:[%s2924 + $0x18] sm:$0xff]
    %v2929 = vld [vmem:[%s2924 + $0x20] sm:$0xff]
    %v2930 = vld [vmem:[%s2924 + $0x28] sm:$0xff]
    %v2931 = vld [vmem:[%s2924 + $0x30] sm:$0xff]
    %v2932 = vld [vmem:[%s2924 + $0x38] sm:$0xff]
    %v2933 = vld [vmem:[%s2924 + $0x40] sm:$0xff]
    %v2934 = vld [vmem:[%s2924 + $0x48] sm:$0xff]
    %v2935 = vld [vmem:[%s2924 + $0x50] sm:$0xff]
    %v2936 = vld [vmem:[%s2924 + $0x58] sm:$0xff]
    %v2937 = vld [vmem:[%s2924 + $0x60] sm:$0xff]
    %v2938 = vld [vmem:[%s2924 + $0x68] sm:$0xff]
    %v2939 = vld [vmem:[%s2924 + $0x70] sm:$0xff]
    %v2940 = vld [vmem:[%s2924 + $0x78] sm:$0xff]
    %v2941 = vld [vmem:[%s2924 + $0x80] sm:$0xff]
    %v2942 = vld [vmem:[%s2924 + $0x88] sm:$0xff]
    %v2943 = vld [vmem:[%s2924 + $0x90] sm:$0xff]
    %v2944 = vld [vmem:[%s2924 + $0x98] sm:$0xff]
    %v2945 = vld [vmem:[%s2924 + $0xa0] sm:$0xff]
    %v2946 = vld [vmem:[%s2924 + $0xa8] sm:$0xff]
    %v2947 = vld [vmem:[%s2924 + $0xb0] sm:$0xff]
    %v2948 = vld [vmem:[%s2924 + $0xb8] sm:$0xff]
    %v2949 = vld [vmem:[%s2924 + $0xc0] sm:$0xff]
    %v2950 = vld [vmem:[%s2924 + $0xc8] sm:$0xff]
    %v2951 = vld [vmem:[%s2924 + $0xd0] sm:$0xff]
    %v2952 = vld [vmem:[%s2924 + $0xd8] sm:$0xff]
    %v2953 = vld [vmem:[%s2924 + $0xe0] sm:$0xff]
    %v2954 = vld [vmem:[%s2924 + $0xe8] sm:$0xff]
    %v2955 = vld [vmem:[%s2924 + $0xf0] sm:$0xff]
    %v2956 = vld [vmem:[%s2924 + $0xf8] sm:$0xff]
    %v2989 = vunpack.c.l.b16 %v2925
    %v2990 = vunpack.c.h.b16 %v2925
    %v2991 = vunpack.c.l.b16 %v2926
    %v2992 = vunpack.c.h.b16 %v2926
    %v2993 = vunpack.c.l.b16 %v2927
    %v2994 = vunpack.c.h.b16 %v2927
    %v2995 = vunpack.c.l.b16 %v2928
    %v2996 = vunpack.c.h.b16 %v2928
    %v2997 = vunpack.c.l.b16 %v2929
    %v2998 = vunpack.c.h.b16 %v2929
    %v2999 = vunpack.c.l.b16 %v2930
    %v3000 = vunpack.c.h.b16 %v2930
    %v3001 = vunpack.c.l.b16 %v2931
    %v3002 = vunpack.c.h.b16 %v2931
    %v3003 = vunpack.c.l.b16 %v2932
    %v3004 = vunpack.c.h.b16 %v2932
    %v3005 = vunpack.c.l.b16 %v2933
    %v3006 = vunpack.c.h.b16 %v2933
    %v3007 = vunpack.c.l.b16 %v2934
    %v3008 = vunpack.c.h.b16 %v2934
    %v3009 = vunpack.c.l.b16 %v2935
    %v3010 = vunpack.c.h.b16 %v2935
    %v3011 = vunpack.c.l.b16 %v2936
    %v3012 = vunpack.c.h.b16 %v2936
    %v3013 = vunpack.c.l.b16 %v2937
    %v3014 = vunpack.c.h.b16 %v2937
    %v3015 = vunpack.c.l.b16 %v2938
    %v3016 = vunpack.c.h.b16 %v2938
    %v3017 = vunpack.c.l.b16 %v2939
    %v3018 = vunpack.c.h.b16 %v2939
    %v3019 = vunpack.c.l.b16 %v2940
    %v3020 = vunpack.c.h.b16 %v2940
    %v3021 = vunpack.c.l.b16 %v2941
    %v3022 = vunpack.c.h.b16 %v2941
    %v3023 = vunpack.c.l.b16 %v2942
    %v3024 = vunpack.c.h.b16 %v2942
    %v3025 = vunpack.c.l.b16 %v2943
    %v3026 = vunpack.c.h.b16 %v2943
    %v3027 = vunpack.c.l.b16 %v2944
    %v3028 = vunpack.c.h.b16 %v2944
    %v3029 = vunpack.c.l.b16 %v2945
    %v3030 = vunpack.c.h.b16 %v2945
    %v3031 = vunpack.c.l.b16 %v2946
    %v3032 = vunpack.c.h.b16 %v2946
    %v3033 = vunpack.c.l.b16 %v2947
    %v3034 = vunpack.c.h.b16 %v2947
    %v3035 = vunpack.c.l.b16 %v2948
    %v3036 = vunpack.c.h.b16 %v2948
    %v3037 = vunpack.c.l.b16 %v2949
    %v3038 = vunpack.c.h.b16 %v2949
    %v3039 = vunpack.c.l.b16 %v2950
    %v3040 = vunpack.c.h.b16 %v2950
    %v3041 = vunpack.c.l.b16 %v2951
    %v3042 = vunpack.c.h.b16 %v2951
    %v3043 = vunpack.c.l.b16 %v2952
    %v3044 = vunpack.c.h.b16 %v2952
    %v3045 = vunpack.c.l.b16 %v2953
    %v3046 = vunpack.c.h.b16 %v2953
    %v3047 = vunpack.c.l.b16 %v2954
    %v3048 = vunpack.c.h.b16 %v2954
    %v3049 = vunpack.c.l.b16 %v2955
    %v3050 = vunpack.c.h.b16 %v2955
    %v3051 = vunpack.c.l.b16 %v2956
    %v3052 = vunpack.c.h.b16 %v2956
    %v3053 = vpack.c.b16 %v2993, %v2989
    %v3054 = vpack.c.b16 %v2994, %v2990
    %v3055 = vpack.c.b16 %v2995, %v2991
    %v3056 = vpack.c.b16 %v2996, %v2992
    %v3057 = vpack.c.b16 %v3001, %v2997
    %v3058 = vpack.c.b16 %v3002, %v2998
    %v3059 = vpack.c.b16 %v3003, %v2999
    %v3060 = vpack.c.b16 %v3004, %v3000
    %v3061 = vpack.c.b16 %v3009, %v3005
    %v3062 = vpack.c.b16 %v3010, %v3006
    %v3063 = vpack.c.b16 %v3011, %v3007
    %v3064 = vpack.c.b16 %v3012, %v3008
    %v3065 = vpack.c.b16 %v3017, %v3013
    %v3066 = vpack.c.b16 %v3018, %v3014
    %v3067 = vpack.c.b16 %v3019, %v3015
    %v3068 = vpack.c.b16 %v3020, %v3016
    %v3069 = vpack.c.b16 %v3025, %v3021
    %v3070 = vpack.c.b16 %v3026, %v3022
    %v3071 = vpack.c.b16 %v3027, %v3023
    %v3072 = vpack.c.b16 %v3028, %v3024
    %v3073 = vpack.c.b16 %v3033, %v3029
    %v3074 = vpack.c.b16 %v3034, %v3030
    %v3075 = vpack.c.b16 %v3035, %v3031
    %v3076 = vpack.c.b16 %v3036, %v3032
    %v3077 = vpack.c.b16 %v3041, %v3037
    %v3078 = vpack.c.b16 %v3042, %v3038
    %v3079 = vpack.c.b16 %v3043, %v3039
    %v3080 = vpack.c.b16 %v3044, %v3040
    %v3081 = vpack.c.b16 %v3049, %v3045
    %v3082 = vpack.c.b16 %v3050, %v3046
    %v3083 = vpack.c.b16 %v3051, %v3047
    %v3084 = vpack.c.b16 %v3052, %v3048
    %3117 = vmatprep.subr.bf16.mxu0 0
    %3118 = vmatpush1.bf16.msra.mxu0 %v1229
    %3119 = vmatprep.subr.bf16.mxu0 0
    %3120 = vmatpush1.bf16.msra.mxu0 %v1230
    %3121 = vmatprep.subr.bf16.mxu0 0
    %3122 = vmatpush1.bf16.msra.mxu0 %v1231
    %3123 = vmatprep.subr.bf16.mxu0 0
    %3124 = vmatpush1.bf16.msra.mxu0 %v1232
    %3125 = vmatprep.subr.bf16.mxu0 0
    %3126 = vmatpush1.bf16.msra.mxu0 %v1233
    %3127 = vmatprep.subr.bf16.mxu0 0
    %3128 = vmatpush1.bf16.msra.mxu0 %v1234
    %3129 = vmatprep.subr.bf16.mxu0 0
    %3130 = vmatpush1.bf16.msra.mxu0 %v1235
    %3131 = vmatprep.subr.bf16.mxu0 0
    %3132 = vmatpush1.bf16.msra.mxu0 %v1236
    %3133 = vmatprep.subr.bf16.mxu0 0
    %3134 = vmatpush1.bf16.msra.mxu0 %v1237
    %3135 = vmatprep.subr.bf16.mxu0 0
    %3136 = vmatpush1.bf16.msra.mxu0 %v1238
    %3137 = vmatprep.subr.bf16.mxu0 0
    %3138 = vmatpush1.bf16.msra.mxu0 %v1239
    %3139 = vmatprep.subr.bf16.mxu0 0
    %3140 = vmatpush1.bf16.msra.mxu0 %v1240
    %3141 = vmatprep.subr.bf16.mxu0 0
    %3142 = vmatpush1.bf16.msra.mxu0 %v1241
    %3143 = vmatprep.subr.bf16.mxu0 0
    %3144 = vmatpush1.bf16.msra.mxu0 %v1242
    %3145 = vmatprep.subr.bf16.mxu0 0
    %3146 = vmatpush1.bf16.msra.mxu0 %v1243
    %3147 = vmatprep.subr.bf16.mxu0 0
    %3148 = vmatpush1.bf16.msra.mxu0 %v1244
    %3149 = vmatprep.mubr.bf16.mxu0 %v3054
    %3150 = vmatmul.mubr.bf16.gmra.mrb[0].mxu0 %v3053
    %v3151 = vpop.f32.mrb[0].mxu0
    %v3152 = vadd.f32 0.0, %v3151
    %v3153 = vpop.f32.mrb[0].mxu0
    %v3154 = vpop.f32.mrb[0].mxu0
    %v3155 = vadd.f32 0.0, %v3154
    %v3156 = vpop.f32.mrb[0].mxu0
    %3157 = vmatprep.mubr.bf16.mxu0 %v3058
    %3158 = vmatmul.mubr.bf16.gmra.mrb[0].mxu0 %v3057
    %v3159 = vpop.f32.mrb[0].mxu0
    %v3160 = vadd.f32 0.0, %v3159
    %v3161 = vpop.f32.mrb[0].mxu0
    %v3162 = vpop.f32.mrb[0].mxu0
    %v3163 = vadd.f32 0.0, %v3162
    %v3164 = vpop.f32.mrb[0].mxu0
    %3165 = vmatprep.mubr.bf16.mxu0 %v3062
    %3166 = vmatmul.mubr.bf16.gmra.mrb[0].mxu0 %v3061
    %v3167 = vpop.f32.mrb[0].mxu0
    %v3168 = vadd.f32 0.0, %v3167
    %v3169 = vpop.f32.mrb[0].mxu0
    %v3170 = vpop.f32.mrb[0].mxu0
    %v3171 = vadd.f32 0.0, %v3170
    %v3172 = vpop.f32.mrb[0].mxu0
    %3173 = vmatprep.mubr.bf16.mxu0 %v3066
    %3174 = vmatmul.mubr.bf16.gmra.mrb[0].mxu0 %v3065
    %v3175 = vpop.f32.mrb[0].mxu0
    %v3176 = vadd.f32 0.0, %v3175
    %v3177 = vpop.f32.mrb[0].mxu0
    %v3178 = vpop.f32.mrb[0].mxu0
    %v3179 = vadd.f32 0.0, %v3178
    %v3180 = vpop.f32.mrb[0].mxu0
    %3181 = vmatprep.mubr.bf16.mxu0 %v3070
    %3182 = vmatmul.mubr.bf16.gmra.mrb[0].mxu0 %v3069
    %v3183 = vpop.f32.mrb[0].mxu0
    %v3184 = vadd.f32 0.0, %v3183
    %v3185 = vpop.f32.mrb[0].mxu0
    %v3186 = vpop.f32.mrb[0].mxu0
    %v3187 = vadd.f32 0.0, %v3186
    %v3188 = vpop.f32.mrb[0].mxu0
    %3189 = vmatprep.mubr.bf16.mxu0 %v3074
    %3190 = vmatmul.mubr.bf16.gmra.mrb[0].mxu0 %v3073
    %v3191 = vpop.f32.mrb[0].mxu0
    %v3192 = vadd.f32 0.0, %v3191
    %v3193 = vpop.f32.mrb[0].mxu0
    %v3194 = vpop.f32.mrb[0].mxu0
    %v3195 = vadd.f32 0.0, %v3194
    %v3196 = vpop.f32.mrb[0].mxu0
    %3197 = vmatprep.mubr.bf16.mxu0 %v3078
    %3198 = vmatmul.mubr.bf16.gmra.mrb[0].mxu0 %v3077
    %v3199 = vpop.f32.mrb[0].mxu0
    %v3200 = vadd.f32 0.0, %v3199
    %v3201 = vpop.f32.mrb[0].mxu0
    %v3202 = vpop.f32.mrb[0].mxu0
    %v3203 = vadd.f32 0.0, %v3202
    %v3204 = vpop.f32.mrb[0].mxu0
    %3205 = vmatprep.mubr.bf16.mxu0 %v3082
    %3206 = vmatmul.mubr.bf16.gmra.mrb[0].mxu0 %v3081
    %v3207 = vpop.f32.mrb[0].mxu0
    %v3208 = vadd.f32 0.0, %v3207
    %v3209 = vpop.f32.mrb[0].mxu0
    %v3210 = vpop.f32.mrb[0].mxu0
    %v3211 = vadd.f32 0.0, %v3210
    %v3212 = vpop.f32.mrb[0].mxu0
    %3213 = vdwg.mxu0
    %3214 = vmatprep.subr.bf16.mxu0 0
    %3215 = vmatpush1.bf16.msra.mxu0 %v1245
    %3216 = vmatprep.subr.bf16.mxu0 0
    %3217 = vmatpush1.bf16.msra.mxu0 %v1246
    %3218 = vmatprep.subr.bf16.mxu0 0
    %3219 = vmatpush1.bf16.msra.mxu0 %v1247
    %3220 = vmatprep.subr.bf16.mxu0 0
    %3221 = vmatpush1.bf16.msra.mxu0 %v1248
    %3222 = vmatprep.subr.bf16.mxu0 0
    %3223 = vmatpush1.bf16.msra.mxu0 %v1249
    %3224 = vmatprep.subr.bf16.mxu0 0
    %3225 = vmatpush1.bf16.msra.mxu0 %v1250
    %3226 = vmatprep.subr.bf16.mxu0 0
    %3227 = vmatpush1.bf16.msra.mxu0 %v1251
    %3228 = vmatprep.subr.bf16.mxu0 0
    %3229 = vmatpush1.bf16.msra.mxu0 %v1252
    %3230 = vmatprep.subr.bf16.mxu0 0
    %3231 = vmatpush1.bf16.msra.mxu0 %v1253
    %3232 = vmatprep.subr.bf16.mxu0 0
    %3233 = vmatpush1.bf16.msra.mxu0 %v1254
    %3234 = vmatprep.subr.bf16.mxu0 0
    %3235 = vmatpush1.bf16.msra.mxu0 %v1255
    %3236 = vmatprep.subr.bf16.mxu0 0
    %3237 = vmatpush1.bf16.msra.mxu0 %v1256
    %3238 = vmatprep.subr.bf16.mxu0 0
    %3239 = vmatpush1.bf16.msra.mxu0 %v1257
    %3240 = vmatprep.subr.bf16.mxu0 0
    %3241 = vmatpush1.bf16.msra.mxu0 %v1258
    %3242 = vmatprep.subr.bf16.mxu0 0
    %3243 = vmatpush1.bf16.msra.mxu0 %v1259
    %3244 = vmatprep.subr.bf16.mxu0 0
    %3245 = vmatpush1.bf16.msra.mxu0 %v1260
    %3246 = vmatprep.mubr.bf16.mxu0 %v3056
    %3247 = vmatmul.mubr.bf16.gmra.mrb[0].mxu0 %v3055
    %v3248 = vpop.f32.mrb[0].mxu0
    %v3249 = vadd.f32 %v3152, %v3248
    %v3250 = vpop.f32.mrb[0].mxu0
    %v3251 = vpop.f32.mrb[0].mxu0
    %v3252 = vadd.f32 %v3155, %v3251
    %v3253 = vpop.f32.mrb[0].mxu0
    %3254 = vmatprep.mubr.bf16.mxu0 %v3060
    %3255 = vmatmul.mubr.bf16.gmra.mrb[0].mxu0 %v3059
    %v3256 = vpop.f32.mrb[0].mxu0
    %v3257 = vadd.f32 %v3160, %v3256
    %v3258 = vpop.f32.mrb[0].mxu0
    %v3259 = vpop.f32.mrb[0].mxu0
    %v3260 = vadd.f32 %v3163, %v3259
    %v3261 = vpop.f32.mrb[0].mxu0
    %3262 = vmatprep.mubr.bf16.mxu0 %v3064
    %3263 = vmatmul.mubr.bf16.gmra.mrb[0].mxu0 %v3063
    %v3264 = vpop.f32.mrb[0].mxu0
    %v3265 = vadd.f32 %v3168, %v3264
    %v3266 = vpop.f32.mrb[0].mxu0
    %v3267 = vpop.f32.mrb[0].mxu0
    %v3268 = vadd.f32 %v3171, %v3267
    %v3269 = vpop.f32.mrb[0].mxu0
    %3270 = vmatprep.mubr.bf16.mxu0 %v3068
    %3271 = vmatmul.mubr.bf16.gmra.mrb[0].mxu0 %v3067
    %v3272 = vpop.f32.mrb[0].mxu0
    %v3273 = vadd.f32 %v3176, %v3272
    %v3274 = vpop.f32.mrb[0].mxu0
    %v3275 = vpop.f32.mrb[0].mxu0
    %v3276 = vadd.f32 %v3179, %v3275
    %v3277 = vpop.f32.mrb[0].mxu0
    %3278 = vmatprep.mubr.bf16.mxu0 %v3072
    %3279 = vmatmul.mubr.bf16.gmra.mrb[0].mxu0 %v3071
    %v3280 = vpop.f32.mrb[0].mxu0
    %v3281 = vadd.f32 %v3184, %v3280
    %v3282 = vpop.f32.mrb[0].mxu0
    %v3283 = vpop.f32.mrb[0].mxu0
    %v3284 = vadd.f32 %v3187, %v3283
    %v3285 = vpop.f32.mrb[0].mxu0
    %3286 = vmatprep.mubr.bf16.mxu0 %v3076
    %3287 = vmatmul.mubr.bf16.gmra.mrb[0].mxu0 %v3075
    %v3288 = vpop.f32.mrb[0].mxu0
    %v3289 = vadd.f32 %v3192, %v3288
    %v3290 = vpop.f32.mrb[0].mxu0
    %v3291 = vpop.f32.mrb[0].mxu0
    %v3292 = vadd.f32 %v3195, %v3291
    %v3293 = vpop.f32.mrb[0].mxu0
    %3294 = vmatprep.mubr.bf16.mxu0 %v3080
    %3295 = vmatmul.mubr.bf16.gmra.mrb[0].mxu0 %v3079
    %v3296 = vpop.f32.mrb[0].mxu0
    %v3297 = vadd.f32 %v3200, %v3296
    %v3298 = vpop.f32.mrb[0].mxu0
    %v3299 = vpop.f32.mrb[0].mxu0
    %v3300 = vadd.f32 %v3203, %v3299
    %v3301 = vpop.f32.mrb[0].mxu0
    %3302 = vmatprep.mubr.bf16.mxu0 %v3084
    %3303 = vmatmul.mubr.bf16.gmra.mrb[0].mxu0 %v3083
    %v3304 = vpop.f32.mrb[0].mxu0
    %v3305 = vadd.f32 %v3208, %v3304
    %v3306 = vpop.f32.mrb[0].mxu0
    %v3307 = vpop.f32.mrb[0].mxu0
    %v3308 = vadd.f32 %v3211, %v3307
    %v3309 = vpop.f32.mrb[0].mxu0
    %3310 = vdwg.mxu0
    %v3311 = vpack.c.bf16 %v3252, %v3249
    %v3312 = vpack.c.bf16 %v3260, %v3257
    %v3313 = vpack.c.bf16 %v3268, %v3265
    %v3314 = vpack.c.bf16 %v3276, %v3273
    %v3315 = vpack.c.bf16 %v3284, %v3281
    %v3316 = vpack.c.bf16 %v3292, %v3289
    %v3317 = vpack.c.bf16 %v3300, %v3297
    %v3318 = vpack.c.bf16 %v3308, %v3305
    %s3319 = scalar_lea.vmem %s5, 96
    %v3320 = vld [vmem:[%s3319] sm:$0xf]
    %v3321 = vld [vmem:[%s3319 + $0x4] sm:$0xf]
    %v3322 = vld [vmem:[%s3319 + $0x8] sm:$0xf]
    %v3323 = vld [vmem:[%s3319 + $0xc] sm:$0xf]
    %v3324 = vld [vmem:[%s3319 + $0x10] sm:$0xf]
    %v3325 = vld [vmem:[%s3319 + $0x14] sm:$0xf]
    %v3326 = vld [vmem:[%s3319 + $0x18] sm:$0xf]
    %v3327 = vld [vmem:[%s3319 + $0x1c] sm:$0xf]
    %v3336 = vunpack.c.l.b16 %v3320
    %v3337 = vunpack.c.l.b16 %v3321
    %v3338 = vunpack.c.l.b16 %v3322
    %v3339 = vunpack.c.l.b16 %v3323
    %v3340 = vunpack.c.l.b16 %v3324
    %v3341 = vunpack.c.l.b16 %v3325
    %v3342 = vunpack.c.l.b16 %v3326
    %v3343 = vunpack.c.l.b16 %v3327
    %v3344 = vpack.c.b16 %v3337, %v3336
    %v3345 = vpack.c.b16 %v3339, %v3338
    %v3346 = vpack.c.b16 %v3341, %v3340
    %v3347 = vpack.c.b16 %v3343, %v3342
    %v3353 = vsel %vm685, %v3311, 0
    %v3356 = vsel %vm685, %v3312, 0
    %v3359 = vsel %vm685, %v3313, 0
    %v3362 = vsel %vm685, %v3314, 0
    %v3365 = vsel %vm685, %v3315, 0
    %v3368 = vsel %vm685, %v3316, 0
    %v3371 = vsel %vm685, %v3317, 0
    %v3374 = vsel %vm685, %v3318, 0
    %3376 = vmatprep.subr.bf16.mxu0 0
    %3377 = vmatpush1.bf16.msra.mxu0 %v3344
    %3378 = vmatprep.subr.bf16.mxu0 0
    %3379 = vmatpush1.bf16.msra.mxu0 %v3345
    %3380 = vmatprep.subr.bf16.mxu0 0
    %3381 = vmatpush1.bf16.msra.mxu0 %v3346
    %3382 = vmatprep.subr.bf16.mxu0 0
    %3383 = vmatpush1.bf16.msra.mxu0 %v3347
    %3384 = vmatprep.subr.bf16.mxu0 0
    %3385 = vmatpush1.bf16.msra.mxu0 0
    %3386 = vmatprep.subr.bf16.mxu0 0
    %3387 = vmatpush1.bf16.msra.mxu0 0
    %3388 = vmatprep.subr.bf16.mxu0 0
    %3389 = vmatpush1.bf16.msra.mxu0 0
    %3390 = vmatprep.subr.bf16.mxu0 0
    %3391 = vmatpush1.bf16.msra.mxu0 0
    %3392 = vmatprep.subr.bf16.mxu0 0
    %3393 = vmatpush1.bf16.msra.mxu0 0
    %3394 = vmatprep.subr.bf16.mxu0 0
    %3395 = vmatpush1.bf16.msra.mxu0 0
    %3396 = vmatprep.subr.bf16.mxu0 0
    %3397 = vmatpush1.bf16.msra.mxu0 0
    %3398 = vmatprep.subr.bf16.mxu0 0
    %3399 = vmatpush1.bf16.msra.mxu0 0
    %3400 = vmatprep.subr.bf16.mxu0 0
    %3401 = vmatpush1.bf16.msra.mxu0 0
    %3402 = vmatprep.subr.bf16.mxu0 0
    %3403 = vmatpush1.bf16.msra.mxu0 0
    %3404 = vmatprep.subr.bf16.mxu0 0
    %3405 = vmatpush1.bf16.msra.mxu0 0
    %3406 = vmatprep.subr.bf16.mxu0 0
    %3407 = vmatpush1.bf16.msra.mxu0 0
    %3408 = vmatprep.mubr.bf16.mxu0 0
    %3409 = vmatmul.mubr.bf16.gmra.mrb[0].mxu0 %v3353
    %v3410 = vpop.f32.mrb[0].mxu0
    %v3411 = vadd.f32 0.0, %v3410
    %v3412 = vpop.f32.mrb[0].mxu0
    %v3413 = vpop.f32.mrb[0].mxu0
    %v3414 = vadd.f32 0.0, %v3413
    %v3415 = vpop.f32.mrb[0].mxu0
    %3416 = vmatprep.mubr.bf16.mxu0 0
    %3417 = vmatmul.mubr.bf16.gmra.mrb[0].mxu0 %v3356
    %v3418 = vpop.f32.mrb[0].mxu0
    %v3419 = vadd.f32 0.0, %v3418
    %v3420 = vpop.f32.mrb[0].mxu0
    %v3421 = vpop.f32.mrb[0].mxu0
    %v3422 = vadd.f32 0.0, %v3421
    %v3423 = vpop.f32.mrb[0].mxu0
    %3424 = vmatprep.mubr.bf16.mxu0 0
    %3425 = vmatmul.mubr.bf16.gmra.mrb[0].mxu0 %v3359
    %v3426 = vpop.f32.mrb[0].mxu0
    %v3427 = vadd.f32 0.0, %v3426
    %v3428 = vpop.f32.mrb[0].mxu0
    %v3429 = vpop.f32.mrb[0].mxu0
    %v3430 = vadd.f32 0.0, %v3429
    %v3431 = vpop.f32.mrb[0].mxu0
    %3432 = vmatprep.mubr.bf16.mxu0 0
    %3433 = vmatmul.mubr.bf16.gmra.mrb[0].mxu0 %v3362
    %v3434 = vpop.f32.mrb[0].mxu0
    %v3435 = vadd.f32 0.0, %v3434
    %v3436 = vpop.f32.mrb[0].mxu0
    %v3437 = vpop.f32.mrb[0].mxu0
    %v3438 = vadd.f32 0.0, %v3437
    %v3439 = vpop.f32.mrb[0].mxu0
    %3440 = vmatprep.mubr.bf16.mxu0 0
    %3441 = vmatmul.mubr.bf16.gmra.mrb[0].mxu0 %v3365
    %v3442 = vpop.f32.mrb[0].mxu0
    %v3443 = vadd.f32 0.0, %v3442
    %v3444 = vpop.f32.mrb[0].mxu0
    %v3445 = vpop.f32.mrb[0].mxu0
    %v3446 = vadd.f32 0.0, %v3445
    %v3447 = vpop.f32.mrb[0].mxu0
    %3448 = vmatprep.mubr.bf16.mxu0 0
    %3449 = vmatmul.mubr.bf16.gmra.mrb[0].mxu0 %v3368
    %v3450 = vpop.f32.mrb[0].mxu0
    %v3451 = vadd.f32 0.0, %v3450
    %v3452 = vpop.f32.mrb[0].mxu0
    %v3453 = vpop.f32.mrb[0].mxu0
    %v3454 = vadd.f32 0.0, %v3453
    %v3455 = vpop.f32.mrb[0].mxu0
    %3456 = vmatprep.mubr.bf16.mxu0 0
    %3457 = vmatmul.mubr.bf16.gmra.mrb[0].mxu0 %v3371
    %v3458 = vpop.f32.mrb[0].mxu0
    %v3459 = vadd.f32 0.0, %v3458
    %v3460 = vpop.f32.mrb[0].mxu0
    %v3461 = vpop.f32.mrb[0].mxu0
    %v3462 = vadd.f32 0.0, %v3461
    %v3463 = vpop.f32.mrb[0].mxu0
    %3464 = vmatprep.mubr.bf16.mxu0 0
    %3465 = vmatmul.mubr.bf16.gmra.mrb[0].mxu0 %v3374
    %v3466 = vpop.f32.mrb[0].mxu0
    %v3467 = vadd.f32 0.0, %v3466
    %v3468 = vpop.f32.mrb[0].mxu0
    %v3469 = vpop.f32.mrb[0].mxu0
    %v3470 = vadd.f32 0.0, %v3469
    %v3471 = vpop.f32.mrb[0].mxu0
    %3472 = vdwg.mxu0
    %v3473 = vadd.f32 %v2908, %v3411
    %v3474 = vadd.f32 %v2909, %v3414
    %v3475 = vadd.f32 %v2910, %v3419
    %v3476 = vadd.f32 %v2911, %v3422
    %v3477 = vadd.f32 %v2912, %v3427
    %v3478 = vadd.f32 %v2913, %v3430
    %v3479 = vadd.f32 %v2914, %v3435
    %v3480 = vadd.f32 %v2915, %v3438
    %v3481 = vadd.f32 %v2916, %v3443
    %v3482 = vadd.f32 %v2917, %v3446
    %v3483 = vadd.f32 %v2918, %v3451
    %v3484 = vadd.f32 %v2919, %v3454
    %v3485 = vadd.f32 %v2920, %v3459
    %v3486 = vadd.f32 %v2921, %v3462
    %v3487 = vadd.f32 %v2922, %v3467
    %v3488 = vadd.f32 %v2923, %v3470
    %s3489 = scalar_lea.vmem %s4, 1024
    %v3490 = vld [vmem:[%s3489] sm:$0xff]
    %v3491 = vld [vmem:[%s3489 + $0x8] sm:$0xff]
    %v3492 = vld [vmem:[%s3489 + $0x10] sm:$0xff]
    %v3493 = vld [vmem:[%s3489 + $0x18] sm:$0xff]
    %v3494 = vld [vmem:[%s3489 + $0x20] sm:$0xff]
    %v3495 = vld [vmem:[%s3489 + $0x28] sm:$0xff]
    %v3496 = vld [vmem:[%s3489 + $0x30] sm:$0xff]
    %v3497 = vld [vmem:[%s3489 + $0x38] sm:$0xff]
    %v3498 = vld [vmem:[%s3489 + $0x40] sm:$0xff]
    %v3499 = vld [vmem:[%s3489 + $0x48] sm:$0xff]
    %v3500 = vld [vmem:[%s3489 + $0x50] sm:$0xff]
    %v3501 = vld [vmem:[%s3489 + $0x58] sm:$0xff]
    %v3502 = vld [vmem:[%s3489 + $0x60] sm:$0xff]
    %v3503 = vld [vmem:[%s3489 + $0x68] sm:$0xff]
    %v3504 = vld [vmem:[%s3489 + $0x70] sm:$0xff]
    %v3505 = vld [vmem:[%s3489 + $0x78] sm:$0xff]
    %v3506 = vld [vmem:[%s3489 + $0x80] sm:$0xff]
    %v3507 = vld [vmem:[%s3489 + $0x88] sm:$0xff]
    %v3508 = vld [vmem:[%s3489 + $0x90] sm:$0xff]
    %v3509 = vld [vmem:[%s3489 + $0x98] sm:$0xff]
    %v3510 = vld [vmem:[%s3489 + $0xa0] sm:$0xff]
    %v3511 = vld [vmem:[%s3489 + $0xa8] sm:$0xff]
    %v3512 = vld [vmem:[%s3489 + $0xb0] sm:$0xff]
    %v3513 = vld [vmem:[%s3489 + $0xb8] sm:$0xff]
    %v3514 = vld [vmem:[%s3489 + $0xc0] sm:$0xff]
    %v3515 = vld [vmem:[%s3489 + $0xc8] sm:$0xff]
    %v3516 = vld [vmem:[%s3489 + $0xd0] sm:$0xff]
    %v3517 = vld [vmem:[%s3489 + $0xd8] sm:$0xff]
    %v3518 = vld [vmem:[%s3489 + $0xe0] sm:$0xff]
    %v3519 = vld [vmem:[%s3489 + $0xe8] sm:$0xff]
    %v3520 = vld [vmem:[%s3489 + $0xf0] sm:$0xff]
    %v3521 = vld [vmem:[%s3489 + $0xf8] sm:$0xff]
    %v3554 = vunpack.c.l.b16 %v3490
    %v3555 = vunpack.c.h.b16 %v3490
    %v3556 = vunpack.c.l.b16 %v3491
    %v3557 = vunpack.c.h.b16 %v3491
    %v3558 = vunpack.c.l.b16 %v3492
    %v3559 = vunpack.c.h.b16 %v3492
    %v3560 = vunpack.c.l.b16 %v3493
    %v3561 = vunpack.c.h.b16 %v3493
    %v3562 = vunpack.c.l.b16 %v3494
    %v3563 = vunpack.c.h.b16 %v3494
    %v3564 = vunpack.c.l.b16 %v3495
    %v3565 = vunpack.c.h.b16 %v3495
    %v3566 = vunpack.c.l.b16 %v3496
    %v3567 = vunpack.c.h.b16 %v3496
    %v3568 = vunpack.c.l.b16 %v3497
    %v3569 = vunpack.c.h.b16 %v3497
    %v3570 = vunpack.c.l.b16 %v3498
    %v3571 = vunpack.c.h.b16 %v3498
    %v3572 = vunpack.c.l.b16 %v3499
    %v3573 = vunpack.c.h.b16 %v3499
    %v3574 = vunpack.c.l.b16 %v3500
    %v3575 = vunpack.c.h.b16 %v3500
    %v3576 = vunpack.c.l.b16 %v3501
    %v3577 = vunpack.c.h.b16 %v3501
    %v3578 = vunpack.c.l.b16 %v3502
    %v3579 = vunpack.c.h.b16 %v3502
    %v3580 = vunpack.c.l.b16 %v3503
    %v3581 = vunpack.c.h.b16 %v3503
    %v3582 = vunpack.c.l.b16 %v3504
    %v3583 = vunpack.c.h.b16 %v3504
    %v3584 = vunpack.c.l.b16 %v3505
    %v3585 = vunpack.c.h.b16 %v3505
    %v3586 = vunpack.c.l.b16 %v3506
    %v3587 = vunpack.c.h.b16 %v3506
    %v3588 = vunpack.c.l.b16 %v3507
    %v3589 = vunpack.c.h.b16 %v3507
    %v3590 = vunpack.c.l.b16 %v3508
    %v3591 = vunpack.c.h.b16 %v3508
    %v3592 = vunpack.c.l.b16 %v3509
    %v3593 = vunpack.c.h.b16 %v3509
    %v3594 = vunpack.c.l.b16 %v3510
    %v3595 = vunpack.c.h.b16 %v3510
    %v3596 = vunpack.c.l.b16 %v3511
    %v3597 = vunpack.c.h.b16 %v3511
    %v3598 = vunpack.c.l.b16 %v3512
    %v3599 = vunpack.c.h.b16 %v3512
    %v3600 = vunpack.c.l.b16 %v3513
    %v3601 = vunpack.c.h.b16 %v3513
    %v3602 = vunpack.c.l.b16 %v3514
    %v3603 = vunpack.c.h.b16 %v3514
    %v3604 = vunpack.c.l.b16 %v3515
    %v3605 = vunpack.c.h.b16 %v3515
    %v3606 = vunpack.c.l.b16 %v3516
    %v3607 = vunpack.c.h.b16 %v3516
    %v3608 = vunpack.c.l.b16 %v3517
    %v3609 = vunpack.c.h.b16 %v3517
    %v3610 = vunpack.c.l.b16 %v3518
    %v3611 = vunpack.c.h.b16 %v3518
    %v3612 = vunpack.c.l.b16 %v3519
    %v3613 = vunpack.c.h.b16 %v3519
    %v3614 = vunpack.c.l.b16 %v3520
    %v3615 = vunpack.c.h.b16 %v3520
    %v3616 = vunpack.c.l.b16 %v3521
    %v3617 = vunpack.c.h.b16 %v3521
    %v3618 = vpack.c.b16 %v3558, %v3554
    %v3619 = vpack.c.b16 %v3559, %v3555
    %v3620 = vpack.c.b16 %v3560, %v3556
    %v3621 = vpack.c.b16 %v3561, %v3557
    %v3622 = vpack.c.b16 %v3566, %v3562
    %v3623 = vpack.c.b16 %v3567, %v3563
    %v3624 = vpack.c.b16 %v3568, %v3564
    %v3625 = vpack.c.b16 %v3569, %v3565
    %v3626 = vpack.c.b16 %v3574, %v3570
    %v3627 = vpack.c.b16 %v3575, %v3571
    %v3628 = vpack.c.b16 %v3576, %v3572
    %v3629 = vpack.c.b16 %v3577, %v3573
    %v3630 = vpack.c.b16 %v3582, %v3578
    %v3631 = vpack.c.b16 %v3583, %v3579
    %v3632 = vpack.c.b16 %v3584, %v3580
    %v3633 = vpack.c.b16 %v3585, %v3581
    %v3634 = vpack.c.b16 %v3590, %v3586
    %v3635 = vpack.c.b16 %v3591, %v3587
    %v3636 = vpack.c.b16 %v3592, %v3588
    %v3637 = vpack.c.b16 %v3593, %v3589
    %v3638 = vpack.c.b16 %v3598, %v3594
    %v3639 = vpack.c.b16 %v3599, %v3595
    %v3640 = vpack.c.b16 %v3600, %v3596
    %v3641 = vpack.c.b16 %v3601, %v3597
    %v3642 = vpack.c.b16 %v3606, %v3602
    %v3643 = vpack.c.b16 %v3607, %v3603
    %v3644 = vpack.c.b16 %v3608, %v3604
    %v3645 = vpack.c.b16 %v3609, %v3605
    %v3646 = vpack.c.b16 %v3614, %v3610
    %v3647 = vpack.c.b16 %v3615, %v3611
    %v3648 = vpack.c.b16 %v3616, %v3612
    %v3649 = vpack.c.b16 %v3617, %v3613
    %3682 = vmatprep.subr.bf16.mxu0 0
    %3683 = vmatpush1.bf16.msra.mxu0 %v1229
    %3684 = vmatprep.subr.bf16.mxu0 0
    %3685 = vmatpush1.bf16.msra.mxu0 %v1230
    %3686 = vmatprep.subr.bf16.mxu0 0
    %3687 = vmatpush1.bf16.msra.mxu0 %v1231
    %3688 = vmatprep.subr.bf16.mxu0 0
    %3689 = vmatpush1.bf16.msra.mxu0 %v1232
    %3690 = vmatprep.subr.bf16.mxu0 0
    %3691 = vmatpush1.bf16.msra.mxu0 %v1233
    %3692 = vmatprep.subr.bf16.mxu0 0
    %3693 = vmatpush1.bf16.msra.mxu0 %v1234
    %3694 = vmatprep.subr.bf16.mxu0 0
    %3695 = vmatpush1.bf16.msra.mxu0 %v1235
    %3696 = vmatprep.subr.bf16.mxu0 0
    %3697 = vmatpush1.bf16.msra.mxu0 %v1236
    %3698 = vmatprep.subr.bf16.mxu0 0
    %3699 = vmatpush1.bf16.msra.mxu0 %v1237
    %3700 = vmatprep.subr.bf16.mxu0 0
    %3701 = vmatpush1.bf16.msra.mxu0 %v1238
    %3702 = vmatprep.subr.bf16.mxu0 0
    %3703 = vmatpush1.bf16.msra.mxu0 %v1239
    %3704 = vmatprep.subr.bf16.mxu0 0
    %3705 = vmatpush1.bf16.msra.mxu0 %v1240
    %3706 = vmatprep.subr.bf16.mxu0 0
    %3707 = vmatpush1.bf16.msra.mxu0 %v1241
    %3708 = vmatprep.subr.bf16.mxu0 0
    %3709 = vmatpush1.bf16.msra.mxu0 %v1242
    %3710 = vmatprep.subr.bf16.mxu0 0
    %3711 = vmatpush1.bf16.msra.mxu0 %v1243
    %3712 = vmatprep.subr.bf16.mxu0 0
    %3713 = vmatpush1.bf16.msra.mxu0 %v1244
    %3714 = vmatprep.mubr.bf16.mxu0 %v3619
    %3715 = vmatmul.mubr.bf16.gmra.mrb[0].mxu0 %v3618
    %v3716 = vpop.f32.mrb[0].mxu0
    %v3717 = vadd.f32 0.0, %v3716
    %v3718 = vpop.f32.mrb[0].mxu0
    %v3719 = vpop.f32.mrb[0].mxu0
    %v3720 = vadd.f32 0.0, %v3719
    %v3721 = vpop.f32.mrb[0].mxu0
    %3722 = vmatprep.mubr.bf16.mxu0 %v3623
    %3723 = vmatmul.mubr.bf16.gmra.mrb[0].mxu0 %v3622
    %v3724 = vpop.f32.mrb[0].mxu0
    %v3725 = vadd.f32 0.0, %v3724
    %v3726 = vpop.f32.mrb[0].mxu0
    %v3727 = vpop.f32.mrb[0].mxu0
    %v3728 = vadd.f32 0.0, %v3727
    %v3729 = vpop.f32.mrb[0].mxu0
    %3730 = vmatprep.mubr.bf16.mxu0 %v3627
    %3731 = vmatmul.mubr.bf16.gmra.mrb[0].mxu0 %v3626
    %v3732 = vpop.f32.mrb[0].mxu0
    %v3733 = vadd.f32 0.0, %v3732
    %v3734 = vpop.f32.mrb[0].mxu0
    %v3735 = vpop.f32.mrb[0].mxu0
    %v3736 = vadd.f32 0.0, %v3735
    %v3737 = vpop.f32.mrb[0].mxu0
    %3738 = vmatprep.mubr.bf16.mxu0 %v3631
    %3739 = vmatmul.mubr.bf16.gmra.mrb[0].mxu0 %v3630
    %v3740 = vpop.f32.mrb[0].mxu0
    %v3741 = vadd.f32 0.0, %v3740
    %v3742 = vpop.f32.mrb[0].mxu0
    %v3743 = vpop.f32.mrb[0].mxu0
    %v3744 = vadd.f32 0.0, %v3743
    %v3745 = vpop.f32.mrb[0].mxu0
    %3746 = vmatprep.mubr.bf16.mxu0 %v3635
    %3747 = vmatmul.mubr.bf16.gmra.mrb[0].mxu0 %v3634
    %v3748 = vpop.f32.mrb[0].mxu0
    %v3749 = vadd.f32 0.0, %v3748
    %v3750 = vpop.f32.mrb[0].mxu0
    %v3751 = vpop.f32.mrb[0].mxu0
    %v3752 = vadd.f32 0.0, %v3751
    %v3753 = vpop.f32.mrb[0].mxu0
    %3754 = vmatprep.mubr.bf16.mxu0 %v3639
    %3755 = vmatmul.mubr.bf16.gmra.mrb[0].mxu0 %v3638
    %v3756 = vpop.f32.mrb[0].mxu0
    %v3757 = vadd.f32 0.0, %v3756
    %v3758 = vpop.f32.mrb[0].mxu0
    %v3759 = vpop.f32.mrb[0].mxu0
    %v3760 = vadd.f32 0.0, %v3759
    %v3761 = vpop.f32.mrb[0].mxu0
    %3762 = vmatprep.mubr.bf16.mxu0 %v3643
    %3763 = vmatmul.mubr.bf16.gmra.mrb[0].mxu0 %v3642
    %v3764 = vpop.f32.mrb[0].mxu0
    %v3765 = vadd.f32 0.0, %v3764
    %v3766 = vpop.f32.mrb[0].mxu0
    %v3767 = vpop.f32.mrb[0].mxu0
    %v3768 = vadd.f32 0.0, %v3767
    %v3769 = vpop.f32.mrb[0].mxu0
    %3770 = vmatprep.mubr.bf16.mxu0 %v3647
    %3771 = vmatmul.mubr.bf16.gmra.mrb[0].mxu0 %v3646
    %v3772 = vpop.f32.mrb[0].mxu0
    %v3773 = vadd.f32 0.0, %v3772
    %v3774 = vpop.f32.mrb[0].mxu0
    %v3775 = vpop.f32.mrb[0].mxu0
    %v3776 = vadd.f32 0.0, %v3775
    %v3777 = vpop.f32.mrb[0].mxu0
    %3778 = vdwg.mxu0
    %3779 = vmatprep.subr.bf16.mxu0 0
    %3780 = vmatpush1.bf16.msra.mxu0 %v1245
    %3781 = vmatprep.subr.bf16.mxu0 0
    %3782 = vmatpush1.bf16.msra.mxu0 %v1246
    %3783 = vmatprep.subr.bf16.mxu0 0
    %3784 = vmatpush1.bf16.msra.mxu0 %v1247
    %3785 = vmatprep.subr.bf16.mxu0 0
    %3786 = vmatpush1.bf16.msra.mxu0 %v1248
    %3787 = vmatprep.subr.bf16.mxu0 0
    %3788 = vmatpush1.bf16.msra.mxu0 %v1249
    %3789 = vmatprep.subr.bf16.mxu0 0
    %3790 = vmatpush1.bf16.msra.mxu0 %v1250
    %3791 = vmatprep.subr.bf16.mxu0 0
    %3792 = vmatpush1.bf16.msra.mxu0 %v1251
    %3793 = vmatprep.subr.bf16.mxu0 0
    %3794 = vmatpush1.bf16.msra.mxu0 %v1252
    %3795 = vmatprep.subr.bf16.mxu0 0
    %3796 = vmatpush1.bf16.msra.mxu0 %v1253
    %3797 = vmatprep.subr.bf16.mxu0 0
    %3798 = vmatpush1.bf16.msra.mxu0 %v1254
    %3799 = vmatprep.subr.bf16.mxu0 0
    %3800 = vmatpush1.bf16.msra.mxu0 %v1255
    %3801 = vmatprep.subr.bf16.mxu0 0
    %3802 = vmatpush1.bf16.msra.mxu0 %v1256
    %3803 = vmatprep.subr.bf16.mxu0 0
    %3804 = vmatpush1.bf16.msra.mxu0 %v1257
    %3805 = vmatprep.subr.bf16.mxu0 0
    %3806 = vmatpush1.bf16.msra.mxu0 %v1258
    %3807 = vmatprep.subr.bf16.mxu0 0
    %3808 = vmatpush1.bf16.msra.mxu0 %v1259
    %3809 = vmatprep.subr.bf16.mxu0 0
    %3810 = vmatpush1.bf16.msra.mxu0 %v1260
    %3811 = vmatprep.mubr.bf16.mxu0 %v3621
    %3812 = vmatmul.mubr.bf16.gmra.mrb[0].mxu0 %v3620
    %v3813 = vpop.f32.mrb[0].mxu0
    %v3814 = vadd.f32 %v3717, %v3813
    %v3815 = vpop.f32.mrb[0].mxu0
    %v3816 = vpop.f32.mrb[0].mxu0
    %v3817 = vadd.f32 %v3720, %v3816
    %v3818 = vpop.f32.mrb[0].mxu0
    %3819 = vmatprep.mubr.bf16.mxu0 %v3625
    %3820 = vmatmul.mubr.bf16.gmra.mrb[0].mxu0 %v3624
    %v3821 = vpop.f32.mrb[0].mxu0
    %v3822 = vadd.f32 %v3725, %v3821
    %v3823 = vpop.f32.mrb[0].mxu0
    %v3824 = vpop.f32.mrb[0].mxu0
    %v3825 = vadd.f32 %v3728, %v3824
    %v3826 = vpop.f32.mrb[0].mxu0
    %3827 = vmatprep.mubr.bf16.mxu0 %v3629
    %3828 = vmatmul.mubr.bf16.gmra.mrb[0].mxu0 %v3628
    %v3829 = vpop.f32.mrb[0].mxu0
    %v3830 = vadd.f32 %v3733, %v3829
    %v3831 = vpop.f32.mrb[0].mxu0
    %v3832 = vpop.f32.mrb[0].mxu0
    %v3833 = vadd.f32 %v3736, %v3832
    %v3834 = vpop.f32.mrb[0].mxu0
    %3835 = vmatprep.mubr.bf16.mxu0 %v3633
    %3836 = vmatmul.mubr.bf16.gmra.mrb[0].mxu0 %v3632
    %v3837 = vpop.f32.mrb[0].mxu0
    %v3838 = vadd.f32 %v3741, %v3837
    %v3839 = vpop.f32.mrb[0].mxu0
    %v3840 = vpop.f32.mrb[0].mxu0
    %v3841 = vadd.f32 %v3744, %v3840
    %v3842 = vpop.f32.mrb[0].mxu0
    %3843 = vmatprep.mubr.bf16.mxu0 %v3637
    %3844 = vmatmul.mubr.bf16.gmra.mrb[0].mxu0 %v3636
    %v3845 = vpop.f32.mrb[0].mxu0
    %v3846 = vadd.f32 %v3749, %v3845
    %v3847 = vpop.f32.mrb[0].mxu0
    %v3848 = vpop.f32.mrb[0].mxu0
    %v3849 = vadd.f32 %v3752, %v3848
    %v3850 = vpop.f32.mrb[0].mxu0
    %3851 = vmatprep.mubr.bf16.mxu0 %v3641
    %3852 = vmatmul.mubr.bf16.gmra.mrb[0].mxu0 %v3640
    %v3853 = vpop.f32.mrb[0].mxu0
    %v3854 = vadd.f32 %v3757, %v3853
    %v3855 = vpop.f32.mrb[0].mxu0
    %v3856 = vpop.f32.mrb[0].mxu0
    %v3857 = vadd.f32 %v3760, %v3856
    %v3858 = vpop.f32.mrb[0].mxu0
    %3859 = vmatprep.mubr.bf16.mxu0 %v3645
    %3860 = vmatmul.mubr.bf16.gmra.mrb[0].mxu0 %v3644
    %v3861 = vpop.f32.mrb[0].mxu0
    %v3862 = vadd.f32 %v3765, %v3861
    %v3863 = vpop.f32.mrb[0].mxu0
    %v3864 = vpop.f32.mrb[0].mxu0
    %v3865 = vadd.f32 %v3768, %v3864
    %v3866 = vpop.f32.mrb[0].mxu0
    %3867 = vmatprep.mubr.bf16.mxu0 %v3649
    %3868 = vmatmul.mubr.bf16.gmra.mrb[0].mxu0 %v3648
    %v3869 = vpop.f32.mrb[0].mxu0
    %v3870 = vadd.f32 %v3773, %v3869
    %v3871 = vpop.f32.mrb[0].mxu0
    %v3872 = vpop.f32.mrb[0].mxu0
    %v3873 = vadd.f32 %v3776, %v3872
    %v3874 = vpop.f32.mrb[0].mxu0
    %3875 = vdwg.mxu0
    %v3876 = vpack.c.bf16 %v3817, %v3814
    %v3877 = vpack.c.bf16 %v3825, %v3822
    %v3878 = vpack.c.bf16 %v3833, %v3830
    %v3879 = vpack.c.bf16 %v3841, %v3838
    %v3880 = vpack.c.bf16 %v3849, %v3846
    %v3881 = vpack.c.bf16 %v3857, %v3854
    %v3882 = vpack.c.bf16 %v3865, %v3862
    %v3883 = vpack.c.bf16 %v3873, %v3870
    %s3884 = scalar_lea.vmem %s5, 128
    %v3885 = vld [vmem:[%s3884] sm:$0xf]
    %v3886 = vld [vmem:[%s3884 + $0x4] sm:$0xf]
    %v3887 = vld [vmem:[%s3884 + $0x8] sm:$0xf]
    %v3888 = vld [vmem:[%s3884 + $0xc] sm:$0xf]
    %v3889 = vld [vmem:[%s3884 + $0x10] sm:$0xf]
    %v3890 = vld [vmem:[%s3884 + $0x14] sm:$0xf]
    %v3891 = vld [vmem:[%s3884 + $0x18] sm:$0xf]
    %v3892 = vld [vmem:[%s3884 + $0x1c] sm:$0xf]
    %v3901 = vunpack.c.l.b16 %v3885
    %v3902 = vunpack.c.l.b16 %v3886
    %v3903 = vunpack.c.l.b16 %v3887
    %v3904 = vunpack.c.l.b16 %v3888
    %v3905 = vunpack.c.l.b16 %v3889
    %v3906 = vunpack.c.l.b16 %v3890
    %v3907 = vunpack.c.l.b16 %v3891
    %v3908 = vunpack.c.l.b16 %v3892
    %v3909 = vpack.c.b16 %v3902, %v3901
    %v3910 = vpack.c.b16 %v3904, %v3903
    %v3911 = vpack.c.b16 %v3906, %v3905
    %v3912 = vpack.c.b16 %v3908, %v3907
    %v3918 = vsel %vm685, %v3876, 0
    %v3921 = vsel %vm685, %v3877, 0
    %v3924 = vsel %vm685, %v3878, 0
    %v3927 = vsel %vm685, %v3879, 0
    %v3930 = vsel %vm685, %v3880, 0
    %v3933 = vsel %vm685, %v3881, 0
    %v3936 = vsel %vm685, %v3882, 0
    %v3939 = vsel %vm685, %v3883, 0
    %3941 = vmatprep.subr.bf16.mxu0 0
    %3942 = vmatpush1.bf16.msra.mxu0 %v3909
    %3943 = vmatprep.subr.bf16.mxu0 0
    %3944 = vmatpush1.bf16.msra.mxu0 %v3910
    %3945 = vmatprep.subr.bf16.mxu0 0
    %3946 = vmatpush1.bf16.msra.mxu0 %v3911
    %3947 = vmatprep.subr.bf16.mxu0 0
    %3948 = vmatpush1.bf16.msra.mxu0 %v3912
    %3949 = vmatprep.subr.bf16.mxu0 0
    %3950 = vmatpush1.bf16.msra.mxu0 0
    %3951 = vmatprep.subr.bf16.mxu0 0
    %3952 = vmatpush1.bf16.msra.mxu0 0
    %3953 = vmatprep.subr.bf16.mxu0 0
    %3954 = vmatpush1.bf16.msra.mxu0 0
    %3955 = vmatprep.subr.bf16.mxu0 0
    %3956 = vmatpush1.bf16.msra.mxu0 0
    %3957 = vmatprep.subr.bf16.mxu0 0
    %3958 = vmatpush1.bf16.msra.mxu0 0
    %3959 = vmatprep.subr.bf16.mxu0 0
    %3960 = vmatpush1.bf16.msra.mxu0 0
    %3961 = vmatprep.subr.bf16.mxu0 0
    %3962 = vmatpush1.bf16.msra.mxu0 0
    %3963 = vmatprep.subr.bf16.mxu0 0
    %3964 = vmatpush1.bf16.msra.mxu0 0
    %3965 = vmatprep.subr.bf16.mxu0 0
    %3966 = vmatpush1.bf16.msra.mxu0 0
    %3967 = vmatprep.subr.bf16.mxu0 0
    %3968 = vmatpush1.bf16.msra.mxu0 0
    %3969 = vmatprep.subr.bf16.mxu0 0
    %3970 = vmatpush1.bf16.msra.mxu0 0
    %3971 = vmatprep.subr.bf16.mxu0 0
    %3972 = vmatpush1.bf16.msra.mxu0 0
    %3973 = vmatprep.mubr.bf16.mxu0 0
    %3974 = vmatmul.mubr.bf16.gmra.mrb[0].mxu0 %v3918
    %v3975 = vpop.f32.mrb[0].mxu0
    %v3976 = vadd.f32 0.0, %v3975
    %v3977 = vpop.f32.mrb[0].mxu0
    %v3978 = vpop.f32.mrb[0].mxu0
    %v3979 = vadd.f32 0.0, %v3978
    %v3980 = vpop.f32.mrb[0].mxu0
    %3981 = vmatprep.mubr.bf16.mxu0 0
    %3982 = vmatmul.mubr.bf16.gmra.mrb[0].mxu0 %v3921
    %v3983 = vpop.f32.mrb[0].mxu0
    %v3984 = vadd.f32 0.0, %v3983
    %v3985 = vpop.f32.mrb[0].mxu0
    %v3986 = vpop.f32.mrb[0].mxu0
    %v3987 = vadd.f32 0.0, %v3986
    %v3988 = vpop.f32.mrb[0].mxu0
    %3989 = vmatprep.mubr.bf16.mxu0 0
    %3990 = vmatmul.mubr.bf16.gmra.mrb[0].mxu0 %v3924
    %v3991 = vpop.f32.mrb[0].mxu0
    %v3992 = vadd.f32 0.0, %v3991
    %v3993 = vpop.f32.mrb[0].mxu0
    %v3994 = vpop.f32.mrb[0].mxu0
    %v3995 = vadd.f32 0.0, %v3994
    %v3996 = vpop.f32.mrb[0].mxu0
    %3997 = vmatprep.mubr.bf16.mxu0 0
    %3998 = vmatmul.mubr.bf16.gmra.mrb[0].mxu0 %v3927
    %v3999 = vpop.f32.mrb[0].mxu0
    %v4000 = vadd.f32 0.0, %v3999
    %v4001 = vpop.f32.mrb[0].mxu0
    %v4002 = vpop.f32.mrb[0].mxu0
    %v4003 = vadd.f32 0.0, %v4002
    %v4004 = vpop.f32.mrb[0].mxu0
    %4005 = vmatprep.mubr.bf16.mxu0 0
    %4006 = vmatmul.mubr.bf16.gmra.mrb[0].mxu0 %v3930
    %v4007 = vpop.f32.mrb[0].mxu0
    %v4008 = vadd.f32 0.0, %v4007
    %v4009 = vpop.f32.mrb[0].mxu0
    %v4010 = vpop.f32.mrb[0].mxu0
    %v4011 = vadd.f32 0.0, %v4010
    %v4012 = vpop.f32.mrb[0].mxu0
    %4013 = vmatprep.mubr.bf16.mxu0 0
    %4014 = vmatmul.mubr.bf16.gmra.mrb[0].mxu0 %v3933
    %v4015 = vpop.f32.mrb[0].mxu0
    %v4016 = vadd.f32 0.0, %v4015
    %v4017 = vpop.f32.mrb[0].mxu0
    %v4018 = vpop.f32.mrb[0].mxu0
    %v4019 = vadd.f32 0.0, %v4018
    %v4020 = vpop.f32.mrb[0].mxu0
    %4021 = vmatprep.mubr.bf16.mxu0 0
    %4022 = vmatmul.mubr.bf16.gmra.mrb[0].mxu0 %v3936
    %v4023 = vpop.f32.mrb[0].mxu0
    %v4024 = vadd.f32 0.0, %v4023
    %v4025 = vpop.f32.mrb[0].mxu0
    %v4026 = vpop.f32.mrb[0].mxu0
    %v4027 = vadd.f32 0.0, %v4026
    %v4028 = vpop.f32.mrb[0].mxu0
    %4029 = vmatprep.mubr.bf16.mxu0 0
    %4030 = vmatmul.mubr.bf16.gmra.mrb[0].mxu0 %v3939
    %v4031 = vpop.f32.mrb[0].mxu0
    %v4032 = vadd.f32 0.0, %v4031
    %v4033 = vpop.f32.mrb[0].mxu0
    %v4034 = vpop.f32.mrb[0].mxu0
    %v4035 = vadd.f32 0.0, %v4034
    %v4036 = vpop.f32.mrb[0].mxu0
    %4037 = vdwg.mxu0
    %v4038 = vadd.f32 %v3473, %v3976
    %v4039 = vadd.f32 %v3474, %v3979
    %v4040 = vadd.f32 %v3475, %v3984
    %v4041 = vadd.f32 %v3476, %v3987
    %v4042 = vadd.f32 %v3477, %v3992
    %v4043 = vadd.f32 %v3478, %v3995
    %v4044 = vadd.f32 %v3479, %v4000
    %v4045 = vadd.f32 %v3480, %v4003
    %v4046 = vadd.f32 %v3481, %v4008
    %v4047 = vadd.f32 %v3482, %v4011
    %v4048 = vadd.f32 %v3483, %v4016
    %v4049 = vadd.f32 %v3484, %v4019
    %v4050 = vadd.f32 %v3485, %v4024
    %v4051 = vadd.f32 %v3486, %v4027
    %v4052 = vadd.f32 %v3487, %v4032
    %v4053 = vadd.f32 %v3488, %v4035
    %s4054 = scalar_lea.vmem %s4, 1280
    %v4055 = vld [vmem:[%s4054] sm:$0xff]
    %v4056 = vld [vmem:[%s4054 + $0x8] sm:$0xff]
    %v4057 = vld [vmem:[%s4054 + $0x10] sm:$0xff]
    %v4058 = vld [vmem:[%s4054 + $0x18] sm:$0xff]
    %v4059 = vld [vmem:[%s4054 + $0x20] sm:$0xff]
    %v4060 = vld [vmem:[%s4054 + $0x28] sm:$0xff]
    %v4061 = vld [vmem:[%s4054 + $0x30] sm:$0xff]
    %v4062 = vld [vmem:[%s4054 + $0x38] sm:$0xff]
    %v4063 = vld [vmem:[%s4054 + $0x40] sm:$0xff]
    %v4064 = vld [vmem:[%s4054 + $0x48] sm:$0xff]
    %v4065 = vld [vmem:[%s4054 + $0x50] sm:$0xff]
    %v4066 = vld [vmem:[%s4054 + $0x58] sm:$0xff]
    %v4067 = vld [vmem:[%s4054 + $0x60] sm:$0xff]
    %v4068 = vld [vmem:[%s4054 + $0x68] sm:$0xff]
    %v4069 = vld [vmem:[%s4054 + $0x70] sm:$0xff]
    %v4070 = vld [vmem:[%s4054 + $0x78] sm:$0xff]
    %v4071 = vld [vmem:[%s4054 + $0x80] sm:$0xff]
    %v4072 = vld [vmem:[%s4054 + $0x88] sm:$0xff]
    %v4073 = vld [vmem:[%s4054 + $0x90] sm:$0xff]
    %v4074 = vld [vmem:[%s4054 + $0x98] sm:$0xff]
    %v4075 = vld [vmem:[%s4054 + $0xa0] sm:$0xff]
    %v4076 = vld [vmem:[%s4054 + $0xa8] sm:$0xff]
    %v4077 = vld [vmem:[%s4054 + $0xb0] sm:$0xff]
    %v4078 = vld [vmem:[%s4054 + $0xb8] sm:$0xff]
    %v4079 = vld [vmem:[%s4054 + $0xc0] sm:$0xff]
    %v4080 = vld [vmem:[%s4054 + $0xc8] sm:$0xff]
    %v4081 = vld [vmem:[%s4054 + $0xd0] sm:$0xff]
    %v4082 = vld [vmem:[%s4054 + $0xd8] sm:$0xff]
    %v4083 = vld [vmem:[%s4054 + $0xe0] sm:$0xff]
    %v4084 = vld [vmem:[%s4054 + $0xe8] sm:$0xff]
    %v4085 = vld [vmem:[%s4054 + $0xf0] sm:$0xff]
    %v4086 = vld [vmem:[%s4054 + $0xf8] sm:$0xff]
    %v4119 = vunpack.c.l.b16 %v4055
    %v4120 = vunpack.c.h.b16 %v4055
    %v4121 = vunpack.c.l.b16 %v4056
    %v4122 = vunpack.c.h.b16 %v4056
    %v4123 = vunpack.c.l.b16 %v4057
    %v4124 = vunpack.c.h.b16 %v4057
    %v4125 = vunpack.c.l.b16 %v4058
    %v4126 = vunpack.c.h.b16 %v4058
    %v4127 = vunpack.c.l.b16 %v4059
    %v4128 = vunpack.c.h.b16 %v4059
    %v4129 = vunpack.c.l.b16 %v4060
    %v4130 = vunpack.c.h.b16 %v4060
    %v4131 = vunpack.c.l.b16 %v4061
    %v4132 = vunpack.c.h.b16 %v4061
    %v4133 = vunpack.c.l.b16 %v4062
    %v4134 = vunpack.c.h.b16 %v4062
    %v4135 = vunpack.c.l.b16 %v4063
    %v4136 = vunpack.c.h.b16 %v4063
    %v4137 = vunpack.c.l.b16 %v4064
    %v4138 = vunpack.c.h.b16 %v4064
    %v4139 = vunpack.c.l.b16 %v4065
    %v4140 = vunpack.c.h.b16 %v4065
    %v4141 = vunpack.c.l.b16 %v4066
    %v4142 = vunpack.c.h.b16 %v4066
    %v4143 = vunpack.c.l.b16 %v4067
    %v4144 = vunpack.c.h.b16 %v4067
    %v4145 = vunpack.c.l.b16 %v4068
    %v4146 = vunpack.c.h.b16 %v4068
    %v4147 = vunpack.c.l.b16 %v4069
    %v4148 = vunpack.c.h.b16 %v4069
    %v4149 = vunpack.c.l.b16 %v4070
    %v4150 = vunpack.c.h.b16 %v4070
    %v4151 = vunpack.c.l.b16 %v4071
    %v4152 = vunpack.c.h.b16 %v4071
    %v4153 = vunpack.c.l.b16 %v4072
    %v4154 = vunpack.c.h.b16 %v4072
    %v4155 = vunpack.c.l.b16 %v4073
    %v4156 = vunpack.c.h.b16 %v4073
    %v4157 = vunpack.c.l.b16 %v4074
    %v4158 = vunpack.c.h.b16 %v4074
    %v4159 = vunpack.c.l.b16 %v4075
    %v4160 = vunpack.c.h.b16 %v4075
    %v4161 = vunpack.c.l.b16 %v4076
    %v4162 = vunpack.c.h.b16 %v4076
    %v4163 = vunpack.c.l.b16 %v4077
    %v4164 = vunpack.c.h.b16 %v4077
    %v4165 = vunpack.c.l.b16 %v4078
    %v4166 = vunpack.c.h.b16 %v4078
    %v4167 = vunpack.c.l.b16 %v4079
    %v4168 = vunpack.c.h.b16 %v4079
    %v4169 = vunpack.c.l.b16 %v4080
    %v4170 = vunpack.c.h.b16 %v4080
    %v4171 = vunpack.c.l.b16 %v4081
    %v4172 = vunpack.c.h.b16 %v4081
    %v4173 = vunpack.c.l.b16 %v4082
    %v4174 = vunpack.c.h.b16 %v4082
    %v4175 = vunpack.c.l.b16 %v4083
    %v4176 = vunpack.c.h.b16 %v4083
    %v4177 = vunpack.c.l.b16 %v4084
    %v4178 = vunpack.c.h.b16 %v4084
    %v4179 = vunpack.c.l.b16 %v4085
    %v4180 = vunpack.c.h.b16 %v4085
    %v4181 = vunpack.c.l.b16 %v4086
    %v4182 = vunpack.c.h.b16 %v4086
    %v4183 = vpack.c.b16 %v4123, %v4119
    %v4184 = vpack.c.b16 %v4124, %v4120
    %v4185 = vpack.c.b16 %v4125, %v4121
    %v4186 = vpack.c.b16 %v4126, %v4122
    %v4187 = vpack.c.b16 %v4131, %v4127
    %v4188 = vpack.c.b16 %v4132, %v4128
    %v4189 = vpack.c.b16 %v4133, %v4129
    %v4190 = vpack.c.b16 %v4134, %v4130
    %v4191 = vpack.c.b16 %v4139, %v4135
    %v4192 = vpack.c.b16 %v4140, %v4136
    %v4193 = vpack.c.b16 %v4141, %v4137
    %v4194 = vpack.c.b16 %v4142, %v4138
    %v4195 = vpack.c.b16 %v4147, %v4143
    %v4196 = vpack.c.b16 %v4148, %v4144
    %v4197 = vpack.c.b16 %v4149, %v4145
    %v4198 = vpack.c.b16 %v4150, %v4146
    %v4199 = vpack.c.b16 %v4155, %v4151
    %v4200 = vpack.c.b16 %v4156, %v4152
    %v4201 = vpack.c.b16 %v4157, %v4153
    %v4202 = vpack.c.b16 %v4158, %v4154
    %v4203 = vpack.c.b16 %v4163, %v4159
    %v4204 = vpack.c.b16 %v4164, %v4160
    %v4205 = vpack.c.b16 %v4165, %v4161
    %v4206 = vpack.c.b16 %v4166, %v4162
    %v4207 = vpack.c.b16 %v4171, %v4167
    %v4208 = vpack.c.b16 %v4172, %v4168
    %v4209 = vpack.c.b16 %v4173, %v4169
    %v4210 = vpack.c.b16 %v4174, %v4170
    %v4211 = vpack.c.b16 %v4179, %v4175
    %v4212 = vpack.c.b16 %v4180, %v4176
    %v4213 = vpack.c.b16 %v4181, %v4177
    %v4214 = vpack.c.b16 %v4182, %v4178
    %4247 = vmatprep.subr.bf16.mxu0 0
    %4248 = vmatpush1.bf16.msra.mxu0 %v1229
    %4249 = vmatprep.subr.bf16.mxu0 0
    %4250 = vmatpush1.bf16.msra.mxu0 %v1230
    %4251 = vmatprep.subr.bf16.mxu0 0
    %4252 = vmatpush1.bf16.msra.mxu0 %v1231
    %4253 = vmatprep.subr.bf16.mxu0 0
    %4254 = vmatpush1.bf16.msra.mxu0 %v1232
    %4255 = vmatprep.subr.bf16.mxu0 0
    %4256 = vmatpush1.bf16.msra.mxu0 %v1233
    %4257 = vmatprep.subr.bf16.mxu0 0
    %4258 = vmatpush1.bf16.msra.mxu0 %v1234
    %4259 = vmatprep.subr.bf16.mxu0 0
    %4260 = vmatpush1.bf16.msra.mxu0 %v1235
    %4261 = vmatprep.subr.bf16.mxu0 0
    %4262 = vmatpush1.bf16.msra.mxu0 %v1236
    %4263 = vmatprep.subr.bf16.mxu0 0
    %4264 = vmatpush1.bf16.msra.mxu0 %v1237
    %4265 = vmatprep.subr.bf16.mxu0 0
    %4266 = vmatpush1.bf16.msra.mxu0 %v1238
    %4267 = vmatprep.subr.bf16.mxu0 0
    %4268 = vmatpush1.bf16.msra.mxu0 %v1239
    %4269 = vmatprep.subr.bf16.mxu0 0
    %4270 = vmatpush1.bf16.msra.mxu0 %v1240
    %4271 = vmatprep.subr.bf16.mxu0 0
    %4272 = vmatpush1.bf16.msra.mxu0 %v1241
    %4273 = vmatprep.subr.bf16.mxu0 0
    %4274 = vmatpush1.bf16.msra.mxu0 %v1242
    %4275 = vmatprep.subr.bf16.mxu0 0
    %4276 = vmatpush1.bf16.msra.mxu0 %v1243
    %4277 = vmatprep.subr.bf16.mxu0 0
    %4278 = vmatpush1.bf16.msra.mxu0 %v1244
    %4279 = vmatprep.mubr.bf16.mxu0 %v4184
    %4280 = vmatmul.mubr.bf16.gmra.mrb[0].mxu0 %v4183
    %v4281 = vpop.f32.mrb[0].mxu0
    %v4282 = vadd.f32 0.0, %v4281
    %v4283 = vpop.f32.mrb[0].mxu0
    %v4284 = vpop.f32.mrb[0].mxu0
    %v4285 = vadd.f32 0.0, %v4284
    %v4286 = vpop.f32.mrb[0].mxu0
    %4287 = vmatprep.mubr.bf16.mxu0 %v4188
    %4288 = vmatmul.mubr.bf16.gmra.mrb[0].mxu0 %v4187
    %v4289 = vpop.f32.mrb[0].mxu0
    %v4290 = vadd.f32 0.0, %v4289
    %v4291 = vpop.f32.mrb[0].mxu0
    %v4292 = vpop.f32.mrb[0].mxu0
    %v4293 = vadd.f32 0.0, %v4292
    %v4294 = vpop.f32.mrb[0].mxu0
    %4295 = vmatprep.mubr.bf16.mxu0 %v4192
    %4296 = vmatmul.mubr.bf16.gmra.mrb[0].mxu0 %v4191
    %v4297 = vpop.f32.mrb[0].mxu0
    %v4298 = vadd.f32 0.0, %v4297
    %v4299 = vpop.f32.mrb[0].mxu0
    %v4300 = vpop.f32.mrb[0].mxu0
    %v4301 = vadd.f32 0.0, %v4300
    %v4302 = vpop.f32.mrb[0].mxu0
    %4303 = vmatprep.mubr.bf16.mxu0 %v4196
    %4304 = vmatmul.mubr.bf16.gmra.mrb[0].mxu0 %v4195
    %v4305 = vpop.f32.mrb[0].mxu0
    %v4306 = vadd.f32 0.0, %v4305
    %v4307 = vpop.f32.mrb[0].mxu0
    %v4308 = vpop.f32.mrb[0].mxu0
    %v4309 = vadd.f32 0.0, %v4308
    %v4310 = vpop.f32.mrb[0].mxu0
    %4311 = vmatprep.mubr.bf16.mxu0 %v4200
    %4312 = vmatmul.mubr.bf16.gmra.mrb[0].mxu0 %v4199
    %v4313 = vpop.f32.mrb[0].mxu0
    %v4314 = vadd.f32 0.0, %v4313
    %v4315 = vpop.f32.mrb[0].mxu0
    %v4316 = vpop.f32.mrb[0].mxu0
    %v4317 = vadd.f32 0.0, %v4316
    %v4318 = vpop.f32.mrb[0].mxu0
    %4319 = vmatprep.mubr.bf16.mxu0 %v4204
    %4320 = vmatmul.mubr.bf16.gmra.mrb[0].mxu0 %v4203
    %v4321 = vpop.f32.mrb[0].mxu0
    %v4322 = vadd.f32 0.0, %v4321
    %v4323 = vpop.f32.mrb[0].mxu0
    %v4324 = vpop.f32.mrb[0].mxu0
    %v4325 = vadd.f32 0.0, %v4324
    %v4326 = vpop.f32.mrb[0].mxu0
    %4327 = vmatprep.mubr.bf16.mxu0 %v4208
    %4328 = vmatmul.mubr.bf16.gmra.mrb[0].mxu0 %v4207
    %v4329 = vpop.f32.mrb[0].mxu0
    %v4330 = vadd.f32 0.0, %v4329
    %v4331 = vpop.f32.mrb[0].mxu0
    %v4332 = vpop.f32.mrb[0].mxu0
    %v4333 = vadd.f32 0.0, %v4332
    %v4334 = vpop.f32.mrb[0].mxu0
    %4335 = vmatprep.mubr.bf16.mxu0 %v4212
    %4336 = vmatmul.mubr.bf16.gmra.mrb[0].mxu0 %v4211
    %v4337 = vpop.f32.mrb[0].mxu0
    %v4338 = vadd.f32 0.0, %v4337
    %v4339 = vpop.f32.mrb[0].mxu0
    %v4340 = vpop.f32.mrb[0].mxu0
    %v4341 = vadd.f32 0.0, %v4340
    %v4342 = vpop.f32.mrb[0].mxu0
    %4343 = vdwg.mxu0
    %4344 = vmatprep.subr.bf16.mxu0 0
    %4345 = vmatpush1.bf16.msra.mxu0 %v1245
    %4346 = vmatprep.subr.bf16.mxu0 0
    %4347 = vmatpush1.bf16.msra.mxu0 %v1246
    %4348 = vmatprep.subr.bf16.mxu0 0
    %4349 = vmatpush1.bf16.msra.mxu0 %v1247
    %4350 = vmatprep.subr.bf16.mxu0 0
    %4351 = vmatpush1.bf16.msra.mxu0 %v1248
    %4352 = vmatprep.subr.bf16.mxu0 0
    %4353 = vmatpush1.bf16.msra.mxu0 %v1249
    %4354 = vmatprep.subr.bf16.mxu0 0
    %4355 = vmatpush1.bf16.msra.mxu0 %v1250
    %4356 = vmatprep.subr.bf16.mxu0 0
    %4357 = vmatpush1.bf16.msra.mxu0 %v1251
    %4358 = vmatprep.subr.bf16.mxu0 0
    %4359 = vmatpush1.bf16.msra.mxu0 %v1252
    %4360 = vmatprep.subr.bf16.mxu0 0
    %4361 = vmatpush1.bf16.msra.mxu0 %v1253
    %4362 = vmatprep.subr.bf16.mxu0 0
    %4363 = vmatpush1.bf16.msra.mxu0 %v1254
    %4364 = vmatprep.subr.bf16.mxu0 0
    %4365 = vmatpush1.bf16.msra.mxu0 %v1255
    %4366 = vmatprep.subr.bf16.mxu0 0
    %4367 = vmatpush1.bf16.msra.mxu0 %v1256
    %4368 = vmatprep.subr.bf16.mxu0 0
    %4369 = vmatpush1.bf16.msra.mxu0 %v1257
    %4370 = vmatprep.subr.bf16.mxu0 0
    %4371 = vmatpush1.bf16.msra.mxu0 %v1258
    %4372 = vmatprep.subr.bf16.mxu0 0
    %4373 = vmatpush1.bf16.msra.mxu0 %v1259
    %4374 = vmatprep.subr.bf16.mxu0 0
    %4375 = vmatpush1.bf16.msra.mxu0 %v1260
    %4376 = vmatprep.mubr.bf16.mxu0 %v4186
    %4377 = vmatmul.mubr.bf16.gmra.mrb[0].mxu0 %v4185
    %v4378 = vpop.f32.mrb[0].mxu0
    %v4379 = vadd.f32 %v4282, %v4378
    %v4380 = vpop.f32.mrb[0].mxu0
    %v4381 = vpop.f32.mrb[0].mxu0
    %v4382 = vadd.f32 %v4285, %v4381
    %v4383 = vpop.f32.mrb[0].mxu0
    %4384 = vmatprep.mubr.bf16.mxu0 %v4190
    %4385 = vmatmul.mubr.bf16.gmra.mrb[0].mxu0 %v4189
    %v4386 = vpop.f32.mrb[0].mxu0
    %v4387 = vadd.f32 %v4290, %v4386
    %v4388 = vpop.f32.mrb[0].mxu0
    %v4389 = vpop.f32.mrb[0].mxu0
    %v4390 = vadd.f32 %v4293, %v4389
    %v4391 = vpop.f32.mrb[0].mxu0
    %4392 = vmatprep.mubr.bf16.mxu0 %v4194
    %4393 = vmatmul.mubr.bf16.gmra.mrb[0].mxu0 %v4193
    %v4394 = vpop.f32.mrb[0].mxu0
    %v4395 = vadd.f32 %v4298, %v4394
    %v4396 = vpop.f32.mrb[0].mxu0
    %v4397 = vpop.f32.mrb[0].mxu0
    %v4398 = vadd.f32 %v4301, %v4397
    %v4399 = vpop.f32.mrb[0].mxu0
    %4400 = vmatprep.mubr.bf16.mxu0 %v4198
    %4401 = vmatmul.mubr.bf16.gmra.mrb[0].mxu0 %v4197
    %v4402 = vpop.f32.mrb[0].mxu0
    %v4403 = vadd.f32 %v4306, %v4402
    %v4404 = vpop.f32.mrb[0].mxu0
    %v4405 = vpop.f32.mrb[0].mxu0
    %v4406 = vadd.f32 %v4309, %v4405
    %v4407 = vpop.f32.mrb[0].mxu0
    %4408 = vmatprep.mubr.bf16.mxu0 %v4202
    %4409 = vmatmul.mubr.bf16.gmra.mrb[0].mxu0 %v4201
    %v4410 = vpop.f32.mrb[0].mxu0
    %v4411 = vadd.f32 %v4314, %v4410
    %v4412 = vpop.f32.mrb[0].mxu0
    %v4413 = vpop.f32.mrb[0].mxu0
    %v4414 = vadd.f32 %v4317, %v4413
    %v4415 = vpop.f32.mrb[0].mxu0
    %4416 = vmatprep.mubr.bf16.mxu0 %v4206
    %4417 = vmatmul.mubr.bf16.gmra.mrb[0].mxu0 %v4205
    %v4418 = vpop.f32.mrb[0].mxu0
    %v4419 = vadd.f32 %v4322, %v4418
    %v4420 = vpop.f32.mrb[0].mxu0
    %v4421 = vpop.f32.mrb[0].mxu0
    %v4422 = vadd.f32 %v4325, %v4421
    %v4423 = vpop.f32.mrb[0].mxu0
    %4424 = vmatprep.mubr.bf16.mxu0 %v4210
    %4425 = vmatmul.mubr.bf16.gmra.mrb[0].mxu0 %v4209
    %v4426 = vpop.f32.mrb[0].mxu0
    %v4427 = vadd.f32 %v4330, %v4426
    %v4428 = vpop.f32.mrb[0].mxu0
    %v4429 = vpop.f32.mrb[0].mxu0
    %v4430 = vadd.f32 %v4333, %v4429
    %v4431 = vpop.f32.mrb[0].mxu0
    %4432 = vmatprep.mubr.bf16.mxu0 %v4214
    %4433 = vmatmul.mubr.bf16.gmra.mrb[0].mxu0 %v4213
    %v4434 = vpop.f32.mrb[0].mxu0
    %v4435 = vadd.f32 %v4338, %v4434
    %v4436 = vpop.f32.mrb[0].mxu0
    %v4437 = vpop.f32.mrb[0].mxu0
    %v4438 = vadd.f32 %v4341, %v4437
    %v4439 = vpop.f32.mrb[0].mxu0
    %4440 = vdwg.mxu0
    %v4441 = vpack.c.bf16 %v4382, %v4379
    %v4442 = vpack.c.bf16 %v4390, %v4387
    %v4443 = vpack.c.bf16 %v4398, %v4395
    %v4444 = vpack.c.bf16 %v4406, %v4403
    %v4445 = vpack.c.bf16 %v4414, %v4411
    %v4446 = vpack.c.bf16 %v4422, %v4419
    %v4447 = vpack.c.bf16 %v4430, %v4427
    %v4448 = vpack.c.bf16 %v4438, %v4435
    %s4449 = scalar_lea.vmem %s5, 160
    %v4450 = vld [vmem:[%s4449] sm:$0xf]
    %v4451 = vld [vmem:[%s4449 + $0x4] sm:$0xf]
    %v4452 = vld [vmem:[%s4449 + $0x8] sm:$0xf]
    %v4453 = vld [vmem:[%s4449 + $0xc] sm:$0xf]
    %v4454 = vld [vmem:[%s4449 + $0x10] sm:$0xf]
    %v4455 = vld [vmem:[%s4449 + $0x14] sm:$0xf]
    %v4456 = vld [vmem:[%s4449 + $0x18] sm:$0xf]
    %v4457 = vld [vmem:[%s4449 + $0x1c] sm:$0xf]
    %v4466 = vunpack.c.l.b16 %v4450
    %v4467 = vunpack.c.l.b16 %v4451
    %v4468 = vunpack.c.l.b16 %v4452
    %v4469 = vunpack.c.l.b16 %v4453
    %v4470 = vunpack.c.l.b16 %v4454
    %v4471 = vunpack.c.l.b16 %v4455
    %v4472 = vunpack.c.l.b16 %v4456
    %v4473 = vunpack.c.l.b16 %v4457
    %v4474 = vpack.c.b16 %v4467, %v4466
    %v4475 = vpack.c.b16 %v4469, %v4468
    %v4476 = vpack.c.b16 %v4471, %v4470
    %v4477 = vpack.c.b16 %v4473, %v4472
    %v4483 = vsel %vm685, %v4441, 0
    %v4486 = vsel %vm685, %v4442, 0
    %v4489 = vsel %vm685, %v4443, 0
    %v4492 = vsel %vm685, %v4444, 0
    %v4495 = vsel %vm685, %v4445, 0
    %v4498 = vsel %vm685, %v4446, 0
    %v4501 = vsel %vm685, %v4447, 0
    %v4504 = vsel %vm685, %v4448, 0
    %4506 = vmatprep.subr.bf16.mxu0 0
    %4507 = vmatpush1.bf16.msra.mxu0 %v4474
    %4508 = vmatprep.subr.bf16.mxu0 0
    %4509 = vmatpush1.bf16.msra.mxu0 %v4475
    %4510 = vmatprep.subr.bf16.mxu0 0
    %4511 = vmatpush1.bf16.msra.mxu0 %v4476
    %4512 = vmatprep.subr.bf16.mxu0 0
    %4513 = vmatpush1.bf16.msra.mxu0 %v4477
    %4514 = vmatprep.subr.bf16.mxu0 0
    %4515 = vmatpush1.bf16.msra.mxu0 0
    %4516 = vmatprep.subr.bf16.mxu0 0
    %4517 = vmatpush1.bf16.msra.mxu0 0
    %4518 = vmatprep.subr.bf16.mxu0 0
    %4519 = vmatpush1.bf16.msra.mxu0 0
    %4520 = vmatprep.subr.bf16.mxu0 0
    %4521 = vmatpush1.bf16.msra.mxu0 0
    %4522 = vmatprep.subr.bf16.mxu0 0
    %4523 = vmatpush1.bf16.msra.mxu0 0
    %4524 = vmatprep.subr.bf16.mxu0 0
    %4525 = vmatpush1.bf16.msra.mxu0 0
    %4526 = vmatprep.subr.bf16.mxu0 0
    %4527 = vmatpush1.bf16.msra.mxu0 0
    %4528 = vmatprep.subr.bf16.mxu0 0
    %4529 = vmatpush1.bf16.msra.mxu0 0
    %4530 = vmatprep.subr.bf16.mxu0 0
    %4531 = vmatpush1.bf16.msra.mxu0 0
    %4532 = vmatprep.subr.bf16.mxu0 0
    %4533 = vmatpush1.bf16.msra.mxu0 0
    %4534 = vmatprep.subr.bf16.mxu0 0
    %4535 = vmatpush1.bf16.msra.mxu0 0
    %4536 = vmatprep.subr.bf16.mxu0 0
    %4537 = vmatpush1.bf16.msra.mxu0 0
    %4538 = vmatprep.mubr.bf16.mxu0 0
    %4539 = vmatmul.mubr.bf16.gmra.mrb[0].mxu0 %v4483
    %v4540 = vpop.f32.mrb[0].mxu0
    %v4541 = vadd.f32 0.0, %v4540
    %v4542 = vpop.f32.mrb[0].mxu0
    %v4543 = vpop.f32.mrb[0].mxu0
    %v4544 = vadd.f32 0.0, %v4543
    %v4545 = vpop.f32.mrb[0].mxu0
    %4546 = vmatprep.mubr.bf16.mxu0 0
    %4547 = vmatmul.mubr.bf16.gmra.mrb[0].mxu0 %v4486
    %v4548 = vpop.f32.mrb[0].mxu0
    %v4549 = vadd.f32 0.0, %v4548
    %v4550 = vpop.f32.mrb[0].mxu0
    %v4551 = vpop.f32.mrb[0].mxu0
    %v4552 = vadd.f32 0.0, %v4551
    %v4553 = vpop.f32.mrb[0].mxu0
    %4554 = vmatprep.mubr.bf16.mxu0 0
    %4555 = vmatmul.mubr.bf16.gmra.mrb[0].mxu0 %v4489
    %v4556 = vpop.f32.mrb[0].mxu0
    %v4557 = vadd.f32 0.0, %v4556
    %v4558 = vpop.f32.mrb[0].mxu0
    %v4559 = vpop.f32.mrb[0].mxu0
    %v4560 = vadd.f32 0.0, %v4559
    %v4561 = vpop.f32.mrb[0].mxu0
    %4562 = vmatprep.mubr.bf16.mxu0 0
    %4563 = vmatmul.mubr.bf16.gmra.mrb[0].mxu0 %v4492
    %v4564 = vpop.f32.mrb[0].mxu0
    %v4565 = vadd.f32 0.0, %v4564
    %v4566 = vpop.f32.mrb[0].mxu0
    %v4567 = vpop.f32.mrb[0].mxu0
    %v4568 = vadd.f32 0.0, %v4567
    %v4569 = vpop.f32.mrb[0].mxu0
    %4570 = vmatprep.mubr.bf16.mxu0 0
    %4571 = vmatmul.mubr.bf16.gmra.mrb[0].mxu0 %v4495
    %v4572 = vpop.f32.mrb[0].mxu0
    %v4573 = vadd.f32 0.0, %v4572
    %v4574 = vpop.f32.mrb[0].mxu0
    %v4575 = vpop.f32.mrb[0].mxu0
    %v4576 = vadd.f32 0.0, %v4575
    %v4577 = vpop.f32.mrb[0].mxu0
    %4578 = vmatprep.mubr.bf16.mxu0 0
    %4579 = vmatmul.mubr.bf16.gmra.mrb[0].mxu0 %v4498
    %v4580 = vpop.f32.mrb[0].mxu0
    %v4581 = vadd.f32 0.0, %v4580
    %v4582 = vpop.f32.mrb[0].mxu0
    %v4583 = vpop.f32.mrb[0].mxu0
    %v4584 = vadd.f32 0.0, %v4583
    %v4585 = vpop.f32.mrb[0].mxu0
    %4586 = vmatprep.mubr.bf16.mxu0 0
    %4587 = vmatmul.mubr.bf16.gmra.mrb[0].mxu0 %v4501
    %v4588 = vpop.f32.mrb[0].mxu0
    %v4589 = vadd.f32 0.0, %v4588
    %v4590 = vpop.f32.mrb[0].mxu0
    %v4591 = vpop.f32.mrb[0].mxu0
    %v4592 = vadd.f32 0.0, %v4591
    %v4593 = vpop.f32.mrb[0].mxu0
    %4594 = vmatprep.mubr.bf16.mxu0 0
    %4595 = vmatmul.mubr.bf16.gmra.mrb[0].mxu0 %v4504
    %v4596 = vpop.f32.mrb[0].mxu0
    %v4597 = vadd.f32 0.0, %v4596
    %v4598 = vpop.f32.mrb[0].mxu0
    %v4599 = vpop.f32.mrb[0].mxu0
    %v4600 = vadd.f32 0.0, %v4599
    %v4601 = vpop.f32.mrb[0].mxu0
    %4602 = vdwg.mxu0
    %v4603 = vadd.f32 %v4038, %v4541
    %v4604 = vadd.f32 %v4039, %v4544
    %v4605 = vadd.f32 %v4040, %v4549
    %v4606 = vadd.f32 %v4041, %v4552
    %v4607 = vadd.f32 %v4042, %v4557
    %v4608 = vadd.f32 %v4043, %v4560
    %v4609 = vadd.f32 %v4044, %v4565
    %v4610 = vadd.f32 %v4045, %v4568
    %v4611 = vadd.f32 %v4046, %v4573
    %v4612 = vadd.f32 %v4047, %v4576
    %v4613 = vadd.f32 %v4048, %v4581
    %v4614 = vadd.f32 %v4049, %v4584
    %v4615 = vadd.f32 %v4050, %v4589
    %v4616 = vadd.f32 %v4051, %v4592
    %v4617 = vadd.f32 %v4052, %v4597
    %v4618 = vadd.f32 %v4053, %v4600
    %s4619 = scalar_lea.vmem %s4, 1536
    %v4620 = vld [vmem:[%s4619] sm:$0xff]
    %v4621 = vld [vmem:[%s4619 + $0x8] sm:$0xff]
    %v4622 = vld [vmem:[%s4619 + $0x10] sm:$0xff]
    %v4623 = vld [vmem:[%s4619 + $0x18] sm:$0xff]
    %v4624 = vld [vmem:[%s4619 + $0x20] sm:$0xff]
    %v4625 = vld [vmem:[%s4619 + $0x28] sm:$0xff]
    %v4626 = vld [vmem:[%s4619 + $0x30] sm:$0xff]
    %v4627 = vld [vmem:[%s4619 + $0x38] sm:$0xff]
    %v4628 = vld [vmem:[%s4619 + $0x40] sm:$0xff]
    %v4629 = vld [vmem:[%s4619 + $0x48] sm:$0xff]
    %v4630 = vld [vmem:[%s4619 + $0x50] sm:$0xff]
    %v4631 = vld [vmem:[%s4619 + $0x58] sm:$0xff]
    %v4632 = vld [vmem:[%s4619 + $0x60] sm:$0xff]
    %v4633 = vld [vmem:[%s4619 + $0x68] sm:$0xff]
    %v4634 = vld [vmem:[%s4619 + $0x70] sm:$0xff]
    %v4635 = vld [vmem:[%s4619 + $0x78] sm:$0xff]
    %v4636 = vld [vmem:[%s4619 + $0x80] sm:$0xff]
    %v4637 = vld [vmem:[%s4619 + $0x88] sm:$0xff]
    %v4638 = vld [vmem:[%s4619 + $0x90] sm:$0xff]
    %v4639 = vld [vmem:[%s4619 + $0x98] sm:$0xff]
    %v4640 = vld [vmem:[%s4619 + $0xa0] sm:$0xff]
    %v4641 = vld [vmem:[%s4619 + $0xa8] sm:$0xff]
    %v4642 = vld [vmem:[%s4619 + $0xb0] sm:$0xff]
    %v4643 = vld [vmem:[%s4619 + $0xb8] sm:$0xff]
    %v4644 = vld [vmem:[%s4619 + $0xc0] sm:$0xff]
    %v4645 = vld [vmem:[%s4619 + $0xc8] sm:$0xff]
    %v4646 = vld [vmem:[%s4619 + $0xd0] sm:$0xff]
    %v4647 = vld [vmem:[%s4619 + $0xd8] sm:$0xff]
    %v4648 = vld [vmem:[%s4619 + $0xe0] sm:$0xff]
    %v4649 = vld [vmem:[%s4619 + $0xe8] sm:$0xff]
    %v4650 = vld [vmem:[%s4619 + $0xf0] sm:$0xff]
    %v4651 = vld [vmem:[%s4619 + $0xf8] sm:$0xff]
    %v4684 = vunpack.c.l.b16 %v4620
    %v4685 = vunpack.c.h.b16 %v4620
    %v4686 = vunpack.c.l.b16 %v4621
    %v4687 = vunpack.c.h.b16 %v4621
    %v4688 = vunpack.c.l.b16 %v4622
    %v4689 = vunpack.c.h.b16 %v4622
    %v4690 = vunpack.c.l.b16 %v4623
    %v4691 = vunpack.c.h.b16 %v4623
    %v4692 = vunpack.c.l.b16 %v4624
    %v4693 = vunpack.c.h.b16 %v4624
    %v4694 = vunpack.c.l.b16 %v4625
    %v4695 = vunpack.c.h.b16 %v4625
    %v4696 = vunpack.c.l.b16 %v4626
    %v4697 = vunpack.c.h.b16 %v4626
    %v4698 = vunpack.c.l.b16 %v4627
    %v4699 = vunpack.c.h.b16 %v4627
    %v4700 = vunpack.c.l.b16 %v4628
    %v4701 = vunpack.c.h.b16 %v4628
    %v4702 = vunpack.c.l.b16 %v4629
    %v4703 = vunpack.c.h.b16 %v4629
    %v4704 = vunpack.c.l.b16 %v4630
    %v4705 = vunpack.c.h.b16 %v4630
    %v4706 = vunpack.c.l.b16 %v4631
    %v4707 = vunpack.c.h.b16 %v4631
    %v4708 = vunpack.c.l.b16 %v4632
    %v4709 = vunpack.c.h.b16 %v4632
    %v4710 = vunpack.c.l.b16 %v4633
    %v4711 = vunpack.c.h.b16 %v4633
    %v4712 = vunpack.c.l.b16 %v4634
    %v4713 = vunpack.c.h.b16 %v4634
    %v4714 = vunpack.c.l.b16 %v4635
    %v4715 = vunpack.c.h.b16 %v4635
    %v4716 = vunpack.c.l.b16 %v4636
    %v4717 = vunpack.c.h.b16 %v4636
    %v4718 = vunpack.c.l.b16 %v4637
    %v4719 = vunpack.c.h.b16 %v4637
    %v4720 = vunpack.c.l.b16 %v4638
    %v4721 = vunpack.c.h.b16 %v4638
    %v4722 = vunpack.c.l.b16 %v4639
    %v4723 = vunpack.c.h.b16 %v4639
    %v4724 = vunpack.c.l.b16 %v4640
    %v4725 = vunpack.c.h.b16 %v4640
    %v4726 = vunpack.c.l.b16 %v4641
    %v4727 = vunpack.c.h.b16 %v4641
    %v4728 = vunpack.c.l.b16 %v4642
    %v4729 = vunpack.c.h.b16 %v4642
    %v4730 = vunpack.c.l.b16 %v4643
    %v4731 = vunpack.c.h.b16 %v4643
    %v4732 = vunpack.c.l.b16 %v4644
    %v4733 = vunpack.c.h.b16 %v4644
    %v4734 = vunpack.c.l.b16 %v4645
    %v4735 = vunpack.c.h.b16 %v4645
    %v4736 = vunpack.c.l.b16 %v4646
    %v4737 = vunpack.c.h.b16 %v4646
    %v4738 = vunpack.c.l.b16 %v4647
    %v4739 = vunpack.c.h.b16 %v4647
    %v4740 = vunpack.c.l.b16 %v4648
    %v4741 = vunpack.c.h.b16 %v4648
    %v4742 = vunpack.c.l.b16 %v4649
    %v4743 = vunpack.c.h.b16 %v4649
    %v4744 = vunpack.c.l.b16 %v4650
    %v4745 = vunpack.c.h.b16 %v4650
    %v4746 = vunpack.c.l.b16 %v4651
    %v4747 = vunpack.c.h.b16 %v4651
    %v4748 = vpack.c.b16 %v4688, %v4684
    %v4749 = vpack.c.b16 %v4689, %v4685
    %v4750 = vpack.c.b16 %v4690, %v4686
    %v4751 = vpack.c.b16 %v4691, %v4687
    %v4752 = vpack.c.b16 %v4696, %v4692
    %v4753 = vpack.c.b16 %v4697, %v4693
    %v4754 = vpack.c.b16 %v4698, %v4694
    %v4755 = vpack.c.b16 %v4699, %v4695
    %v4756 = vpack.c.b16 %v4704, %v4700
    %v4757 = vpack.c.b16 %v4705, %v4701
    %v4758 = vpack.c.b16 %v4706, %v4702
    %v4759 = vpack.c.b16 %v4707, %v4703
    %v4760 = vpack.c.b16 %v4712, %v4708
    %v4761 = vpack.c.b16 %v4713, %v4709
    %v4762 = vpack.c.b16 %v4714, %v4710
    %v4763 = vpack.c.b16 %v4715, %v4711
    %v4764 = vpack.c.b16 %v4720, %v4716
    %v4765 = vpack.c.b16 %v4721, %v4717
    %v4766 = vpack.c.b16 %v4722, %v4718
    %v4767 = vpack.c.b16 %v4723, %v4719
    %v4768 = vpack.c.b16 %v4728, %v4724
    %v4769 = vpack.c.b16 %v4729, %v4725
    %v4770 = vpack.c.b16 %v4730, %v4726
    %v4771 = vpack.c.b16 %v4731, %v4727
    %v4772 = vpack.c.b16 %v4736, %v4732
    %v4773 = vpack.c.b16 %v4737, %v4733
    %v4774 = vpack.c.b16 %v4738, %v4734
    %v4775 = vpack.c.b16 %v4739, %v4735
    %v4776 = vpack.c.b16 %v4744, %v4740
    %v4777 = vpack.c.b16 %v4745, %v4741
    %v4778 = vpack.c.b16 %v4746, %v4742
    %v4779 = vpack.c.b16 %v4747, %v4743
    %4812 = vmatprep.subr.bf16.mxu0 0
    %4813 = vmatpush1.bf16.msra.mxu0 %v1229
    %4814 = vmatprep.subr.bf16.mxu0 0
    %4815 = vmatpush1.bf16.msra.mxu0 %v1230
    %4816 = vmatprep.subr.bf16.mxu0 0
    %4817 = vmatpush1.bf16.msra.mxu0 %v1231
    %4818 = vmatprep.subr.bf16.mxu0 0
    %4819 = vmatpush1.bf16.msra.mxu0 %v1232
    %4820 = vmatprep.subr.bf16.mxu0 0
    %4821 = vmatpush1.bf16.msra.mxu0 %v1233
    %4822 = vmatprep.subr.bf16.mxu0 0
    %4823 = vmatpush1.bf16.msra.mxu0 %v1234
    %4824 = vmatprep.subr.bf16.mxu0 0
    %4825 = vmatpush1.bf16.msra.mxu0 %v1235
    %4826 = vmatprep.subr.bf16.mxu0 0
    %4827 = vmatpush1.bf16.msra.mxu0 %v1236
    %4828 = vmatprep.subr.bf16.mxu0 0
    %4829 = vmatpush1.bf16.msra.mxu0 %v1237
    %4830 = vmatprep.subr.bf16.mxu0 0
    %4831 = vmatpush1.bf16.msra.mxu0 %v1238
    %4832 = vmatprep.subr.bf16.mxu0 0
    %4833 = vmatpush1.bf16.msra.mxu0 %v1239
    %4834 = vmatprep.subr.bf16.mxu0 0
    %4835 = vmatpush1.bf16.msra.mxu0 %v1240
    %4836 = vmatprep.subr.bf16.mxu0 0
    %4837 = vmatpush1.bf16.msra.mxu0 %v1241
    %4838 = vmatprep.subr.bf16.mxu0 0
    %4839 = vmatpush1.bf16.msra.mxu0 %v1242
    %4840 = vmatprep.subr.bf16.mxu0 0
    %4841 = vmatpush1.bf16.msra.mxu0 %v1243
    %4842 = vmatprep.subr.bf16.mxu0 0
    %4843 = vmatpush1.bf16.msra.mxu0 %v1244
    %4844 = vmatprep.mubr.bf16.mxu0 %v4749
    %4845 = vmatmul.mubr.bf16.gmra.mrb[0].mxu0 %v4748
    %v4846 = vpop.f32.mrb[0].mxu0
    %v4847 = vadd.f32 0.0, %v4846
    %v4848 = vpop.f32.mrb[0].mxu0
    %v4849 = vpop.f32.mrb[0].mxu0
    %v4850 = vadd.f32 0.0, %v4849
    %v4851 = vpop.f32.mrb[0].mxu0
    %4852 = vmatprep.mubr.bf16.mxu0 %v4753
    %4853 = vmatmul.mubr.bf16.gmra.mrb[0].mxu0 %v4752
    %v4854 = vpop.f32.mrb[0].mxu0
    %v4855 = vadd.f32 0.0, %v4854
    %v4856 = vpop.f32.mrb[0].mxu0
    %v4857 = vpop.f32.mrb[0].mxu0
    %v4858 = vadd.f32 0.0, %v4857
    %v4859 = vpop.f32.mrb[0].mxu0
    %4860 = vmatprep.mubr.bf16.mxu0 %v4757
    %4861 = vmatmul.mubr.bf16.gmra.mrb[0].mxu0 %v4756
    %v4862 = vpop.f32.mrb[0].mxu0
    %v4863 = vadd.f32 0.0, %v4862
    %v4864 = vpop.f32.mrb[0].mxu0
    %v4865 = vpop.f32.mrb[0].mxu0
    %v4866 = vadd.f32 0.0, %v4865
    %v4867 = vpop.f32.mrb[0].mxu0
    %4868 = vmatprep.mubr.bf16.mxu0 %v4761
    %4869 = vmatmul.mubr.bf16.gmra.mrb[0].mxu0 %v4760
    %v4870 = vpop.f32.mrb[0].mxu0
    %v4871 = vadd.f32 0.0, %v4870
    %v4872 = vpop.f32.mrb[0].mxu0
    %v4873 = vpop.f32.mrb[0].mxu0
    %v4874 = vadd.f32 0.0, %v4873
    %v4875 = vpop.f32.mrb[0].mxu0
    %4876 = vmatprep.mubr.bf16.mxu0 %v4765
    %4877 = vmatmul.mubr.bf16.gmra.mrb[0].mxu0 %v4764
    %v4878 = vpop.f32.mrb[0].mxu0
    %v4879 = vadd.f32 0.0, %v4878
    %v4880 = vpop.f32.mrb[0].mxu0
    %v4881 = vpop.f32.mrb[0].mxu0
    %v4882 = vadd.f32 0.0, %v4881
    %v4883 = vpop.f32.mrb[0].mxu0
    %4884 = vmatprep.mubr.bf16.mxu0 %v4769
    %4885 = vmatmul.mubr.bf16.gmra.mrb[0].mxu0 %v4768
    %v4886 = vpop.f32.mrb[0].mxu0
    %v4887 = vadd.f32 0.0, %v4886
    %v4888 = vpop.f32.mrb[0].mxu0
    %v4889 = vpop.f32.mrb[0].mxu0
    %v4890 = vadd.f32 0.0, %v4889
    %v4891 = vpop.f32.mrb[0].mxu0
    %4892 = vmatprep.mubr.bf16.mxu0 %v4773
    %4893 = vmatmul.mubr.bf16.gmra.mrb[0].mxu0 %v4772
    %v4894 = vpop.f32.mrb[0].mxu0
    %v4895 = vadd.f32 0.0, %v4894
    %v4896 = vpop.f32.mrb[0].mxu0
    %v4897 = vpop.f32.mrb[0].mxu0
    %v4898 = vadd.f32 0.0, %v4897
    %v4899 = vpop.f32.mrb[0].mxu0
    %4900 = vmatprep.mubr.bf16.mxu0 %v4777
    %4901 = vmatmul.mubr.bf16.gmra.mrb[0].mxu0 %v4776
    %v4902 = vpop.f32.mrb[0].mxu0
    %v4903 = vadd.f32 0.0, %v4902
    %v4904 = vpop.f32.mrb[0].mxu0
    %v4905 = vpop.f32.mrb[0].mxu0
    %v4906 = vadd.f32 0.0, %v4905
    %v4907 = vpop.f32.mrb[0].mxu0
    %4908 = vdwg.mxu0
    %4909 = vmatprep.subr.bf16.mxu0 0
    %4910 = vmatpush1.bf16.msra.mxu0 %v1245
    %4911 = vmatprep.subr.bf16.mxu0 0
    %4912 = vmatpush1.bf16.msra.mxu0 %v1246
    %4913 = vmatprep.subr.bf16.mxu0 0
    %4914 = vmatpush1.bf16.msra.mxu0 %v1247
    %4915 = vmatprep.subr.bf16.mxu0 0
    %4916 = vmatpush1.bf16.msra.mxu0 %v1248
    %4917 = vmatprep.subr.bf16.mxu0 0
    %4918 = vmatpush1.bf16.msra.mxu0 %v1249
    %4919 = vmatprep.subr.bf16.mxu0 0
    %4920 = vmatpush1.bf16.msra.mxu0 %v1250
    %4921 = vmatprep.subr.bf16.mxu0 0
    %4922 = vmatpush1.bf16.msra.mxu0 %v1251
    %4923 = vmatprep.subr.bf16.mxu0 0
    %4924 = vmatpush1.bf16.msra.mxu0 %v1252
    %4925 = vmatprep.subr.bf16.mxu0 0
    %4926 = vmatpush1.bf16.msra.mxu0 %v1253
    %4927 = vmatprep.subr.bf16.mxu0 0
    %4928 = vmatpush1.bf16.msra.mxu0 %v1254
    %4929 = vmatprep.subr.bf16.mxu0 0
    %4930 = vmatpush1.bf16.msra.mxu0 %v1255
    %4931 = vmatprep.subr.bf16.mxu0 0
    %4932 = vmatpush1.bf16.msra.mxu0 %v1256
    %4933 = vmatprep.subr.bf16.mxu0 0
    %4934 = vmatpush1.bf16.msra.mxu0 %v1257
    %4935 = vmatprep.subr.bf16.mxu0 0
    %4936 = vmatpush1.bf16.msra.mxu0 %v1258
    %4937 = vmatprep.subr.bf16.mxu0 0
    %4938 = vmatpush1.bf16.msra.mxu0 %v1259
    %4939 = vmatprep.subr.bf16.mxu0 0
    %4940 = vmatpush1.bf16.msra.mxu0 %v1260
    %4941 = vmatprep.mubr.bf16.mxu0 %v4751
    %4942 = vmatmul.mubr.bf16.gmra.mrb[0].mxu0 %v4750
    %v4943 = vpop.f32.mrb[0].mxu0
    %v4944 = vadd.f32 %v4847, %v4943
    %v4945 = vpop.f32.mrb[0].mxu0
    %v4946 = vpop.f32.mrb[0].mxu0
    %v4947 = vadd.f32 %v4850, %v4946
    %v4948 = vpop.f32.mrb[0].mxu0
    %4949 = vmatprep.mubr.bf16.mxu0 %v4755
    %4950 = vmatmul.mubr.bf16.gmra.mrb[0].mxu0 %v4754
    %v4951 = vpop.f32.mrb[0].mxu0
    %v4952 = vadd.f32 %v4855, %v4951
    %v4953 = vpop.f32.mrb[0].mxu0
    %v4954 = vpop.f32.mrb[0].mxu0
    %v4955 = vadd.f32 %v4858, %v4954
    %v4956 = vpop.f32.mrb[0].mxu0
    %4957 = vmatprep.mubr.bf16.mxu0 %v4759
    %4958 = vmatmul.mubr.bf16.gmra.mrb[0].mxu0 %v4758
    %v4959 = vpop.f32.mrb[0].mxu0
    %v4960 = vadd.f32 %v4863, %v4959
    %v4961 = vpop.f32.mrb[0].mxu0
    %v4962 = vpop.f32.mrb[0].mxu0
    %v4963 = vadd.f32 %v4866, %v4962
    %v4964 = vpop.f32.mrb[0].mxu0
    %4965 = vmatprep.mubr.bf16.mxu0 %v4763
    %4966 = vmatmul.mubr.bf16.gmra.mrb[0].mxu0 %v4762
    %v4967 = vpop.f32.mrb[0].mxu0
    %v4968 = vadd.f32 %v4871, %v4967
    %v4969 = vpop.f32.mrb[0].mxu0
    %v4970 = vpop.f32.mrb[0].mxu0
    %v4971 = vadd.f32 %v4874, %v4970
    %v4972 = vpop.f32.mrb[0].mxu0
    %4973 = vmatprep.mubr.bf16.mxu0 %v4767
    %4974 = vmatmul.mubr.bf16.gmra.mrb[0].mxu0 %v4766
    %v4975 = vpop.f32.mrb[0].mxu0
    %v4976 = vadd.f32 %v4879, %v4975
    %v4977 = vpop.f32.mrb[0].mxu0
    %v4978 = vpop.f32.mrb[0].mxu0
    %v4979 = vadd.f32 %v4882, %v4978
    %v4980 = vpop.f32.mrb[0].mxu0
    %4981 = vmatprep.mubr.bf16.mxu0 %v4771
    %4982 = vmatmul.mubr.bf16.gmra.mrb[0].mxu0 %v4770
    %v4983 = vpop.f32.mrb[0].mxu0
    %v4984 = vadd.f32 %v4887, %v4983
    %v4985 = vpop.f32.mrb[0].mxu0
    %v4986 = vpop.f32.mrb[0].mxu0
    %v4987 = vadd.f32 %v4890, %v4986
    %v4988 = vpop.f32.mrb[0].mxu0
    %4989 = vmatprep.mubr.bf16.mxu0 %v4775
    %4990 = vmatmul.mubr.bf16.gmra.mrb[0].mxu0 %v4774
    %v4991 = vpop.f32.mrb[0].mxu0
    %v4992 = vadd.f32 %v4895, %v4991
    %v4993 = vpop.f32.mrb[0].mxu0
    %v4994 = vpop.f32.mrb[0].mxu0
    %v4995 = vadd.f32 %v4898, %v4994
    %v4996 = vpop.f32.mrb[0].mxu0
    %4997 = vmatprep.mubr.bf16.mxu0 %v4779
    %4998 = vmatmul.mubr.bf16.gmra.mrb[0].mxu0 %v4778
    %v4999 = vpop.f32.mrb[0].mxu0
    %v5000 = vadd.f32 %v4903, %v4999
    %v5001 = vpop.f32.mrb[0].mxu0
    %v5002 = vpop.f32.mrb[0].mxu0
    %v5003 = vadd.f32 %v4906, %v5002
    %v5004 = vpop.f32.mrb[0].mxu0
    %5005 = vdwg.mxu0
    %v5006 = vpack.c.bf16 %v4947, %v4944
    %v5007 = vpack.c.bf16 %v4955, %v4952
    %v5008 = vpack.c.bf16 %v4963, %v4960
    %v5009 = vpack.c.bf16 %v4971, %v4968
    %v5010 = vpack.c.bf16 %v4979, %v4976
    %v5011 = vpack.c.bf16 %v4987, %v4984
    %v5012 = vpack.c.bf16 %v4995, %v4992
    %v5013 = vpack.c.bf16 %v5003, %v5000
    %s5014 = scalar_lea.vmem %s5, 192
    %v5015 = vld [vmem:[%s5014] sm:$0xf]
    %v5016 = vld [vmem:[%s5014 + $0x4] sm:$0xf]
    %v5017 = vld [vmem:[%s5014 + $0x8] sm:$0xf]
    %v5018 = vld [vmem:[%s5014 + $0xc] sm:$0xf]
    %v5019 = vld [vmem:[%s5014 + $0x10] sm:$0xf]
    %v5020 = vld [vmem:[%s5014 + $0x14] sm:$0xf]
    %v5021 = vld [vmem:[%s5014 + $0x18] sm:$0xf]
    %v5022 = vld [vmem:[%s5014 + $0x1c] sm:$0xf]
    %v5031 = vunpack.c.l.b16 %v5015
    %v5032 = vunpack.c.l.b16 %v5016
    %v5033 = vunpack.c.l.b16 %v5017
    %v5034 = vunpack.c.l.b16 %v5018
    %v5035 = vunpack.c.l.b16 %v5019
    %v5036 = vunpack.c.l.b16 %v5020
    %v5037 = vunpack.c.l.b16 %v5021
    %v5038 = vunpack.c.l.b16 %v5022
    %v5039 = vpack.c.b16 %v5032, %v5031
    %v5040 = vpack.c.b16 %v5034, %v5033
    %v5041 = vpack.c.b16 %v5036, %v5035
    %v5042 = vpack.c.b16 %v5038, %v5037
    %v5048 = vsel %vm685, %v5006, 0
    %v5051 = vsel %vm685, %v5007, 0
    %v5054 = vsel %vm685, %v5008, 0
    %v5057 = vsel %vm685, %v5009, 0
    %v5060 = vsel %vm685, %v5010, 0
    %v5063 = vsel %vm685, %v5011, 0
    %v5066 = vsel %vm685, %v5012, 0
    %v5069 = vsel %vm685, %v5013, 0
    %5071 = vmatprep.subr.bf16.mxu0 0
    %5072 = vmatpush1.bf16.msra.mxu0 %v5039
    %5073 = vmatprep.subr.bf16.mxu0 0
    %5074 = vmatpush1.bf16.msra.mxu0 %v5040
    %5075 = vmatprep.subr.bf16.mxu0 0
    %5076 = vmatpush1.bf16.msra.mxu0 %v5041
    %5077 = vmatprep.subr.bf16.mxu0 0
    %5078 = vmatpush1.bf16.msra.mxu0 %v5042
    %5079 = vmatprep.subr.bf16.mxu0 0
    %5080 = vmatpush1.bf16.msra.mxu0 0
    %5081 = vmatprep.subr.bf16.mxu0 0
    %5082 = vmatpush1.bf16.msra.mxu0 0
    %5083 = vmatprep.subr.bf16.mxu0 0
    %5084 = vmatpush1.bf16.msra.mxu0 0
    %5085 = vmatprep.subr.bf16.mxu0 0
    %5086 = vmatpush1.bf16.msra.mxu0 0
    %5087 = vmatprep.subr.bf16.mxu0 0
    %5088 = vmatpush1.bf16.msra.mxu0 0
    %5089 = vmatprep.subr.bf16.mxu0 0
    %5090 = vmatpush1.bf16.msra.mxu0 0
    %5091 = vmatprep.subr.bf16.mxu0 0
    %5092 = vmatpush1.bf16.msra.mxu0 0
    %5093 = vmatprep.subr.bf16.mxu0 0
    %5094 = vmatpush1.bf16.msra.mxu0 0
    %5095 = vmatprep.subr.bf16.mxu0 0
    %5096 = vmatpush1.bf16.msra.mxu0 0
    %5097 = vmatprep.subr.bf16.mxu0 0
    %5098 = vmatpush1.bf16.msra.mxu0 0
    %5099 = vmatprep.subr.bf16.mxu0 0
    %5100 = vmatpush1.bf16.msra.mxu0 0
    %5101 = vmatprep.subr.bf16.mxu0 0
    %5102 = vmatpush1.bf16.msra.mxu0 0
    %5103 = vmatprep.mubr.bf16.mxu0 0
    %5104 = vmatmul.mubr.bf16.gmra.mrb[0].mxu0 %v5048
    %v5105 = vpop.f32.mrb[0].mxu0
    %v5106 = vadd.f32 0.0, %v5105
    %v5107 = vpop.f32.mrb[0].mxu0
    %v5108 = vpop.f32.mrb[0].mxu0
    %v5109 = vadd.f32 0.0, %v5108
    %v5110 = vpop.f32.mrb[0].mxu0
    %5111 = vmatprep.mubr.bf16.mxu0 0
    %5112 = vmatmul.mubr.bf16.gmra.mrb[0].mxu0 %v5051
    %v5113 = vpop.f32.mrb[0].mxu0
    %v5114 = vadd.f32 0.0, %v5113
    %v5115 = vpop.f32.mrb[0].mxu0
    %v5116 = vpop.f32.mrb[0].mxu0
    %v5117 = vadd.f32 0.0, %v5116
    %v5118 = vpop.f32.mrb[0].mxu0
    %5119 = vmatprep.mubr.bf16.mxu0 0
    %5120 = vmatmul.mubr.bf16.gmra.mrb[0].mxu0 %v5054
    %v5121 = vpop.f32.mrb[0].mxu0
    %v5122 = vadd.f32 0.0, %v5121
    %v5123 = vpop.f32.mrb[0].mxu0
    %v5124 = vpop.f32.mrb[0].mxu0
    %v5125 = vadd.f32 0.0, %v5124
    %v5126 = vpop.f32.mrb[0].mxu0
    %5127 = vmatprep.mubr.bf16.mxu0 0
    %5128 = vmatmul.mubr.bf16.gmra.mrb[0].mxu0 %v5057
    %v5129 = vpop.f32.mrb[0].mxu0
    %v5130 = vadd.f32 0.0, %v5129
    %v5131 = vpop.f32.mrb[0].mxu0
    %v5132 = vpop.f32.mrb[0].mxu0
    %v5133 = vadd.f32 0.0, %v5132
    %v5134 = vpop.f32.mrb[0].mxu0
    %5135 = vmatprep.mubr.bf16.mxu0 0
    %5136 = vmatmul.mubr.bf16.gmra.mrb[0].mxu0 %v5060
    %v5137 = vpop.f32.mrb[0].mxu0
    %v5138 = vadd.f32 0.0, %v5137
    %v5139 = vpop.f32.mrb[0].mxu0
    %v5140 = vpop.f32.mrb[0].mxu0
    %v5141 = vadd.f32 0.0, %v5140
    %v5142 = vpop.f32.mrb[0].mxu0
    %5143 = vmatprep.mubr.bf16.mxu0 0
    %5144 = vmatmul.mubr.bf16.gmra.mrb[0].mxu0 %v5063
    %v5145 = vpop.f32.mrb[0].mxu0
    %v5146 = vadd.f32 0.0, %v5145
    %v5147 = vpop.f32.mrb[0].mxu0
    %v5148 = vpop.f32.mrb[0].mxu0
    %v5149 = vadd.f32 0.0, %v5148
    %v5150 = vpop.f32.mrb[0].mxu0
    %5151 = vmatprep.mubr.bf16.mxu0 0
    %5152 = vmatmul.mubr.bf16.gmra.mrb[0].mxu0 %v5066
    %v5153 = vpop.f32.mrb[0].mxu0
    %v5154 = vadd.f32 0.0, %v5153
    %v5155 = vpop.f32.mrb[0].mxu0
    %v5156 = vpop.f32.mrb[0].mxu0
    %v5157 = vadd.f32 0.0, %v5156
    %v5158 = vpop.f32.mrb[0].mxu0
    %5159 = vmatprep.mubr.bf16.mxu0 0
    %5160 = vmatmul.mubr.bf16.gmra.mrb[0].mxu0 %v5069
    %v5161 = vpop.f32.mrb[0].mxu0
    %v5162 = vadd.f32 0.0, %v5161
    %v5163 = vpop.f32.mrb[0].mxu0
    %v5164 = vpop.f32.mrb[0].mxu0
    %v5165 = vadd.f32 0.0, %v5164
    %v5166 = vpop.f32.mrb[0].mxu0
    %5167 = vdwg.mxu0
    %v5168 = vadd.f32 %v4603, %v5106
    %v5169 = vadd.f32 %v4604, %v5109
    %v5170 = vadd.f32 %v4605, %v5114
    %v5171 = vadd.f32 %v4606, %v5117
    %v5172 = vadd.f32 %v4607, %v5122
    %v5173 = vadd.f32 %v4608, %v5125
    %v5174 = vadd.f32 %v4609, %v5130
    %v5175 = vadd.f32 %v4610, %v5133
    %v5176 = vadd.f32 %v4611, %v5138
    %v5177 = vadd.f32 %v4612, %v5141
    %v5178 = vadd.f32 %v4613, %v5146
    %v5179 = vadd.f32 %v4614, %v5149
    %v5180 = vadd.f32 %v4615, %v5154
    %v5181 = vadd.f32 %v4616, %v5157
    %v5182 = vadd.f32 %v4617, %v5162
    %v5183 = vadd.f32 %v4618, %v5165
    %s5184 = scalar_lea.vmem %s4, 1792
    %v5185 = vld [vmem:[%s5184] sm:$0xff]
    %v5186 = vld [vmem:[%s5184 + $0x8] sm:$0xff]
    %v5187 = vld [vmem:[%s5184 + $0x10] sm:$0xff]
    %v5188 = vld [vmem:[%s5184 + $0x18] sm:$0xff]
    %v5189 = vld [vmem:[%s5184 + $0x20] sm:$0xff]
    %v5190 = vld [vmem:[%s5184 + $0x28] sm:$0xff]
    %v5191 = vld [vmem:[%s5184 + $0x30] sm:$0xff]
    %v5192 = vld [vmem:[%s5184 + $0x38] sm:$0xff]
    %v5193 = vld [vmem:[%s5184 + $0x40] sm:$0xff]
    %v5194 = vld [vmem:[%s5184 + $0x48] sm:$0xff]
    %v5195 = vld [vmem:[%s5184 + $0x50] sm:$0xff]
    %v5196 = vld [vmem:[%s5184 + $0x58] sm:$0xff]
    %v5197 = vld [vmem:[%s5184 + $0x60] sm:$0xff]
    %v5198 = vld [vmem:[%s5184 + $0x68] sm:$0xff]
    %v5199 = vld [vmem:[%s5184 + $0x70] sm:$0xff]
    %v5200 = vld [vmem:[%s5184 + $0x78] sm:$0xff]
    %v5201 = vld [vmem:[%s5184 + $0x80] sm:$0xff]
    %v5202 = vld [vmem:[%s5184 + $0x88] sm:$0xff]
    %v5203 = vld [vmem:[%s5184 + $0x90] sm:$0xff]
    %v5204 = vld [vmem:[%s5184 + $0x98] sm:$0xff]
    %v5205 = vld [vmem:[%s5184 + $0xa0] sm:$0xff]
    %v5206 = vld [vmem:[%s5184 + $0xa8] sm:$0xff]
    %v5207 = vld [vmem:[%s5184 + $0xb0] sm:$0xff]
    %v5208 = vld [vmem:[%s5184 + $0xb8] sm:$0xff]
    %v5209 = vld [vmem:[%s5184 + $0xc0] sm:$0xff]
    %v5210 = vld [vmem:[%s5184 + $0xc8] sm:$0xff]
    %v5211 = vld [vmem:[%s5184 + $0xd0] sm:$0xff]
    %v5212 = vld [vmem:[%s5184 + $0xd8] sm:$0xff]
    %v5213 = vld [vmem:[%s5184 + $0xe0] sm:$0xff]
    %v5214 = vld [vmem:[%s5184 + $0xe8] sm:$0xff]
    %v5215 = vld [vmem:[%s5184 + $0xf0] sm:$0xff]
    %v5216 = vld [vmem:[%s5184 + $0xf8] sm:$0xff]
    %v5249 = vunpack.c.l.b16 %v5185
    %v5250 = vunpack.c.h.b16 %v5185
    %v5251 = vunpack.c.l.b16 %v5186
    %v5252 = vunpack.c.h.b16 %v5186
    %v5253 = vunpack.c.l.b16 %v5187
    %v5254 = vunpack.c.h.b16 %v5187
    %v5255 = vunpack.c.l.b16 %v5188
    %v5256 = vunpack.c.h.b16 %v5188
    %v5257 = vunpack.c.l.b16 %v5189
    %v5258 = vunpack.c.h.b16 %v5189
    %v5259 = vunpack.c.l.b16 %v5190
    %v5260 = vunpack.c.h.b16 %v5190
    %v5261 = vunpack.c.l.b16 %v5191
    %v5262 = vunpack.c.h.b16 %v5191
    %v5263 = vunpack.c.l.b16 %v5192
    %v5264 = vunpack.c.h.b16 %v5192
    %v5265 = vunpack.c.l.b16 %v5193
    %v5266 = vunpack.c.h.b16 %v5193
    %v5267 = vunpack.c.l.b16 %v5194
    %v5268 = vunpack.c.h.b16 %v5194
    %v5269 = vunpack.c.l.b16 %v5195
    %v5270 = vunpack.c.h.b16 %v5195
    %v5271 = vunpack.c.l.b16 %v5196
    %v5272 = vunpack.c.h.b16 %v5196
    %v5273 = vunpack.c.l.b16 %v5197
    %v5274 = vunpack.c.h.b16 %v5197
    %v5275 = vunpack.c.l.b16 %v5198
    %v5276 = vunpack.c.h.b16 %v5198
    %v5277 = vunpack.c.l.b16 %v5199
    %v5278 = vunpack.c.h.b16 %v5199
    %v5279 = vunpack.c.l.b16 %v5200
    %v5280 = vunpack.c.h.b16 %v5200
    %v5281 = vunpack.c.l.b16 %v5201
    %v5282 = vunpack.c.h.b16 %v5201
    %v5283 = vunpack.c.l.b16 %v5202
    %v5284 = vunpack.c.h.b16 %v5202
    %v5285 = vunpack.c.l.b16 %v5203
    %v5286 = vunpack.c.h.b16 %v5203
    %v5287 = vunpack.c.l.b16 %v5204
    %v5288 = vunpack.c.h.b16 %v5204
    %v5289 = vunpack.c.l.b16 %v5205
    %v5290 = vunpack.c.h.b16 %v5205
    %v5291 = vunpack.c.l.b16 %v5206
    %v5292 = vunpack.c.h.b16 %v5206
    %v5293 = vunpack.c.l.b16 %v5207
    %v5294 = vunpack.c.h.b16 %v5207
    %v5295 = vunpack.c.l.b16 %v5208
    %v5296 = vunpack.c.h.b16 %v5208
    %v5297 = vunpack.c.l.b16 %v5209
    %v5298 = vunpack.c.h.b16 %v5209
    %v5299 = vunpack.c.l.b16 %v5210
    %v5300 = vunpack.c.h.b16 %v5210
    %v5301 = vunpack.c.l.b16 %v5211
    %v5302 = vunpack.c.h.b16 %v5211
    %v5303 = vunpack.c.l.b16 %v5212
    %v5304 = vunpack.c.h.b16 %v5212
    %v5305 = vunpack.c.l.b16 %v5213
    %v5306 = vunpack.c.h.b16 %v5213
    %v5307 = vunpack.c.l.b16 %v5214
    %v5308 = vunpack.c.h.b16 %v5214
    %v5309 = vunpack.c.l.b16 %v5215
    %v5310 = vunpack.c.h.b16 %v5215
    %v5311 = vunpack.c.l.b16 %v5216
    %v5312 = vunpack.c.h.b16 %v5216
    %v5313 = vpack.c.b16 %v5253, %v5249
    %v5314 = vpack.c.b16 %v5254, %v5250
    %v5315 = vpack.c.b16 %v5255, %v5251
    %v5316 = vpack.c.b16 %v5256, %v5252
    %v5317 = vpack.c.b16 %v5261, %v5257
    %v5318 = vpack.c.b16 %v5262, %v5258
    %v5319 = vpack.c.b16 %v5263, %v5259
    %v5320 = vpack.c.b16 %v5264, %v5260
    %v5321 = vpack.c.b16 %v5269, %v5265
    %v5322 = vpack.c.b16 %v5270, %v5266
    %v5323 = vpack.c.b16 %v5271, %v5267
    %v5324 = vpack.c.b16 %v5272, %v5268
    %v5325 = vpack.c.b16 %v5277, %v5273
    %v5326 = vpack.c.b16 %v5278, %v5274
    %v5327 = vpack.c.b16 %v5279, %v5275
    %v5328 = vpack.c.b16 %v5280, %v5276
    %v5329 = vpack.c.b16 %v5285, %v5281
    %v5330 = vpack.c.b16 %v5286, %v5282
    %v5331 = vpack.c.b16 %v5287, %v5283
    %v5332 = vpack.c.b16 %v5288, %v5284
    %v5333 = vpack.c.b16 %v5293, %v5289
    %v5334 = vpack.c.b16 %v5294, %v5290
    %v5335 = vpack.c.b16 %v5295, %v5291
    %v5336 = vpack.c.b16 %v5296, %v5292
    %v5337 = vpack.c.b16 %v5301, %v5297
    %v5338 = vpack.c.b16 %v5302, %v5298
    %v5339 = vpack.c.b16 %v5303, %v5299
    %v5340 = vpack.c.b16 %v5304, %v5300
    %v5341 = vpack.c.b16 %v5309, %v5305
    %v5342 = vpack.c.b16 %v5310, %v5306
    %v5343 = vpack.c.b16 %v5311, %v5307
    %v5344 = vpack.c.b16 %v5312, %v5308
    %5377 = vmatprep.subr.bf16.mxu0 0
    %5378 = vmatpush1.bf16.msra.mxu0 %v1229
    %5379 = vmatprep.subr.bf16.mxu0 0
    %5380 = vmatpush1.bf16.msra.mxu0 %v1230
    %5381 = vmatprep.subr.bf16.mxu0 0
    %5382 = vmatpush1.bf16.msra.mxu0 %v1231
    %5383 = vmatprep.subr.bf16.mxu0 0
    %5384 = vmatpush1.bf16.msra.mxu0 %v1232
    %5385 = vmatprep.subr.bf16.mxu0 0
    %5386 = vmatpush1.bf16.msra.mxu0 %v1233
    %5387 = vmatprep.subr.bf16.mxu0 0
    %5388 = vmatpush1.bf16.msra.mxu0 %v1234
    %5389 = vmatprep.subr.bf16.mxu0 0
    %5390 = vmatpush1.bf16.msra.mxu0 %v1235
    %5391 = vmatprep.subr.bf16.mxu0 0
    %5392 = vmatpush1.bf16.msra.mxu0 %v1236
    %5393 = vmatprep.subr.bf16.mxu0 0
    %5394 = vmatpush1.bf16.msra.mxu0 %v1237
    %5395 = vmatprep.subr.bf16.mxu0 0
    %5396 = vmatpush1.bf16.msra.mxu0 %v1238
    %5397 = vmatprep.subr.bf16.mxu0 0
    %5398 = vmatpush1.bf16.msra.mxu0 %v1239
    %5399 = vmatprep.subr.bf16.mxu0 0
    %5400 = vmatpush1.bf16.msra.mxu0 %v1240
    %5401 = vmatprep.subr.bf16.mxu0 0
    %5402 = vmatpush1.bf16.msra.mxu0 %v1241
    %5403 = vmatprep.subr.bf16.mxu0 0
    %5404 = vmatpush1.bf16.msra.mxu0 %v1242
    %5405 = vmatprep.subr.bf16.mxu0 0
    %5406 = vmatpush1.bf16.msra.mxu0 %v1243
    %5407 = vmatprep.subr.bf16.mxu0 0
    %5408 = vmatpush1.bf16.msra.mxu0 %v1244
    %5409 = vmatprep.mubr.bf16.mxu0 %v5314
    %5410 = vmatmul.mubr.bf16.gmra.mrb[0].mxu0 %v5313
    %v5411 = vpop.f32.mrb[0].mxu0
    %v5412 = vadd.f32 0.0, %v5411
    %v5413 = vpop.f32.mrb[0].mxu0
    %v5414 = vpop.f32.mrb[0].mxu0
    %v5415 = vadd.f32 0.0, %v5414
    %v5416 = vpop.f32.mrb[0].mxu0
    %5417 = vmatprep.mubr.bf16.mxu0 %v5318
    %5418 = vmatmul.mubr.bf16.gmra.mrb[0].mxu0 %v5317
    %v5419 = vpop.f32.mrb[0].mxu0
    %v5420 = vadd.f32 0.0, %v5419
    %v5421 = vpop.f32.mrb[0].mxu0
    %v5422 = vpop.f32.mrb[0].mxu0
    %v5423 = vadd.f32 0.0, %v5422
    %v5424 = vpop.f32.mrb[0].mxu0
    %5425 = vmatprep.mubr.bf16.mxu0 %v5322
    %5426 = vmatmul.mubr.bf16.gmra.mrb[0].mxu0 %v5321
    %v5427 = vpop.f32.mrb[0].mxu0
    %v5428 = vadd.f32 0.0, %v5427
    %v5429 = vpop.f32.mrb[0].mxu0
    %v5430 = vpop.f32.mrb[0].mxu0
    %v5431 = vadd.f32 0.0, %v5430
    %v5432 = vpop.f32.mrb[0].mxu0
    %5433 = vmatprep.mubr.bf16.mxu0 %v5326
    %5434 = vmatmul.mubr.bf16.gmra.mrb[0].mxu0 %v5325
    %v5435 = vpop.f32.mrb[0].mxu0
    %v5436 = vadd.f32 0.0, %v5435
    %v5437 = vpop.f32.mrb[0].mxu0
    %v5438 = vpop.f32.mrb[0].mxu0
    %v5439 = vadd.f32 0.0, %v5438
    %v5440 = vpop.f32.mrb[0].mxu0
    %5441 = vmatprep.mubr.bf16.mxu0 %v5330
    %5442 = vmatmul.mubr.bf16.gmra.mrb[0].mxu0 %v5329
    %v5443 = vpop.f32.mrb[0].mxu0
    %v5444 = vadd.f32 0.0, %v5443
    %v5445 = vpop.f32.mrb[0].mxu0
    %v5446 = vpop.f32.mrb[0].mxu0
    %v5447 = vadd.f32 0.0, %v5446
    %v5448 = vpop.f32.mrb[0].mxu0
    %5449 = vmatprep.mubr.bf16.mxu0 %v5334
    %5450 = vmatmul.mubr.bf16.gmra.mrb[0].mxu0 %v5333
    %v5451 = vpop.f32.mrb[0].mxu0
    %v5452 = vadd.f32 0.0, %v5451
    %v5453 = vpop.f32.mrb[0].mxu0
    %v5454 = vpop.f32.mrb[0].mxu0
    %v5455 = vadd.f32 0.0, %v5454
    %v5456 = vpop.f32.mrb[0].mxu0
    %5457 = vmatprep.mubr.bf16.mxu0 %v5338
    %5458 = vmatmul.mubr.bf16.gmra.mrb[0].mxu0 %v5337
    %v5459 = vpop.f32.mrb[0].mxu0
    %v5460 = vadd.f32 0.0, %v5459
    %v5461 = vpop.f32.mrb[0].mxu0
    %v5462 = vpop.f32.mrb[0].mxu0
    %v5463 = vadd.f32 0.0, %v5462
    %v5464 = vpop.f32.mrb[0].mxu0
    %5465 = vmatprep.mubr.bf16.mxu0 %v5342
    %5466 = vmatmul.mubr.bf16.gmra.mrb[0].mxu0 %v5341
    %v5467 = vpop.f32.mrb[0].mxu0
    %v5468 = vadd.f32 0.0, %v5467
    %v5469 = vpop.f32.mrb[0].mxu0
    %v5470 = vpop.f32.mrb[0].mxu0
    %v5471 = vadd.f32 0.0, %v5470
    %v5472 = vpop.f32.mrb[0].mxu0
    %5473 = vdwg.mxu0
    %5474 = vmatprep.subr.bf16.mxu0 0
    %5475 = vmatpush1.bf16.msra.mxu0 %v1245
    %5476 = vmatprep.subr.bf16.mxu0 0
    %5477 = vmatpush1.bf16.msra.mxu0 %v1246
    %5478 = vmatprep.subr.bf16.mxu0 0
    %5479 = vmatpush1.bf16.msra.mxu0 %v1247
    %5480 = vmatprep.subr.bf16.mxu0 0
    %5481 = vmatpush1.bf16.msra.mxu0 %v1248
    %5482 = vmatprep.subr.bf16.mxu0 0
    %5483 = vmatpush1.bf16.msra.mxu0 %v1249
    %5484 = vmatprep.subr.bf16.mxu0 0
    %5485 = vmatpush1.bf16.msra.mxu0 %v1250
    %5486 = vmatprep.subr.bf16.mxu0 0
    %5487 = vmatpush1.bf16.msra.mxu0 %v1251
    %5488 = vmatprep.subr.bf16.mxu0 0
    %5489 = vmatpush1.bf16.msra.mxu0 %v1252
    %5490 = vmatprep.subr.bf16.mxu0 0
    %5491 = vmatpush1.bf16.msra.mxu0 %v1253
    %5492 = vmatprep.subr.bf16.mxu0 0
    %5493 = vmatpush1.bf16.msra.mxu0 %v1254
    %5494 = vmatprep.subr.bf16.mxu0 0
    %5495 = vmatpush1.bf16.msra.mxu0 %v1255
    %5496 = vmatprep.subr.bf16.mxu0 0
    %5497 = vmatpush1.bf16.msra.mxu0 %v1256
    %5498 = vmatprep.subr.bf16.mxu0 0
    %5499 = vmatpush1.bf16.msra.mxu0 %v1257
    %5500 = vmatprep.subr.bf16.mxu0 0
    %5501 = vmatpush1.bf16.msra.mxu0 %v1258
    %5502 = vmatprep.subr.bf16.mxu0 0
    %5503 = vmatpush1.bf16.msra.mxu0 %v1259
    %5504 = vmatprep.subr.bf16.mxu0 0
    %5505 = vmatpush1.bf16.msra.mxu0 %v1260
    %5506 = vmatprep.mubr.bf16.mxu0 %v5316
    %5507 = vmatmul.mubr.bf16.gmra.mrb[0].mxu0 %v5315
    %v5508 = vpop.f32.mrb[0].mxu0
    %v5509 = vadd.f32 %v5412, %v5508
    %v5510 = vpop.f32.mrb[0].mxu0
    %v5511 = vpop.f32.mrb[0].mxu0
    %v5512 = vadd.f32 %v5415, %v5511
    %v5513 = vpop.f32.mrb[0].mxu0
    %5514 = vmatprep.mubr.bf16.mxu0 %v5320
    %5515 = vmatmul.mubr.bf16.gmra.mrb[0].mxu0 %v5319
    %v5516 = vpop.f32.mrb[0].mxu0
    %v5517 = vadd.f32 %v5420, %v5516
    %v5518 = vpop.f32.mrb[0].mxu0
    %v5519 = vpop.f32.mrb[0].mxu0
    %v5520 = vadd.f32 %v5423, %v5519
    %v5521 = vpop.f32.mrb[0].mxu0
    %5522 = vmatprep.mubr.bf16.mxu0 %v5324
    %5523 = vmatmul.mubr.bf16.gmra.mrb[0].mxu0 %v5323
    %v5524 = vpop.f32.mrb[0].mxu0
    %v5525 = vadd.f32 %v5428, %v5524
    %v5526 = vpop.f32.mrb[0].mxu0
    %v5527 = vpop.f32.mrb[0].mxu0
    %v5528 = vadd.f32 %v5431, %v5527
    %v5529 = vpop.f32.mrb[0].mxu0
    %5530 = vmatprep.mubr.bf16.mxu0 %v5328
    %5531 = vmatmul.mubr.bf16.gmra.mrb[0].mxu0 %v5327
    %v5532 = vpop.f32.mrb[0].mxu0
    %v5533 = vadd.f32 %v5436, %v5532
    %v5534 = vpop.f32.mrb[0].mxu0
    %v5535 = vpop.f32.mrb[0].mxu0
    %v5536 = vadd.f32 %v5439, %v5535
    %v5537 = vpop.f32.mrb[0].mxu0
    %5538 = vmatprep.mubr.bf16.mxu0 %v5332
    %5539 = vmatmul.mubr.bf16.gmra.mrb[0].mxu0 %v5331
    %v5540 = vpop.f32.mrb[0].mxu0
    %v5541 = vadd.f32 %v5444, %v5540
    %v5542 = vpop.f32.mrb[0].mxu0
    %v5543 = vpop.f32.mrb[0].mxu0
    %v5544 = vadd.f32 %v5447, %v5543
    %v5545 = vpop.f32.mrb[0].mxu0
    %5546 = vmatprep.mubr.bf16.mxu0 %v5336
    %5547 = vmatmul.mubr.bf16.gmra.mrb[0].mxu0 %v5335
    %v5548 = vpop.f32.mrb[0].mxu0
    %v5549 = vadd.f32 %v5452, %v5548
    %v5550 = vpop.f32.mrb[0].mxu0
    %v5551 = vpop.f32.mrb[0].mxu0
    %v5552 = vadd.f32 %v5455, %v5551
    %v5553 = vpop.f32.mrb[0].mxu0
    %5554 = vmatprep.mubr.bf16.mxu0 %v5340
    %5555 = vmatmul.mubr.bf16.gmra.mrb[0].mxu0 %v5339
    %v5556 = vpop.f32.mrb[0].mxu0
    %v5557 = vadd.f32 %v5460, %v5556
    %v5558 = vpop.f32.mrb[0].mxu0
    %v5559 = vpop.f32.mrb[0].mxu0
    %v5560 = vadd.f32 %v5463, %v5559
    %v5561 = vpop.f32.mrb[0].mxu0
    %5562 = vmatprep.mubr.bf16.mxu0 %v5344
    %5563 = vmatmul.mubr.bf16.gmra.mrb[0].mxu0 %v5343
    %v5564 = vpop.f32.mrb[0].mxu0
    %v5565 = vadd.f32 %v5468, %v5564
    %v5566 = vpop.f32.mrb[0].mxu0
    %v5567 = vpop.f32.mrb[0].mxu0
    %v5568 = vadd.f32 %v5471, %v5567
    %v5569 = vpop.f32.mrb[0].mxu0
    %5570 = vdwg.mxu0
    %v5571 = vpack.c.bf16 %v5512, %v5509
    %v5572 = vpack.c.bf16 %v5520, %v5517
    %v5573 = vpack.c.bf16 %v5528, %v5525
    %v5574 = vpack.c.bf16 %v5536, %v5533
    %v5575 = vpack.c.bf16 %v5544, %v5541
    %v5576 = vpack.c.bf16 %v5552, %v5549
    %v5577 = vpack.c.bf16 %v5560, %v5557
    %v5578 = vpack.c.bf16 %v5568, %v5565
    %s5579 = scalar_lea.vmem %s5, 224
    %v5580 = vld [vmem:[%s5579] sm:$0xf]
    %v5581 = vld [vmem:[%s5579 + $0x4] sm:$0xf]
    %v5582 = vld [vmem:[%s5579 + $0x8] sm:$0xf]
    %v5583 = vld [vmem:[%s5579 + $0xc] sm:$0xf]
    %v5584 = vld [vmem:[%s5579 + $0x10] sm:$0xf]
    %v5585 = vld [vmem:[%s5579 + $0x14] sm:$0xf]
    %v5586 = vld [vmem:[%s5579 + $0x18] sm:$0xf]
    %v5587 = vld [vmem:[%s5579 + $0x1c] sm:$0xf]
    %v5596 = vunpack.c.l.b16 %v5580
    %v5597 = vunpack.c.l.b16 %v5581
    %v5598 = vunpack.c.l.b16 %v5582
    %v5599 = vunpack.c.l.b16 %v5583
    %v5600 = vunpack.c.l.b16 %v5584
    %v5601 = vunpack.c.l.b16 %v5585
    %v5602 = vunpack.c.l.b16 %v5586
    %v5603 = vunpack.c.l.b16 %v5587
    %v5604 = vpack.c.b16 %v5597, %v5596
    %v5605 = vpack.c.b16 %v5599, %v5598
    %v5606 = vpack.c.b16 %v5601, %v5600
    %v5607 = vpack.c.b16 %v5603, %v5602
    %v5613 = vsel %vm685, %v5571, 0
    %v5616 = vsel %vm685, %v5572, 0
    %v5619 = vsel %vm685, %v5573, 0
    %v5622 = vsel %vm685, %v5574, 0
    %v5625 = vsel %vm685, %v5575, 0
    %v5628 = vsel %vm685, %v5576, 0
    %v5631 = vsel %vm685, %v5577, 0
    %v5634 = vsel %vm685, %v5578, 0
    %5636 = vmatprep.subr.bf16.mxu0 0
    %5637 = vmatpush1.bf16.msra.mxu0 %v5604
    %5638 = vmatprep.subr.bf16.mxu0 0
    %5639 = vmatpush1.bf16.msra.mxu0 %v5605
    %5640 = vmatprep.subr.bf16.mxu0 0
    %5641 = vmatpush1.bf16.msra.mxu0 %v5606
    %5642 = vmatprep.subr.bf16.mxu0 0
    %5643 = vmatpush1.bf16.msra.mxu0 %v5607
    %5644 = vmatprep.subr.bf16.mxu0 0
    %5645 = vmatpush1.bf16.msra.mxu0 0
    %5646 = vmatprep.subr.bf16.mxu0 0
    %5647 = vmatpush1.bf16.msra.mxu0 0
    %5648 = vmatprep.subr.bf16.mxu0 0
    %5649 = vmatpush1.bf16.msra.mxu0 0
    %5650 = vmatprep.subr.bf16.mxu0 0
    %5651 = vmatpush1.bf16.msra.mxu0 0
    %5652 = vmatprep.subr.bf16.mxu0 0
    %5653 = vmatpush1.bf16.msra.mxu0 0
    %5654 = vmatprep.subr.bf16.mxu0 0
    %5655 = vmatpush1.bf16.msra.mxu0 0
    %5656 = vmatprep.subr.bf16.mxu0 0
    %5657 = vmatpush1.bf16.msra.mxu0 0
    %5658 = vmatprep.subr.bf16.mxu0 0
    %5659 = vmatpush1.bf16.msra.mxu0 0
    %5660 = vmatprep.subr.bf16.mxu0 0
    %5661 = vmatpush1.bf16.msra.mxu0 0
    %5662 = vmatprep.subr.bf16.mxu0 0
    %5663 = vmatpush1.bf16.msra.mxu0 0
    %5664 = vmatprep.subr.bf16.mxu0 0
    %5665 = vmatpush1.bf16.msra.mxu0 0
    %5666 = vmatprep.subr.bf16.mxu0 0
    %5667 = vmatpush1.bf16.msra.mxu0 0
    %5668 = vmatprep.mubr.bf16.mxu0 0
    %5669 = vmatmul.mubr.bf16.gmra.mrb[0].mxu0 %v5613
    %v5670 = vpop.f32.mrb[0].mxu0
    %v5671 = vadd.f32 0.0, %v5670
    %v5672 = vpop.f32.mrb[0].mxu0
    %v5673 = vpop.f32.mrb[0].mxu0
    %v5674 = vadd.f32 0.0, %v5673
    %v5675 = vpop.f32.mrb[0].mxu0
    %5676 = vmatprep.mubr.bf16.mxu0 0
    %5677 = vmatmul.mubr.bf16.gmra.mrb[0].mxu0 %v5616
    %v5678 = vpop.f32.mrb[0].mxu0
    %v5679 = vadd.f32 0.0, %v5678
    %v5680 = vpop.f32.mrb[0].mxu0
    %v5681 = vpop.f32.mrb[0].mxu0
    %v5682 = vadd.f32 0.0, %v5681
    %v5683 = vpop.f32.mrb[0].mxu0
    %5684 = vmatprep.mubr.bf16.mxu0 0
    %5685 = vmatmul.mubr.bf16.gmra.mrb[0].mxu0 %v5619
    %v5686 = vpop.f32.mrb[0].mxu0
    %v5687 = vadd.f32 0.0, %v5686
    %v5688 = vpop.f32.mrb[0].mxu0
    %v5689 = vpop.f32.mrb[0].mxu0
    %v5690 = vadd.f32 0.0, %v5689
    %v5691 = vpop.f32.mrb[0].mxu0
    %5692 = vmatprep.mubr.bf16.mxu0 0
    %5693 = vmatmul.mubr.bf16.gmra.mrb[0].mxu0 %v5622
    %v5694 = vpop.f32.mrb[0].mxu0
    %v5695 = vadd.f32 0.0, %v5694
    %v5696 = vpop.f32.mrb[0].mxu0
    %v5697 = vpop.f32.mrb[0].mxu0
    %v5698 = vadd.f32 0.0, %v5697
    %v5699 = vpop.f32.mrb[0].mxu0
    %5700 = vmatprep.mubr.bf16.mxu0 0
    %5701 = vmatmul.mubr.bf16.gmra.mrb[0].mxu0 %v5625
    %v5702 = vpop.f32.mrb[0].mxu0
    %v5703 = vadd.f32 0.0, %v5702
    %v5704 = vpop.f32.mrb[0].mxu0
    %v5705 = vpop.f32.mrb[0].mxu0
    %v5706 = vadd.f32 0.0, %v5705
    %v5707 = vpop.f32.mrb[0].mxu0
    %5708 = vmatprep.mubr.bf16.mxu0 0
    %5709 = vmatmul.mubr.bf16.gmra.mrb[0].mxu0 %v5628
    %v5710 = vpop.f32.mrb[0].mxu0
    %v5711 = vadd.f32 0.0, %v5710
    %v5712 = vpop.f32.mrb[0].mxu0
    %v5713 = vpop.f32.mrb[0].mxu0
    %v5714 = vadd.f32 0.0, %v5713
    %v5715 = vpop.f32.mrb[0].mxu0
    %5716 = vmatprep.mubr.bf16.mxu0 0
    %5717 = vmatmul.mubr.bf16.gmra.mrb[0].mxu0 %v5631
    %v5718 = vpop.f32.mrb[0].mxu0
    %v5719 = vadd.f32 0.0, %v5718
    %v5720 = vpop.f32.mrb[0].mxu0
    %v5721 = vpop.f32.mrb[0].mxu0
    %v5722 = vadd.f32 0.0, %v5721
    %v5723 = vpop.f32.mrb[0].mxu0
    %5724 = vmatprep.mubr.bf16.mxu0 0
    %5725 = vmatmul.mubr.bf16.gmra.mrb[0].mxu0 %v5634
    %v5726 = vpop.f32.mrb[0].mxu0
    %v5727 = vadd.f32 0.0, %v5726
    %v5728 = vpop.f32.mrb[0].mxu0
    %v5729 = vpop.f32.mrb[0].mxu0
    %v5730 = vadd.f32 0.0, %v5729
    %v5731 = vpop.f32.mrb[0].mxu0
    %5732 = vdwg.mxu0
    %v5733 = vadd.f32 %v5168, %v5671
    %v5734 = vadd.f32 %v5169, %v5674
    %v5735 = vadd.f32 %v5170, %v5679
    %v5736 = vadd.f32 %v5171, %v5682
    %v5737 = vadd.f32 %v5172, %v5687
    %v5738 = vadd.f32 %v5173, %v5690
    %v5739 = vadd.f32 %v5174, %v5695
    %v5740 = vadd.f32 %v5175, %v5698
    %v5741 = vadd.f32 %v5176, %v5703
    %v5742 = vadd.f32 %v5177, %v5706
    %v5743 = vadd.f32 %v5178, %v5711
    %v5744 = vadd.f32 %v5179, %v5714
    %v5745 = vadd.f32 %v5180, %v5719
    %v5746 = vadd.f32 %v5181, %v5722
    %v5747 = vadd.f32 %v5182, %v5727
    %v5748 = vadd.f32 %v5183, %v5730
    %s5749 = scalar_lea.vmem %s4, 2048
    %v5750 = vld [vmem:[%s5749] sm:$0xff]
    %v5751 = vld [vmem:[%s5749 + $0x8] sm:$0xff]
    %v5752 = vld [vmem:[%s5749 + $0x10] sm:$0xff]
    %v5753 = vld [vmem:[%s5749 + $0x18] sm:$0xff]
    %v5754 = vld [vmem:[%s5749 + $0x20] sm:$0xff]
    %v5755 = vld [vmem:[%s5749 + $0x28] sm:$0xff]
    %v5756 = vld [vmem:[%s5749 + $0x30] sm:$0xff]
    %v5757 = vld [vmem:[%s5749 + $0x38] sm:$0xff]
    %v5758 = vld [vmem:[%s5749 + $0x40] sm:$0xff]
    %v5759 = vld [vmem:[%s5749 + $0x48] sm:$0xff]
    %v5760 = vld [vmem:[%s5749 + $0x50] sm:$0xff]
    %v5761 = vld [vmem:[%s5749 + $0x58] sm:$0xff]
    %v5762 = vld [vmem:[%s5749 + $0x60] sm:$0xff]
    %v5763 = vld [vmem:[%s5749 + $0x68] sm:$0xff]
    %v5764 = vld [vmem:[%s5749 + $0x70] sm:$0xff]
    %v5765 = vld [vmem:[%s5749 + $0x78] sm:$0xff]
    %v5766 = vld [vmem:[%s5749 + $0x80] sm:$0xff]
    %v5767 = vld [vmem:[%s5749 + $0x88] sm:$0xff]
    %v5768 = vld [vmem:[%s5749 + $0x90] sm:$0xff]
    %v5769 = vld [vmem:[%s5749 + $0x98] sm:$0xff]
    %v5770 = vld [vmem:[%s5749 + $0xa0] sm:$0xff]
    %v5771 = vld [vmem:[%s5749 + $0xa8] sm:$0xff]
    %v5772 = vld [vmem:[%s5749 + $0xb0] sm:$0xff]
    %v5773 = vld [vmem:[%s5749 + $0xb8] sm:$0xff]
    %v5774 = vld [vmem:[%s5749 + $0xc0] sm:$0xff]
    %v5775 = vld [vmem:[%s5749 + $0xc8] sm:$0xff]
    %v5776 = vld [vmem:[%s5749 + $0xd0] sm:$0xff]
    %v5777 = vld [vmem:[%s5749 + $0xd8] sm:$0xff]
    %v5778 = vld [vmem:[%s5749 + $0xe0] sm:$0xff]
    %v5779 = vld [vmem:[%s5749 + $0xe8] sm:$0xff]
    %v5780 = vld [vmem:[%s5749 + $0xf0] sm:$0xff]
    %v5781 = vld [vmem:[%s5749 + $0xf8] sm:$0xff]
    %v5814 = vunpack.c.l.b16 %v5750
    %v5815 = vunpack.c.h.b16 %v5750
    %v5816 = vunpack.c.l.b16 %v5751
    %v5817 = vunpack.c.h.b16 %v5751
    %v5818 = vunpack.c.l.b16 %v5752
    %v5819 = vunpack.c.h.b16 %v5752
    %v5820 = vunpack.c.l.b16 %v5753
    %v5821 = vunpack.c.h.b16 %v5753
    %v5822 = vunpack.c.l.b16 %v5754
    %v5823 = vunpack.c.h.b16 %v5754
    %v5824 = vunpack.c.l.b16 %v5755
    %v5825 = vunpack.c.h.b16 %v5755
    %v5826 = vunpack.c.l.b16 %v5756
    %v5827 = vunpack.c.h.b16 %v5756
    %v5828 = vunpack.c.l.b16 %v5757
    %v5829 = vunpack.c.h.b16 %v5757
    %v5830 = vunpack.c.l.b16 %v5758
    %v5831 = vunpack.c.h.b16 %v5758
    %v5832 = vunpack.c.l.b16 %v5759
    %v5833 = vunpack.c.h.b16 %v5759
    %v5834 = vunpack.c.l.b16 %v5760
    %v5835 = vunpack.c.h.b16 %v5760
    %v5836 = vunpack.c.l.b16 %v5761
    %v5837 = vunpack.c.h.b16 %v5761
    %v5838 = vunpack.c.l.b16 %v5762
    %v5839 = vunpack.c.h.b16 %v5762
    %v5840 = vunpack.c.l.b16 %v5763
    %v5841 = vunpack.c.h.b16 %v5763
    %v5842 = vunpack.c.l.b16 %v5764
    %v5843 = vunpack.c.h.b16 %v5764
    %v5844 = vunpack.c.l.b16 %v5765
    %v5845 = vunpack.c.h.b16 %v5765
    %v5846 = vunpack.c.l.b16 %v5766
    %v5847 = vunpack.c.h.b16 %v5766
    %v5848 = vunpack.c.l.b16 %v5767
    %v5849 = vunpack.c.h.b16 %v5767
    %v5850 = vunpack.c.l.b16 %v5768
    %v5851 = vunpack.c.h.b16 %v5768
    %v5852 = vunpack.c.l.b16 %v5769
    %v5853 = vunpack.c.h.b16 %v5769
    %v5854 = vunpack.c.l.b16 %v5770
    %v5855 = vunpack.c.h.b16 %v5770
    %v5856 = vunpack.c.l.b16 %v5771
    %v5857 = vunpack.c.h.b16 %v5771
    %v5858 = vunpack.c.l.b16 %v5772
    %v5859 = vunpack.c.h.b16 %v5772
    %v5860 = vunpack.c.l.b16 %v5773
    %v5861 = vunpack.c.h.b16 %v5773
    %v5862 = vunpack.c.l.b16 %v5774
    %v5863 = vunpack.c.h.b16 %v5774
    %v5864 = vunpack.c.l.b16 %v5775
    %v5865 = vunpack.c.h.b16 %v5775
    %v5866 = vunpack.c.l.b16 %v5776
    %v5867 = vunpack.c.h.b16 %v5776
    %v5868 = vunpack.c.l.b16 %v5777
    %v5869 = vunpack.c.h.b16 %v5777
    %v5870 = vunpack.c.l.b16 %v5778
    %v5871 = vunpack.c.h.b16 %v5778
    %v5872 = vunpack.c.l.b16 %v5779
    %v5873 = vunpack.c.h.b16 %v5779
    %v5874 = vunpack.c.l.b16 %v5780
    %v5875 = vunpack.c.h.b16 %v5780
    %v5876 = vunpack.c.l.b16 %v5781
    %v5877 = vunpack.c.h.b16 %v5781
    %v5878 = vpack.c.b16 %v5818, %v5814
    %v5879 = vpack.c.b16 %v5819, %v5815
    %v5880 = vpack.c.b16 %v5820, %v5816
    %v5881 = vpack.c.b16 %v5821, %v5817
    %v5882 = vpack.c.b16 %v5826, %v5822
    %v5883 = vpack.c.b16 %v5827, %v5823
    %v5884 = vpack.c.b16 %v5828, %v5824
    %v5885 = vpack.c.b16 %v5829, %v5825
    %v5886 = vpack.c.b16 %v5834, %v5830
    %v5887 = vpack.c.b16 %v5835, %v5831
    %v5888 = vpack.c.b16 %v5836, %v5832
    %v5889 = vpack.c.b16 %v5837, %v5833
    %v5890 = vpack.c.b16 %v5842, %v5838
    %v5891 = vpack.c.b16 %v5843, %v5839
    %v5892 = vpack.c.b16 %v5844, %v5840
    %v5893 = vpack.c.b16 %v5845, %v5841
    %v5894 = vpack.c.b16 %v5850, %v5846
    %v5895 = vpack.c.b16 %v5851, %v5847
    %v5896 = vpack.c.b16 %v5852, %v5848
    %v5897 = vpack.c.b16 %v5853, %v5849
    %v5898 = vpack.c.b16 %v5858, %v5854
    %v5899 = vpack.c.b16 %v5859, %v5855
    %v5900 = vpack.c.b16 %v5860, %v5856
    %v5901 = vpack.c.b16 %v5861, %v5857
    %v5902 = vpack.c.b16 %v5866, %v5862
    %v5903 = vpack.c.b16 %v5867, %v5863
    %v5904 = vpack.c.b16 %v5868, %v5864
    %v5905 = vpack.c.b16 %v5869, %v5865
    %v5906 = vpack.c.b16 %v5874, %v5870
    %v5907 = vpack.c.b16 %v5875, %v5871
    %v5908 = vpack.c.b16 %v5876, %v5872
    %v5909 = vpack.c.b16 %v5877, %v5873
    %5942 = vmatprep.subr.bf16.mxu0 0
    %5943 = vmatpush1.bf16.msra.mxu0 %v1229
    %5944 = vmatprep.subr.bf16.mxu0 0
    %5945 = vmatpush1.bf16.msra.mxu0 %v1230
    %5946 = vmatprep.subr.bf16.mxu0 0
    %5947 = vmatpush1.bf16.msra.mxu0 %v1231
    %5948 = vmatprep.subr.bf16.mxu0 0
    %5949 = vmatpush1.bf16.msra.mxu0 %v1232
    %5950 = vmatprep.subr.bf16.mxu0 0
    %5951 = vmatpush1.bf16.msra.mxu0 %v1233
    %5952 = vmatprep.subr.bf16.mxu0 0
    %5953 = vmatpush1.bf16.msra.mxu0 %v1234
    %5954 = vmatprep.subr.bf16.mxu0 0
    %5955 = vmatpush1.bf16.msra.mxu0 %v1235
    %5956 = vmatprep.subr.bf16.mxu0 0
    %5957 = vmatpush1.bf16.msra.mxu0 %v1236
    %5958 = vmatprep.subr.bf16.mxu0 0
    %5959 = vmatpush1.bf16.msra.mxu0 %v1237
    %5960 = vmatprep.subr.bf16.mxu0 0
    %5961 = vmatpush1.bf16.msra.mxu0 %v1238
    %5962 = vmatprep.subr.bf16.mxu0 0
    %5963 = vmatpush1.bf16.msra.mxu0 %v1239
    %5964 = vmatprep.subr.bf16.mxu0 0
    %5965 = vmatpush1.bf16.msra.mxu0 %v1240
    %5966 = vmatprep.subr.bf16.mxu0 0
    %5967 = vmatpush1.bf16.msra.mxu0 %v1241
    %5968 = vmatprep.subr.bf16.mxu0 0
    %5969 = vmatpush1.bf16.msra.mxu0 %v1242
    %5970 = vmatprep.subr.bf16.mxu0 0
    %5971 = vmatpush1.bf16.msra.mxu0 %v1243
    %5972 = vmatprep.subr.bf16.mxu0 0
    %5973 = vmatpush1.bf16.msra.mxu0 %v1244
    %5974 = vmatprep.mubr.bf16.mxu0 %v5879
    %5975 = vmatmul.mubr.bf16.gmra.mrb[0].mxu0 %v5878
    %v5976 = vpop.f32.mrb[0].mxu0
    %v5977 = vadd.f32 0.0, %v5976
    %v5978 = vpop.f32.mrb[0].mxu0
    %v5979 = vpop.f32.mrb[0].mxu0
    %v5980 = vadd.f32 0.0, %v5979
    %v5981 = vpop.f32.mrb[0].mxu0
    %5982 = vmatprep.mubr.bf16.mxu0 %v5883
    %5983 = vmatmul.mubr.bf16.gmra.mrb[0].mxu0 %v5882
    %v5984 = vpop.f32.mrb[0].mxu0
    %v5985 = vadd.f32 0.0, %v5984
    %v5986 = vpop.f32.mrb[0].mxu0
    %v5987 = vpop.f32.mrb[0].mxu0
    %v5988 = vadd.f32 0.0, %v5987
    %v5989 = vpop.f32.mrb[0].mxu0
    %5990 = vmatprep.mubr.bf16.mxu0 %v5887
    %5991 = vmatmul.mubr.bf16.gmra.mrb[0].mxu0 %v5886
    %v5992 = vpop.f32.mrb[0].mxu0
    %v5993 = vadd.f32 0.0, %v5992
    %v5994 = vpop.f32.mrb[0].mxu0
    %v5995 = vpop.f32.mrb[0].mxu0
    %v5996 = vadd.f32 0.0, %v5995
    %v5997 = vpop.f32.mrb[0].mxu0
    %5998 = vmatprep.mubr.bf16.mxu0 %v5891
    %5999 = vmatmul.mubr.bf16.gmra.mrb[0].mxu0 %v5890
    %v6000 = vpop.f32.mrb[0].mxu0
    %v6001 = vadd.f32 0.0, %v6000
    %v6002 = vpop.f32.mrb[0].mxu0
    %v6003 = vpop.f32.mrb[0].mxu0
    %v6004 = vadd.f32 0.0, %v6003
    %v6005 = vpop.f32.mrb[0].mxu0
    %6006 = vmatprep.mubr.bf16.mxu0 %v5895
    %6007 = vmatmul.mubr.bf16.gmra.mrb[0].mxu0 %v5894
    %v6008 = vpop.f32.mrb[0].mxu0
    %v6009 = vadd.f32 0.0, %v6008
    %v6010 = vpop.f32.mrb[0].mxu0
    %v6011 = vpop.f32.mrb[0].mxu0
    %v6012 = vadd.f32 0.0, %v6011
    %v6013 = vpop.f32.mrb[0].mxu0
    %6014 = vmatprep.mubr.bf16.mxu0 %v5899
    %6015 = vmatmul.mubr.bf16.gmra.mrb[0].mxu0 %v5898
    %v6016 = vpop.f32.mrb[0].mxu0
    %v6017 = vadd.f32 0.0, %v6016
    %v6018 = vpop.f32.mrb[0].mxu0
    %v6019 = vpop.f32.mrb[0].mxu0
    %v6020 = vadd.f32 0.0, %v6019
    %v6021 = vpop.f32.mrb[0].mxu0
    %6022 = vmatprep.mubr.bf16.mxu0 %v5903
    %6023 = vmatmul.mubr.bf16.gmra.mrb[0].mxu0 %v5902
    %v6024 = vpop.f32.mrb[0].mxu0
    %v6025 = vadd.f32 0.0, %v6024
    %v6026 = vpop.f32.mrb[0].mxu0
    %v6027 = vpop.f32.mrb[0].mxu0
    %v6028 = vadd.f32 0.0, %v6027
    %v6029 = vpop.f32.mrb[0].mxu0
    %6030 = vmatprep.mubr.bf16.mxu0 %v5907
    %6031 = vmatmul.mubr.bf16.gmra.mrb[0].mxu0 %v5906
    %v6032 = vpop.f32.mrb[0].mxu0
    %v6033 = vadd.f32 0.0, %v6032
    %v6034 = vpop.f32.mrb[0].mxu0
    %v6035 = vpop.f32.mrb[0].mxu0
    %v6036 = vadd.f32 0.0, %v6035
    %v6037 = vpop.f32.mrb[0].mxu0
    %6038 = vdwg.mxu0
    %6039 = vmatprep.subr.bf16.mxu0 0
    %6040 = vmatpush1.bf16.msra.mxu0 %v1245
    %6041 = vmatprep.subr.bf16.mxu0 0
    %6042 = vmatpush1.bf16.msra.mxu0 %v1246
    %6043 = vmatprep.subr.bf16.mxu0 0
    %6044 = vmatpush1.bf16.msra.mxu0 %v1247
    %6045 = vmatprep.subr.bf16.mxu0 0
    %6046 = vmatpush1.bf16.msra.mxu0 %v1248
    %6047 = vmatprep.subr.bf16.mxu0 0
    %6048 = vmatpush1.bf16.msra.mxu0 %v1249
    %6049 = vmatprep.subr.bf16.mxu0 0
    %6050 = vmatpush1.bf16.msra.mxu0 %v1250
    %6051 = vmatprep.subr.bf16.mxu0 0
    %6052 = vmatpush1.bf16.msra.mxu0 %v1251
    %6053 = vmatprep.subr.bf16.mxu0 0
    %6054 = vmatpush1.bf16.msra.mxu0 %v1252
    %6055 = vmatprep.subr.bf16.mxu0 0
    %6056 = vmatpush1.bf16.msra.mxu0 %v1253
    %6057 = vmatprep.subr.bf16.mxu0 0
    %6058 = vmatpush1.bf16.msra.mxu0 %v1254
    %6059 = vmatprep.subr.bf16.mxu0 0
    %6060 = vmatpush1.bf16.msra.mxu0 %v1255
    %6061 = vmatprep.subr.bf16.mxu0 0
    %6062 = vmatpush1.bf16.msra.mxu0 %v1256
    %6063 = vmatprep.subr.bf16.mxu0 0
    %6064 = vmatpush1.bf16.msra.mxu0 %v1257
    %6065 = vmatprep.subr.bf16.mxu0 0
    %6066 = vmatpush1.bf16.msra.mxu0 %v1258
    %6067 = vmatprep.subr.bf16.mxu0 0
    %6068 = vmatpush1.bf16.msra.mxu0 %v1259
    %6069 = vmatprep.subr.bf16.mxu0 0
    %6070 = vmatpush1.bf16.msra.mxu0 %v1260
    %6071 = vmatprep.mubr.bf16.mxu0 %v5881
    %6072 = vmatmul.mubr.bf16.gmra.mrb[0].mxu0 %v5880
    %v6073 = vpop.f32.mrb[0].mxu0
    %v6074 = vadd.f32 %v5977, %v6073
    %v6075 = vpop.f32.mrb[0].mxu0
    %v6076 = vpop.f32.mrb[0].mxu0
    %v6077 = vadd.f32 %v5980, %v6076
    %v6078 = vpop.f32.mrb[0].mxu0
    %6079 = vmatprep.mubr.bf16.mxu0 %v5885
    %6080 = vmatmul.mubr.bf16.gmra.mrb[0].mxu0 %v5884
    %v6081 = vpop.f32.mrb[0].mxu0
    %v6082 = vadd.f32 %v5985, %v6081
    %v6083 = vpop.f32.mrb[0].mxu0
    %v6084 = vpop.f32.mrb[0].mxu0
    %v6085 = vadd.f32 %v5988, %v6084
    %v6086 = vpop.f32.mrb[0].mxu0
    %6087 = vmatprep.mubr.bf16.mxu0 %v5889
    %6088 = vmatmul.mubr.bf16.gmra.mrb[0].mxu0 %v5888
    %v6089 = vpop.f32.mrb[0].mxu0
    %v6090 = vadd.f32 %v5993, %v6089
    %v6091 = vpop.f32.mrb[0].mxu0
    %v6092 = vpop.f32.mrb[0].mxu0
    %v6093 = vadd.f32 %v5996, %v6092
    %v6094 = vpop.f32.mrb[0].mxu0
    %6095 = vmatprep.mubr.bf16.mxu0 %v5893
    %6096 = vmatmul.mubr.bf16.gmra.mrb[0].mxu0 %v5892
    %v6097 = vpop.f32.mrb[0].mxu0
    %v6098 = vadd.f32 %v6001, %v6097
    %v6099 = vpop.f32.mrb[0].mxu0
    %v6100 = vpop.f32.mrb[0].mxu0
    %v6101 = vadd.f32 %v6004, %v6100
    %v6102 = vpop.f32.mrb[0].mxu0
    %6103 = vmatprep.mubr.bf16.mxu0 %v5897
    %6104 = vmatmul.mubr.bf16.gmra.mrb[0].mxu0 %v5896
    %v6105 = vpop.f32.mrb[0].mxu0
    %v6106 = vadd.f32 %v6009, %v6105
    %v6107 = vpop.f32.mrb[0].mxu0
    %v6108 = vpop.f32.mrb[0].mxu0
    %v6109 = vadd.f32 %v6012, %v6108
    %v6110 = vpop.f32.mrb[0].mxu0
    %6111 = vmatprep.mubr.bf16.mxu0 %v5901
    %6112 = vmatmul.mubr.bf16.gmra.mrb[0].mxu0 %v5900
    %v6113 = vpop.f32.mrb[0].mxu0
    %v6114 = vadd.f32 %v6017, %v6113
    %v6115 = vpop.f32.mrb[0].mxu0
    %v6116 = vpop.f32.mrb[0].mxu0
    %v6117 = vadd.f32 %v6020, %v6116
    %v6118 = vpop.f32.mrb[0].mxu0
    %6119 = vmatprep.mubr.bf16.mxu0 %v5905
    %6120 = vmatmul.mubr.bf16.gmra.mrb[0].mxu0 %v5904
    %v6121 = vpop.f32.mrb[0].mxu0
    %v6122 = vadd.f32 %v6025, %v6121
    %v6123 = vpop.f32.mrb[0].mxu0
    %v6124 = vpop.f32.mrb[0].mxu0
    %v6125 = vadd.f32 %v6028, %v6124
    %v6126 = vpop.f32.mrb[0].mxu0
    %6127 = vmatprep.mubr.bf16.mxu0 %v5909
    %6128 = vmatmul.mubr.bf16.gmra.mrb[0].mxu0 %v5908
    %v6129 = vpop.f32.mrb[0].mxu0
    %v6130 = vadd.f32 %v6033, %v6129
    %v6131 = vpop.f32.mrb[0].mxu0
    %v6132 = vpop.f32.mrb[0].mxu0
    %v6133 = vadd.f32 %v6036, %v6132
    %v6134 = vpop.f32.mrb[0].mxu0
    %6135 = vdwg.mxu0
    %v6136 = vpack.c.bf16 %v6077, %v6074
    %v6137 = vpack.c.bf16 %v6085, %v6082
    %v6138 = vpack.c.bf16 %v6093, %v6090
    %v6139 = vpack.c.bf16 %v6101, %v6098
    %v6140 = vpack.c.bf16 %v6109, %v6106
    %v6141 = vpack.c.bf16 %v6117, %v6114
    %v6142 = vpack.c.bf16 %v6125, %v6122
    %v6143 = vpack.c.bf16 %v6133, %v6130
    %s6144 = scalar_lea.vmem %s5, 256
    %v6145 = vld [vmem:[%s6144] sm:$0xf]
    %v6146 = vld [vmem:[%s6144 + $0x4] sm:$0xf]
    %v6147 = vld [vmem:[%s6144 + $0x8] sm:$0xf]
    %v6148 = vld [vmem:[%s6144 + $0xc] sm:$0xf]
    %v6149 = vld [vmem:[%s6144 + $0x10] sm:$0xf]
    %v6150 = vld [vmem:[%s6144 + $0x14] sm:$0xf]
    %v6151 = vld [vmem:[%s6144 + $0x18] sm:$0xf]
    %v6152 = vld [vmem:[%s6144 + $0x1c] sm:$0xf]
    %v6161 = vunpack.c.l.b16 %v6145
    %v6162 = vunpack.c.l.b16 %v6146
    %v6163 = vunpack.c.l.b16 %v6147
    %v6164 = vunpack.c.l.b16 %v6148
    %v6165 = vunpack.c.l.b16 %v6149
    %v6166 = vunpack.c.l.b16 %v6150
    %v6167 = vunpack.c.l.b16 %v6151
    %v6168 = vunpack.c.l.b16 %v6152
    %v6169 = vpack.c.b16 %v6162, %v6161
    %v6170 = vpack.c.b16 %v6164, %v6163
    %v6171 = vpack.c.b16 %v6166, %v6165
    %v6172 = vpack.c.b16 %v6168, %v6167
    %v6178 = vsel %vm685, %v6136, 0
    %v6181 = vsel %vm685, %v6137, 0
    %v6184 = vsel %vm685, %v6138, 0
    %v6187 = vsel %vm685, %v6139, 0
    %v6190 = vsel %vm685, %v6140, 0
    %v6193 = vsel %vm685, %v6141, 0
    %v6196 = vsel %vm685, %v6142, 0
    %v6199 = vsel %vm685, %v6143, 0
    %6201 = vmatprep.subr.bf16.mxu0 0
    %6202 = vmatpush1.bf16.msra.mxu0 %v6169
    %6203 = vmatprep.subr.bf16.mxu0 0
    %6204 = vmatpush1.bf16.msra.mxu0 %v6170
    %6205 = vmatprep.subr.bf16.mxu0 0
    %6206 = vmatpush1.bf16.msra.mxu0 %v6171
    %6207 = vmatprep.subr.bf16.mxu0 0
    %6208 = vmatpush1.bf16.msra.mxu0 %v6172
    %6209 = vmatprep.subr.bf16.mxu0 0
    %6210 = vmatpush1.bf16.msra.mxu0 0
    %6211 = vmatprep.subr.bf16.mxu0 0
    %6212 = vmatpush1.bf16.msra.mxu0 0
    %6213 = vmatprep.subr.bf16.mxu0 0
    %6214 = vmatpush1.bf16.msra.mxu0 0
    %6215 = vmatprep.subr.bf16.mxu0 0
    %6216 = vmatpush1.bf16.msra.mxu0 0
    %6217 = vmatprep.subr.bf16.mxu0 0
    %6218 = vmatpush1.bf16.msra.mxu0 0
    %6219 = vmatprep.subr.bf16.mxu0 0
    %6220 = vmatpush1.bf16.msra.mxu0 0
    %6221 = vmatprep.subr.bf16.mxu0 0
    %6222 = vmatpush1.bf16.msra.mxu0 0
    %6223 = vmatprep.subr.bf16.mxu0 0
    %6224 = vmatpush1.bf16.msra.mxu0 0
    %6225 = vmatprep.subr.bf16.mxu0 0
    %6226 = vmatpush1.bf16.msra.mxu0 0
    %6227 = vmatprep.subr.bf16.mxu0 0
    %6228 = vmatpush1.bf16.msra.mxu0 0
    %6229 = vmatprep.subr.bf16.mxu0 0
    %6230 = vmatpush1.bf16.msra.mxu0 0
    %6231 = vmatprep.subr.bf16.mxu0 0
    %6232 = vmatpush1.bf16.msra.mxu0 0
    %6233 = vmatprep.mubr.bf16.mxu0 0
    %6234 = vmatmul.mubr.bf16.gmra.mrb[0].mxu0 %v6178
    %v6235 = vpop.f32.mrb[0].mxu0
    %v6236 = vadd.f32 0.0, %v6235
    %v6237 = vpop.f32.mrb[0].mxu0
    %v6238 = vpop.f32.mrb[0].mxu0
    %v6239 = vadd.f32 0.0, %v6238
    %v6240 = vpop.f32.mrb[0].mxu0
    %6241 = vmatprep.mubr.bf16.mxu0 0
    %6242 = vmatmul.mubr.bf16.gmra.mrb[0].mxu0 %v6181
    %v6243 = vpop.f32.mrb[0].mxu0
    %v6244 = vadd.f32 0.0, %v6243
    %v6245 = vpop.f32.mrb[0].mxu0
    %v6246 = vpop.f32.mrb[0].mxu0
    %v6247 = vadd.f32 0.0, %v6246
    %v6248 = vpop.f32.mrb[0].mxu0
    %6249 = vmatprep.mubr.bf16.mxu0 0
    %6250 = vmatmul.mubr.bf16.gmra.mrb[0].mxu0 %v6184
    %v6251 = vpop.f32.mrb[0].mxu0
    %v6252 = vadd.f32 0.0, %v6251
    %v6253 = vpop.f32.mrb[0].mxu0
    %v6254 = vpop.f32.mrb[0].mxu0
    %v6255 = vadd.f32 0.0, %v6254
    %v6256 = vpop.f32.mrb[0].mxu0
    %6257 = vmatprep.mubr.bf16.mxu0 0
    %6258 = vmatmul.mubr.bf16.gmra.mrb[0].mxu0 %v6187
    %v6259 = vpop.f32.mrb[0].mxu0
    %v6260 = vadd.f32 0.0, %v6259
    %v6261 = vpop.f32.mrb[0].mxu0
    %v6262 = vpop.f32.mrb[0].mxu0
    %v6263 = vadd.f32 0.0, %v6262
    %v6264 = vpop.f32.mrb[0].mxu0
    %6265 = vmatprep.mubr.bf16.mxu0 0
    %6266 = vmatmul.mubr.bf16.gmra.mrb[0].mxu0 %v6190
    %v6267 = vpop.f32.mrb[0].mxu0
    %v6268 = vadd.f32 0.0, %v6267
    %v6269 = vpop.f32.mrb[0].mxu0
    %v6270 = vpop.f32.mrb[0].mxu0
    %v6271 = vadd.f32 0.0, %v6270
    %v6272 = vpop.f32.mrb[0].mxu0
    %6273 = vmatprep.mubr.bf16.mxu0 0
    %6274 = vmatmul.mubr.bf16.gmra.mrb[0].mxu0 %v6193
    %v6275 = vpop.f32.mrb[0].mxu0
    %v6276 = vadd.f32 0.0, %v6275
    %v6277 = vpop.f32.mrb[0].mxu0
    %v6278 = vpop.f32.mrb[0].mxu0
    %v6279 = vadd.f32 0.0, %v6278
    %v6280 = vpop.f32.mrb[0].mxu0
    %6281 = vmatprep.mubr.bf16.mxu0 0
    %6282 = vmatmul.mubr.bf16.gmra.mrb[0].mxu0 %v6196
    %v6283 = vpop.f32.mrb[0].mxu0
    %v6284 = vadd.f32 0.0, %v6283
    %v6285 = vpop.f32.mrb[0].mxu0
    %v6286 = vpop.f32.mrb[0].mxu0
    %v6287 = vadd.f32 0.0, %v6286
    %v6288 = vpop.f32.mrb[0].mxu0
    %6289 = vmatprep.mubr.bf16.mxu0 0
    %6290 = vmatmul.mubr.bf16.gmra.mrb[0].mxu0 %v6199
    %v6291 = vpop.f32.mrb[0].mxu0
    %v6292 = vadd.f32 0.0, %v6291
    %v6293 = vpop.f32.mrb[0].mxu0
    %v6294 = vpop.f32.mrb[0].mxu0
    %v6295 = vadd.f32 0.0, %v6294
    %v6296 = vpop.f32.mrb[0].mxu0
    %6297 = vdwg.mxu0
    %v6298 = vadd.f32 %v5733, %v6236
    %v6299 = vadd.f32 %v5734, %v6239
    %v6300 = vadd.f32 %v5735, %v6244
    %v6301 = vadd.f32 %v5736, %v6247
    %v6302 = vadd.f32 %v5737, %v6252
    %v6303 = vadd.f32 %v5738, %v6255
    %v6304 = vadd.f32 %v5739, %v6260
    %v6305 = vadd.f32 %v5740, %v6263
    %v6306 = vadd.f32 %v5741, %v6268
    %v6307 = vadd.f32 %v5742, %v6271
    %v6308 = vadd.f32 %v5743, %v6276
    %v6309 = vadd.f32 %v5744, %v6279
    %v6310 = vadd.f32 %v5745, %v6284
    %v6311 = vadd.f32 %v5746, %v6287
    %v6312 = vadd.f32 %v5747, %v6292
    %v6313 = vadd.f32 %v5748, %v6295
    %v6314 = vadd.f32 %v6298, %v6299
    %v6315 = vadd.f32 %v6314, %v6300
    %v6316 = vadd.f32 %v6315, %v6301
    %v6317 = vadd.f32 %v6316, %v6302
    %v6318 = vadd.f32 %v6317, %v6303
    %v6319 = vadd.f32 %v6318, %v6304
    %v6320 = vadd.f32 %v6319, %v6305
    %v6321 = vadd.f32 %v6320, %v6306
    %v6322 = vadd.f32 %v6321, %v6307
    %v6323 = vadd.f32 %v6322, %v6308
    %v6324 = vadd.f32 %v6323, %v6309
    %v6325 = vadd.f32 %v6324, %v6310
    %v6326 = vadd.f32 %v6325, %v6311
    %v6327 = vadd.f32 %v6326, %v6312
    %v6328 = vadd.f32 %v6327, %v6313
    %v6329 = vrot.slane %v6328, 4
    %v6330 = vadd.f32 %v6328, %v6329
    %v6331 = vrot.slane %v6330, 2
    %v6332 = vadd.f32 %v6330, %v6331
    %v6333 = vrot.slane %v6332, 1
    %v6334 = vadd.f32 %v6332, %v6333
    %v6335 = vmul.f32 %v6298, %v6298
    %v6336 = vmul.f32 %v6299, %v6299
    %v6337 = vmul.f32 %v6300, %v6300
    %v6338 = vmul.f32 %v6301, %v6301
    %v6339 = vmul.f32 %v6302, %v6302
    %v6340 = vmul.f32 %v6303, %v6303
    %v6341 = vmul.f32 %v6304, %v6304
    %v6342 = vmul.f32 %v6305, %v6305
    %v6343 = vmul.f32 %v6306, %v6306
    %v6344 = vmul.f32 %v6307, %v6307
    %v6345 = vmul.f32 %v6308, %v6308
    %v6346 = vmul.f32 %v6309, %v6309
    %v6347 = vmul.f32 %v6310, %v6310
    %v6348 = vmul.f32 %v6311, %v6311
    %v6349 = vmul.f32 %v6312, %v6312
    %v6350 = vmul.f32 %v6313, %v6313
    %v6351 = vadd.f32 %v6335, %v6336
    %v6352 = vadd.f32 %v6351, %v6337
    %v6353 = vadd.f32 %v6352, %v6338
    %v6354 = vadd.f32 %v6353, %v6339
    %v6355 = vadd.f32 %v6354, %v6340
    %v6356 = vadd.f32 %v6355, %v6341
    %v6357 = vadd.f32 %v6356, %v6342
    %v6358 = vadd.f32 %v6357, %v6343
    %v6359 = vadd.f32 %v6358, %v6344
    %v6360 = vadd.f32 %v6359, %v6345
    %v6361 = vadd.f32 %v6360, %v6346
    %v6362 = vadd.f32 %v6361, %v6347
    %v6363 = vadd.f32 %v6362, %v6348
    %v6364 = vadd.f32 %v6363, %v6349
    %v6365 = vadd.f32 %v6364, %v6350
    %v6366 = vrot.slane %v6365, 4
    %v6367 = vadd.f32 %v6365, %v6366
    %v6368 = vrot.slane %v6367, 2
    %v6369 = vadd.f32 %v6367, %v6368
    %v6370 = vrot.slane %v6369, 1
    %v6371 = vadd.f32 %v6369, %v6370
    %v6372 = vmul.f32 %v6334, 0.0078125
    %v6373 = vmul.f32 %v6371, 0.0078125
    %v6374 = vmul.f32 %v6372, %v6372
    %v6375 = vsub.f32 %v6373, %v6374
    %v6376 = vadd.f32 %v6375, 1e-05
    %v6377 = vrsqrt.pop %v6376
    %v6378 = vmul.f32 %v1261, %v6377
    %v6379 = vmul.f32 %v6372, %v6378
    %v6380 = vsub.f32 %v1262, %v6379
    %v6382 = vlaneseq
    %v6383 = vshrl.u32 %v6382, 7
    %v6384 = vsub.s32 0, %v6383
    %v6385 = vrot.slane %v6378, %v6384
    %v6387 = vmul.f32 %v6298, %v6385
    %v6388 = vmul.f32 %v6299, %v6385
    %v6389 = vmul.f32 %v6300, %v6385
    %v6390 = vmul.f32 %v6301, %v6385
    %v6391 = vmul.f32 %v6302, %v6385
    %v6392 = vmul.f32 %v6303, %v6385
    %v6393 = vmul.f32 %v6304, %v6385
    %v6394 = vmul.f32 %v6305, %v6385
    %v6395 = vmul.f32 %v6306, %v6385
    %v6396 = vmul.f32 %v6307, %v6385
    %v6397 = vmul.f32 %v6308, %v6385
    %v6398 = vmul.f32 %v6309, %v6385
    %v6399 = vmul.f32 %v6310, %v6385
    %v6400 = vmul.f32 %v6311, %v6385
    %v6401 = vmul.f32 %v6312, %v6385
    %v6402 = vmul.f32 %v6313, %v6385
    %v6404 = vlaneseq
    %v6405 = vshrl.u32 %v6404, 7
    %v6406 = vsub.s32 0, %v6405
    %v6407 = vrot.slane %v6380, %v6406
    %v6409 = vadd.f32 %v6387, %v6407
    %v6410 = vadd.f32 %v6388, %v6407
    %v6411 = vadd.f32 %v6389, %v6407
    %v6412 = vadd.f32 %v6390, %v6407
    %v6413 = vadd.f32 %v6391, %v6407
    %v6414 = vadd.f32 %v6392, %v6407
    %v6415 = vadd.f32 %v6393, %v6407
    %v6416 = vadd.f32 %v6394, %v6407
    %v6417 = vadd.f32 %v6395, %v6407
    %v6418 = vadd.f32 %v6396, %v6407
    %v6419 = vadd.f32 %v6397, %v6407
    %v6420 = vadd.f32 %v6398, %v6407
    %v6421 = vadd.f32 %v6399, %v6407
    %v6422 = vadd.f32 %v6400, %v6407
    %v6423 = vadd.f32 %v6401, %v6407
    %v6424 = vadd.f32 %v6402, %v6407
    %v6425 = vmax.f32 %v6409, 0.0
    %v6426 = vmax.f32 %v6410, 0.0
    %v6427 = vmax.f32 %v6411, 0.0
    %v6428 = vmax.f32 %v6412, 0.0
    %v6429 = vmax.f32 %v6413, 0.0
    %v6430 = vmax.f32 %v6414, 0.0
    %v6431 = vmax.f32 %v6415, 0.0
    %v6432 = vmax.f32 %v6416, 0.0
    %v6433 = vmax.f32 %v6417, 0.0
    %v6434 = vmax.f32 %v6418, 0.0
    %v6435 = vmax.f32 %v6419, 0.0
    %v6436 = vmax.f32 %v6420, 0.0
    %v6437 = vmax.f32 %v6421, 0.0
    %v6438 = vmax.f32 %v6422, 0.0
    %v6439 = vmax.f32 %v6423, 0.0
    %v6440 = vmax.f32 %v6424, 0.0
    %v6441 = vpack.c.bf16 %v6426, %v6425
    %v6442 = vpack.c.bf16 %v6428, %v6427
    %v6443 = vpack.c.bf16 %v6430, %v6429
    %v6444 = vpack.c.bf16 %v6432, %v6431
    %v6445 = vpack.c.bf16 %v6434, %v6433
    %v6446 = vpack.c.bf16 %v6436, %v6435
    %v6447 = vpack.c.bf16 %v6438, %v6437
    %v6448 = vpack.c.bf16 %v6440, %v6439
    %v6449 = vld [vmem:[%s10] sm:$0x3]
    %v6450 = vld [vmem:[%s11] sm:$0x3]
    %v6451 = vld [vmem:[%s8] sm:$0xf]
    %v6452 = vld [vmem:[%s8 + $0x4] sm:$0xf]
    %v6453 = vld [vmem:[%s8 + $0x8] sm:$0xf]
    %v6454 = vld [vmem:[%s8 + $0xc] sm:$0xf]
    %v6459 = vunpack.c.l.b16 %v6451
    %v6460 = vunpack.c.l.b16 %v6452
    %v6461 = vunpack.c.l.b16 %v6453
    %v6462 = vunpack.c.l.b16 %v6454
    %v6463 = vpack.c.b16 %v6460, %v6459
    %v6464 = vpack.c.b16 %v6462, %v6461
    %6467 = vmatprep.subr.bf16.mxu0 0
    %6468 = vmatpush1.bf16.msra.mxu0 %v6441
    %6469 = vmatprep.subr.bf16.mxu0 0
    %6470 = vmatpush1.bf16.msra.mxu0 %v6442
    %6471 = vmatprep.subr.bf16.mxu0 0
    %6472 = vmatpush1.bf16.msra.mxu0 %v6443
    %6473 = vmatprep.subr.bf16.mxu0 0
    %6474 = vmatpush1.bf16.msra.mxu0 %v6444
    %6475 = vmatprep.subr.bf16.mxu0 0
    %6476 = vmatpush1.bf16.msra.mxu0 %v6445
    %6477 = vmatprep.subr.bf16.mxu0 0
    %6478 = vmatpush1.bf16.msra.mxu0 %v6446
    %6479 = vmatprep.subr.bf16.mxu0 0
    %6480 = vmatpush1.bf16.msra.mxu0 %v6447
    %6481 = vmatprep.subr.bf16.mxu0 0
    %6482 = vmatpush1.bf16.msra.mxu0 %v6448
    %6483 = vmatprep.subr.bf16.mxu0 0
    %6484 = vmatpush1.bf16.msra.mxu0 0
    %6485 = vmatprep.subr.bf16.mxu0 0
    %6486 = vmatpush1.bf16.msra.mxu0 0
    %6487 = vmatprep.subr.bf16.mxu0 0
    %6488 = vmatpush1.bf16.msra.mxu0 0
    %6489 = vmatprep.subr.bf16.mxu0 0
    %6490 = vmatpush1.bf16.msra.mxu0 0
    %6491 = vmatprep.subr.bf16.mxu0 0
    %6492 = vmatpush1.bf16.msra.mxu0 0
    %6493 = vmatprep.subr.bf16.mxu0 0
    %6494 = vmatpush1.bf16.msra.mxu0 0
    %6495 = vmatprep.subr.bf16.mxu0 0
    %6496 = vmatpush1.bf16.msra.mxu0 0
    %6497 = vmatprep.subr.bf16.mxu0 0
    %6498 = vmatpush1.bf16.msra.mxu0 0
    %6499 = vmatprep.mubr.bf16.mxu0 0
    %6500 = vmatmul.mubr.bf16.gmra.mrb[0].mxu0 %v6463
    %v6501 = vpop.f32.mrb[0].mxu0
    %v6502 = vadd.f32 0.0, %v6501
    %v6503 = vpop.f32.mrb[0].mxu0
    %v6504 = vpop.f32.mrb[0].mxu0
    %v6505 = vadd.f32 0.0, %v6504
    %v6506 = vpop.f32.mrb[0].mxu0
    %6507 = vmatprep.mubr.bf16.mxu0 0
    %6508 = vmatmul.mubr.bf16.gmra.mrb[0].mxu0 %v6464
    %v6509 = vpop.f32.mrb[0].mxu0
    %v6510 = vadd.f32 0.0, %v6509
    %v6511 = vpop.f32.mrb[0].mxu0
    %v6512 = vpop.f32.mrb[0].mxu0
    %v6513 = vadd.f32 0.0, %v6512
    %v6514 = vpop.f32.mrb[0].mxu0
    %6515 = vdwg.mxu0
    %v6516 = vpack.c.bf16 %v6505, %v6502
    %v6517 = vpack.c.bf16 %v6513, %v6510
    %v6518 = vld [vmem:[%s9] sm:$0xff]
    %v6519 = vld [vmem:[%s9 + $0x8] sm:$0xff]
    %v6520 = vld [vmem:[%s9 + $0x10] sm:$0xff]
    %v6521 = vld [vmem:[%s9 + $0x18] sm:$0xff]
    %v6522 = vld [vmem:[%s9 + $0x20] sm:$0xff]
    %v6523 = vld [vmem:[%s9 + $0x28] sm:$0xff]
    %v6524 = vld [vmem:[%s9 + $0x30] sm:$0xff]
    %v6525 = vld [vmem:[%s9 + $0x38] sm:$0xff]
    %v6526 = vld [vmem:[%s9 + $0x40] sm:$0xff]
    %v6527 = vld [vmem:[%s9 + $0x48] sm:$0xff]
    %v6528 = vld [vmem:[%s9 + $0x50] sm:$0xff]
    %v6529 = vld [vmem:[%s9 + $0x58] sm:$0xff]
    %v6530 = vld [vmem:[%s9 + $0x60] sm:$0xff]
    %v6531 = vld [vmem:[%s9 + $0x68] sm:$0xff]
    %v6532 = vld [vmem:[%s9 + $0x70] sm:$0xff]
    %v6533 = vld [vmem:[%s9 + $0x78] sm:$0xff]
    %s6534 = scalar_lea.vmem %s8, 16
    %v6535 = vld [vmem:[%s6534] sm:$0xf]
    %v6536 = vld [vmem:[%s6534 + $0x4] sm:$0xf]
    %v6537 = vld [vmem:[%s6534 + $0x8] sm:$0xf]
    %v6538 = vld [vmem:[%s6534 + $0xc] sm:$0xf]
    %v6543 = vunpack.c.l.b16 %v6535
    %v6544 = vunpack.c.l.b16 %v6536
    %v6545 = vunpack.c.l.b16 %v6537
    %v6546 = vunpack.c.l.b16 %v6538
    %v6547 = vpack.c.b16 %v6544, %v6543
    %v6548 = vpack.c.b16 %v6546, %v6545
    %6551 = vmatprep.subr.bf16.mxu0 0
    %6552 = vmatpush1.bf16.msra.mxu0 %v6441
    %6553 = vmatprep.subr.bf16.mxu0 0
    %6554 = vmatpush1.bf16.msra.mxu0 %v6442
    %6555 = vmatprep.subr.bf16.mxu0 0
    %6556 = vmatpush1.bf16.msra.mxu0 %v6443
    %6557 = vmatprep.subr.bf16.mxu0 0
    %6558 = vmatpush1.bf16.msra.mxu0 %v6444
    %6559 = vmatprep.subr.bf16.mxu0 0
    %6560 = vmatpush1.bf16.msra.mxu0 %v6445
    %6561 = vmatprep.subr.bf16.mxu0 0
    %6562 = vmatpush1.bf16.msra.mxu0 %v6446
    %6563 = vmatprep.subr.bf16.mxu0 0
    %6564 = vmatpush1.bf16.msra.mxu0 %v6447
    %6565 = vmatprep.subr.bf16.mxu0 0
    %6566 = vmatpush1.bf16.msra.mxu0 %v6448
    %6567 = vmatprep.subr.bf16.mxu0 0
    %6568 = vmatpush1.bf16.msra.mxu0 0
    %6569 = vmatprep.subr.bf16.mxu0 0
    %6570 = vmatpush1.bf16.msra.mxu0 0
    %6571 = vmatprep.subr.bf16.mxu0 0
    %6572 = vmatpush1.bf16.msra.mxu0 0
    %6573 = vmatprep.subr.bf16.mxu0 0
    %6574 = vmatpush1.bf16.msra.mxu0 0
    %6575 = vmatprep.subr.bf16.mxu0 0
    %6576 = vmatpush1.bf16.msra.mxu0 0
    %6577 = vmatprep.subr.bf16.mxu0 0
    %6578 = vmatpush1.bf16.msra.mxu0 0
    %6579 = vmatprep.subr.bf16.mxu0 0
    %6580 = vmatpush1.bf16.msra.mxu0 0
    %6581 = vmatprep.subr.bf16.mxu0 0
    %6582 = vmatpush1.bf16.msra.mxu0 0
    %6583 = vmatprep.mubr.bf16.mxu0 0
    %6584 = vmatmul.mubr.bf16.gmra.mrb[0].mxu0 %v6547
    %v6585 = vpop.f32.mrb[0].mxu0
    %v6586 = vadd.f32 0.0, %v6585
    %v6587 = vpop.f32.mrb[0].mxu0
    %v6588 = vpop.f32.mrb[0].mxu0
    %v6589 = vadd.f32 0.0, %v6588
    %v6590 = vpop.f32.mrb[0].mxu0
    %6591 = vmatprep.mubr.bf16.mxu0 0
    %6592 = vmatmul.mubr.bf16.gmra.mrb[0].mxu0 %v6548
    %v6593 = vpop.f32.mrb[0].mxu0
    %v6594 = vadd.f32 0.0, %v6593
    %v6595 = vpop.f32.mrb[0].mxu0
    %v6596 = vpop.f32.mrb[0].mxu0
    %v6597 = vadd.f32 0.0, %v6596
    %v6598 = vpop.f32.mrb[0].mxu0
    %6599 = vdwg.mxu0
    %v6600 = vpack.c.bf16 %v6589, %v6586
    %v6601 = vpack.c.bf16 %v6597, %v6594
    %s6602 = scalar_lea.vmem %s9, 128
    %v6603 = vld [vmem:[%s6602] sm:$0xff]
    %v6604 = vld [vmem:[%s6602 + $0x8] sm:$0xff]
    %v6605 = vld [vmem:[%s6602 + $0x10] sm:$0xff]
    %v6606 = vld [vmem:[%s6602 + $0x18] sm:$0xff]
    %v6607 = vld [vmem:[%s6602 + $0x20] sm:$0xff]
    %v6608 = vld [vmem:[%s6602 + $0x28] sm:$0xff]
    %v6609 = vld [vmem:[%s6602 + $0x30] sm:$0xff]
    %v6610 = vld [vmem:[%s6602 + $0x38] sm:$0xff]
    %v6611 = vld [vmem:[%s6602 + $0x40] sm:$0xff]
    %v6612 = vld [vmem:[%s6602 + $0x48] sm:$0xff]
    %v6613 = vld [vmem:[%s6602 + $0x50] sm:$0xff]
    %v6614 = vld [vmem:[%s6602 + $0x58] sm:$0xff]
    %v6615 = vld [vmem:[%s6602 + $0x60] sm:$0xff]
    %v6616 = vld [vmem:[%s6602 + $0x68] sm:$0xff]
    %v6617 = vld [vmem:[%s6602 + $0x70] sm:$0xff]
    %v6618 = vld [vmem:[%s6602 + $0x78] sm:$0xff]
    %v6635 = vunpack.c.l.b16 %v6603
    %v6636 = vunpack.c.h.b16 %v6603
    %v6637 = vunpack.c.l.b16 %v6604
    %v6638 = vunpack.c.h.b16 %v6604
    %v6639 = vunpack.c.l.b16 %v6605
    %v6640 = vunpack.c.h.b16 %v6605
    %v6641 = vunpack.c.l.b16 %v6606
    %v6642 = vunpack.c.h.b16 %v6606
    %v6643 = vunpack.c.l.b16 %v6607
    %v6644 = vunpack.c.h.b16 %v6607
    %v6645 = vunpack.c.l.b16 %v6608
    %v6646 = vunpack.c.h.b16 %v6608
    %v6647 = vunpack.c.l.b16 %v6609
    %v6648 = vunpack.c.h.b16 %v6609
    %v6649 = vunpack.c.l.b16 %v6610
    %v6650 = vunpack.c.h.b16 %v6610
    %v6651 = vunpack.c.l.b16 %v6611
    %v6652 = vunpack.c.h.b16 %v6611
    %v6653 = vunpack.c.l.b16 %v6612
    %v6654 = vunpack.c.h.b16 %v6612
    %v6655 = vunpack.c.l.b16 %v6613
    %v6656 = vunpack.c.h.b16 %v6613
    %v6657 = vunpack.c.l.b16 %v6614
    %v6658 = vunpack.c.h.b16 %v6614
    %v6659 = vunpack.c.l.b16 %v6615
    %v6660 = vunpack.c.h.b16 %v6615
    %v6661 = vunpack.c.l.b16 %v6616
    %v6662 = vunpack.c.h.b16 %v6616
    %v6663 = vunpack.c.l.b16 %v6617
    %v6664 = vunpack.c.h.b16 %v6617
    %v6665 = vunpack.c.l.b16 %v6618
    %v6666 = vunpack.c.h.b16 %v6618
    %v6667 = vpack.c.b16 %v6637, %v6635
    %v6668 = vpack.c.b16 %v6638, %v6636
    %v6669 = vpack.c.b16 %v6641, %v6639
    %v6670 = vpack.c.b16 %v6642, %v6640
    %v6671 = vpack.c.b16 %v6645, %v6643
    %v6672 = vpack.c.b16 %v6646, %v6644
    %v6673 = vpack.c.b16 %v6649, %v6647
    %v6674 = vpack.c.b16 %v6650, %v6648
    %v6675 = vpack.c.b16 %v6653, %v6651
    %v6676 = vpack.c.b16 %v6654, %v6652
    %v6677 = vpack.c.b16 %v6657, %v6655
    %v6678 = vpack.c.b16 %v6658, %v6656
    %v6679 = vpack.c.b16 %v6661, %v6659
    %v6680 = vpack.c.b16 %v6662, %v6660
    %v6681 = vpack.c.b16 %v6665, %v6663
    %v6682 = vpack.c.b16 %v6666, %v6664
    %6699 = vmatprep.subr.bf16.mxu0 %v6668
    %6700 = vmatpush1.bf16.msra.mxu0 %v6667
    %6701 = vmatprep.subr.bf16.mxu0 %v6670
    %6702 = vmatpush1.bf16.msra.mxu0 %v6669
    %6703 = vmatprep.subr.bf16.mxu0 %v6672
    %6704 = vmatpush1.bf16.msra.mxu0 %v6671
    %6705 = vmatprep.subr.bf16.mxu0 %v6674
    %6706 = vmatpush1.bf16.msra.mxu0 %v6673
    %6707 = vmatprep.subr.bf16.mxu0 %v6676
    %6708 = vmatpush1.bf16.msra.mxu0 %v6675
    %6709 = vmatprep.subr.bf16.mxu0 %v6678
    %6710 = vmatpush1.bf16.msra.mxu0 %v6677
    %6711 = vmatprep.subr.bf16.mxu0 %v6680
    %6712 = vmatpush1.bf16.msra.mxu0 %v6679
    %6713 = vmatprep.subr.bf16.mxu0 %v6682
    %6714 = vmatpush1.bf16.msra.mxu0 %v6681
    %6715 = vmatprep.subr.bf16.mxu0 0
    %6716 = vmatpush1.bf16.msra.mxu0 0
    %6717 = vmatprep.subr.bf16.mxu0 0
    %6718 = vmatpush1.bf16.msra.mxu0 0
    %6719 = vmatprep.subr.bf16.mxu0 0
    %6720 = vmatpush1.bf16.msra.mxu0 0
    %6721 = vmatprep.subr.bf16.mxu0 0
    %6722 = vmatpush1.bf16.msra.mxu0 0
    %6723 = vmatprep.subr.bf16.mxu0 0
    %6724 = vmatpush1.bf16.msra.mxu0 0
    %6725 = vmatprep.subr.bf16.mxu0 0
    %6726 = vmatpush1.bf16.msra.mxu0 0
    %6727 = vmatprep.subr.bf16.mxu0 0
    %6728 = vmatpush1.bf16.msra.mxu0 0
    %6729 = vmatprep.subr.bf16.mxu0 0
    %6730 = vmatpush1.bf16.msra.mxu0 0
    %6731 = vmatprep.mubr.bf16.mxu0 0
    %6732 = vmatmul.mubr.bf16.gmra.mrb[0].mxu0 %v6600
    %v6733 = vpop.f32.mrb[0].mxu0
    %v6734 = vadd.f32 0.0, %v6733
    %v6735 = vpop.f32.mrb[0].mxu0
    %v6736 = vadd.f32 0.0, %v6735
    %v6737 = vpop.f32.mrb[0].mxu0
    %v6738 = vadd.f32 0.0, %v6737
    %v6739 = vpop.f32.mrb[0].mxu0
    %v6740 = vadd.f32 0.0, %v6739
    %6741 = vmatprep.mubr.bf16.mxu0 0
    %6742 = vmatmul.mubr.bf16.gmra.mrb[0].mxu0 %v6601
    %v6743 = vpop.f32.mrb[0].mxu0
    %v6744 = vadd.f32 0.0, %v6743
    %v6745 = vpop.f32.mrb[0].mxu0
    %v6746 = vadd.f32 0.0, %v6745
    %v6747 = vpop.f32.mrb[0].mxu0
    %v6748 = vadd.f32 0.0, %v6747
    %v6749 = vpop.f32.mrb[0].mxu0
    %v6750 = vadd.f32 0.0, %v6749
    %6751 = vdwg.mxu0
    %v6768 = vunpack.c.l.b16 %v6518
    %v6769 = vunpack.c.h.b16 %v6518
    %v6770 = vunpack.c.l.b16 %v6519
    %v6771 = vunpack.c.h.b16 %v6519
    %v6772 = vunpack.c.l.b16 %v6520
    %v6773 = vunpack.c.h.b16 %v6520
    %v6774 = vunpack.c.l.b16 %v6521
    %v6775 = vunpack.c.h.b16 %v6521
    %v6776 = vunpack.c.l.b16 %v6522
    %v6777 = vunpack.c.h.b16 %v6522
    %v6778 = vunpack.c.l.b16 %v6523
    %v6779 = vunpack.c.h.b16 %v6523
    %v6780 = vunpack.c.l.b16 %v6524
    %v6781 = vunpack.c.h.b16 %v6524
    %v6782 = vunpack.c.l.b16 %v6525
    %v6783 = vunpack.c.h.b16 %v6525
    %v6784 = vunpack.c.l.b16 %v6526
    %v6785 = vunpack.c.h.b16 %v6526
    %v6786 = vunpack.c.l.b16 %v6527
    %v6787 = vunpack.c.h.b16 %v6527
    %v6788 = vunpack.c.l.b16 %v6528
    %v6789 = vunpack.c.h.b16 %v6528
    %v6790 = vunpack.c.l.b16 %v6529
    %v6791 = vunpack.c.h.b16 %v6529
    %v6792 = vunpack.c.l.b16 %v6530
    %v6793 = vunpack.c.h.b16 %v6530
    %v6794 = vunpack.c.l.b16 %v6531
    %v6795 = vunpack.c.h.b16 %v6531
    %v6796 = vunpack.c.l.b16 %v6532
    %v6797 = vunpack.c.h.b16 %v6532
    %v6798 = vunpack.c.l.b16 %v6533
    %v6799 = vunpack.c.h.b16 %v6533
    %v6800 = vpack.c.b16 %v6770, %v6768
    %v6801 = vpack.c.b16 %v6771, %v6769
    %v6802 = vpack.c.b16 %v6774, %v6772
    %v6803 = vpack.c.b16 %v6775, %v6773
    %v6804 = vpack.c.b16 %v6778, %v6776
    %v6805 = vpack.c.b16 %v6779, %v6777
    %v6806 = vpack.c.b16 %v6782, %v6780
    %v6807 = vpack.c.b16 %v6783, %v6781
    %v6808 = vpack.c.b16 %v6786, %v6784
    %v6809 = vpack.c.b16 %v6787, %v6785
    %v6810 = vpack.c.b16 %v6790, %v6788
    %v6811 = vpack.c.b16 %v6791, %v6789
    %v6812 = vpack.c.b16 %v6794, %v6792
    %v6813 = vpack.c.b16 %v6795, %v6793
    %v6814 = vpack.c.b16 %v6798, %v6796
    %v6815 = vpack.c.b16 %v6799, %v6797
    %6832 = vmatprep.subr.bf16.mxu0 %v6801
    %6833 = vmatpush1.bf16.msra.mxu0 %v6800
    %6834 = vmatprep.subr.bf16.mxu0 %v6803
    %6835 = vmatpush1.bf16.msra.mxu0 %v6802
    %6836 = vmatprep.subr.bf16.mxu0 %v6805
    %6837 = vmatpush1.bf16.msra.mxu0 %v6804
    %6838 = vmatprep.subr.bf16.mxu0 %v6807
    %6839 = vmatpush1.bf16.msra.mxu0 %v6806
    %6840 = vmatprep.subr.bf16.mxu0 %v6809
    %6841 = vmatpush1.bf16.msra.mxu0 %v6808
    %6842 = vmatprep.subr.bf16.mxu0 %v6811
    %6843 = vmatpush1.bf16.msra.mxu0 %v6810
    %6844 = vmatprep.subr.bf16.mxu0 %v6813
    %6845 = vmatpush1.bf16.msra.mxu0 %v6812
    %6846 = vmatprep.subr.bf16.mxu0 %v6815
    %6847 = vmatpush1.bf16.msra.mxu0 %v6814
    %6848 = vmatprep.subr.bf16.mxu0 0
    %6849 = vmatpush1.bf16.msra.mxu0 0
    %6850 = vmatprep.subr.bf16.mxu0 0
    %6851 = vmatpush1.bf16.msra.mxu0 0
    %6852 = vmatprep.subr.bf16.mxu0 0
    %6853 = vmatpush1.bf16.msra.mxu0 0
    %6854 = vmatprep.subr.bf16.mxu0 0
    %6855 = vmatpush1.bf16.msra.mxu0 0
    %6856 = vmatprep.subr.bf16.mxu0 0
    %6857 = vmatpush1.bf16.msra.mxu0 0
    %6858 = vmatprep.subr.bf16.mxu0 0
    %6859 = vmatpush1.bf16.msra.mxu0 0
    %6860 = vmatprep.subr.bf16.mxu0 0
    %6861 = vmatpush1.bf16.msra.mxu0 0
    %6862 = vmatprep.subr.bf16.mxu0 0
    %6863 = vmatpush1.bf16.msra.mxu0 0
    %6864 = vmatprep.mubr.bf16.mxu0 0
    %6865 = vmatmul.mubr.bf16.gmra.mrb[0].mxu0 %v6516
    %v6866 = vpop.f32.mrb[0].mxu0
    %v6867 = vadd.f32 %v6734, %v6866
    %v6868 = vpop.f32.mrb[0].mxu0
    %v6869 = vadd.f32 %v6736, %v6868
    %v6870 = vpop.f32.mrb[0].mxu0
    %v6871 = vadd.f32 %v6738, %v6870
    %v6872 = vpop.f32.mrb[0].mxu0
    %v6873 = vadd.f32 %v6740, %v6872
    %6874 = vmatprep.mubr.bf16.mxu0 0
    %6875 = vmatmul.mubr.bf16.gmra.mrb[0].mxu0 %v6517
    %v6876 = vpop.f32.mrb[0].mxu0
    %v6877 = vadd.f32 %v6744, %v6876
    %v6878 = vpop.f32.mrb[0].mxu0
    %v6879 = vadd.f32 %v6746, %v6878
    %v6880 = vpop.f32.mrb[0].mxu0
    %v6881 = vadd.f32 %v6748, %v6880
    %v6882 = vpop.f32.mrb[0].mxu0
    %v6883 = vadd.f32 %v6750, %v6882
    %6884 = vdwg.mxu0
    %s6885 = scalar_lea.vmem %s8, 32
    %v6886 = vld [vmem:[%s6885] sm:$0xf]
    %v6887 = vld [vmem:[%s6885 + $0x4] sm:$0xf]
    %v6888 = vld [vmem:[%s6885 + $0x8] sm:$0xf]
    %v6889 = vld [vmem:[%s6885 + $0xc] sm:$0xf]
    %v6894 = vunpack.c.l.b16 %v6886
    %v6895 = vunpack.c.l.b16 %v6887
    %v6896 = vunpack.c.l.b16 %v6888
    %v6897 = vunpack.c.l.b16 %v6889
    %v6898 = vpack.c.b16 %v6895, %v6894
    %v6899 = vpack.c.b16 %v6897, %v6896
    %6902 = vmatprep.subr.bf16.mxu0 0
    %6903 = vmatpush1.bf16.msra.mxu0 %v6441
    %6904 = vmatprep.subr.bf16.mxu0 0
    %6905 = vmatpush1.bf16.msra.mxu0 %v6442
    %6906 = vmatprep.subr.bf16.mxu0 0
    %6907 = vmatpush1.bf16.msra.mxu0 %v6443
    %6908 = vmatprep.subr.bf16.mxu0 0
    %6909 = vmatpush1.bf16.msra.mxu0 %v6444
    %6910 = vmatprep.subr.bf16.mxu0 0
    %6911 = vmatpush1.bf16.msra.mxu0 %v6445
    %6912 = vmatprep.subr.bf16.mxu0 0
    %6913 = vmatpush1.bf16.msra.mxu0 %v6446
    %6914 = vmatprep.subr.bf16.mxu0 0
    %6915 = vmatpush1.bf16.msra.mxu0 %v6447
    %6916 = vmatprep.subr.bf16.mxu0 0
    %6917 = vmatpush1.bf16.msra.mxu0 %v6448
    %6918 = vmatprep.subr.bf16.mxu0 0
    %6919 = vmatpush1.bf16.msra.mxu0 0
    %6920 = vmatprep.subr.bf16.mxu0 0
    %6921 = vmatpush1.bf16.msra.mxu0 0
    %6922 = vmatprep.subr.bf16.mxu0 0
    %6923 = vmatpush1.bf16.msra.mxu0 0
    %6924 = vmatprep.subr.bf16.mxu0 0
    %6925 = vmatpush1.bf16.msra.mxu0 0
    %6926 = vmatprep.subr.bf16.mxu0 0
    %6927 = vmatpush1.bf16.msra.mxu0 0
    %6928 = vmatprep.subr.bf16.mxu0 0
    %6929 = vmatpush1.bf16.msra.mxu0 0
    %6930 = vmatprep.subr.bf16.mxu0 0
    %6931 = vmatpush1.bf16.msra.mxu0 0
    %6932 = vmatprep.subr.bf16.mxu0 0
    %6933 = vmatpush1.bf16.msra.mxu0 0
    %6934 = vmatprep.mubr.bf16.mxu0 0
    %6935 = vmatmul.mubr.bf16.gmra.mrb[0].mxu0 %v6898
    %v6936 = vpop.f32.mrb[0].mxu0
    %v6937 = vadd.f32 0.0, %v6936
    %v6938 = vpop.f32.mrb[0].mxu0
    %v6939 = vpop.f32.mrb[0].mxu0
    %v6940 = vadd.f32 0.0, %v6939
    %v6941 = vpop.f32.mrb[0].mxu0
    %6942 = vmatprep.mubr.bf16.mxu0 0
    %6943 = vmatmul.mubr.bf16.gmra.mrb[0].mxu0 %v6899
    %v6944 = vpop.f32.mrb[0].mxu0
    %v6945 = vadd.f32 0.0, %v6944
    %v6946 = vpop.f32.mrb[0].mxu0
    %v6947 = vpop.f32.mrb[0].mxu0
    %v6948 = vadd.f32 0.0, %v6947
    %v6949 = vpop.f32.mrb[0].mxu0
    %6950 = vdwg.mxu0
    %v6951 = vpack.c.bf16 %v6940, %v6937
    %v6952 = vpack.c.bf16 %v6948, %v6945
    %s6953 = scalar_lea.vmem %s9, 256
    %v6954 = vld [vmem:[%s6953] sm:$0xff]
    %v6955 = vld [vmem:[%s6953 + $0x8] sm:$0xff]
    %v6956 = vld [vmem:[%s6953 + $0x10] sm:$0xff]
    %v6957 = vld [vmem:[%s6953 + $0x18] sm:$0xff]
    %v6958 = vld [vmem:[%s6953 + $0x20] sm:$0xff]
    %v6959 = vld [vmem:[%s6953 + $0x28] sm:$0xff]
    %v6960 = vld [vmem:[%s6953 + $0x30] sm:$0xff]
    %v6961 = vld [vmem:[%s6953 + $0x38] sm:$0xff]
    %v6962 = vld [vmem:[%s6953 + $0x40] sm:$0xff]
    %v6963 = vld [vmem:[%s6953 + $0x48] sm:$0xff]
    %v6964 = vld [vmem:[%s6953 + $0x50] sm:$0xff]
    %v6965 = vld [vmem:[%s6953 + $0x58] sm:$0xff]
    %v6966 = vld [vmem:[%s6953 + $0x60] sm:$0xff]
    %v6967 = vld [vmem:[%s6953 + $0x68] sm:$0xff]
    %v6968 = vld [vmem:[%s6953 + $0x70] sm:$0xff]
    %v6969 = vld [vmem:[%s6953 + $0x78] sm:$0xff]
    %v6986 = vunpack.c.l.b16 %v6954
    %v6987 = vunpack.c.h.b16 %v6954
    %v6988 = vunpack.c.l.b16 %v6955
    %v6989 = vunpack.c.h.b16 %v6955
    %v6990 = vunpack.c.l.b16 %v6956
    %v6991 = vunpack.c.h.b16 %v6956
    %v6992 = vunpack.c.l.b16 %v6957
    %v6993 = vunpack.c.h.b16 %v6957
    %v6994 = vunpack.c.l.b16 %v6958
    %v6995 = vunpack.c.h.b16 %v6958
    %v6996 = vunpack.c.l.b16 %v6959
    %v6997 = vunpack.c.h.b16 %v6959
    %v6998 = vunpack.c.l.b16 %v6960
    %v6999 = vunpack.c.h.b16 %v6960
    %v7000 = vunpack.c.l.b16 %v6961
    %v7001 = vunpack.c.h.b16 %v6961
    %v7002 = vunpack.c.l.b16 %v6962
    %v7003 = vunpack.c.h.b16 %v6962
    %v7004 = vunpack.c.l.b16 %v6963
    %v7005 = vunpack.c.h.b16 %v6963
    %v7006 = vunpack.c.l.b16 %v6964
    %v7007 = vunpack.c.h.b16 %v6964
    %v7008 = vunpack.c.l.b16 %v6965
    %v7009 = vunpack.c.h.b16 %v6965
    %v7010 = vunpack.c.l.b16 %v6966
    %v7011 = vunpack.c.h.b16 %v6966
    %v7012 = vunpack.c.l.b16 %v6967
    %v7013 = vunpack.c.h.b16 %v6967
    %v7014 = vunpack.c.l.b16 %v6968
    %v7015 = vunpack.c.h.b16 %v6968
    %v7016 = vunpack.c.l.b16 %v6969
    %v7017 = vunpack.c.h.b16 %v6969
    %v7018 = vpack.c.b16 %v6988, %v6986
    %v7019 = vpack.c.b16 %v6989, %v6987
    %v7020 = vpack.c.b16 %v6992, %v6990
    %v7021 = vpack.c.b16 %v6993, %v6991
    %v7022 = vpack.c.b16 %v6996, %v6994
    %v7023 = vpack.c.b16 %v6997, %v6995
    %v7024 = vpack.c.b16 %v7000, %v6998
    %v7025 = vpack.c.b16 %v7001, %v6999
    %v7026 = vpack.c.b16 %v7004, %v7002
    %v7027 = vpack.c.b16 %v7005, %v7003
    %v7028 = vpack.c.b16 %v7008, %v7006
    %v7029 = vpack.c.b16 %v7009, %v7007
    %v7030 = vpack.c.b16 %v7012, %v7010
    %v7031 = vpack.c.b16 %v7013, %v7011
    %v7032 = vpack.c.b16 %v7016, %v7014
    %v7033 = vpack.c.b16 %v7017, %v7015
    %7050 = vmatprep.subr.bf16.mxu0 %v7019
    %7051 = vmatpush1.bf16.msra.mxu0 %v7018
    %7052 = vmatprep.subr.bf16.mxu0 %v7021
    %7053 = vmatpush1.bf16.msra.mxu0 %v7020
    %7054 = vmatprep.subr.bf16.mxu0 %v7023
    %7055 = vmatpush1.bf16.msra.mxu0 %v7022
    %7056 = vmatprep.subr.bf16.mxu0 %v7025
    %7057 = vmatpush1.bf16.msra.mxu0 %v7024
    %7058 = vmatprep.subr.bf16.mxu0 %v7027
    %7059 = vmatpush1.bf16.msra.mxu0 %v7026
    %7060 = vmatprep.subr.bf16.mxu0 %v7029
    %7061 = vmatpush1.bf16.msra.mxu0 %v7028
    %7062 = vmatprep.subr.bf16.mxu0 %v7031
    %7063 = vmatpush1.bf16.msra.mxu0 %v7030
    %7064 = vmatprep.subr.bf16.mxu0 %v7033
    %7065 = vmatpush1.bf16.msra.mxu0 %v7032
    %7066 = vmatprep.subr.bf16.mxu0 0
    %7067 = vmatpush1.bf16.msra.mxu0 0
    %7068 = vmatprep.subr.bf16.mxu0 0
    %7069 = vmatpush1.bf16.msra.mxu0 0
    %7070 = vmatprep.subr.bf16.mxu0 0
    %7071 = vmatpush1.bf16.msra.mxu0 0
    %7072 = vmatprep.subr.bf16.mxu0 0
    %7073 = vmatpush1.bf16.msra.mxu0 0
    %7074 = vmatprep.subr.bf16.mxu0 0
    %7075 = vmatpush1.bf16.msra.mxu0 0
    %7076 = vmatprep.subr.bf16.mxu0 0
    %7077 = vmatpush1.bf16.msra.mxu0 0
    %7078 = vmatprep.subr.bf16.mxu0 0
    %7079 = vmatpush1.bf16.msra.mxu0 0
    %7080 = vmatprep.subr.bf16.mxu0 0
    %7081 = vmatpush1.bf16.msra.mxu0 0
    %7082 = vmatprep.mubr.bf16.mxu0 0
    %7083 = vmatmul.mubr.bf16.gmra.mrb[0].mxu0 %v6951
    %v7084 = vpop.f32.mrb[0].mxu0
    %v7085 = vadd.f32 0.0, %v7084
    %v7086 = vpop.f32.mrb[0].mxu0
    %v7087 = vadd.f32 0.0, %v7086
    %v7088 = vpop.f32.mrb[0].mxu0
    %v7089 = vadd.f32 0.0, %v7088
    %v7090 = vpop.f32.mrb[0].mxu0
    %v7091 = vadd.f32 0.0, %v7090
    %7092 = vmatprep.mubr.bf16.mxu0 0
    %7093 = vmatmul.mubr.bf16.gmra.mrb[0].mxu0 %v6952
    %v7094 = vpop.f32.mrb[0].mxu0
    %v7095 = vadd.f32 0.0, %v7094
    %v7096 = vpop.f32.mrb[0].mxu0
    %v7097 = vadd.f32 0.0, %v7096
    %v7098 = vpop.f32.mrb[0].mxu0
    %v7099 = vadd.f32 0.0, %v7098
    %v7100 = vpop.f32.mrb[0].mxu0
    %v7101 = vadd.f32 0.0, %v7100
    %7102 = vdwg.mxu0
    %v7103 = vadd.f32 %v6867, %v7085
    %v7104 = vadd.f32 %v6869, %v7087
    %v7105 = vadd.f32 %v6871, %v7089
    %v7106 = vadd.f32 %v6873, %v7091
    %v7107 = vadd.f32 %v6877, %v7095
    %v7108 = vadd.f32 %v6879, %v7097
    %v7109 = vadd.f32 %v6881, %v7099
    %v7110 = vadd.f32 %v6883, %v7101
    %s7111 = scalar_lea.vmem %s8, 48
    %v7112 = vld [vmem:[%s7111] sm:$0xf]
    %v7113 = vld [vmem:[%s7111 + $0x4] sm:$0xf]
    %v7114 = vld [vmem:[%s7111 + $0x8] sm:$0xf]
    %v7115 = vld [vmem:[%s7111 + $0xc] sm:$0xf]
    %v7120 = vunpack.c.l.b16 %v7112
    %v7121 = vunpack.c.l.b16 %v7113
    %v7122 = vunpack.c.l.b16 %v7114
    %v7123 = vunpack.c.l.b16 %v7115
    %v7124 = vpack.c.b16 %v7121, %v7120
    %v7125 = vpack.c.b16 %v7123, %v7122
    %7128 = vmatprep.subr.bf16.mxu0 0
    %7129 = vmatpush1.bf16.msra.mxu0 %v6441
    %7130 = vmatprep.subr.bf16.mxu0 0
    %7131 = vmatpush1.bf16.msra.mxu0 %v6442
    %7132 = vmatprep.subr.bf16.mxu0 0
    %7133 = vmatpush1.bf16.msra.mxu0 %v6443
    %7134 = vmatprep.subr.bf16.mxu0 0
    %7135 = vmatpush1.bf16.msra.mxu0 %v6444
    %7136 = vmatprep.subr.bf16.mxu0 0
    %7137 = vmatpush1.bf16.msra.mxu0 %v6445
    %7138 = vmatprep.subr.bf16.mxu0 0
    %7139 = vmatpush1.bf16.msra.mxu0 %v6446
    %7140 = vmatprep.subr.bf16.mxu0 0
    %7141 = vmatpush1.bf16.msra.mxu0 %v6447
    %7142 = vmatprep.subr.bf16.mxu0 0
    %7143 = vmatpush1.bf16.msra.mxu0 %v6448
    %7144 = vmatprep.subr.bf16.mxu0 0
    %7145 = vmatpush1.bf16.msra.mxu0 0
    %7146 = vmatprep.subr.bf16.mxu0 0
    %7147 = vmatpush1.bf16.msra.mxu0 0
    %7148 = vmatprep.subr.bf16.mxu0 0
    %7149 = vmatpush1.bf16.msra.mxu0 0
    %7150 = vmatprep.subr.bf16.mxu0 0
    %7151 = vmatpush1.bf16.msra.mxu0 0
    %7152 = vmatprep.subr.bf16.mxu0 0
    %7153 = vmatpush1.bf16.msra.mxu0 0
    %7154 = vmatprep.subr.bf16.mxu0 0
    %7155 = vmatpush1.bf16.msra.mxu0 0
    %7156 = vmatprep.subr.bf16.mxu0 0
    %7157 = vmatpush1.bf16.msra.mxu0 0
    %7158 = vmatprep.subr.bf16.mxu0 0
    %7159 = vmatpush1.bf16.msra.mxu0 0
    %7160 = vmatprep.mubr.bf16.mxu0 0
    %7161 = vmatmul.mubr.bf16.gmra.mrb[0].mxu0 %v7124
    %v7162 = vpop.f32.mrb[0].mxu0
    %v7163 = vadd.f32 0.0, %v7162
    %v7164 = vpop.f32.mrb[0].mxu0
    %v7165 = vpop.f32.mrb[0].mxu0
    %v7166 = vadd.f32 0.0, %v7165
    %v7167 = vpop.f32.mrb[0].mxu0
    %7168 = vmatprep.mubr.bf16.mxu0 0
    %7169 = vmatmul.mubr.bf16.gmra.mrb[0].mxu0 %v7125
    %v7170 = vpop.f32.mrb[0].mxu0
    %v7171 = vadd.f32 0.0, %v7170
    %v7172 = vpop.f32.mrb[0].mxu0
    %v7173 = vpop.f32.mrb[0].mxu0
    %v7174 = vadd.f32 0.0, %v7173
    %v7175 = vpop.f32.mrb[0].mxu0
    %7176 = vdwg.mxu0
    %v7177 = vpack.c.bf16 %v7166, %v7163
    %v7178 = vpack.c.bf16 %v7174, %v7171
    %s7179 = scalar_lea.vmem %s9, 384
    %v7180 = vld [vmem:[%s7179] sm:$0xff]
    %v7181 = vld [vmem:[%s7179 + $0x8] sm:$0xff]
    %v7182 = vld [vmem:[%s7179 + $0x10] sm:$0xff]
    %v7183 = vld [vmem:[%s7179 + $0x18] sm:$0xff]
    %v7184 = vld [vmem:[%s7179 + $0x20] sm:$0xff]
    %v7185 = vld [vmem:[%s7179 + $0x28] sm:$0xff]
    %v7186 = vld [vmem:[%s7179 + $0x30] sm:$0xff]
    %v7187 = vld [vmem:[%s7179 + $0x38] sm:$0xff]
    %v7188 = vld [vmem:[%s7179 + $0x40] sm:$0xff]
    %v7189 = vld [vmem:[%s7179 + $0x48] sm:$0xff]
    %v7190 = vld [vmem:[%s7179 + $0x50] sm:$0xff]
    %v7191 = vld [vmem:[%s7179 + $0x58] sm:$0xff]
    %v7192 = vld [vmem:[%s7179 + $0x60] sm:$0xff]
    %v7193 = vld [vmem:[%s7179 + $0x68] sm:$0xff]
    %v7194 = vld [vmem:[%s7179 + $0x70] sm:$0xff]
    %v7195 = vld [vmem:[%s7179 + $0x78] sm:$0xff]
    %v7212 = vunpack.c.l.b16 %v7180
    %v7213 = vunpack.c.h.b16 %v7180
    %v7214 = vunpack.c.l.b16 %v7181
    %v7215 = vunpack.c.h.b16 %v7181
    %v7216 = vunpack.c.l.b16 %v7182
    %v7217 = vunpack.c.h.b16 %v7182
    %v7218 = vunpack.c.l.b16 %v7183
    %v7219 = vunpack.c.h.b16 %v7183
    %v7220 = vunpack.c.l.b16 %v7184
    %v7221 = vunpack.c.h.b16 %v7184
    %v7222 = vunpack.c.l.b16 %v7185
    %v7223 = vunpack.c.h.b16 %v7185
    %v7224 = vunpack.c.l.b16 %v7186
    %v7225 = vunpack.c.h.b16 %v7186
    %v7226 = vunpack.c.l.b16 %v7187
    %v7227 = vunpack.c.h.b16 %v7187
    %v7228 = vunpack.c.l.b16 %v7188
    %v7229 = vunpack.c.h.b16 %v7188
    %v7230 = vunpack.c.l.b16 %v7189
    %v7231 = vunpack.c.h.b16 %v7189
    %v7232 = vunpack.c.l.b16 %v7190
    %v7233 = vunpack.c.h.b16 %v7190
    %v7234 = vunpack.c.l.b16 %v7191
    %v7235 = vunpack.c.h.b16 %v7191
    %v7236 = vunpack.c.l.b16 %v7192
    %v7237 = vunpack.c.h.b16 %v7192
    %v7238 = vunpack.c.l.b16 %v7193
    %v7239 = vunpack.c.h.b16 %v7193
    %v7240 = vunpack.c.l.b16 %v7194
    %v7241 = vunpack.c.h.b16 %v7194
    %v7242 = vunpack.c.l.b16 %v7195
    %v7243 = vunpack.c.h.b16 %v7195
    %v7244 = vpack.c.b16 %v7214, %v7212
    %v7245 = vpack.c.b16 %v7215, %v7213
    %v7246 = vpack.c.b16 %v7218, %v7216
    %v7247 = vpack.c.b16 %v7219, %v7217
    %v7248 = vpack.c.b16 %v7222, %v7220
    %v7249 = vpack.c.b16 %v7223, %v7221
    %v7250 = vpack.c.b16 %v7226, %v7224
    %v7251 = vpack.c.b16 %v7227, %v7225
    %v7252 = vpack.c.b16 %v7230, %v7228
    %v7253 = vpack.c.b16 %v7231, %v7229
    %v7254 = vpack.c.b16 %v7234, %v7232
    %v7255 = vpack.c.b16 %v7235, %v7233
    %v7256 = vpack.c.b16 %v7238, %v7236
    %v7257 = vpack.c.b16 %v7239, %v7237
    %v7258 = vpack.c.b16 %v7242, %v7240
    %v7259 = vpack.c.b16 %v7243, %v7241
    %7276 = vmatprep.subr.bf16.mxu0 %v7245
    %7277 = vmatpush1.bf16.msra.mxu0 %v7244
    %7278 = vmatprep.subr.bf16.mxu0 %v7247
    %7279 = vmatpush1.bf16.msra.mxu0 %v7246
    %7280 = vmatprep.subr.bf16.mxu0 %v7249
    %7281 = vmatpush1.bf16.msra.mxu0 %v7248
    %7282 = vmatprep.subr.bf16.mxu0 %v7251
    %7283 = vmatpush1.bf16.msra.mxu0 %v7250
    %7284 = vmatprep.subr.bf16.mxu0 %v7253
    %7285 = vmatpush1.bf16.msra.mxu0 %v7252
    %7286 = vmatprep.subr.bf16.mxu0 %v7255
    %7287 = vmatpush1.bf16.msra.mxu0 %v7254
    %7288 = vmatprep.subr.bf16.mxu0 %v7257
    %7289 = vmatpush1.bf16.msra.mxu0 %v7256
    %7290 = vmatprep.subr.bf16.mxu0 %v7259
    %7291 = vmatpush1.bf16.msra.mxu0 %v7258
    %7292 = vmatprep.subr.bf16.mxu0 0
    %7293 = vmatpush1.bf16.msra.mxu0 0
    %7294 = vmatprep.subr.bf16.mxu0 0
    %7295 = vmatpush1.bf16.msra.mxu0 0
    %7296 = vmatprep.subr.bf16.mxu0 0
    %7297 = vmatpush1.bf16.msra.mxu0 0
    %7298 = vmatprep.subr.bf16.mxu0 0
    %7299 = vmatpush1.bf16.msra.mxu0 0
    %7300 = vmatprep.subr.bf16.mxu0 0
    %7301 = vmatpush1.bf16.msra.mxu0 0
    %7302 = vmatprep.subr.bf16.mxu0 0
    %7303 = vmatpush1.bf16.msra.mxu0 0
    %7304 = vmatprep.subr.bf16.mxu0 0
    %7305 = vmatpush1.bf16.msra.mxu0 0
    %7306 = vmatprep.subr.bf16.mxu0 0
    %7307 = vmatpush1.bf16.msra.mxu0 0
    %7308 = vmatprep.mubr.bf16.mxu0 0
    %7309 = vmatmul.mubr.bf16.gmra.mrb[0].mxu0 %v7177
    %v7310 = vpop.f32.mrb[0].mxu0
    %v7311 = vadd.f32 0.0, %v7310
    %v7312 = vpop.f32.mrb[0].mxu0
    %v7313 = vadd.f32 0.0, %v7312
    %v7314 = vpop.f32.mrb[0].mxu0
    %v7315 = vadd.f32 0.0, %v7314
    %v7316 = vpop.f32.mrb[0].mxu0
    %v7317 = vadd.f32 0.0, %v7316
    %7318 = vmatprep.mubr.bf16.mxu0 0
    %7319 = vmatmul.mubr.bf16.gmra.mrb[0].mxu0 %v7178
    %v7320 = vpop.f32.mrb[0].mxu0
    %v7321 = vadd.f32 0.0, %v7320
    %v7322 = vpop.f32.mrb[0].mxu0
    %v7323 = vadd.f32 0.0, %v7322
    %v7324 = vpop.f32.mrb[0].mxu0
    %v7325 = vadd.f32 0.0, %v7324
    %v7326 = vpop.f32.mrb[0].mxu0
    %v7327 = vadd.f32 0.0, %v7326
    %7328 = vdwg.mxu0
    %v7329 = vadd.f32 %v7103, %v7311
    %v7330 = vadd.f32 %v7104, %v7313
    %v7331 = vadd.f32 %v7105, %v7315
    %v7332 = vadd.f32 %v7106, %v7317
    %v7333 = vadd.f32 %v7107, %v7321
    %v7334 = vadd.f32 %v7108, %v7323
    %v7335 = vadd.f32 %v7109, %v7325
    %v7336 = vadd.f32 %v7110, %v7327
    %s7337 = scalar_lea.vmem %s8, 64
    %v7338 = vld [vmem:[%s7337] sm:$0xf]
    %v7339 = vld [vmem:[%s7337 + $0x4] sm:$0xf]
    %v7340 = vld [vmem:[%s7337 + $0x8] sm:$0xf]
    %v7341 = vld [vmem:[%s7337 + $0xc] sm:$0xf]
    %v7346 = vunpack.c.l.b16 %v7338
    %v7347 = vunpack.c.l.b16 %v7339
    %v7348 = vunpack.c.l.b16 %v7340
    %v7349 = vunpack.c.l.b16 %v7341
    %v7350 = vpack.c.b16 %v7347, %v7346
    %v7351 = vpack.c.b16 %v7349, %v7348
    %7354 = vmatprep.subr.bf16.mxu0 0
    %7355 = vmatpush1.bf16.msra.mxu0 %v6441
    %7356 = vmatprep.subr.bf16.mxu0 0
    %7357 = vmatpush1.bf16.msra.mxu0 %v6442
    %7358 = vmatprep.subr.bf16.mxu0 0
    %7359 = vmatpush1.bf16.msra.mxu0 %v6443
    %7360 = vmatprep.subr.bf16.mxu0 0
    %7361 = vmatpush1.bf16.msra.mxu0 %v6444
    %7362 = vmatprep.subr.bf16.mxu0 0
    %7363 = vmatpush1.bf16.msra.mxu0 %v6445
    %7364 = vmatprep.subr.bf16.mxu0 0
    %7365 = vmatpush1.bf16.msra.mxu0 %v6446
    %7366 = vmatprep.subr.bf16.mxu0 0
    %7367 = vmatpush1.bf16.msra.mxu0 %v6447
    %7368 = vmatprep.subr.bf16.mxu0 0
    %7369 = vmatpush1.bf16.msra.mxu0 %v6448
    %7370 = vmatprep.subr.bf16.mxu0 0
    %7371 = vmatpush1.bf16.msra.mxu0 0
    %7372 = vmatprep.subr.bf16.mxu0 0
    %7373 = vmatpush1.bf16.msra.mxu0 0
    %7374 = vmatprep.subr.bf16.mxu0 0
    %7375 = vmatpush1.bf16.msra.mxu0 0
    %7376 = vmatprep.subr.bf16.mxu0 0
    %7377 = vmatpush1.bf16.msra.mxu0 0
    %7378 = vmatprep.subr.bf16.mxu0 0
    %7379 = vmatpush1.bf16.msra.mxu0 0
    %7380 = vmatprep.subr.bf16.mxu0 0
    %7381 = vmatpush1.bf16.msra.mxu0 0
    %7382 = vmatprep.subr.bf16.mxu0 0
    %7383 = vmatpush1.bf16.msra.mxu0 0
    %7384 = vmatprep.subr.bf16.mxu0 0
    %7385 = vmatpush1.bf16.msra.mxu0 0
    %7386 = vmatprep.mubr.bf16.mxu0 0
    %7387 = vmatmul.mubr.bf16.gmra.mrb[0].mxu0 %v7350
    %v7388 = vpop.f32.mrb[0].mxu0
    %v7389 = vadd.f32 0.0, %v7388
    %v7390 = vpop.f32.mrb[0].mxu0
    %v7391 = vpop.f32.mrb[0].mxu0
    %v7392 = vadd.f32 0.0, %v7391
    %v7393 = vpop.f32.mrb[0].mxu0
    %7394 = vmatprep.mubr.bf16.mxu0 0
    %7395 = vmatmul.mubr.bf16.gmra.mrb[0].mxu0 %v7351
    %v7396 = vpop.f32.mrb[0].mxu0
    %v7397 = vadd.f32 0.0, %v7396
    %v7398 = vpop.f32.mrb[0].mxu0
    %v7399 = vpop.f32.mrb[0].mxu0
    %v7400 = vadd.f32 0.0, %v7399
    %v7401 = vpop.f32.mrb[0].mxu0
    %7402 = vdwg.mxu0
    %v7403 = vpack.c.bf16 %v7392, %v7389
    %v7404 = vpack.c.bf16 %v7400, %v7397
    %s7405 = scalar_lea.vmem %s9, 512
    %v7406 = vld [vmem:[%s7405] sm:$0xff]
    %v7407 = vld [vmem:[%s7405 + $0x8] sm:$0xff]
    %v7408 = vld [vmem:[%s7405 + $0x10] sm:$0xff]
    %v7409 = vld [vmem:[%s7405 + $0x18] sm:$0xff]
    %v7410 = vld [vmem:[%s7405 + $0x20] sm:$0xff]
    %v7411 = vld [vmem:[%s7405 + $0x28] sm:$0xff]
    %v7412 = vld [vmem:[%s7405 + $0x30] sm:$0xff]
    %v7413 = vld [vmem:[%s7405 + $0x38] sm:$0xff]
    %v7414 = vld [vmem:[%s7405 + $0x40] sm:$0xff]
    %v7415 = vld [vmem:[%s7405 + $0x48] sm:$0xff]
    %v7416 = vld [vmem:[%s7405 + $0x50] sm:$0xff]
    %v7417 = vld [vmem:[%s7405 + $0x58] sm:$0xff]
    %v7418 = vld [vmem:[%s7405 + $0x60] sm:$0xff]
    %v7419 = vld [vmem:[%s7405 + $0x68] sm:$0xff]
    %v7420 = vld [vmem:[%s7405 + $0x70] sm:$0xff]
    %v7421 = vld [vmem:[%s7405 + $0x78] sm:$0xff]
    %v7438 = vunpack.c.l.b16 %v7406
    %v7439 = vunpack.c.h.b16 %v7406
    %v7440 = vunpack.c.l.b16 %v7407
    %v7441 = vunpack.c.h.b16 %v7407
    %v7442 = vunpack.c.l.b16 %v7408
    %v7443 = vunpack.c.h.b16 %v7408
    %v7444 = vunpack.c.l.b16 %v7409
    %v7445 = vunpack.c.h.b16 %v7409
    %v7446 = vunpack.c.l.b16 %v7410
    %v7447 = vunpack.c.h.b16 %v7410
    %v7448 = vunpack.c.l.b16 %v7411
    %v7449 = vunpack.c.h.b16 %v7411
    %v7450 = vunpack.c.l.b16 %v7412
    %v7451 = vunpack.c.h.b16 %v7412
    %v7452 = vunpack.c.l.b16 %v7413
    %v7453 = vunpack.c.h.b16 %v7413
    %v7454 = vunpack.c.l.b16 %v7414
    %v7455 = vunpack.c.h.b16 %v7414
    %v7456 = vunpack.c.l.b16 %v7415
    %v7457 = vunpack.c.h.b16 %v7415
    %v7458 = vunpack.c.l.b16 %v7416
    %v7459 = vunpack.c.h.b16 %v7416
    %v7460 = vunpack.c.l.b16 %v7417
    %v7461 = vunpack.c.h.b16 %v7417
    %v7462 = vunpack.c.l.b16 %v7418
    %v7463 = vunpack.c.h.b16 %v7418
    %v7464 = vunpack.c.l.b16 %v7419
    %v7465 = vunpack.c.h.b16 %v7419
    %v7466 = vunpack.c.l.b16 %v7420
    %v7467 = vunpack.c.h.b16 %v7420
    %v7468 = vunpack.c.l.b16 %v7421
    %v7469 = vunpack.c.h.b16 %v7421
    %v7470 = vpack.c.b16 %v7440, %v7438
    %v7471 = vpack.c.b16 %v7441, %v7439
    %v7472 = vpack.c.b16 %v7444, %v7442
    %v7473 = vpack.c.b16 %v7445, %v7443
    %v7474 = vpack.c.b16 %v7448, %v7446
    %v7475 = vpack.c.b16 %v7449, %v7447
    %v7476 = vpack.c.b16 %v7452, %v7450
    %v7477 = vpack.c.b16 %v7453, %v7451
    %v7478 = vpack.c.b16 %v7456, %v7454
    %v7479 = vpack.c.b16 %v7457, %v7455
    %v7480 = vpack.c.b16 %v7460, %v7458
    %v7481 = vpack.c.b16 %v7461, %v7459
    %v7482 = vpack.c.b16 %v7464, %v7462
    %v7483 = vpack.c.b16 %v7465, %v7463
    %v7484 = vpack.c.b16 %v7468, %v7466
    %v7485 = vpack.c.b16 %v7469, %v7467
    %7502 = vmatprep.subr.bf16.mxu0 %v7471
    %7503 = vmatpush1.bf16.msra.mxu0 %v7470
    %7504 = vmatprep.subr.bf16.mxu0 %v7473
    %7505 = vmatpush1.bf16.msra.mxu0 %v7472
    %7506 = vmatprep.subr.bf16.mxu0 %v7475
    %7507 = vmatpush1.bf16.msra.mxu0 %v7474
    %7508 = vmatprep.subr.bf16.mxu0 %v7477
    %7509 = vmatpush1.bf16.msra.mxu0 %v7476
    %7510 = vmatprep.subr.bf16.mxu0 %v7479
    %7511 = vmatpush1.bf16.msra.mxu0 %v7478
    %7512 = vmatprep.subr.bf16.mxu0 %v7481
    %7513 = vmatpush1.bf16.msra.mxu0 %v7480
    %7514 = vmatprep.subr.bf16.mxu0 %v7483
    %7515 = vmatpush1.bf16.msra.mxu0 %v7482
    %7516 = vmatprep.subr.bf16.mxu0 %v7485
    %7517 = vmatpush1.bf16.msra.mxu0 %v7484
    %7518 = vmatprep.subr.bf16.mxu0 0
    %7519 = vmatpush1.bf16.msra.mxu0 0
    %7520 = vmatprep.subr.bf16.mxu0 0
    %7521 = vmatpush1.bf16.msra.mxu0 0
    %7522 = vmatprep.subr.bf16.mxu0 0
    %7523 = vmatpush1.bf16.msra.mxu0 0
    %7524 = vmatprep.subr.bf16.mxu0 0
    %7525 = vmatpush1.bf16.msra.mxu0 0
    %7526 = vmatprep.subr.bf16.mxu0 0
    %7527 = vmatpush1.bf16.msra.mxu0 0
    %7528 = vmatprep.subr.bf16.mxu0 0
    %7529 = vmatpush1.bf16.msra.mxu0 0
    %7530 = vmatprep.subr.bf16.mxu0 0
    %7531 = vmatpush1.bf16.msra.mxu0 0
    %7532 = vmatprep.subr.bf16.mxu0 0
    %7533 = vmatpush1.bf16.msra.mxu0 0
    %7534 = vmatprep.mubr.bf16.mxu0 0
    %7535 = vmatmul.mubr.bf16.gmra.mrb[0].mxu0 %v7403
    %v7536 = vpop.f32.mrb[0].mxu0
    %v7537 = vadd.f32 0.0, %v7536
    %v7538 = vpop.f32.mrb[0].mxu0
    %v7539 = vadd.f32 0.0, %v7538
    %v7540 = vpop.f32.mrb[0].mxu0
    %v7541 = vadd.f32 0.0, %v7540
    %v7542 = vpop.f32.mrb[0].mxu0
    %v7543 = vadd.f32 0.0, %v7542
    %7544 = vmatprep.mubr.bf16.mxu0 0
    %7545 = vmatmul.mubr.bf16.gmra.mrb[0].mxu0 %v7404
    %v7546 = vpop.f32.mrb[0].mxu0
    %v7547 = vadd.f32 0.0, %v7546
    %v7548 = vpop.f32.mrb[0].mxu0
    %v7549 = vadd.f32 0.0, %v7548
    %v7550 = vpop.f32.mrb[0].mxu0
    %v7551 = vadd.f32 0.0, %v7550
    %v7552 = vpop.f32.mrb[0].mxu0
    %v7553 = vadd.f32 0.0, %v7552
    %7554 = vdwg.mxu0
    %v7555 = vadd.f32 %v7329, %v7537
    %v7556 = vadd.f32 %v7330, %v7539
    %v7557 = vadd.f32 %v7331, %v7541
    %v7558 = vadd.f32 %v7332, %v7543
    %v7559 = vadd.f32 %v7333, %v7547
    %v7560 = vadd.f32 %v7334, %v7549
    %v7561 = vadd.f32 %v7335, %v7551
    %v7562 = vadd.f32 %v7336, %v7553
    %s7563 = scalar_lea.vmem %s8, 80
    %v7564 = vld [vmem:[%s7563] sm:$0xf]
    %v7565 = vld [vmem:[%s7563 + $0x4] sm:$0xf]
    %v7566 = vld [vmem:[%s7563 + $0x8] sm:$0xf]
    %v7567 = vld [vmem:[%s7563 + $0xc] sm:$0xf]
    %v7572 = vunpack.c.l.b16 %v7564
    %v7573 = vunpack.c.l.b16 %v7565
    %v7574 = vunpack.c.l.b16 %v7566
    %v7575 = vunpack.c.l.b16 %v7567
    %v7576 = vpack.c.b16 %v7573, %v7572
    %v7577 = vpack.c.b16 %v7575, %v7574
    %7580 = vmatprep.subr.bf16.mxu0 0
    %7581 = vmatpush1.bf16.msra.mxu0 %v6441
    %7582 = vmatprep.subr.bf16.mxu0 0
    %7583 = vmatpush1.bf16.msra.mxu0 %v6442
    %7584 = vmatprep.subr.bf16.mxu0 0
    %7585 = vmatpush1.bf16.msra.mxu0 %v6443
    %7586 = vmatprep.subr.bf16.mxu0 0
    %7587 = vmatpush1.bf16.msra.mxu0 %v6444
    %7588 = vmatprep.subr.bf16.mxu0 0
    %7589 = vmatpush1.bf16.msra.mxu0 %v6445
    %7590 = vmatprep.subr.bf16.mxu0 0
    %7591 = vmatpush1.bf16.msra.mxu0 %v6446
    %7592 = vmatprep.subr.bf16.mxu0 0
    %7593 = vmatpush1.bf16.msra.mxu0 %v6447
    %7594 = vmatprep.subr.bf16.mxu0 0
    %7595 = vmatpush1.bf16.msra.mxu0 %v6448
    %7596 = vmatprep.subr.bf16.mxu0 0
    %7597 = vmatpush1.bf16.msra.mxu0 0
    %7598 = vmatprep.subr.bf16.mxu0 0
    %7599 = vmatpush1.bf16.msra.mxu0 0
    %7600 = vmatprep.subr.bf16.mxu0 0
    %7601 = vmatpush1.bf16.msra.mxu0 0
    %7602 = vmatprep.subr.bf16.mxu0 0
    %7603 = vmatpush1.bf16.msra.mxu0 0
    %7604 = vmatprep.subr.bf16.mxu0 0
    %7605 = vmatpush1.bf16.msra.mxu0 0
    %7606 = vmatprep.subr.bf16.mxu0 0
    %7607 = vmatpush1.bf16.msra.mxu0 0
    %7608 = vmatprep.subr.bf16.mxu0 0
    %7609 = vmatpush1.bf16.msra.mxu0 0
    %7610 = vmatprep.subr.bf16.mxu0 0
    %7611 = vmatpush1.bf16.msra.mxu0 0
    %7612 = vmatprep.mubr.bf16.mxu0 0
    %7613 = vmatmul.mubr.bf16.gmra.mrb[0].mxu0 %v7576
    %v7614 = vpop.f32.mrb[0].mxu0
    %v7615 = vadd.f32 0.0, %v7614
    %v7616 = vpop.f32.mrb[0].mxu0
    %v7617 = vpop.f32.mrb[0].mxu0
    %v7618 = vadd.f32 0.0, %v7617
    %v7619 = vpop.f32.mrb[0].mxu0
    %7620 = vmatprep.mubr.bf16.mxu0 0
    %7621 = vmatmul.mubr.bf16.gmra.mrb[0].mxu0 %v7577
    %v7622 = vpop.f32.mrb[0].mxu0
    %v7623 = vadd.f32 0.0, %v7622
    %v7624 = vpop.f32.mrb[0].mxu0
    %v7625 = vpop.f32.mrb[0].mxu0
    %v7626 = vadd.f32 0.0, %v7625
    %v7627 = vpop.f32.mrb[0].mxu0
    %7628 = vdwg.mxu0
    %v7629 = vpack.c.bf16 %v7618, %v7615
    %v7630 = vpack.c.bf16 %v7626, %v7623
    %s7631 = scalar_lea.vmem %s9, 640
    %v7632 = vld [vmem:[%s7631] sm:$0xff]
    %v7633 = vld [vmem:[%s7631 + $0x8] sm:$0xff]
    %v7634 = vld [vmem:[%s7631 + $0x10] sm:$0xff]
    %v7635 = vld [vmem:[%s7631 + $0x18] sm:$0xff]
    %v7636 = vld [vmem:[%s7631 + $0x20] sm:$0xff]
    %v7637 = vld [vmem:[%s7631 + $0x28] sm:$0xff]
    %v7638 = vld [vmem:[%s7631 + $0x30] sm:$0xff]
    %v7639 = vld [vmem:[%s7631 + $0x38] sm:$0xff]
    %v7640 = vld [vmem:[%s7631 + $0x40] sm:$0xff]
    %v7641 = vld [vmem:[%s7631 + $0x48] sm:$0xff]
    %v7642 = vld [vmem:[%s7631 + $0x50] sm:$0xff]
    %v7643 = vld [vmem:[%s7631 + $0x58] sm:$0xff]
    %v7644 = vld [vmem:[%s7631 + $0x60] sm:$0xff]
    %v7645 = vld [vmem:[%s7631 + $0x68] sm:$0xff]
    %v7646 = vld [vmem:[%s7631 + $0x70] sm:$0xff]
    %v7647 = vld [vmem:[%s7631 + $0x78] sm:$0xff]
    %v7664 = vunpack.c.l.b16 %v7632
    %v7665 = vunpack.c.h.b16 %v7632
    %v7666 = vunpack.c.l.b16 %v7633
    %v7667 = vunpack.c.h.b16 %v7633
    %v7668 = vunpack.c.l.b16 %v7634
    %v7669 = vunpack.c.h.b16 %v7634
    %v7670 = vunpack.c.l.b16 %v7635
    %v7671 = vunpack.c.h.b16 %v7635
    %v7672 = vunpack.c.l.b16 %v7636
    %v7673 = vunpack.c.h.b16 %v7636
    %v7674 = vunpack.c.l.b16 %v7637
    %v7675 = vunpack.c.h.b16 %v7637
    %v7676 = vunpack.c.l.b16 %v7638
    %v7677 = vunpack.c.h.b16 %v7638
    %v7678 = vunpack.c.l.b16 %v7639
    %v7679 = vunpack.c.h.b16 %v7639
    %v7680 = vunpack.c.l.b16 %v7640
    %v7681 = vunpack.c.h.b16 %v7640
    %v7682 = vunpack.c.l.b16 %v7641
    %v7683 = vunpack.c.h.b16 %v7641
    %v7684 = vunpack.c.l.b16 %v7642
    %v7685 = vunpack.c.h.b16 %v7642
    %v7686 = vunpack.c.l.b16 %v7643
    %v7687 = vunpack.c.h.b16 %v7643
    %v7688 = vunpack.c.l.b16 %v7644
    %v7689 = vunpack.c.h.b16 %v7644
    %v7690 = vunpack.c.l.b16 %v7645
    %v7691 = vunpack.c.h.b16 %v7645
    %v7692 = vunpack.c.l.b16 %v7646
    %v7693 = vunpack.c.h.b16 %v7646
    %v7694 = vunpack.c.l.b16 %v7647
    %v7695 = vunpack.c.h.b16 %v7647
    %v7696 = vpack.c.b16 %v7666, %v7664
    %v7697 = vpack.c.b16 %v7667, %v7665
    %v7698 = vpack.c.b16 %v7670, %v7668
    %v7699 = vpack.c.b16 %v7671, %v7669
    %v7700 = vpack.c.b16 %v7674, %v7672
    %v7701 = vpack.c.b16 %v7675, %v7673
    %v7702 = vpack.c.b16 %v7678, %v7676
    %v7703 = vpack.c.b16 %v7679, %v7677
    %v7704 = vpack.c.b16 %v7682, %v7680
    %v7705 = vpack.c.b16 %v7683, %v7681
    %v7706 = vpack.c.b16 %v7686, %v7684
    %v7707 = vpack.c.b16 %v7687, %v7685
    %v7708 = vpack.c.b16 %v7690, %v7688
    %v7709 = vpack.c.b16 %v7691, %v7689
    %v7710 = vpack.c.b16 %v7694, %v7692
    %v7711 = vpack.c.b16 %v7695, %v7693
    %7728 = vmatprep.subr.bf16.mxu0 %v7697
    %7729 = vmatpush1.bf16.msra.mxu0 %v7696
    %7730 = vmatprep.subr.bf16.mxu0 %v7699
    %7731 = vmatpush1.bf16.msra.mxu0 %v7698
    %7732 = vmatprep.subr.bf16.mxu0 %v7701
    %7733 = vmatpush1.bf16.msra.mxu0 %v7700
    %7734 = vmatprep.subr.bf16.mxu0 %v7703
    %7735 = vmatpush1.bf16.msra.mxu0 %v7702
    %7736 = vmatprep.subr.bf16.mxu0 %v7705
    %7737 = vmatpush1.bf16.msra.mxu0 %v7704
    %7738 = vmatprep.subr.bf16.mxu0 %v7707
    %7739 = vmatpush1.bf16.msra.mxu0 %v7706
    %7740 = vmatprep.subr.bf16.mxu0 %v7709
    %7741 = vmatpush1.bf16.msra.mxu0 %v7708
    %7742 = vmatprep.subr.bf16.mxu0 %v7711
    %7743 = vmatpush1.bf16.msra.mxu0 %v7710
    %7744 = vmatprep.subr.bf16.mxu0 0
    %7745 = vmatpush1.bf16.msra.mxu0 0
    %7746 = vmatprep.subr.bf16.mxu0 0
    %7747 = vmatpush1.bf16.msra.mxu0 0
    %7748 = vmatprep.subr.bf16.mxu0 0
    %7749 = vmatpush1.bf16.msra.mxu0 0
    %7750 = vmatprep.subr.bf16.mxu0 0
    %7751 = vmatpush1.bf16.msra.mxu0 0
    %7752 = vmatprep.subr.bf16.mxu0 0
    %7753 = vmatpush1.bf16.msra.mxu0 0
    %7754 = vmatprep.subr.bf16.mxu0 0
    %7755 = vmatpush1.bf16.msra.mxu0 0
    %7756 = vmatprep.subr.bf16.mxu0 0
    %7757 = vmatpush1.bf16.msra.mxu0 0
    %7758 = vmatprep.subr.bf16.mxu0 0
    %7759 = vmatpush1.bf16.msra.mxu0 0
    %7760 = vmatprep.mubr.bf16.mxu0 0
    %7761 = vmatmul.mubr.bf16.gmra.mrb[0].mxu0 %v7629
    %v7762 = vpop.f32.mrb[0].mxu0
    %v7763 = vadd.f32 0.0, %v7762
    %v7764 = vpop.f32.mrb[0].mxu0
    %v7765 = vadd.f32 0.0, %v7764
    %v7766 = vpop.f32.mrb[0].mxu0
    %v7767 = vadd.f32 0.0, %v7766
    %v7768 = vpop.f32.mrb[0].mxu0
    %v7769 = vadd.f32 0.0, %v7768
    %7770 = vmatprep.mubr.bf16.mxu0 0
    %7771 = vmatmul.mubr.bf16.gmra.mrb[0].mxu0 %v7630
    %v7772 = vpop.f32.mrb[0].mxu0
    %v7773 = vadd.f32 0.0, %v7772
    %v7774 = vpop.f32.mrb[0].mxu0
    %v7775 = vadd.f32 0.0, %v7774
    %v7776 = vpop.f32.mrb[0].mxu0
    %v7777 = vadd.f32 0.0, %v7776
    %v7778 = vpop.f32.mrb[0].mxu0
    %v7779 = vadd.f32 0.0, %v7778
    %7780 = vdwg.mxu0
    %v7781 = vadd.f32 %v7555, %v7763
    %v7782 = vadd.f32 %v7556, %v7765
    %v7783 = vadd.f32 %v7557, %v7767
    %v7784 = vadd.f32 %v7558, %v7769
    %v7785 = vadd.f32 %v7559, %v7773
    %v7786 = vadd.f32 %v7560, %v7775
    %v7787 = vadd.f32 %v7561, %v7777
    %v7788 = vadd.f32 %v7562, %v7779
    %s7789 = scalar_lea.vmem %s8, 96
    %v7790 = vld [vmem:[%s7789] sm:$0xf]
    %v7791 = vld [vmem:[%s7789 + $0x4] sm:$0xf]
    %v7792 = vld [vmem:[%s7789 + $0x8] sm:$0xf]
    %v7793 = vld [vmem:[%s7789 + $0xc] sm:$0xf]
    %v7798 = vunpack.c.l.b16 %v7790
    %v7799 = vunpack.c.l.b16 %v7791
    %v7800 = vunpack.c.l.b16 %v7792
    %v7801 = vunpack.c.l.b16 %v7793
    %v7802 = vpack.c.b16 %v7799, %v7798
    %v7803 = vpack.c.b16 %v7801, %v7800
    %7806 = vmatprep.subr.bf16.mxu0 0
    %7807 = vmatpush1.bf16.msra.mxu0 %v6441
    %7808 = vmatprep.subr.bf16.mxu0 0
    %7809 = vmatpush1.bf16.msra.mxu0 %v6442
    %7810 = vmatprep.subr.bf16.mxu0 0
    %7811 = vmatpush1.bf16.msra.mxu0 %v6443
    %7812 = vmatprep.subr.bf16.mxu0 0
    %7813 = vmatpush1.bf16.msra.mxu0 %v6444
    %7814 = vmatprep.subr.bf16.mxu0 0
    %7815 = vmatpush1.bf16.msra.mxu0 %v6445
    %7816 = vmatprep.subr.bf16.mxu0 0
    %7817 = vmatpush1.bf16.msra.mxu0 %v6446
    %7818 = vmatprep.subr.bf16.mxu0 0
    %7819 = vmatpush1.bf16.msra.mxu0 %v6447
    %7820 = vmatprep.subr.bf16.mxu0 0
    %7821 = vmatpush1.bf16.msra.mxu0 %v6448
    %7822 = vmatprep.subr.bf16.mxu0 0
    %7823 = vmatpush1.bf16.msra.mxu0 0
    %7824 = vmatprep.subr.bf16.mxu0 0
    %7825 = vmatpush1.bf16.msra.mxu0 0
    %7826 = vmatprep.subr.bf16.mxu0 0
    %7827 = vmatpush1.bf16.msra.mxu0 0
    %7828 = vmatprep.subr.bf16.mxu0 0
    %7829 = vmatpush1.bf16.msra.mxu0 0
    %7830 = vmatprep.subr.bf16.mxu0 0
    %7831 = vmatpush1.bf16.msra.mxu0 0
    %7832 = vmatprep.subr.bf16.mxu0 0
    %7833 = vmatpush1.bf16.msra.mxu0 0
    %7834 = vmatprep.subr.bf16.mxu0 0
    %7835 = vmatpush1.bf16.msra.mxu0 0
    %7836 = vmatprep.subr.bf16.mxu0 0
    %7837 = vmatpush1.bf16.msra.mxu0 0
    %7838 = vmatprep.mubr.bf16.mxu0 0
    %7839 = vmatmul.mubr.bf16.gmra.mrb[0].mxu0 %v7802
    %v7840 = vpop.f32.mrb[0].mxu0
    %v7841 = vadd.f32 0.0, %v7840
    %v7842 = vpop.f32.mrb[0].mxu0
    %v7843 = vpop.f32.mrb[0].mxu0
    %v7844 = vadd.f32 0.0, %v7843
    %v7845 = vpop.f32.mrb[0].mxu0
    %7846 = vmatprep.mubr.bf16.mxu0 0
    %7847 = vmatmul.mubr.bf16.gmra.mrb[0].mxu0 %v7803
    %v7848 = vpop.f32.mrb[0].mxu0
    %v7849 = vadd.f32 0.0, %v7848
    %v7850 = vpop.f32.mrb[0].mxu0
    %v7851 = vpop.f32.mrb[0].mxu0
    %v7852 = vadd.f32 0.0, %v7851
    %v7853 = vpop.f32.mrb[0].mxu0
    %7854 = vdwg.mxu0
    %v7855 = vpack.c.bf16 %v7844, %v7841
    %v7856 = vpack.c.bf16 %v7852, %v7849
    %s7857 = scalar_lea.vmem %s9, 768
    %v7858 = vld [vmem:[%s7857] sm:$0xff]
    %v7859 = vld [vmem:[%s7857 + $0x8] sm:$0xff]
    %v7860 = vld [vmem:[%s7857 + $0x10] sm:$0xff]
    %v7861 = vld [vmem:[%s7857 + $0x18] sm:$0xff]
    %v7862 = vld [vmem:[%s7857 + $0x20] sm:$0xff]
    %v7863 = vld [vmem:[%s7857 + $0x28] sm:$0xff]
    %v7864 = vld [vmem:[%s7857 + $0x30] sm:$0xff]
    %v7865 = vld [vmem:[%s7857 + $0x38] sm:$0xff]
    %v7866 = vld [vmem:[%s7857 + $0x40] sm:$0xff]
    %v7867 = vld [vmem:[%s7857 + $0x48] sm:$0xff]
    %v7868 = vld [vmem:[%s7857 + $0x50] sm:$0xff]
    %v7869 = vld [vmem:[%s7857 + $0x58] sm:$0xff]
    %v7870 = vld [vmem:[%s7857 + $0x60] sm:$0xff]
    %v7871 = vld [vmem:[%s7857 + $0x68] sm:$0xff]
    %v7872 = vld [vmem:[%s7857 + $0x70] sm:$0xff]
    %v7873 = vld [vmem:[%s7857 + $0x78] sm:$0xff]
    %v7890 = vunpack.c.l.b16 %v7858
    %v7891 = vunpack.c.h.b16 %v7858
    %v7892 = vunpack.c.l.b16 %v7859
    %v7893 = vunpack.c.h.b16 %v7859
    %v7894 = vunpack.c.l.b16 %v7860
    %v7895 = vunpack.c.h.b16 %v7860
    %v7896 = vunpack.c.l.b16 %v7861
    %v7897 = vunpack.c.h.b16 %v7861
    %v7898 = vunpack.c.l.b16 %v7862
    %v7899 = vunpack.c.h.b16 %v7862
    %v7900 = vunpack.c.l.b16 %v7863
    %v7901 = vunpack.c.h.b16 %v7863
    %v7902 = vunpack.c.l.b16 %v7864
    %v7903 = vunpack.c.h.b16 %v7864
    %v7904 = vunpack.c.l.b16 %v7865
    %v7905 = vunpack.c.h.b16 %v7865
    %v7906 = vunpack.c.l.b16 %v7866
    %v7907 = vunpack.c.h.b16 %v7866
    %v7908 = vunpack.c.l.b16 %v7867
    %v7909 = vunpack.c.h.b16 %v7867
    %v7910 = vunpack.c.l.b16 %v7868
    %v7911 = vunpack.c.h.b16 %v7868
    %v7912 = vunpack.c.l.b16 %v7869
    %v7913 = vunpack.c.h.b16 %v7869
    %v7914 = vunpack.c.l.b16 %v7870
    %v7915 = vunpack.c.h.b16 %v7870
    %v7916 = vunpack.c.l.b16 %v7871
    %v7917 = vunpack.c.h.b16 %v7871
    %v7918 = vunpack.c.l.b16 %v7872
    %v7919 = vunpack.c.h.b16 %v7872
    %v7920 = vunpack.c.l.b16 %v7873
    %v7921 = vunpack.c.h.b16 %v7873
    %v7922 = vpack.c.b16 %v7892, %v7890
    %v7923 = vpack.c.b16 %v7893, %v7891
    %v7924 = vpack.c.b16 %v7896, %v7894
    %v7925 = vpack.c.b16 %v7897, %v7895
    %v7926 = vpack.c.b16 %v7900, %v7898
    %v7927 = vpack.c.b16 %v7901, %v7899
    %v7928 = vpack.c.b16 %v7904, %v7902
    %v7929 = vpack.c.b16 %v7905, %v7903
    %v7930 = vpack.c.b16 %v7908, %v7906
    %v7931 = vpack.c.b16 %v7909, %v7907
    %v7932 = vpack.c.b16 %v7912, %v7910
    %v7933 = vpack.c.b16 %v7913, %v7911
    %v7934 = vpack.c.b16 %v7916, %v7914
    %v7935 = vpack.c.b16 %v7917, %v7915
    %v7936 = vpack.c.b16 %v7920, %v7918
    %v7937 = vpack.c.b16 %v7921, %v7919
    %7954 = vmatprep.subr.bf16.mxu0 %v7923
    %7955 = vmatpush1.bf16.msra.mxu0 %v7922
    %7956 = vmatprep.subr.bf16.mxu0 %v7925
    %7957 = vmatpush1.bf16.msra.mxu0 %v7924
    %7958 = vmatprep.subr.bf16.mxu0 %v7927
    %7959 = vmatpush1.bf16.msra.mxu0 %v7926
    %7960 = vmatprep.subr.bf16.mxu0 %v7929
    %7961 = vmatpush1.bf16.msra.mxu0 %v7928
    %7962 = vmatprep.subr.bf16.mxu0 %v7931
    %7963 = vmatpush1.bf16.msra.mxu0 %v7930
    %7964 = vmatprep.subr.bf16.mxu0 %v7933
    %7965 = vmatpush1.bf16.msra.mxu0 %v7932
    %7966 = vmatprep.subr.bf16.mxu0 %v7935
    %7967 = vmatpush1.bf16.msra.mxu0 %v7934
    %7968 = vmatprep.subr.bf16.mxu0 %v7937
    %7969 = vmatpush1.bf16.msra.mxu0 %v7936
    %7970 = vmatprep.subr.bf16.mxu0 0
    %7971 = vmatpush1.bf16.msra.mxu0 0
    %7972 = vmatprep.subr.bf16.mxu0 0
    %7973 = vmatpush1.bf16.msra.mxu0 0
    %7974 = vmatprep.subr.bf16.mxu0 0
    %7975 = vmatpush1.bf16.msra.mxu0 0
    %7976 = vmatprep.subr.bf16.mxu0 0
    %7977 = vmatpush1.bf16.msra.mxu0 0
    %7978 = vmatprep.subr.bf16.mxu0 0
    %7979 = vmatpush1.bf16.msra.mxu0 0
    %7980 = vmatprep.subr.bf16.mxu0 0
    %7981 = vmatpush1.bf16.msra.mxu0 0
    %7982 = vmatprep.subr.bf16.mxu0 0
    %7983 = vmatpush1.bf16.msra.mxu0 0
    %7984 = vmatprep.subr.bf16.mxu0 0
    %7985 = vmatpush1.bf16.msra.mxu0 0
    %7986 = vmatprep.mubr.bf16.mxu0 0
    %7987 = vmatmul.mubr.bf16.gmra.mrb[0].mxu0 %v7855
    %v7988 = vpop.f32.mrb[0].mxu0
    %v7989 = vadd.f32 0.0, %v7988
    %v7990 = vpop.f32.mrb[0].mxu0
    %v7991 = vadd.f32 0.0, %v7990
    %v7992 = vpop.f32.mrb[0].mxu0
    %v7993 = vadd.f32 0.0, %v7992
    %v7994 = vpop.f32.mrb[0].mxu0
    %v7995 = vadd.f32 0.0, %v7994
    %7996 = vmatprep.mubr.bf16.mxu0 0
    %7997 = vmatmul.mubr.bf16.gmra.mrb[0].mxu0 %v7856
    %v7998 = vpop.f32.mrb[0].mxu0
    %v7999 = vadd.f32 0.0, %v7998
    %v8000 = vpop.f32.mrb[0].mxu0
    %v8001 = vadd.f32 0.0, %v8000
    %v8002 = vpop.f32.mrb[0].mxu0
    %v8003 = vadd.f32 0.0, %v8002
    %v8004 = vpop.f32.mrb[0].mxu0
    %v8005 = vadd.f32 0.0, %v8004
    %8006 = vdwg.mxu0
    %v8007 = vadd.f32 %v7781, %v7989
    %v8008 = vadd.f32 %v7782, %v7991
    %v8009 = vadd.f32 %v7783, %v7993
    %v8010 = vadd.f32 %v7784, %v7995
    %v8011 = vadd.f32 %v7785, %v7999
    %v8012 = vadd.f32 %v7786, %v8001
    %v8013 = vadd.f32 %v7787, %v8003
    %v8014 = vadd.f32 %v7788, %v8005
    %s8015 = scalar_lea.vmem %s8, 112
    %v8016 = vld [vmem:[%s8015] sm:$0xf]
    %v8017 = vld [vmem:[%s8015 + $0x4] sm:$0xf]
    %v8018 = vld [vmem:[%s8015 + $0x8] sm:$0xf]
    %v8019 = vld [vmem:[%s8015 + $0xc] sm:$0xf]
    %v8024 = vunpack.c.l.b16 %v8016
    %v8025 = vunpack.c.l.b16 %v8017
    %v8026 = vunpack.c.l.b16 %v8018
    %v8027 = vunpack.c.l.b16 %v8019
    %v8028 = vpack.c.b16 %v8025, %v8024
    %v8029 = vpack.c.b16 %v8027, %v8026
    %8032 = vmatprep.subr.bf16.mxu0 0
    %8033 = vmatpush1.bf16.msra.mxu0 %v6441
    %8034 = vmatprep.subr.bf16.mxu0 0
    %8035 = vmatpush1.bf16.msra.mxu0 %v6442
    %8036 = vmatprep.subr.bf16.mxu0 0
    %8037 = vmatpush1.bf16.msra.mxu0 %v6443
    %8038 = vmatprep.subr.bf16.mxu0 0
    %8039 = vmatpush1.bf16.msra.mxu0 %v6444
    %8040 = vmatprep.subr.bf16.mxu0 0
    %8041 = vmatpush1.bf16.msra.mxu0 %v6445
    %8042 = vmatprep.subr.bf16.mxu0 0
    %8043 = vmatpush1.bf16.msra.mxu0 %v6446
    %8044 = vmatprep.subr.bf16.mxu0 0
    %8045 = vmatpush1.bf16.msra.mxu0 %v6447
    %8046 = vmatprep.subr.bf16.mxu0 0
    %8047 = vmatpush1.bf16.msra.mxu0 %v6448
    %8048 = vmatprep.subr.bf16.mxu0 0
    %8049 = vmatpush1.bf16.msra.mxu0 0
    %8050 = vmatprep.subr.bf16.mxu0 0
    %8051 = vmatpush1.bf16.msra.mxu0 0
    %8052 = vmatprep.subr.bf16.mxu0 0
    %8053 = vmatpush1.bf16.msra.mxu0 0
    %8054 = vmatprep.subr.bf16.mxu0 0
    %8055 = vmatpush1.bf16.msra.mxu0 0
    %8056 = vmatprep.subr.bf16.mxu0 0
    %8057 = vmatpush1.bf16.msra.mxu0 0
    %8058 = vmatprep.subr.bf16.mxu0 0
    %8059 = vmatpush1.bf16.msra.mxu0 0
    %8060 = vmatprep.subr.bf16.mxu0 0
    %8061 = vmatpush1.bf16.msra.mxu0 0
    %8062 = vmatprep.subr.bf16.mxu0 0
    %8063 = vmatpush1.bf16.msra.mxu0 0
    %8064 = vmatprep.mubr.bf16.mxu0 0
    %8065 = vmatmul.mubr.bf16.gmra.mrb[0].mxu0 %v8028
    %v8066 = vpop.f32.mrb[0].mxu0
    %v8067 = vadd.f32 0.0, %v8066
    %v8068 = vpop.f32.mrb[0].mxu0
    %v8069 = vpop.f32.mrb[0].mxu0
    %v8070 = vadd.f32 0.0, %v8069
    %v8071 = vpop.f32.mrb[0].mxu0
    %8072 = vmatprep.mubr.bf16.mxu0 0
    %8073 = vmatmul.mubr.bf16.gmra.mrb[0].mxu0 %v8029
    %v8074 = vpop.f32.mrb[0].mxu0
    %v8075 = vadd.f32 0.0, %v8074
    %v8076 = vpop.f32.mrb[0].mxu0
    %v8077 = vpop.f32.mrb[0].mxu0
    %v8078 = vadd.f32 0.0, %v8077
    %v8079 = vpop.f32.mrb[0].mxu0
    %8080 = vdwg.mxu0
    %v8081 = vpack.c.bf16 %v8070, %v8067
    %v8082 = vpack.c.bf16 %v8078, %v8075
    %s8083 = scalar_lea.vmem %s9, 896
    %v8084 = vld [vmem:[%s8083] sm:$0xff]
    %v8085 = vld [vmem:[%s8083 + $0x8] sm:$0xff]
    %v8086 = vld [vmem:[%s8083 + $0x10] sm:$0xff]
    %v8087 = vld [vmem:[%s8083 + $0x18] sm:$0xff]
    %v8088 = vld [vmem:[%s8083 + $0x20] sm:$0xff]
    %v8089 = vld [vmem:[%s8083 + $0x28] sm:$0xff]
    %v8090 = vld [vmem:[%s8083 + $0x30] sm:$0xff]
    %v8091 = vld [vmem:[%s8083 + $0x38] sm:$0xff]
    %v8092 = vld [vmem:[%s8083 + $0x40] sm:$0xff]
    %v8093 = vld [vmem:[%s8083 + $0x48] sm:$0xff]
    %v8094 = vld [vmem:[%s8083 + $0x50] sm:$0xff]
    %v8095 = vld [vmem:[%s8083 + $0x58] sm:$0xff]
    %v8096 = vld [vmem:[%s8083 + $0x60] sm:$0xff]
    %v8097 = vld [vmem:[%s8083 + $0x68] sm:$0xff]
    %v8098 = vld [vmem:[%s8083 + $0x70] sm:$0xff]
    %v8099 = vld [vmem:[%s8083 + $0x78] sm:$0xff]
    %v8116 = vunpack.c.l.b16 %v8084
    %v8117 = vunpack.c.h.b16 %v8084
    %v8118 = vunpack.c.l.b16 %v8085
    %v8119 = vunpack.c.h.b16 %v8085
    %v8120 = vunpack.c.l.b16 %v8086
    %v8121 = vunpack.c.h.b16 %v8086
    %v8122 = vunpack.c.l.b16 %v8087
    %v8123 = vunpack.c.h.b16 %v8087
    %v8124 = vunpack.c.l.b16 %v8088
    %v8125 = vunpack.c.h.b16 %v8088
    %v8126 = vunpack.c.l.b16 %v8089
    %v8127 = vunpack.c.h.b16 %v8089
    %v8128 = vunpack.c.l.b16 %v8090
    %v8129 = vunpack.c.h.b16 %v8090
    %v8130 = vunpack.c.l.b16 %v8091
    %v8131 = vunpack.c.h.b16 %v8091
    %v8132 = vunpack.c.l.b16 %v8092
    %v8133 = vunpack.c.h.b16 %v8092
    %v8134 = vunpack.c.l.b16 %v8093
    %v8135 = vunpack.c.h.b16 %v8093
    %v8136 = vunpack.c.l.b16 %v8094
    %v8137 = vunpack.c.h.b16 %v8094
    %v8138 = vunpack.c.l.b16 %v8095
    %v8139 = vunpack.c.h.b16 %v8095
    %v8140 = vunpack.c.l.b16 %v8096
    %v8141 = vunpack.c.h.b16 %v8096
    %v8142 = vunpack.c.l.b16 %v8097
    %v8143 = vunpack.c.h.b16 %v8097
    %v8144 = vunpack.c.l.b16 %v8098
    %v8145 = vunpack.c.h.b16 %v8098
    %v8146 = vunpack.c.l.b16 %v8099
    %v8147 = vunpack.c.h.b16 %v8099
    %v8148 = vpack.c.b16 %v8118, %v8116
    %v8149 = vpack.c.b16 %v8119, %v8117
    %v8150 = vpack.c.b16 %v8122, %v8120
    %v8151 = vpack.c.b16 %v8123, %v8121
    %v8152 = vpack.c.b16 %v8126, %v8124
    %v8153 = vpack.c.b16 %v8127, %v8125
    %v8154 = vpack.c.b16 %v8130, %v8128
    %v8155 = vpack.c.b16 %v8131, %v8129
    %v8156 = vpack.c.b16 %v8134, %v8132
    %v8157 = vpack.c.b16 %v8135, %v8133
    %v8158 = vpack.c.b16 %v8138, %v8136
    %v8159 = vpack.c.b16 %v8139, %v8137
    %v8160 = vpack.c.b16 %v8142, %v8140
    %v8161 = vpack.c.b16 %v8143, %v8141
    %v8162 = vpack.c.b16 %v8146, %v8144
    %v8163 = vpack.c.b16 %v8147, %v8145
    %8180 = vmatprep.subr.bf16.mxu0 %v8149
    %8181 = vmatpush1.bf16.msra.mxu0 %v8148
    %8182 = vmatprep.subr.bf16.mxu0 %v8151
    %8183 = vmatpush1.bf16.msra.mxu0 %v8150
    %8184 = vmatprep.subr.bf16.mxu0 %v8153
    %8185 = vmatpush1.bf16.msra.mxu0 %v8152
    %8186 = vmatprep.subr.bf16.mxu0 %v8155
    %8187 = vmatpush1.bf16.msra.mxu0 %v8154
    %8188 = vmatprep.subr.bf16.mxu0 %v8157
    %8189 = vmatpush1.bf16.msra.mxu0 %v8156
    %8190 = vmatprep.subr.bf16.mxu0 %v8159
    %8191 = vmatpush1.bf16.msra.mxu0 %v8158
    %8192 = vmatprep.subr.bf16.mxu0 %v8161
    %8193 = vmatpush1.bf16.msra.mxu0 %v8160
    %8194 = vmatprep.subr.bf16.mxu0 %v8163
    %8195 = vmatpush1.bf16.msra.mxu0 %v8162
    %8196 = vmatprep.subr.bf16.mxu0 0
    %8197 = vmatpush1.bf16.msra.mxu0 0
    %8198 = vmatprep.subr.bf16.mxu0 0
    %8199 = vmatpush1.bf16.msra.mxu0 0
    %8200 = vmatprep.subr.bf16.mxu0 0
    %8201 = vmatpush1.bf16.msra.mxu0 0
    %8202 = vmatprep.subr.bf16.mxu0 0
    %8203 = vmatpush1.bf16.msra.mxu0 0
    %8204 = vmatprep.subr.bf16.mxu0 0
    %8205 = vmatpush1.bf16.msra.mxu0 0
    %8206 = vmatprep.subr.bf16.mxu0 0
    %8207 = vmatpush1.bf16.msra.mxu0 0
    %8208 = vmatprep.subr.bf16.mxu0 0
    %8209 = vmatpush1.bf16.msra.mxu0 0
    %8210 = vmatprep.subr.bf16.mxu0 0
    %8211 = vmatpush1.bf16.msra.mxu0 0
    %8212 = vmatprep.mubr.bf16.mxu0 0
    %8213 = vmatmul.mubr.bf16.gmra.mrb[0].mxu0 %v8081
    %v8214 = vpop.f32.mrb[0].mxu0
    %v8215 = vadd.f32 0.0, %v8214
    %v8216 = vpop.f32.mrb[0].mxu0
    %v8217 = vadd.f32 0.0, %v8216
    %v8218 = vpop.f32.mrb[0].mxu0
    %v8219 = vadd.f32 0.0, %v8218
    %v8220 = vpop.f32.mrb[0].mxu0
    %v8221 = vadd.f32 0.0, %v8220
    %8222 = vmatprep.mubr.bf16.mxu0 0
    %8223 = vmatmul.mubr.bf16.gmra.mrb[0].mxu0 %v8082
    %v8224 = vpop.f32.mrb[0].mxu0
    %v8225 = vadd.f32 0.0, %v8224
    %v8226 = vpop.f32.mrb[0].mxu0
    %v8227 = vadd.f32 0.0, %v8226
    %v8228 = vpop.f32.mrb[0].mxu0
    %v8229 = vadd.f32 0.0, %v8228
    %v8230 = vpop.f32.mrb[0].mxu0
    %v8231 = vadd.f32 0.0, %v8230
    %8232 = vdwg.mxu0
    %v8233 = vadd.f32 %v8007, %v8215
    %v8234 = vadd.f32 %v8008, %v8217
    %v8235 = vadd.f32 %v8009, %v8219
    %v8236 = vadd.f32 %v8010, %v8221
    %v8237 = vadd.f32 %v8011, %v8225
    %v8238 = vadd.f32 %v8012, %v8227
    %v8239 = vadd.f32 %v8013, %v8229
    %v8240 = vadd.f32 %v8014, %v8231
    %s8241 = scalar_lea.vmem %s8, 128
    %v8242 = vld [vmem:[%s8241] sm:$0xf]
    %v8243 = vld [vmem:[%s8241 + $0x4] sm:$0xf]
    %v8244 = vld [vmem:[%s8241 + $0x8] sm:$0xf]
    %v8245 = vld [vmem:[%s8241 + $0xc] sm:$0xf]
    %v8250 = vunpack.c.l.b16 %v8242
    %v8251 = vunpack.c.l.b16 %v8243
    %v8252 = vunpack.c.l.b16 %v8244
    %v8253 = vunpack.c.l.b16 %v8245
    %v8254 = vpack.c.b16 %v8251, %v8250
    %v8255 = vpack.c.b16 %v8253, %v8252
    %8258 = vmatprep.subr.bf16.mxu0 0
    %8259 = vmatpush1.bf16.msra.mxu0 %v6441
    %8260 = vmatprep.subr.bf16.mxu0 0
    %8261 = vmatpush1.bf16.msra.mxu0 %v6442
    %8262 = vmatprep.subr.bf16.mxu0 0
    %8263 = vmatpush1.bf16.msra.mxu0 %v6443
    %8264 = vmatprep.subr.bf16.mxu0 0
    %8265 = vmatpush1.bf16.msra.mxu0 %v6444
    %8266 = vmatprep.subr.bf16.mxu0 0
    %8267 = vmatpush1.bf16.msra.mxu0 %v6445
    %8268 = vmatprep.subr.bf16.mxu0 0
    %8269 = vmatpush1.bf16.msra.mxu0 %v6446
    %8270 = vmatprep.subr.bf16.mxu0 0
    %8271 = vmatpush1.bf16.msra.mxu0 %v6447
    %8272 = vmatprep.subr.bf16.mxu0 0
    %8273 = vmatpush1.bf16.msra.mxu0 %v6448
    %8274 = vmatprep.subr.bf16.mxu0 0
    %8275 = vmatpush1.bf16.msra.mxu0 0
    %8276 = vmatprep.subr.bf16.mxu0 0
    %8277 = vmatpush1.bf16.msra.mxu0 0
    %8278 = vmatprep.subr.bf16.mxu0 0
    %8279 = vmatpush1.bf16.msra.mxu0 0
    %8280 = vmatprep.subr.bf16.mxu0 0
    %8281 = vmatpush1.bf16.msra.mxu0 0
    %8282 = vmatprep.subr.bf16.mxu0 0
    %8283 = vmatpush1.bf16.msra.mxu0 0
    %8284 = vmatprep.subr.bf16.mxu0 0
    %8285 = vmatpush1.bf16.msra.mxu0 0
    %8286 = vmatprep.subr.bf16.mxu0 0
    %8287 = vmatpush1.bf16.msra.mxu0 0
    %8288 = vmatprep.subr.bf16.mxu0 0
    %8289 = vmatpush1.bf16.msra.mxu0 0
    %8290 = vmatprep.mubr.bf16.mxu0 0
    %8291 = vmatmul.mubr.bf16.gmra.mrb[0].mxu0 %v8254
    %v8292 = vpop.f32.mrb[0].mxu0
    %v8293 = vadd.f32 0.0, %v8292
    %v8294 = vpop.f32.mrb[0].mxu0
    %v8295 = vpop.f32.mrb[0].mxu0
    %v8296 = vadd.f32 0.0, %v8295
    %v8297 = vpop.f32.mrb[0].mxu0
    %8298 = vmatprep.mubr.bf16.mxu0 0
    %8299 = vmatmul.mubr.bf16.gmra.mrb[0].mxu0 %v8255
    %v8300 = vpop.f32.mrb[0].mxu0
    %v8301 = vadd.f32 0.0, %v8300
    %v8302 = vpop.f32.mrb[0].mxu0
    %v8303 = vpop.f32.mrb[0].mxu0
    %v8304 = vadd.f32 0.0, %v8303
    %v8305 = vpop.f32.mrb[0].mxu0
    %8306 = vdwg.mxu0
    %v8307 = vpack.c.bf16 %v8296, %v8293
    %v8308 = vpack.c.bf16 %v8304, %v8301
    %s8309 = scalar_lea.vmem %s9, 1024
    %v8310 = vld [vmem:[%s8309] sm:$0xff]
    %v8311 = vld [vmem:[%s8309 + $0x8] sm:$0xff]
    %v8312 = vld [vmem:[%s8309 + $0x10] sm:$0xff]
    %v8313 = vld [vmem:[%s8309 + $0x18] sm:$0xff]
    %v8314 = vld [vmem:[%s8309 + $0x20] sm:$0xff]
    %v8315 = vld [vmem:[%s8309 + $0x28] sm:$0xff]
    %v8316 = vld [vmem:[%s8309 + $0x30] sm:$0xff]
    %v8317 = vld [vmem:[%s8309 + $0x38] sm:$0xff]
    %v8318 = vld [vmem:[%s8309 + $0x40] sm:$0xff]
    %v8319 = vld [vmem:[%s8309 + $0x48] sm:$0xff]
    %v8320 = vld [vmem:[%s8309 + $0x50] sm:$0xff]
    %v8321 = vld [vmem:[%s8309 + $0x58] sm:$0xff]
    %v8322 = vld [vmem:[%s8309 + $0x60] sm:$0xff]
    %v8323 = vld [vmem:[%s8309 + $0x68] sm:$0xff]
    %v8324 = vld [vmem:[%s8309 + $0x70] sm:$0xff]
    %v8325 = vld [vmem:[%s8309 + $0x78] sm:$0xff]
    %v8342 = vunpack.c.l.b16 %v8310
    %v8343 = vunpack.c.h.b16 %v8310
    %v8344 = vunpack.c.l.b16 %v8311
    %v8345 = vunpack.c.h.b16 %v8311
    %v8346 = vunpack.c.l.b16 %v8312
    %v8347 = vunpack.c.h.b16 %v8312
    %v8348 = vunpack.c.l.b16 %v8313
    %v8349 = vunpack.c.h.b16 %v8313
    %v8350 = vunpack.c.l.b16 %v8314
    %v8351 = vunpack.c.h.b16 %v8314
    %v8352 = vunpack.c.l.b16 %v8315
    %v8353 = vunpack.c.h.b16 %v8315
    %v8354 = vunpack.c.l.b16 %v8316
    %v8355 = vunpack.c.h.b16 %v8316
    %v8356 = vunpack.c.l.b16 %v8317
    %v8357 = vunpack.c.h.b16 %v8317
    %v8358 = vunpack.c.l.b16 %v8318
    %v8359 = vunpack.c.h.b16 %v8318
    %v8360 = vunpack.c.l.b16 %v8319
    %v8361 = vunpack.c.h.b16 %v8319
    %v8362 = vunpack.c.l.b16 %v8320
    %v8363 = vunpack.c.h.b16 %v8320
    %v8364 = vunpack.c.l.b16 %v8321
    %v8365 = vunpack.c.h.b16 %v8321
    %v8366 = vunpack.c.l.b16 %v8322
    %v8367 = vunpack.c.h.b16 %v8322
    %v8368 = vunpack.c.l.b16 %v8323
    %v8369 = vunpack.c.h.b16 %v8323
    %v8370 = vunpack.c.l.b16 %v8324
    %v8371 = vunpack.c.h.b16 %v8324
    %v8372 = vunpack.c.l.b16 %v8325
    %v8373 = vunpack.c.h.b16 %v8325
    %v8374 = vpack.c.b16 %v8344, %v8342
    %v8375 = vpack.c.b16 %v8345, %v8343
    %v8376 = vpack.c.b16 %v8348, %v8346
    %v8377 = vpack.c.b16 %v8349, %v8347
    %v8378 = vpack.c.b16 %v8352, %v8350
    %v8379 = vpack.c.b16 %v8353, %v8351
    %v8380 = vpack.c.b16 %v8356, %v8354
    %v8381 = vpack.c.b16 %v8357, %v8355
    %v8382 = vpack.c.b16 %v8360, %v8358
    %v8383 = vpack.c.b16 %v8361, %v8359
    %v8384 = vpack.c.b16 %v8364, %v8362
    %v8385 = vpack.c.b16 %v8365, %v8363
    %v8386 = vpack.c.b16 %v8368, %v8366
    %v8387 = vpack.c.b16 %v8369, %v8367
    %v8388 = vpack.c.b16 %v8372, %v8370
    %v8389 = vpack.c.b16 %v8373, %v8371
    %8406 = vmatprep.subr.bf16.mxu0 %v8375
    %8407 = vmatpush1.bf16.msra.mxu0 %v8374
    %8408 = vmatprep.subr.bf16.mxu0 %v8377
    %8409 = vmatpush1.bf16.msra.mxu0 %v8376
    %8410 = vmatprep.subr.bf16.mxu0 %v8379
    %8411 = vmatpush1.bf16.msra.mxu0 %v8378
    %8412 = vmatprep.subr.bf16.mxu0 %v8381
    %8413 = vmatpush1.bf16.msra.mxu0 %v8380
    %8414 = vmatprep.subr.bf16.mxu0 %v8383
    %8415 = vmatpush1.bf16.msra.mxu0 %v8382
    %8416 = vmatprep.subr.bf16.mxu0 %v8385
    %8417 = vmatpush1.bf16.msra.mxu0 %v8384
    %8418 = vmatprep.subr.bf16.mxu0 %v8387
    %8419 = vmatpush1.bf16.msra.mxu0 %v8386
    %8420 = vmatprep.subr.bf16.mxu0 %v8389
    %8421 = vmatpush1.bf16.msra.mxu0 %v8388
    %8422 = vmatprep.subr.bf16.mxu0 0
    %8423 = vmatpush1.bf16.msra.mxu0 0
    %8424 = vmatprep.subr.bf16.mxu0 0
    %8425 = vmatpush1.bf16.msra.mxu0 0
    %8426 = vmatprep.subr.bf16.mxu0 0
    %8427 = vmatpush1.bf16.msra.mxu0 0
    %8428 = vmatprep.subr.bf16.mxu0 0
    %8429 = vmatpush1.bf16.msra.mxu0 0
    %8430 = vmatprep.subr.bf16.mxu0 0
    %8431 = vmatpush1.bf16.msra.mxu0 0
    %8432 = vmatprep.subr.bf16.mxu0 0
    %8433 = vmatpush1.bf16.msra.mxu0 0
    %8434 = vmatprep.subr.bf16.mxu0 0
    %8435 = vmatpush1.bf16.msra.mxu0 0
    %8436 = vmatprep.subr.bf16.mxu0 0
    %8437 = vmatpush1.bf16.msra.mxu0 0
    %8438 = vmatprep.mubr.bf16.mxu0 0
    %8439 = vmatmul.mubr.bf16.gmra.mrb[0].mxu0 %v8307
    %v8440 = vpop.f32.mrb[0].mxu0
    %v8441 = vadd.f32 0.0, %v8440
    %v8442 = vpop.f32.mrb[0].mxu0
    %v8443 = vadd.f32 0.0, %v8442
    %v8444 = vpop.f32.mrb[0].mxu0
    %v8445 = vadd.f32 0.0, %v8444
    %v8446 = vpop.f32.mrb[0].mxu0
    %v8447 = vadd.f32 0.0, %v8446
    %8448 = vmatprep.mubr.bf16.mxu0 0
    %8449 = vmatmul.mubr.bf16.gmra.mrb[0].mxu0 %v8308
    %v8450 = vpop.f32.mrb[0].mxu0
    %v8451 = vadd.f32 0.0, %v8450
    %v8452 = vpop.f32.mrb[0].mxu0
    %v8453 = vadd.f32 0.0, %v8452
    %v8454 = vpop.f32.mrb[0].mxu0
    %v8455 = vadd.f32 0.0, %v8454
    %v8456 = vpop.f32.mrb[0].mxu0
    %v8457 = vadd.f32 0.0, %v8456
    %8458 = vdwg.mxu0
    %v8459 = vadd.f32 %v8233, %v8441
    %v8460 = vadd.f32 %v8234, %v8443
    %v8461 = vadd.f32 %v8235, %v8445
    %v8462 = vadd.f32 %v8236, %v8447
    %v8463 = vadd.f32 %v8237, %v8451
    %v8464 = vadd.f32 %v8238, %v8453
    %v8465 = vadd.f32 %v8239, %v8455
    %v8466 = vadd.f32 %v8240, %v8457
    %v8467 = vadd.f32 %v8459, %v8461
    %v8468 = vadd.f32 %v8467, %v8463
    %v8469 = vadd.f32 %v8468, %v8465
    %v8470 = vrot.slane %v8469, 4
    %v8471 = vadd.f32 %v8469, %v8470
    %v8472 = vrot.slane %v8471, 2
    %v8473 = vadd.f32 %v8471, %v8472
    %v8474 = vrot.slane %v8473, 1
    %v8475 = vadd.f32 %v8473, %v8474
    %v8476 = vadd.f32 %v8460, %v8462
    %v8477 = vadd.f32 %v8476, %v8464
    %v8478 = vadd.f32 %v8477, %v8466
    %v8479 = vrot.slane %v8478, 4
    %v8480 = vadd.f32 %v8478, %v8479
    %v8481 = vrot.slane %v8480, 2
    %v8482 = vadd.f32 %v8480, %v8481
    %v8483 = vrot.slane %v8482, 1
    %v8484 = vadd.f32 %v8482, %v8483
    %v8485 = vmul.f32 %v8459, %v8459
    %v8486 = vmul.f32 %v8460, %v8460
    %v8487 = vmul.f32 %v8461, %v8461
    %v8488 = vmul.f32 %v8462, %v8462
    %v8489 = vmul.f32 %v8463, %v8463
    %v8490 = vmul.f32 %v8464, %v8464
    %v8491 = vmul.f32 %v8465, %v8465
    %v8492 = vmul.f32 %v8466, %v8466
    %v8493 = vadd.f32 %v8485, %v8487
    %v8494 = vadd.f32 %v8493, %v8489
    %v8495 = vadd.f32 %v8494, %v8491
    %v8496 = vrot.slane %v8495, 4
    %v8497 = vadd.f32 %v8495, %v8496
    %v8498 = vrot.slane %v8497, 2
    %v8499 = vadd.f32 %v8497, %v8498
    %v8500 = vrot.slane %v8499, 1
    %v8501 = vadd.f32 %v8499, %v8500
    %v8502 = vadd.f32 %v8486, %v8488
    %v8503 = vadd.f32 %v8502, %v8490
    %v8504 = vadd.f32 %v8503, %v8492
    %v8505 = vrot.slane %v8504, 4
    %v8506 = vadd.f32 %v8504, %v8505
    %v8507 = vrot.slane %v8506, 2
    %v8508 = vadd.f32 %v8506, %v8507
    %v8509 = vrot.slane %v8508, 1
    %v8510 = vadd.f32 %v8508, %v8509
    %v8511 = vmul.f32 %v8475, 0.03125
    %v8512 = vmul.f32 %v8484, 0.03125
    %v8513 = vmul.f32 %v8501, 0.03125
    %v8514 = vmul.f32 %v8510, 0.03125
    %v8515 = vmul.f32 %v8511, %v8511
    %v8516 = vmul.f32 %v8512, %v8512
    %v8517 = vsub.f32 %v8513, %v8515
    %v8518 = vsub.f32 %v8514, %v8516
    %v8519 = vadd.f32 %v8517, 1e-05
    %v8520 = vadd.f32 %v8518, 1e-05
    %v8521 = vrsqrt.pop %v8519
    %v8522 = vrsqrt.pop %v8520
    %v8525 = vcombine.low %v8521, %v8522
    %v8527 = vunpack.c.l.s4 1966171168
    %v8528 = vunpack.c.0.s8 %v8527
    %v8529 = vlaneseq
    %v8530 = vshrl.u32 %v8529, 7
    %v8531 = vsub.s32 %v8528, %v8530
    %v8532 = vrot.slane %v8525, %v8531
    %v8534 = vunpack.c.l.s4 1966171168
    %v8535 = vunpack.c.0.s8 %v8534
    %v8536 = vlaneseq
    %v8537 = vshrl.u32 %v8536, 7
    %v8538 = vsub.s32 %v8535, %v8537
    %v8539 = vrot.slane %v8532, %v8538
    %v8541 = vmul.f32 %v6449, %v8539
    %v8543 = vlaneseq
    %v8544 = vshrl.u32 %v8543, 7
    %v8545 = vsub.s32 0, %v8544
    %v8546 = vrot.slane %v8541, %v8545
    %v8547 = vlaneseq
    %v8548 = vshrl.u32 %v8547, 7
    %v8549 = vsub.s32 1, %v8548
    %v8550 = vrot.slane %v8541, %v8549
    %v8553 = vmul.f32 %v8511, %v8546
    %v8554 = vmul.f32 %v8512, %v8550
    %v8557 = vcombine.low %v8553, %v8554
    %v8559 = vunpack.c.l.s4 1966171168
    %v8560 = vunpack.c.0.s8 %v8559
    %v8561 = vlaneseq
    %v8562 = vshrl.u32 %v8561, 7
    %v8563 = vsub.s32 %v8560, %v8562
    %v8564 = vrot.slane %v8557, %v8563
    %v8566 = vunpack.c.l.s4 1966171168
    %v8567 = vunpack.c.0.s8 %v8566
    %v8568 = vlaneseq
    %v8569 = vshrl.u32 %v8568, 7
    %v8570 = vsub.s32 %v8567, %v8569
    %v8571 = vrot.slane %v8564, %v8570
    %v8573 = vsub.f32 %v6450, %v8571
    %v8574 = vmul.f32 %v8459, %v8546
    %v8575 = vmul.f32 %v8460, %v8550
    %v8576 = vmul.f32 %v8461, %v8546
    %v8577 = vmul.f32 %v8462, %v8550
    %v8578 = vmul.f32 %v8463, %v8546
    %v8579 = vmul.f32 %v8464, %v8550
    %v8580 = vmul.f32 %v8465, %v8546
    %v8581 = vmul.f32 %v8466, %v8550
    %v8583 = vlaneseq
    %v8584 = vshrl.u32 %v8583, 7
    %v8585 = vsub.s32 0, %v8584
    %v8586 = vrot.slane %v8573, %v8585
    %v8587 = vlaneseq
    %v8588 = vshrl.u32 %v8587, 7
    %v8589 = vsub.s32 1, %v8588
    %v8590 = vrot.slane %v8573, %v8589
    %v8593 = vadd.f32 %v8574, %v8586
    %v8594 = vadd.f32 %v8575, %v8590
    %v8595 = vadd.f32 %v8576, %v8586
    %v8596 = vadd.f32 %v8577, %v8590
    %v8597 = vadd.f32 %v8578, %v8586
    %v8598 = vadd.f32 %v8579, %v8590
    %v8599 = vadd.f32 %v8580, %v8586
    %v8600 = vadd.f32 %v8581, %v8590
    %v8601 = vmax.f32 %v8593, 0.0
    %v8602 = vmax.f32 %v8594, 0.0
    %v8603 = vmax.f32 %v8595, 0.0
    %v8604 = vmax.f32 %v8596, 0.0
    %v8605 = vmax.f32 %v8597, 0.0
    %v8606 = vmax.f32 %v8598, 0.0
    %v8607 = vmax.f32 %v8599, 0.0
    %v8608 = vmax.f32 %v8600, 0.0
    %v8609 = vpack.c.bf16 %v8601, %v8601
    %v8610 = vpack.c.bf16 %v8602, %v8602
    %v8611 = vld [vmem:[%s12] sm:$0xf]
    %v8612 = vld [vmem:[%s12 + $0x4] sm:$0xf]
    %v8613 = vld [vmem:[%s12 + $0x8] sm:$0xf]
    %v8614 = vld [vmem:[%s12 + $0xc] sm:$0xf]
    %v8615 = vld [vmem:[%s12 + $0x10] sm:$0xf]
    %v8616 = vld [vmem:[%s12 + $0x14] sm:$0xf]
    %v8617 = vld [vmem:[%s12 + $0x18] sm:$0xf]
    %v8618 = vld [vmem:[%s12 + $0x1c] sm:$0xf]
    %v8619 = vld [vmem:[%s12 + $0x20] sm:$0xf]
    %v8620 = vld [vmem:[%s12 + $0x24] sm:$0xf]
    %v8621 = vld [vmem:[%s12 + $0x28] sm:$0xf]
    %v8622 = vld [vmem:[%s12 + $0x2c] sm:$0xf]
    %v8623 = vld [vmem:[%s12 + $0x30] sm:$0xf]
    %v8624 = vld [vmem:[%s12 + $0x34] sm:$0xf]
    %v8625 = vld [vmem:[%s12 + $0x38] sm:$0xf]
    %v8626 = vld [vmem:[%s12 + $0x3c] sm:$0xf]
    %v8627 = vld [vmem:[%s12 + $0x40] sm:$0xf]
    %v8628 = vld [vmem:[%s12 + $0x44] sm:$0xf]
    %v8629 = vld [vmem:[%s12 + $0x48] sm:$0xf]
    %v8630 = vld [vmem:[%s12 + $0x4c] sm:$0xf]
    %v8631 = vld [vmem:[%s12 + $0x50] sm:$0xf]
    %v8632 = vld [vmem:[%s12 + $0x54] sm:$0xf]
    %v8633 = vld [vmem:[%s12 + $0x58] sm:$0xf]
    %v8634 = vld [vmem:[%s12 + $0x5c] sm:$0xf]
    %v8635 = vld [vmem:[%s12 + $0x60] sm:$0xf]
    %v8636 = vld [vmem:[%s12 + $0x64] sm:$0xf]
    %v8637 = vld [vmem:[%s12 + $0x68] sm:$0xf]
    %v8638 = vld [vmem:[%s12 + $0x6c] sm:$0xf]
    %v8639 = vld [vmem:[%s12 + $0x70] sm:$0xf]
    %v8640 = vld [vmem:[%s12 + $0x74] sm:$0xf]
    %v8641 = vld [vmem:[%s12 + $0x78] sm:$0xf]
    %v8642 = vld [vmem:[%s12 + $0x7c] sm:$0xf]
    %s8643 = scalar_lea.vmem %s12, 128
    %v8644 = vld [vmem:[%s8643] sm:$0xf]
    %v8645 = vld [vmem:[%s8643 + $0x4] sm:$0xf]
    %v8646 = vld [vmem:[%s8643 + $0x8] sm:$0xf]
    %v8647 = vld [vmem:[%s8643 + $0xc] sm:$0xf]
    %v8648 = vld [vmem:[%s8643 + $0x10] sm:$0xf]
    %v8649 = vld [vmem:[%s8643 + $0x14] sm:$0xf]
    %v8650 = vld [vmem:[%s8643 + $0x18] sm:$0xf]
    %v8651 = vld [vmem:[%s8643 + $0x1c] sm:$0xf]
    %v8652 = vld [vmem:[%s8643 + $0x20] sm:$0xf]
    %v8653 = vld [vmem:[%s8643 + $0x24] sm:$0xf]
    %v8654 = vld [vmem:[%s8643 + $0x28] sm:$0xf]
    %v8655 = vld [vmem:[%s8643 + $0x2c] sm:$0xf]
    %v8656 = vld [vmem:[%s8643 + $0x30] sm:$0xf]
    %v8657 = vld [vmem:[%s8643 + $0x34] sm:$0xf]
    %v8658 = vld [vmem:[%s8643 + $0x38] sm:$0xf]
    %v8659 = vld [vmem:[%s8643 + $0x3c] sm:$0xf]
    %v8660 = vld [vmem:[%s8643 + $0x40] sm:$0xf]
    %v8661 = vld [vmem:[%s8643 + $0x44] sm:$0xf]
    %v8662 = vld [vmem:[%s8643 + $0x48] sm:$0xf]
    %v8663 = vld [vmem:[%s8643 + $0x4c] sm:$0xf]
    %v8664 = vld [vmem:[%s8643 + $0x50] sm:$0xf]
    %v8665 = vld [vmem:[%s8643 + $0x54] sm:$0xf]
    %v8666 = vld [vmem:[%s8643 + $0x58] sm:$0xf]
    %v8667 = vld [vmem:[%s8643 + $0x5c] sm:$0xf]
    %v8668 = vld [vmem:[%s8643 + $0x60] sm:$0xf]
    %v8669 = vld [vmem:[%s8643 + $0x64] sm:$0xf]
    %v8670 = vld [vmem:[%s8643 + $0x68] sm:$0xf]
    %v8671 = vld [vmem:[%s8643 + $0x6c] sm:$0xf]
    %v8672 = vld [vmem:[%s8643 + $0x70] sm:$0xf]
    %v8673 = vld [vmem:[%s8643 + $0x74] sm:$0xf]
    %v8674 = vld [vmem:[%s8643 + $0x78] sm:$0xf]
    %v8675 = vld [vmem:[%s8643 + $0x7c] sm:$0xf]
    %v8678 = vrot.slane %v8609, 1
    %v8679 = vrot.slane %v8610, 1
    %v8714 = vunpack.c.l.b16 %v8644
    %v8715 = vunpack.c.l.b16 %v8645
    %v8716 = vunpack.c.l.b16 %v8646
    %v8717 = vunpack.c.l.b16 %v8647
    %v8718 = vunpack.c.l.b16 %v8648
    %v8719 = vunpack.c.l.b16 %v8649
    %v8720 = vunpack.c.l.b16 %v8650
    %v8721 = vunpack.c.l.b16 %v8651
    %v8722 = vunpack.c.l.b16 %v8652
    %v8723 = vunpack.c.l.b16 %v8653
    %v8724 = vunpack.c.l.b16 %v8654
    %v8725 = vunpack.c.l.b16 %v8655
    %v8726 = vunpack.c.l.b16 %v8656
    %v8727 = vunpack.c.l.b16 %v8657
    %v8728 = vunpack.c.l.b16 %v8658
    %v8729 = vunpack.c.l.b16 %v8659
    %v8730 = vunpack.c.l.b16 %v8660
    %v8731 = vunpack.c.l.b16 %v8661
    %v8732 = vunpack.c.l.b16 %v8662
    %v8733 = vunpack.c.l.b16 %v8663
    %v8734 = vunpack.c.l.b16 %v8664
    %v8735 = vunpack.c.l.b16 %v8665
    %v8736 = vunpack.c.l.b16 %v8666
    %v8737 = vunpack.c.l.b16 %v8667
    %v8738 = vunpack.c.l.b16 %v8668
    %v8739 = vunpack.c.l.b16 %v8669
    %v8740 = vunpack.c.l.b16 %v8670
    %v8741 = vunpack.c.l.b16 %v8671
    %v8742 = vunpack.c.l.b16 %v8672
    %v8743 = vunpack.c.l.b16 %v8673
    %v8744 = vunpack.c.l.b16 %v8674
    %v8745 = vunpack.c.l.b16 %v8675
    %v8746 = vpack.c.b16 %v8715, %v8714
    %v8747 = vpack.c.b16 %v8717, %v8716
    %v8748 = vpack.c.b16 %v8719, %v8718
    %v8749 = vpack.c.b16 %v8721, %v8720
    %v8750 = vpack.c.b16 %v8723, %v8722
    %v8751 = vpack.c.b16 %v8725, %v8724
    %v8752 = vpack.c.b16 %v8727, %v8726
    %v8753 = vpack.c.b16 %v8729, %v8728
    %v8754 = vpack.c.b16 %v8731, %v8730
    %v8755 = vpack.c.b16 %v8733, %v8732
    %v8756 = vpack.c.b16 %v8735, %v8734
    %v8757 = vpack.c.b16 %v8737, %v8736
    %v8758 = vpack.c.b16 %v8739, %v8738
    %v8759 = vpack.c.b16 %v8741, %v8740
    %v8760 = vpack.c.b16 %v8743, %v8742
    %v8761 = vpack.c.b16 %v8745, %v8744
    %8778 = vmatprep.subr.bf16.mxu0 0
    %8779 = vmatpush1.bf16.msra.mxu0 %v8746
    %8780 = vmatprep.subr.bf16.mxu0 0
    %8781 = vmatpush1.bf16.msra.mxu0 %v8747
    %8782 = vmatprep.subr.bf16.mxu0 0
    %8783 = vmatpush1.bf16.msra.mxu0 %v8748
    %8784 = vmatprep.subr.bf16.mxu0 0
    %8785 = vmatpush1.bf16.msra.mxu0 %v8749
    %8786 = vmatprep.subr.bf16.mxu0 0
    %8787 = vmatpush1.bf16.msra.mxu0 %v8750
    %8788 = vmatprep.subr.bf16.mxu0 0
    %8789 = vmatpush1.bf16.msra.mxu0 %v8751
    %8790 = vmatprep.subr.bf16.mxu0 0
    %8791 = vmatpush1.bf16.msra.mxu0 %v8752
    %8792 = vmatprep.subr.bf16.mxu0 0
    %8793 = vmatpush1.bf16.msra.mxu0 %v8753
    %8794 = vmatprep.subr.bf16.mxu0 0
    %8795 = vmatpush1.bf16.msra.mxu0 %v8754
    %8796 = vmatprep.subr.bf16.mxu0 0
    %8797 = vmatpush1.bf16.msra.mxu0 %v8755
    %8798 = vmatprep.subr.bf16.mxu0 0
    %8799 = vmatpush1.bf16.msra.mxu0 %v8756
    %8800 = vmatprep.subr.bf16.mxu0 0
    %8801 = vmatpush1.bf16.msra.mxu0 %v8757
    %8802 = vmatprep.subr.bf16.mxu0 0
    %8803 = vmatpush1.bf16.msra.mxu0 %v8758
    %8804 = vmatprep.subr.bf16.mxu0 0
    %8805 = vmatpush1.bf16.msra.mxu0 %v8759
    %8806 = vmatprep.subr.bf16.mxu0 0
    %8807 = vmatpush1.bf16.msra.mxu0 %v8760
    %8808 = vmatprep.subr.bf16.mxu0 0
    %8809 = vmatpush1.bf16.msra.mxu0 %v8761
    %8810 = vmatprep.mubr.bf16.mxu0 %v8679
    %8811 = vmatmul.mubr.bf16.gmra.mrb[0].mxu0 %v8678
    %v8812 = vpop.f32.mrb[0].mxu0
    %v8813 = vadd.f32 0.0, %v8812
    %v8814 = vpop.f32.mrb[0].mxu0
    %v8815 = vpop.f32.mrb[0].mxu0
    %v8816 = vpop.f32.mrb[0].mxu0
    %8817 = vdwg.mxu0
    %v8850 = vunpack.c.l.b16 %v8611
    %v8851 = vunpack.c.l.b16 %v8612
    %v8852 = vunpack.c.l.b16 %v8613
    %v8853 = vunpack.c.l.b16 %v8614
    %v8854 = vunpack.c.l.b16 %v8615
    %v8855 = vunpack.c.l.b16 %v8616
    %v8856 = vunpack.c.l.b16 %v8617
    %v8857 = vunpack.c.l.b16 %v8618
    %v8858 = vunpack.c.l.b16 %v8619
    %v8859 = vunpack.c.l.b16 %v8620
    %v8860 = vunpack.c.l.b16 %v8621
    %v8861 = vunpack.c.l.b16 %v8622
    %v8862 = vunpack.c.l.b16 %v8623
    %v8863 = vunpack.c.l.b16 %v8624
    %v8864 = vunpack.c.l.b16 %v8625
    %v8865 = vunpack.c.l.b16 %v8626
    %v8866 = vunpack.c.l.b16 %v8627
    %v8867 = vunpack.c.l.b16 %v8628
    %v8868 = vunpack.c.l.b16 %v8629
    %v8869 = vunpack.c.l.b16 %v8630
    %v8870 = vunpack.c.l.b16 %v8631
    %v8871 = vunpack.c.l.b16 %v8632
    %v8872 = vunpack.c.l.b16 %v8633
    %v8873 = vunpack.c.l.b16 %v8634
    %v8874 = vunpack.c.l.b16 %v8635
    %v8875 = vunpack.c.l.b16 %v8636
    %v8876 = vunpack.c.l.b16 %v8637
    %v8877 = vunpack.c.l.b16 %v8638
    %v8878 = vunpack.c.l.b16 %v8639
    %v8879 = vunpack.c.l.b16 %v8640
    %v8880 = vunpack.c.l.b16 %v8641
    %v8881 = vunpack.c.l.b16 %v8642
    %v8882 = vpack.c.b16 %v8851, %v8850
    %v8883 = vpack.c.b16 %v8853, %v8852
    %v8884 = vpack.c.b16 %v8855, %v8854
    %v8885 = vpack.c.b16 %v8857, %v8856
    %v8886 = vpack.c.b16 %v8859, %v8858
    %v8887 = vpack.c.b16 %v8861, %v8860
    %v8888 = vpack.c.b16 %v8863, %v8862
    %v8889 = vpack.c.b16 %v8865, %v8864
    %v8890 = vpack.c.b16 %v8867, %v8866
    %v8891 = vpack.c.b16 %v8869, %v8868
    %v8892 = vpack.c.b16 %v8871, %v8870
    %v8893 = vpack.c.b16 %v8873, %v8872
    %v8894 = vpack.c.b16 %v8875, %v8874
    %v8895 = vpack.c.b16 %v8877, %v8876
    %v8896 = vpack.c.b16 %v8879, %v8878
    %v8897 = vpack.c.b16 %v8881, %v8880
    %8914 = vmatprep.subr.bf16.mxu0 0
    %8915 = vmatpush1.bf16.msra.mxu0 %v8882
    %8916 = vmatprep.subr.bf16.mxu0 0
    %8917 = vmatpush1.bf16.msra.mxu0 %v8883
    %8918 = vmatprep.subr.bf16.mxu0 0
    %8919 = vmatpush1.bf16.msra.mxu0 %v8884
    %8920 = vmatprep.subr.bf16.mxu0 0
    %8921 = vmatpush1.bf16.msra.mxu0 %v8885
    %8922 = vmatprep.subr.bf16.mxu0 0
    %8923 = vmatpush1.bf16.msra.mxu0 %v8886
    %8924 = vmatprep.subr.bf16.mxu0 0
    %8925 = vmatpush1.bf16.msra.mxu0 %v8887
    %8926 = vmatprep.subr.bf16.mxu0 0
    %8927 = vmatpush1.bf16.msra.mxu0 %v8888
    %8928 = vmatprep.subr.bf16.mxu0 0
    %8929 = vmatpush1.bf16.msra.mxu0 %v8889
    %8930 = vmatprep.subr.bf16.mxu0 0
    %8931 = vmatpush1.bf16.msra.mxu0 %v8890
    %8932 = vmatprep.subr.bf16.mxu0 0
    %8933 = vmatpush1.bf16.msra.mxu0 %v8891
    %8934 = vmatprep.subr.bf16.mxu0 0
    %8935 = vmatpush1.bf16.msra.mxu0 %v8892
    %8936 = vmatprep.subr.bf16.mxu0 0
    %8937 = vmatpush1.bf16.msra.mxu0 %v8893
    %8938 = vmatprep.subr.bf16.mxu0 0
    %8939 = vmatpush1.bf16.msra.mxu0 %v8894
    %8940 = vmatprep.subr.bf16.mxu0 0
    %8941 = vmatpush1.bf16.msra.mxu0 %v8895
    %8942 = vmatprep.subr.bf16.mxu0 0
    %8943 = vmatpush1.bf16.msra.mxu0 %v8896
    %8944 = vmatprep.subr.bf16.mxu0 0
    %8945 = vmatpush1.bf16.msra.mxu0 %v8897
    %8946 = vmatprep.mubr.bf16.mxu0 %v8610
    %8947 = vmatmul.mubr.bf16.gmra.mrb[0].mxu0 %v8609
    %v8948 = vpop.f32.mrb[0].mxu0
    %v8949 = vadd.f32 %v8813, %v8948
    %v8950 = vpop.f32.mrb[0].mxu0
    %v8951 = vpop.f32.mrb[0].mxu0
    %v8952 = vpop.f32.mrb[0].mxu0
    %8953 = vdwg.mxu0
    %s8954 = scalar_lea.vmem %s12, 256
    %v8955 = vld [vmem:[%s8954] sm:$0xf]
    %v8956 = vld [vmem:[%s8954 + $0x4] sm:$0xf]
    %v8957 = vld [vmem:[%s8954 + $0x8] sm:$0xf]
    %v8958 = vld [vmem:[%s8954 + $0xc] sm:$0xf]
    %v8959 = vld [vmem:[%s8954 + $0x10] sm:$0xf]
    %v8960 = vld [vmem:[%s8954 + $0x14] sm:$0xf]
    %v8961 = vld [vmem:[%s8954 + $0x18] sm:$0xf]
    %v8962 = vld [vmem:[%s8954 + $0x1c] sm:$0xf]
    %v8963 = vld [vmem:[%s8954 + $0x20] sm:$0xf]
    %v8964 = vld [vmem:[%s8954 + $0x24] sm:$0xf]
    %v8965 = vld [vmem:[%s8954 + $0x28] sm:$0xf]
    %v8966 = vld [vmem:[%s8954 + $0x2c] sm:$0xf]
    %v8967 = vld [vmem:[%s8954 + $0x30] sm:$0xf]
    %v8968 = vld [vmem:[%s8954 + $0x34] sm:$0xf]
    %v8969 = vld [vmem:[%s8954 + $0x38] sm:$0xf]
    %v8970 = vld [vmem:[%s8954 + $0x3c] sm:$0xf]
    %v8971 = vld [vmem:[%s8954 + $0x40] sm:$0xf]
    %v8972 = vld [vmem:[%s8954 + $0x44] sm:$0xf]
    %v8973 = vld [vmem:[%s8954 + $0x48] sm:$0xf]
    %v8974 = vld [vmem:[%s8954 + $0x4c] sm:$0xf]
    %v8975 = vld [vmem:[%s8954 + $0x50] sm:$0xf]
    %v8976 = vld [vmem:[%s8954 + $0x54] sm:$0xf]
    %v8977 = vld [vmem:[%s8954 + $0x58] sm:$0xf]
    %v8978 = vld [vmem:[%s8954 + $0x5c] sm:$0xf]
    %v8979 = vld [vmem:[%s8954 + $0x60] sm:$0xf]
    %v8980 = vld [vmem:[%s8954 + $0x64] sm:$0xf]
    %v8981 = vld [vmem:[%s8954 + $0x68] sm:$0xf]
    %v8982 = vld [vmem:[%s8954 + $0x6c] sm:$0xf]
    %v8983 = vld [vmem:[%s8954 + $0x70] sm:$0xf]
    %v8984 = vld [vmem:[%s8954 + $0x74] sm:$0xf]
    %v8985 = vld [vmem:[%s8954 + $0x78] sm:$0xf]
    %v8986 = vld [vmem:[%s8954 + $0x7c] sm:$0xf]
    %v8987 = vrot.slane %v8609, 2
    %v8988 = vrot.slane %v8610, 2
    %v9023 = vunpack.c.l.b16 %v8955
    %v9024 = vunpack.c.l.b16 %v8956
    %v9025 = vunpack.c.l.b16 %v8957
    %v9026 = vunpack.c.l.b16 %v8958
    %v9027 = vunpack.c.l.b16 %v8959
    %v9028 = vunpack.c.l.b16 %v8960
    %v9029 = vunpack.c.l.b16 %v8961
    %v9030 = vunpack.c.l.b16 %v8962
    %v9031 = vunpack.c.l.b16 %v8963
    %v9032 = vunpack.c.l.b16 %v8964
    %v9033 = vunpack.c.l.b16 %v8965
    %v9034 = vunpack.c.l.b16 %v8966
    %v9035 = vunpack.c.l.b16 %v8967
    %v9036 = vunpack.c.l.b16 %v8968
    %v9037 = vunpack.c.l.b16 %v8969
    %v9038 = vunpack.c.l.b16 %v8970
    %v9039 = vunpack.c.l.b16 %v8971
    %v9040 = vunpack.c.l.b16 %v8972
    %v9041 = vunpack.c.l.b16 %v8973
    %v9042 = vunpack.c.l.b16 %v8974
    %v9043 = vunpack.c.l.b16 %v8975
    %v9044 = vunpack.c.l.b16 %v8976
    %v9045 = vunpack.c.l.b16 %v8977
    %v9046 = vunpack.c.l.b16 %v8978
    %v9047 = vunpack.c.l.b16 %v8979
    %v9048 = vunpack.c.l.b16 %v8980
    %v9049 = vunpack.c.l.b16 %v8981
    %v9050 = vunpack.c.l.b16 %v8982
    %v9051 = vunpack.c.l.b16 %v8983
    %v9052 = vunpack.c.l.b16 %v8984
    %v9053 = vunpack.c.l.b16 %v8985
    %v9054 = vunpack.c.l.b16 %v8986
    %v9055 = vpack.c.b16 %v9024, %v9023
    %v9056 = vpack.c.b16 %v9026, %v9025
    %v9057 = vpack.c.b16 %v9028, %v9027
    %v9058 = vpack.c.b16 %v9030, %v9029
    %v9059 = vpack.c.b16 %v9032, %v9031
    %v9060 = vpack.c.b16 %v9034, %v9033
    %v9061 = vpack.c.b16 %v9036, %v9035
    %v9062 = vpack.c.b16 %v9038, %v9037
    %v9063 = vpack.c.b16 %v9040, %v9039
    %v9064 = vpack.c.b16 %v9042, %v9041
    %v9065 = vpack.c.b16 %v9044, %v9043
    %v9066 = vpack.c.b16 %v9046, %v9045
    %v9067 = vpack.c.b16 %v9048, %v9047
    %v9068 = vpack.c.b16 %v9050, %v9049
    %v9069 = vpack.c.b16 %v9052, %v9051
    %v9070 = vpack.c.b16 %v9054, %v9053
    %9087 = vmatprep.subr.bf16.mxu0 0
    %9088 = vmatpush1.bf16.msra.mxu0 %v9055
    %9089 = vmatprep.subr.bf16.mxu0 0
    %9090 = vmatpush1.bf16.msra.mxu0 %v9056
    %9091 = vmatprep.subr.bf16.mxu0 0
    %9092 = vmatpush1.bf16.msra.mxu0 %v9057
    %9093 = vmatprep.subr.bf16.mxu0 0
    %9094 = vmatpush1.bf16.msra.mxu0 %v9058
    %9095 = vmatprep.subr.bf16.mxu0 0
    %9096 = vmatpush1.bf16.msra.mxu0 %v9059
    %9097 = vmatprep.subr.bf16.mxu0 0
    %9098 = vmatpush1.bf16.msra.mxu0 %v9060
    %9099 = vmatprep.subr.bf16.mxu0 0
    %9100 = vmatpush1.bf16.msra.mxu0 %v9061
    %9101 = vmatprep.subr.bf16.mxu0 0
    %9102 = vmatpush1.bf16.msra.mxu0 %v9062
    %9103 = vmatprep.subr.bf16.mxu0 0
    %9104 = vmatpush1.bf16.msra.mxu0 %v9063
    %9105 = vmatprep.subr.bf16.mxu0 0
    %9106 = vmatpush1.bf16.msra.mxu0 %v9064
    %9107 = vmatprep.subr.bf16.mxu0 0
    %9108 = vmatpush1.bf16.msra.mxu0 %v9065
    %9109 = vmatprep.subr.bf16.mxu0 0
    %9110 = vmatpush1.bf16.msra.mxu0 %v9066
    %9111 = vmatprep.subr.bf16.mxu0 0
    %9112 = vmatpush1.bf16.msra.mxu0 %v9067
    %9113 = vmatprep.subr.bf16.mxu0 0
    %9114 = vmatpush1.bf16.msra.mxu0 %v9068
    %9115 = vmatprep.subr.bf16.mxu0 0
    %9116 = vmatpush1.bf16.msra.mxu0 %v9069
    %9117 = vmatprep.subr.bf16.mxu0 0
    %9118 = vmatpush1.bf16.msra.mxu0 %v9070
    %9119 = vmatprep.mubr.bf16.mxu0 %v8988
    %9120 = vmatmul.mubr.bf16.gmra.mrb[0].mxu0 %v8987
    %v9121 = vpop.f32.mrb[0].mxu0
    %v9122 = vadd.f32 0.0, %v9121
    %v9123 = vpop.f32.mrb[0].mxu0
    %v9124 = vpop.f32.mrb[0].mxu0
    %v9125 = vpop.f32.mrb[0].mxu0
    %9126 = vdwg.mxu0
    %v9127 = vadd.f32 %v8949, %v9122
    %s9128 = scalar_lea.vmem %s12, 384
    %v9129 = vld [vmem:[%s9128] sm:$0xf]
    %v9130 = vld [vmem:[%s9128 + $0x4] sm:$0xf]
    %v9131 = vld [vmem:[%s9128 + $0x8] sm:$0xf]
    %v9132 = vld [vmem:[%s9128 + $0xc] sm:$0xf]
    %v9133 = vld [vmem:[%s9128 + $0x10] sm:$0xf]
    %v9134 = vld [vmem:[%s9128 + $0x14] sm:$0xf]
    %v9135 = vld [vmem:[%s9128 + $0x18] sm:$0xf]
    %v9136 = vld [vmem:[%s9128 + $0x1c] sm:$0xf]
    %v9137 = vld [vmem:[%s9128 + $0x20] sm:$0xf]
    %v9138 = vld [vmem:[%s9128 + $0x24] sm:$0xf]
    %v9139 = vld [vmem:[%s9128 + $0x28] sm:$0xf]
    %v9140 = vld [vmem:[%s9128 + $0x2c] sm:$0xf]
    %v9141 = vld [vmem:[%s9128 + $0x30] sm:$0xf]
    %v9142 = vld [vmem:[%s9128 + $0x34] sm:$0xf]
    %v9143 = vld [vmem:[%s9128 + $0x38] sm:$0xf]
    %v9144 = vld [vmem:[%s9128 + $0x3c] sm:$0xf]
    %v9145 = vld [vmem:[%s9128 + $0x40] sm:$0xf]
    %v9146 = vld [vmem:[%s9128 + $0x44] sm:$0xf]
    %v9147 = vld [vmem:[%s9128 + $0x48] sm:$0xf]
    %v9148 = vld [vmem:[%s9128 + $0x4c] sm:$0xf]
    %v9149 = vld [vmem:[%s9128 + $0x50] sm:$0xf]
    %v9150 = vld [vmem:[%s9128 + $0x54] sm:$0xf]
    %v9151 = vld [vmem:[%s9128 + $0x58] sm:$0xf]
    %v9152 = vld [vmem:[%s9128 + $0x5c] sm:$0xf]
    %v9153 = vld [vmem:[%s9128 + $0x60] sm:$0xf]
    %v9154 = vld [vmem:[%s9128 + $0x64] sm:$0xf]
    %v9155 = vld [vmem:[%s9128 + $0x68] sm:$0xf]
    %v9156 = vld [vmem:[%s9128 + $0x6c] sm:$0xf]
    %v9157 = vld [vmem:[%s9128 + $0x70] sm:$0xf]
    %v9158 = vld [vmem:[%s9128 + $0x74] sm:$0xf]
    %v9159 = vld [vmem:[%s9128 + $0x78] sm:$0xf]
    %v9160 = vld [vmem:[%s9128 + $0x7c] sm:$0xf]
    %v9161 = vrot.slane %v8609, 3
    %v9162 = vrot.slane %v8610, 3
    %v9197 = vunpack.c.l.b16 %v9129
    %v9198 = vunpack.c.l.b16 %v9130
    %v9199 = vunpack.c.l.b16 %v9131
    %v9200 = vunpack.c.l.b16 %v9132
    %v9201 = vunpack.c.l.b16 %v9133
    %v9202 = vunpack.c.l.b16 %v9134
    %v9203 = vunpack.c.l.b16 %v9135
    %v9204 = vunpack.c.l.b16 %v9136
    %v9205 = vunpack.c.l.b16 %v9137
    %v9206 = vunpack.c.l.b16 %v9138
    %v9207 = vunpack.c.l.b16 %v9139
    %v9208 = vunpack.c.l.b16 %v9140
    %v9209 = vunpack.c.l.b16 %v9141
    %v9210 = vunpack.c.l.b16 %v9142
    %v9211 = vunpack.c.l.b16 %v9143
    %v9212 = vunpack.c.l.b16 %v9144
    %v9213 = vunpack.c.l.b16 %v9145
    %v9214 = vunpack.c.l.b16 %v9146
    %v9215 = vunpack.c.l.b16 %v9147
    %v9216 = vunpack.c.l.b16 %v9148
    %v9217 = vunpack.c.l.b16 %v9149
    %v9218 = vunpack.c.l.b16 %v9150
    %v9219 = vunpack.c.l.b16 %v9151
    %v9220 = vunpack.c.l.b16 %v9152
    %v9221 = vunpack.c.l.b16 %v9153
    %v9222 = vunpack.c.l.b16 %v9154
    %v9223 = vunpack.c.l.b16 %v9155
    %v9224 = vunpack.c.l.b16 %v9156
    %v9225 = vunpack.c.l.b16 %v9157
    %v9226 = vunpack.c.l.b16 %v9158
    %v9227 = vunpack.c.l.b16 %v9159
    %v9228 = vunpack.c.l.b16 %v9160
    %v9229 = vpack.c.b16 %v9198, %v9197
    %v9230 = vpack.c.b16 %v9200, %v9199
    %v9231 = vpack.c.b16 %v9202, %v9201
    %v9232 = vpack.c.b16 %v9204, %v9203
    %v9233 = vpack.c.b16 %v9206, %v9205
    %v9234 = vpack.c.b16 %v9208, %v9207
    %v9235 = vpack.c.b16 %v9210, %v9209
    %v9236 = vpack.c.b16 %v9212, %v9211
    %v9237 = vpack.c.b16 %v9214, %v9213
    %v9238 = vpack.c.b16 %v9216, %v9215
    %v9239 = vpack.c.b16 %v9218, %v9217
    %v9240 = vpack.c.b16 %v9220, %v9219
    %v9241 = vpack.c.b16 %v9222, %v9221
    %v9242 = vpack.c.b16 %v9224, %v9223
    %v9243 = vpack.c.b16 %v9226, %v9225
    %v9244 = vpack.c.b16 %v9228, %v9227
    %9261 = vmatprep.subr.bf16.mxu0 0
    %9262 = vmatpush1.bf16.msra.mxu0 %v9229
    %9263 = vmatprep.subr.bf16.mxu0 0
    %9264 = vmatpush1.bf16.msra.mxu0 %v9230
    %9265 = vmatprep.subr.bf16.mxu0 0
    %9266 = vmatpush1.bf16.msra.mxu0 %v9231
    %9267 = vmatprep.subr.bf16.mxu0 0
    %9268 = vmatpush1.bf16.msra.mxu0 %v9232
    %9269 = vmatprep.subr.bf16.mxu0 0
    %9270 = vmatpush1.bf16.msra.mxu0 %v9233
    %9271 = vmatprep.subr.bf16.mxu0 0
    %9272 = vmatpush1.bf16.msra.mxu0 %v9234
    %9273 = vmatprep.subr.bf16.mxu0 0
    %9274 = vmatpush1.bf16.msra.mxu0 %v9235
    %9275 = vmatprep.subr.bf16.mxu0 0
    %9276 = vmatpush1.bf16.msra.mxu0 %v9236
    %9277 = vmatprep.subr.bf16.mxu0 0
    %9278 = vmatpush1.bf16.msra.mxu0 %v9237
    %9279 = vmatprep.subr.bf16.mxu0 0
    %9280 = vmatpush1.bf16.msra.mxu0 %v9238
    %9281 = vmatprep.subr.bf16.mxu0 0
    %9282 = vmatpush1.bf16.msra.mxu0 %v9239
    %9283 = vmatprep.subr.bf16.mxu0 0
    %9284 = vmatpush1.bf16.msra.mxu0 %v9240
    %9285 = vmatprep.subr.bf16.mxu0 0
    %9286 = vmatpush1.bf16.msra.mxu0 %v9241
    %9287 = vmatprep.subr.bf16.mxu0 0
    %9288 = vmatpush1.bf16.msra.mxu0 %v9242
    %9289 = vmatprep.subr.bf16.mxu0 0
    %9290 = vmatpush1.bf16.msra.mxu0 %v9243
    %9291 = vmatprep.subr.bf16.mxu0 0
    %9292 = vmatpush1.bf16.msra.mxu0 %v9244
    %9293 = vmatprep.mubr.bf16.mxu0 %v9162
    %9294 = vmatmul.mubr.bf16.gmra.mrb[0].mxu0 %v9161
    %v9295 = vpop.f32.mrb[0].mxu0
    %v9296 = vadd.f32 0.0, %v9295
    %v9297 = vpop.f32.mrb[0].mxu0
    %v9298 = vpop.f32.mrb[0].mxu0
    %v9299 = vpop.f32.mrb[0].mxu0
    %9300 = vdwg.mxu0
    %v9301 = vadd.f32 %v9127, %v9296
    %v9302 = vpack.c.bf16 %v8603, %v8603
    %v9303 = vpack.c.bf16 %v8604, %v8604
    %s9304 = scalar_lea.vmem %s12, 512
    %v9305 = vld [vmem:[%s9304] sm:$0xf]
    %v9306 = vld [vmem:[%s9304 + $0x4] sm:$0xf]
    %v9307 = vld [vmem:[%s9304 + $0x8] sm:$0xf]
    %v9308 = vld [vmem:[%s9304 + $0xc] sm:$0xf]
    %v9309 = vld [vmem:[%s9304 + $0x10] sm:$0xf]
    %v9310 = vld [vmem:[%s9304 + $0x14] sm:$0xf]
    %v9311 = vld [vmem:[%s9304 + $0x18] sm:$0xf]
    %v9312 = vld [vmem:[%s9304 + $0x1c] sm:$0xf]
    %v9313 = vld [vmem:[%s9304 + $0x20] sm:$0xf]
    %v9314 = vld [vmem:[%s9304 + $0x24] sm:$0xf]
    %v9315 = vld [vmem:[%s9304 + $0x28] sm:$0xf]
    %v9316 = vld [vmem:[%s9304 + $0x2c] sm:$0xf]
    %v9317 = vld [vmem:[%s9304 + $0x30] sm:$0xf]
    %v9318 = vld [vmem:[%s9304 + $0x34] sm:$0xf]
    %v9319 = vld [vmem:[%s9304 + $0x38] sm:$0xf]
    %v9320 = vld [vmem:[%s9304 + $0x3c] sm:$0xf]
    %v9321 = vld [vmem:[%s9304 + $0x40] sm:$0xf]
    %v9322 = vld [vmem:[%s9304 + $0x44] sm:$0xf]
    %v9323 = vld [vmem:[%s9304 + $0x48] sm:$0xf]
    %v9324 = vld [vmem:[%s9304 + $0x4c] sm:$0xf]
    %v9325 = vld [vmem:[%s9304 + $0x50] sm:$0xf]
    %v9326 = vld [vmem:[%s9304 + $0x54] sm:$0xf]
    %v9327 = vld [vmem:[%s9304 + $0x58] sm:$0xf]
    %v9328 = vld [vmem:[%s9304 + $0x5c] sm:$0xf]
    %v9329 = vld [vmem:[%s9304 + $0x60] sm:$0xf]
    %v9330 = vld [vmem:[%s9304 + $0x64] sm:$0xf]
    %v9331 = vld [vmem:[%s9304 + $0x68] sm:$0xf]
    %v9332 = vld [vmem:[%s9304 + $0x6c] sm:$0xf]
    %v9333 = vld [vmem:[%s9304 + $0x70] sm:$0xf]
    %v9334 = vld [vmem:[%s9304 + $0x74] sm:$0xf]
    %v9335 = vld [vmem:[%s9304 + $0x78] sm:$0xf]
    %v9336 = vld [vmem:[%s9304 + $0x7c] sm:$0xf]
    %v9369 = vunpack.c.l.b16 %v9305
    %v9370 = vunpack.c.l.b16 %v9306
    %v9371 = vunpack.c.l.b16 %v9307
    %v9372 = vunpack.c.l.b16 %v9308
    %v9373 = vunpack.c.l.b16 %v9309
    %v9374 = vunpack.c.l.b16 %v9310
    %v9375 = vunpack.c.l.b16 %v9311
    %v9376 = vunpack.c.l.b16 %v9312
    %v9377 = vunpack.c.l.b16 %v9313
    %v9378 = vunpack.c.l.b16 %v9314
    %v9379 = vunpack.c.l.b16 %v9315
    %v9380 = vunpack.c.l.b16 %v9316
    %v9381 = vunpack.c.l.b16 %v9317
    %v9382 = vunpack.c.l.b16 %v9318
    %v9383 = vunpack.c.l.b16 %v9319
    %v9384 = vunpack.c.l.b16 %v9320
    %v9385 = vunpack.c.l.b16 %v9321
    %v9386 = vunpack.c.l.b16 %v9322
    %v9387 = vunpack.c.l.b16 %v9323
    %v9388 = vunpack.c.l.b16 %v9324
    %v9389 = vunpack.c.l.b16 %v9325
    %v9390 = vunpack.c.l.b16 %v9326
    %v9391 = vunpack.c.l.b16 %v9327
    %v9392 = vunpack.c.l.b16 %v9328
    %v9393 = vunpack.c.l.b16 %v9329
    %v9394 = vunpack.c.l.b16 %v9330
    %v9395 = vunpack.c.l.b16 %v9331
    %v9396 = vunpack.c.l.b16 %v9332
    %v9397 = vunpack.c.l.b16 %v9333
    %v9398 = vunpack.c.l.b16 %v9334
    %v9399 = vunpack.c.l.b16 %v9335
    %v9400 = vunpack.c.l.b16 %v9336
    %v9401 = vpack.c.b16 %v9370, %v9369
    %v9402 = vpack.c.b16 %v9372, %v9371
    %v9403 = vpack.c.b16 %v9374, %v9373
    %v9404 = vpack.c.b16 %v9376, %v9375
    %v9405 = vpack.c.b16 %v9378, %v9377
    %v9406 = vpack.c.b16 %v9380, %v9379
    %v9407 = vpack.c.b16 %v9382, %v9381
    %v9408 = vpack.c.b16 %v9384, %v9383
    %v9409 = vpack.c.b16 %v9386, %v9385
    %v9410 = vpack.c.b16 %v9388, %v9387
    %v9411 = vpack.c.b16 %v9390, %v9389
    %v9412 = vpack.c.b16 %v9392, %v9391
    %v9413 = vpack.c.b16 %v9394, %v9393
    %v9414 = vpack.c.b16 %v9396, %v9395
    %v9415 = vpack.c.b16 %v9398, %v9397
    %v9416 = vpack.c.b16 %v9400, %v9399
    %9433 = vmatprep.subr.bf16.mxu0 0
    %9434 = vmatpush1.bf16.msra.mxu0 %v9401
    %9435 = vmatprep.subr.bf16.mxu0 0
    %9436 = vmatpush1.bf16.msra.mxu0 %v9402
    %9437 = vmatprep.subr.bf16.mxu0 0
    %9438 = vmatpush1.bf16.msra.mxu0 %v9403
    %9439 = vmatprep.subr.bf16.mxu0 0
    %9440 = vmatpush1.bf16.msra.mxu0 %v9404
    %9441 = vmatprep.subr.bf16.mxu0 0
    %9442 = vmatpush1.bf16.msra.mxu0 %v9405
    %9443 = vmatprep.subr.bf16.mxu0 0
    %9444 = vmatpush1.bf16.msra.mxu0 %v9406
    %9445 = vmatprep.subr.bf16.mxu0 0
    %9446 = vmatpush1.bf16.msra.mxu0 %v9407
    %9447 = vmatprep.subr.bf16.mxu0 0
    %9448 = vmatpush1.bf16.msra.mxu0 %v9408
    %9449 = vmatprep.subr.bf16.mxu0 0
    %9450 = vmatpush1.bf16.msra.mxu0 %v9409
    %9451 = vmatprep.subr.bf16.mxu0 0
    %9452 = vmatpush1.bf16.msra.mxu0 %v9410
    %9453 = vmatprep.subr.bf16.mxu0 0
    %9454 = vmatpush1.bf16.msra.mxu0 %v9411
    %9455 = vmatprep.subr.bf16.mxu0 0
    %9456 = vmatpush1.bf16.msra.mxu0 %v9412
    %9457 = vmatprep.subr.bf16.mxu0 0
    %9458 = vmatpush1.bf16.msra.mxu0 %v9413
    %9459 = vmatprep.subr.bf16.mxu0 0
    %9460 = vmatpush1.bf16.msra.mxu0 %v9414
    %9461 = vmatprep.subr.bf16.mxu0 0
    %9462 = vmatpush1.bf16.msra.mxu0 %v9415
    %9463 = vmatprep.subr.bf16.mxu0 0
    %9464 = vmatpush1.bf16.msra.mxu0 %v9416
    %9465 = vmatprep.mubr.bf16.mxu0 %v9303
    %9466 = vmatmul.mubr.bf16.gmra.mrb[0].mxu0 %v9302
    %v9467 = vpop.f32.mrb[0].mxu0
    %v9468 = vadd.f32 0.0, %v9467
    %v9469 = vpop.f32.mrb[0].mxu0
    %v9470 = vpop.f32.mrb[0].mxu0
    %v9471 = vpop.f32.mrb[0].mxu0
    %9472 = vdwg.mxu0
    %v9473 = vadd.f32 %v9301, %v9468
    %s9474 = scalar_lea.vmem %s12, 640
    %v9475 = vld [vmem:[%s9474] sm:$0xf]
    %v9476 = vld [vmem:[%s9474 + $0x4] sm:$0xf]
    %v9477 = vld [vmem:[%s9474 + $0x8] sm:$0xf]
    %v9478 = vld [vmem:[%s9474 + $0xc] sm:$0xf]
    %v9479 = vld [vmem:[%s9474 + $0x10] sm:$0xf]
    %v9480 = vld [vmem:[%s9474 + $0x14] sm:$0xf]
    %v9481 = vld [vmem:[%s9474 + $0x18] sm:$0xf]
    %v9482 = vld [vmem:[%s9474 + $0x1c] sm:$0xf]
    %v9483 = vld [vmem:[%s9474 + $0x20] sm:$0xf]
    %v9484 = vld [vmem:[%s9474 + $0x24] sm:$0xf]
    %v9485 = vld [vmem:[%s9474 + $0x28] sm:$0xf]
    %v9486 = vld [vmem:[%s9474 + $0x2c] sm:$0xf]
    %v9487 = vld [vmem:[%s9474 + $0x30] sm:$0xf]
    %v9488 = vld [vmem:[%s9474 + $0x34] sm:$0xf]
    %v9489 = vld [vmem:[%s9474 + $0x38] sm:$0xf]
    %v9490 = vld [vmem:[%s9474 + $0x3c] sm:$0xf]
    %v9491 = vld [vmem:[%s9474 + $0x40] sm:$0xf]
    %v9492 = vld [vmem:[%s9474 + $0x44] sm:$0xf]
    %v9493 = vld [vmem:[%s9474 + $0x48] sm:$0xf]
    %v9494 = vld [vmem:[%s9474 + $0x4c] sm:$0xf]
    %v9495 = vld [vmem:[%s9474 + $0x50] sm:$0xf]
    %v9496 = vld [vmem:[%s9474 + $0x54] sm:$0xf]
    %v9497 = vld [vmem:[%s9474 + $0x58] sm:$0xf]
    %v9498 = vld [vmem:[%s9474 + $0x5c] sm:$0xf]
    %v9499 = vld [vmem:[%s9474 + $0x60] sm:$0xf]
    %v9500 = vld [vmem:[%s9474 + $0x64] sm:$0xf]
    %v9501 = vld [vmem:[%s9474 + $0x68] sm:$0xf]
    %v9502 = vld [vmem:[%s9474 + $0x6c] sm:$0xf]
    %v9503 = vld [vmem:[%s9474 + $0x70] sm:$0xf]
    %v9504 = vld [vmem:[%s9474 + $0x74] sm:$0xf]
    %v9505 = vld [vmem:[%s9474 + $0x78] sm:$0xf]
    %v9506 = vld [vmem:[%s9474 + $0x7c] sm:$0xf]
    %v9509 = vrot.slane %v9302, 1
    %v9510 = vrot.slane %v9303, 1
    %v9545 = vunpack.c.l.b16 %v9475
    %v9546 = vunpack.c.l.b16 %v9476
    %v9547 = vunpack.c.l.b16 %v9477
    %v9548 = vunpack.c.l.b16 %v9478
    %v9549 = vunpack.c.l.b16 %v9479
    %v9550 = vunpack.c.l.b16 %v9480
    %v9551 = vunpack.c.l.b16 %v9481
    %v9552 = vunpack.c.l.b16 %v9482
    %v9553 = vunpack.c.l.b16 %v9483
    %v9554 = vunpack.c.l.b16 %v9484
    %v9555 = vunpack.c.l.b16 %v9485
    %v9556 = vunpack.c.l.b16 %v9486
    %v9557 = vunpack.c.l.b16 %v9487
    %v9558 = vunpack.c.l.b16 %v9488
    %v9559 = vunpack.c.l.b16 %v9489
    %v9560 = vunpack.c.l.b16 %v9490
    %v9561 = vunpack.c.l.b16 %v9491
    %v9562 = vunpack.c.l.b16 %v9492
    %v9563 = vunpack.c.l.b16 %v9493
    %v9564 = vunpack.c.l.b16 %v9494
    %v9565 = vunpack.c.l.b16 %v9495
    %v9566 = vunpack.c.l.b16 %v9496
    %v9567 = vunpack.c.l.b16 %v9497
    %v9568 = vunpack.c.l.b16 %v9498
    %v9569 = vunpack.c.l.b16 %v9499
    %v9570 = vunpack.c.l.b16 %v9500
    %v9571 = vunpack.c.l.b16 %v9501
    %v9572 = vunpack.c.l.b16 %v9502
    %v9573 = vunpack.c.l.b16 %v9503
    %v9574 = vunpack.c.l.b16 %v9504
    %v9575 = vunpack.c.l.b16 %v9505
    %v9576 = vunpack.c.l.b16 %v9506
    %v9577 = vpack.c.b16 %v9546, %v9545
    %v9578 = vpack.c.b16 %v9548, %v9547
    %v9579 = vpack.c.b16 %v9550, %v9549
    %v9580 = vpack.c.b16 %v9552, %v9551
    %v9581 = vpack.c.b16 %v9554, %v9553
    %v9582 = vpack.c.b16 %v9556, %v9555
    %v9583 = vpack.c.b16 %v9558, %v9557
    %v9584 = vpack.c.b16 %v9560, %v9559
    %v9585 = vpack.c.b16 %v9562, %v9561
    %v9586 = vpack.c.b16 %v9564, %v9563
    %v9587 = vpack.c.b16 %v9566, %v9565
    %v9588 = vpack.c.b16 %v9568, %v9567
    %v9589 = vpack.c.b16 %v9570, %v9569
    %v9590 = vpack.c.b16 %v9572, %v9571
    %v9591 = vpack.c.b16 %v9574, %v9573
    %v9592 = vpack.c.b16 %v9576, %v9575
    %9609 = vmatprep.subr.bf16.mxu0 0
    %9610 = vmatpush1.bf16.msra.mxu0 %v9577
    %9611 = vmatprep.subr.bf16.mxu0 0
    %9612 = vmatpush1.bf16.msra.mxu0 %v9578
    %9613 = vmatprep.subr.bf16.mxu0 0
    %9614 = vmatpush1.bf16.msra.mxu0 %v9579
    %9615 = vmatprep.subr.bf16.mxu0 0
    %9616 = vmatpush1.bf16.msra.mxu0 %v9580
    %9617 = vmatprep.subr.bf16.mxu0 0
    %9618 = vmatpush1.bf16.msra.mxu0 %v9581
    %9619 = vmatprep.subr.bf16.mxu0 0
    %9620 = vmatpush1.bf16.msra.mxu0 %v9582
    %9621 = vmatprep.subr.bf16.mxu0 0
    %9622 = vmatpush1.bf16.msra.mxu0 %v9583
    %9623 = vmatprep.subr.bf16.mxu0 0
    %9624 = vmatpush1.bf16.msra.mxu0 %v9584
    %9625 = vmatprep.subr.bf16.mxu0 0
    %9626 = vmatpush1.bf16.msra.mxu0 %v9585
    %9627 = vmatprep.subr.bf16.mxu0 0
    %9628 = vmatpush1.bf16.msra.mxu0 %v9586
    %9629 = vmatprep.subr.bf16.mxu0 0
    %9630 = vmatpush1.bf16.msra.mxu0 %v9587
    %9631 = vmatprep.subr.bf16.mxu0 0
    %9632 = vmatpush1.bf16.msra.mxu0 %v9588
    %9633 = vmatprep.subr.bf16.mxu0 0
    %9634 = vmatpush1.bf16.msra.mxu0 %v9589
    %9635 = vmatprep.subr.bf16.mxu0 0
    %9636 = vmatpush1.bf16.msra.mxu0 %v9590
    %9637 = vmatprep.subr.bf16.mxu0 0
    %9638 = vmatpush1.bf16.msra.mxu0 %v9591
    %9639 = vmatprep.subr.bf16.mxu0 0
    %9640 = vmatpush1.bf16.msra.mxu0 %v9592
    %9641 = vmatprep.mubr.bf16.mxu0 %v9510
    %9642 = vmatmul.mubr.bf16.gmra.mrb[0].mxu0 %v9509
    %v9643 = vpop.f32.mrb[0].mxu0
    %v9644 = vadd.f32 0.0, %v9643
    %v9645 = vpop.f32.mrb[0].mxu0
    %v9646 = vpop.f32.mrb[0].mxu0
    %v9647 = vpop.f32.mrb[0].mxu0
    %9648 = vdwg.mxu0
    %v9649 = vadd.f32 %v9473, %v9644
    %s9650 = scalar_lea.vmem %s12, 768
    %v9651 = vld [vmem:[%s9650] sm:$0xf]
    %v9652 = vld [vmem:[%s9650 + $0x4] sm:$0xf]
    %v9653 = vld [vmem:[%s9650 + $0x8] sm:$0xf]
    %v9654 = vld [vmem:[%s9650 + $0xc] sm:$0xf]
    %v9655 = vld [vmem:[%s9650 + $0x10] sm:$0xf]
    %v9656 = vld [vmem:[%s9650 + $0x14] sm:$0xf]
    %v9657 = vld [vmem:[%s9650 + $0x18] sm:$0xf]
    %v9658 = vld [vmem:[%s9650 + $0x1c] sm:$0xf]
    %v9659 = vld [vmem:[%s9650 + $0x20] sm:$0xf]
    %v9660 = vld [vmem:[%s9650 + $0x24] sm:$0xf]
    %v9661 = vld [vmem:[%s9650 + $0x28] sm:$0xf]
    %v9662 = vld [vmem:[%s9650 + $0x2c] sm:$0xf]
    %v9663 = vld [vmem:[%s9650 + $0x30] sm:$0xf]
    %v9664 = vld [vmem:[%s9650 + $0x34] sm:$0xf]
    %v9665 = vld [vmem:[%s9650 + $0x38] sm:$0xf]
    %v9666 = vld [vmem:[%s9650 + $0x3c] sm:$0xf]
    %v9667 = vld [vmem:[%s9650 + $0x40] sm:$0xf]
    %v9668 = vld [vmem:[%s9650 + $0x44] sm:$0xf]
    %v9669 = vld [vmem:[%s9650 + $0x48] sm:$0xf]
    %v9670 = vld [vmem:[%s9650 + $0x4c] sm:$0xf]
    %v9671 = vld [vmem:[%s9650 + $0x50] sm:$0xf]
    %v9672 = vld [vmem:[%s9650 + $0x54] sm:$0xf]
    %v9673 = vld [vmem:[%s9650 + $0x58] sm:$0xf]
    %v9674 = vld [vmem:[%s9650 + $0x5c] sm:$0xf]
    %v9675 = vld [vmem:[%s9650 + $0x60] sm:$0xf]
    %v9676 = vld [vmem:[%s9650 + $0x64] sm:$0xf]
    %v9677 = vld [vmem:[%s9650 + $0x68] sm:$0xf]
    %v9678 = vld [vmem:[%s9650 + $0x6c] sm:$0xf]
    %v9679 = vld [vmem:[%s9650 + $0x70] sm:$0xf]
    %v9680 = vld [vmem:[%s9650 + $0x74] sm:$0xf]
    %v9681 = vld [vmem:[%s9650 + $0x78] sm:$0xf]
    %v9682 = vld [vmem:[%s9650 + $0x7c] sm:$0xf]
    %v9683 = vrot.slane %v9302, 2
    %v9684 = vrot.slane %v9303, 2
    %v9719 = vunpack.c.l.b16 %v9651
    %v9720 = vunpack.c.l.b16 %v9652
    %v9721 = vunpack.c.l.b16 %v9653
    %v9722 = vunpack.c.l.b16 %v9654
    %v9723 = vunpack.c.l.b16 %v9655
    %v9724 = vunpack.c.l.b16 %v9656
    %v9725 = vunpack.c.l.b16 %v9657
    %v9726 = vunpack.c.l.b16 %v9658
    %v9727 = vunpack.c.l.b16 %v9659
    %v9728 = vunpack.c.l.b16 %v9660
    %v9729 = vunpack.c.l.b16 %v9661
    %v9730 = vunpack.c.l.b16 %v9662
    %v9731 = vunpack.c.l.b16 %v9663
    %v9732 = vunpack.c.l.b16 %v9664
    %v9733 = vunpack.c.l.b16 %v9665
    %v9734 = vunpack.c.l.b16 %v9666
    %v9735 = vunpack.c.l.b16 %v9667
    %v9736 = vunpack.c.l.b16 %v9668
    %v9737 = vunpack.c.l.b16 %v9669
    %v9738 = vunpack.c.l.b16 %v9670
    %v9739 = vunpack.c.l.b16 %v9671
    %v9740 = vunpack.c.l.b16 %v9672
    %v9741 = vunpack.c.l.b16 %v9673
    %v9742 = vunpack.c.l.b16 %v9674
    %v9743 = vunpack.c.l.b16 %v9675
    %v9744 = vunpack.c.l.b16 %v9676
    %v9745 = vunpack.c.l.b16 %v9677
    %v9746 = vunpack.c.l.b16 %v9678
    %v9747 = vunpack.c.l.b16 %v9679
    %v9748 = vunpack.c.l.b16 %v9680
    %v9749 = vunpack.c.l.b16 %v9681
    %v9750 = vunpack.c.l.b16 %v9682
    %v9751 = vpack.c.b16 %v9720, %v9719
    %v9752 = vpack.c.b16 %v9722, %v9721
    %v9753 = vpack.c.b16 %v9724, %v9723
    %v9754 = vpack.c.b16 %v9726, %v9725
    %v9755 = vpack.c.b16 %v9728, %v9727
    %v9756 = vpack.c.b16 %v9730, %v9729
    %v9757 = vpack.c.b16 %v9732, %v9731
    %v9758 = vpack.c.b16 %v9734, %v9733
    %v9759 = vpack.c.b16 %v9736, %v9735
    %v9760 = vpack.c.b16 %v9738, %v9737
    %v9761 = vpack.c.b16 %v9740, %v9739
    %v9762 = vpack.c.b16 %v9742, %v9741
    %v9763 = vpack.c.b16 %v9744, %v9743
    %v9764 = vpack.c.b16 %v9746, %v9745
    %v9765 = vpack.c.b16 %v9748, %v9747
    %v9766 = vpack.c.b16 %v9750, %v9749
    %9783 = vmatprep.subr.bf16.mxu0 0
    %9784 = vmatpush1.bf16.msra.mxu0 %v9751
    %9785 = vmatprep.subr.bf16.mxu0 0
    %9786 = vmatpush1.bf16.msra.mxu0 %v9752
    %9787 = vmatprep.subr.bf16.mxu0 0
    %9788 = vmatpush1.bf16.msra.mxu0 %v9753
    %9789 = vmatprep.subr.bf16.mxu0 0
    %9790 = vmatpush1.bf16.msra.mxu0 %v9754
    %9791 = vmatprep.subr.bf16.mxu0 0
    %9792 = vmatpush1.bf16.msra.mxu0 %v9755
    %9793 = vmatprep.subr.bf16.mxu0 0
    %9794 = vmatpush1.bf16.msra.mxu0 %v9756
    %9795 = vmatprep.subr.bf16.mxu0 0
    %9796 = vmatpush1.bf16.msra.mxu0 %v9757
    %9797 = vmatprep.subr.bf16.mxu0 0
    %9798 = vmatpush1.bf16.msra.mxu0 %v9758
    %9799 = vmatprep.subr.bf16.mxu0 0
    %9800 = vmatpush1.bf16.msra.mxu0 %v9759
    %9801 = vmatprep.subr.bf16.mxu0 0
    %9802 = vmatpush1.bf16.msra.mxu0 %v9760
    %9803 = vmatprep.subr.bf16.mxu0 0
    %9804 = vmatpush1.bf16.msra.mxu0 %v9761
    %9805 = vmatprep.subr.bf16.mxu0 0
    %9806 = vmatpush1.bf16.msra.mxu0 %v9762
    %9807 = vmatprep.subr.bf16.mxu0 0
    %9808 = vmatpush1.bf16.msra.mxu0 %v9763
    %9809 = vmatprep.subr.bf16.mxu0 0
    %9810 = vmatpush1.bf16.msra.mxu0 %v9764
    %9811 = vmatprep.subr.bf16.mxu0 0
    %9812 = vmatpush1.bf16.msra.mxu0 %v9765
    %9813 = vmatprep.subr.bf16.mxu0 0
    %9814 = vmatpush1.bf16.msra.mxu0 %v9766
    %9815 = vmatprep.mubr.bf16.mxu0 %v9684
    %9816 = vmatmul.mubr.bf16.gmra.mrb[0].mxu0 %v9683
    %v9817 = vpop.f32.mrb[0].mxu0
    %v9818 = vadd.f32 0.0, %v9817
    %v9819 = vpop.f32.mrb[0].mxu0
    %v9820 = vpop.f32.mrb[0].mxu0
    %v9821 = vpop.f32.mrb[0].mxu0
    %9822 = vdwg.mxu0
    %v9823 = vadd.f32 %v9649, %v9818
    %s9824 = scalar_lea.vmem %s12, 896
    %v9825 = vld [vmem:[%s9824] sm:$0xf]
    %v9826 = vld [vmem:[%s9824 + $0x4] sm:$0xf]
    %v9827 = vld [vmem:[%s9824 + $0x8] sm:$0xf]
    %v9828 = vld [vmem:[%s9824 + $0xc] sm:$0xf]
    %v9829 = vld [vmem:[%s9824 + $0x10] sm:$0xf]
    %v9830 = vld [vmem:[%s9824 + $0x14] sm:$0xf]
    %v9831 = vld [vmem:[%s9824 + $0x18] sm:$0xf]
    %v9832 = vld [vmem:[%s9824 + $0x1c] sm:$0xf]
    %v9833 = vld [vmem:[%s9824 + $0x20] sm:$0xf]
    %v9834 = vld [vmem:[%s9824 + $0x24] sm:$0xf]
    %v9835 = vld [vmem:[%s9824 + $0x28] sm:$0xf]
    %v9836 = vld [vmem:[%s9824 + $0x2c] sm:$0xf]
    %v9837 = vld [vmem:[%s9824 + $0x30] sm:$0xf]
    %v9838 = vld [vmem:[%s9824 + $0x34] sm:$0xf]
    %v9839 = vld [vmem:[%s9824 + $0x38] sm:$0xf]
    %v9840 = vld [vmem:[%s9824 + $0x3c] sm:$0xf]
    %v9841 = vld [vmem:[%s9824 + $0x40] sm:$0xf]
    %v9842 = vld [vmem:[%s9824 + $0x44] sm:$0xf]
    %v9843 = vld [vmem:[%s9824 + $0x48] sm:$0xf]
    %v9844 = vld [vmem:[%s9824 + $0x4c] sm:$0xf]
    %v9845 = vld [vmem:[%s9824 + $0x50] sm:$0xf]
    %v9846 = vld [vmem:[%s9824 + $0x54] sm:$0xf]
    %v9847 = vld [vmem:[%s9824 + $0x58] sm:$0xf]
    %v9848 = vld [vmem:[%s9824 + $0x5c] sm:$0xf]
    %v9849 = vld [vmem:[%s9824 + $0x60] sm:$0xf]
    %v9850 = vld [vmem:[%s9824 + $0x64] sm:$0xf]
    %v9851 = vld [vmem:[%s9824 + $0x68] sm:$0xf]
    %v9852 = vld [vmem:[%s9824 + $0x6c] sm:$0xf]
    %v9853 = vld [vmem:[%s9824 + $0x70] sm:$0xf]
    %v9854 = vld [vmem:[%s9824 + $0x74] sm:$0xf]
    %v9855 = vld [vmem:[%s9824 + $0x78] sm:$0xf]
    %v9856 = vld [vmem:[%s9824 + $0x7c] sm:$0xf]
    %v9857 = vrot.slane %v9302, 3
    %v9858 = vrot.slane %v9303, 3
    %v9893 = vunpack.c.l.b16 %v9825
    %v9894 = vunpack.c.l.b16 %v9826
    %v9895 = vunpack.c.l.b16 %v9827
    %v9896 = vunpack.c.l.b16 %v9828
    %v9897 = vunpack.c.l.b16 %v9829
    %v9898 = vunpack.c.l.b16 %v9830
    %v9899 = vunpack.c.l.b16 %v9831
    %v9900 = vunpack.c.l.b16 %v9832
    %v9901 = vunpack.c.l.b16 %v9833
    %v9902 = vunpack.c.l.b16 %v9834
    %v9903 = vunpack.c.l.b16 %v9835
    %v9904 = vunpack.c.l.b16 %v9836
    %v9905 = vunpack.c.l.b16 %v9837
    %v9906 = vunpack.c.l.b16 %v9838
    %v9907 = vunpack.c.l.b16 %v9839
    %v9908 = vunpack.c.l.b16 %v9840
    %v9909 = vunpack.c.l.b16 %v9841
    %v9910 = vunpack.c.l.b16 %v9842
    %v9911 = vunpack.c.l.b16 %v9843
    %v9912 = vunpack.c.l.b16 %v9844
    %v9913 = vunpack.c.l.b16 %v9845
    %v9914 = vunpack.c.l.b16 %v9846
    %v9915 = vunpack.c.l.b16 %v9847
    %v9916 = vunpack.c.l.b16 %v9848
    %v9917 = vunpack.c.l.b16 %v9849
    %v9918 = vunpack.c.l.b16 %v9850
    %v9919 = vunpack.c.l.b16 %v9851
    %v9920 = vunpack.c.l.b16 %v9852
    %v9921 = vunpack.c.l.b16 %v9853
    %v9922 = vunpack.c.l.b16 %v9854
    %v9923 = vunpack.c.l.b16 %v9855
    %v9924 = vunpack.c.l.b16 %v9856
    %v9925 = vpack.c.b16 %v9894, %v9893
    %v9926 = vpack.c.b16 %v9896, %v9895
    %v9927 = vpack.c.b16 %v9898, %v9897
    %v9928 = vpack.c.b16 %v9900, %v9899
    %v9929 = vpack.c.b16 %v9902, %v9901
    %v9930 = vpack.c.b16 %v9904, %v9903
    %v9931 = vpack.c.b16 %v9906, %v9905
    %v9932 = vpack.c.b16 %v9908, %v9907
    %v9933 = vpack.c.b16 %v9910, %v9909
    %v9934 = vpack.c.b16 %v9912, %v9911
    %v9935 = vpack.c.b16 %v9914, %v9913
    %v9936 = vpack.c.b16 %v9916, %v9915
    %v9937 = vpack.c.b16 %v9918, %v9917
    %v9938 = vpack.c.b16 %v9920, %v9919
    %v9939 = vpack.c.b16 %v9922, %v9921
    %v9940 = vpack.c.b16 %v9924, %v9923
    %9957 = vmatprep.subr.bf16.mxu0 0
    %9958 = vmatpush1.bf16.msra.mxu0 %v9925
    %9959 = vmatprep.subr.bf16.mxu0 0
    %9960 = vmatpush1.bf16.msra.mxu0 %v9926
    %9961 = vmatprep.subr.bf16.mxu0 0
    %9962 = vmatpush1.bf16.msra.mxu0 %v9927
    %9963 = vmatprep.subr.bf16.mxu0 0
    %9964 = vmatpush1.bf16.msra.mxu0 %v9928
    %9965 = vmatprep.subr.bf16.mxu0 0
    %9966 = vmatpush1.bf16.msra.mxu0 %v9929
    %9967 = vmatprep.subr.bf16.mxu0 0
    %9968 = vmatpush1.bf16.msra.mxu0 %v9930
    %9969 = vmatprep.subr.bf16.mxu0 0
    %9970 = vmatpush1.bf16.msra.mxu0 %v9931
    %9971 = vmatprep.subr.bf16.mxu0 0
    %9972 = vmatpush1.bf16.msra.mxu0 %v9932
    %9973 = vmatprep.subr.bf16.mxu0 0
    %9974 = vmatpush1.bf16.msra.mxu0 %v9933
    %9975 = vmatprep.subr.bf16.mxu0 0
    %9976 = vmatpush1.bf16.msra.mxu0 %v9934
    %9977 = vmatprep.subr.bf16.mxu0 0
    %9978 = vmatpush1.bf16.msra.mxu0 %v9935
    %9979 = vmatprep.subr.bf16.mxu0 0
    %9980 = vmatpush1.bf16.msra.mxu0 %v9936
    %9981 = vmatprep.subr.bf16.mxu0 0
    %9982 = vmatpush1.bf16.msra.mxu0 %v9937
    %9983 = vmatprep.subr.bf16.mxu0 0
    %9984 = vmatpush1.bf16.msra.mxu0 %v9938
    %9985 = vmatprep.subr.bf16.mxu0 0
    %9986 = vmatpush1.bf16.msra.mxu0 %v9939
    %9987 = vmatprep.subr.bf16.mxu0 0
    %9988 = vmatpush1.bf16.msra.mxu0 %v9940
    %9989 = vmatprep.mubr.bf16.mxu0 %v9858
    %9990 = vmatmul.mubr.bf16.gmra.mrb[0].mxu0 %v9857
    %v9991 = vpop.f32.mrb[0].mxu0
    %v9992 = vadd.f32 0.0, %v9991
    %v9993 = vpop.f32.mrb[0].mxu0
    %v9994 = vpop.f32.mrb[0].mxu0
    %v9995 = vpop.f32.mrb[0].mxu0
    %9996 = vdwg.mxu0
    %v9997 = vadd.f32 %v9823, %v9992
    %v9998 = vpack.c.bf16 %v8605, %v8605
    %v9999 = vpack.c.bf16 %v8606, %v8606
    %s10000 = scalar_lea.vmem %s12, 1024
    %v10001 = vld [vmem:[%s10000] sm:$0xf]
    %v10002 = vld [vmem:[%s10000 + $0x4] sm:$0xf]
    %v10003 = vld [vmem:[%s10000 + $0x8] sm:$0xf]
    %v10004 = vld [vmem:[%s10000 + $0xc] sm:$0xf]
    %v10005 = vld [vmem:[%s10000 + $0x10] sm:$0xf]
    %v10006 = vld [vmem:[%s10000 + $0x14] sm:$0xf]
    %v10007 = vld [vmem:[%s10000 + $0x18] sm:$0xf]
    %v10008 = vld [vmem:[%s10000 + $0x1c] sm:$0xf]
    %v10009 = vld [vmem:[%s10000 + $0x20] sm:$0xf]
    %v10010 = vld [vmem:[%s10000 + $0x24] sm:$0xf]
    %v10011 = vld [vmem:[%s10000 + $0x28] sm:$0xf]
    %v10012 = vld [vmem:[%s10000 + $0x2c] sm:$0xf]
    %v10013 = vld [vmem:[%s10000 + $0x30] sm:$0xf]
    %v10014 = vld [vmem:[%s10000 + $0x34] sm:$0xf]
    %v10015 = vld [vmem:[%s10000 + $0x38] sm:$0xf]
    %v10016 = vld [vmem:[%s10000 + $0x3c] sm:$0xf]
    %v10017 = vld [vmem:[%s10000 + $0x40] sm:$0xf]
    %v10018 = vld [vmem:[%s10000 + $0x44] sm:$0xf]
    %v10019 = vld [vmem:[%s10000 + $0x48] sm:$0xf]
    %v10020 = vld [vmem:[%s10000 + $0x4c] sm:$0xf]
    %v10021 = vld [vmem:[%s10000 + $0x50] sm:$0xf]
    %v10022 = vld [vmem:[%s10000 + $0x54] sm:$0xf]
    %v10023 = vld [vmem:[%s10000 + $0x58] sm:$0xf]
    %v10024 = vld [vmem:[%s10000 + $0x5c] sm:$0xf]
    %v10025 = vld [vmem:[%s10000 + $0x60] sm:$0xf]
    %v10026 = vld [vmem:[%s10000 + $0x64] sm:$0xf]
    %v10027 = vld [vmem:[%s10000 + $0x68] sm:$0xf]
    %v10028 = vld [vmem:[%s10000 + $0x6c] sm:$0xf]
    %v10029 = vld [vmem:[%s10000 + $0x70] sm:$0xf]
    %v10030 = vld [vmem:[%s10000 + $0x74] sm:$0xf]
    %v10031 = vld [vmem:[%s10000 + $0x78] sm:$0xf]
    %v10032 = vld [vmem:[%s10000 + $0x7c] sm:$0xf]
    %v10065 = vunpack.c.l.b16 %v10001
    %v10066 = vunpack.c.l.b16 %v10002
    %v10067 = vunpack.c.l.b16 %v10003
    %v10068 = vunpack.c.l.b16 %v10004
    %v10069 = vunpack.c.l.b16 %v10005
    %v10070 = vunpack.c.l.b16 %v10006
    %v10071 = vunpack.c.l.b16 %v10007
    %v10072 = vunpack.c.l.b16 %v10008
    %v10073 = vunpack.c.l.b16 %v10009
    %v10074 = vunpack.c.l.b16 %v10010
    %v10075 = vunpack.c.l.b16 %v10011
    %v10076 = vunpack.c.l.b16 %v10012
    %v10077 = vunpack.c.l.b16 %v10013
    %v10078 = vunpack.c.l.b16 %v10014
    %v10079 = vunpack.c.l.b16 %v10015
    %v10080 = vunpack.c.l.b16 %v10016
    %v10081 = vunpack.c.l.b16 %v10017
    %v10082 = vunpack.c.l.b16 %v10018
    %v10083 = vunpack.c.l.b16 %v10019
    %v10084 = vunpack.c.l.b16 %v10020
    %v10085 = vunpack.c.l.b16 %v10021
    %v10086 = vunpack.c.l.b16 %v10022
    %v10087 = vunpack.c.l.b16 %v10023
    %v10088 = vunpack.c.l.b16 %v10024
    %v10089 = vunpack.c.l.b16 %v10025
    %v10090 = vunpack.c.l.b16 %v10026
    %v10091 = vunpack.c.l.b16 %v10027
    %v10092 = vunpack.c.l.b16 %v10028
    %v10093 = vunpack.c.l.b16 %v10029
    %v10094 = vunpack.c.l.b16 %v10030
    %v10095 = vunpack.c.l.b16 %v10031
    %v10096 = vunpack.c.l.b16 %v10032
    %v10097 = vpack.c.b16 %v10066, %v10065
    %v10098 = vpack.c.b16 %v10068, %v10067
    %v10099 = vpack.c.b16 %v10070, %v10069
    %v10100 = vpack.c.b16 %v10072, %v10071
    %v10101 = vpack.c.b16 %v10074, %v10073
    %v10102 = vpack.c.b16 %v10076, %v10075
    %v10103 = vpack.c.b16 %v10078, %v10077
    %v10104 = vpack.c.b16 %v10080, %v10079
    %v10105 = vpack.c.b16 %v10082, %v10081
    %v10106 = vpack.c.b16 %v10084, %v10083
    %v10107 = vpack.c.b16 %v10086, %v10085
    %v10108 = vpack.c.b16 %v10088, %v10087
    %v10109 = vpack.c.b16 %v10090, %v10089
    %v10110 = vpack.c.b16 %v10092, %v10091
    %v10111 = vpack.c.b16 %v10094, %v10093
    %v10112 = vpack.c.b16 %v10096, %v10095
    %10129 = vmatprep.subr.bf16.mxu0 0
    %10130 = vmatpush1.bf16.msra.mxu0 %v10097
    %10131 = vmatprep.subr.bf16.mxu0 0
    %10132 = vmatpush1.bf16.msra.mxu0 %v10098
    %10133 = vmatprep.subr.bf16.mxu0 0
    %10134 = vmatpush1.bf16.msra.mxu0 %v10099
    %10135 = vmatprep.subr.bf16.mxu0 0
    %10136 = vmatpush1.bf16.msra.mxu0 %v10100
    %10137 = vmatprep.subr.bf16.mxu0 0
    %10138 = vmatpush1.bf16.msra.mxu0 %v10101
    %10139 = vmatprep.subr.bf16.mxu0 0
    %10140 = vmatpush1.bf16.msra.mxu0 %v10102
    %10141 = vmatprep.subr.bf16.mxu0 0
    %10142 = vmatpush1.bf16.msra.mxu0 %v10103
    %10143 = vmatprep.subr.bf16.mxu0 0
    %10144 = vmatpush1.bf16.msra.mxu0 %v10104
    %10145 = vmatprep.subr.bf16.mxu0 0
    %10146 = vmatpush1.bf16.msra.mxu0 %v10105
    %10147 = vmatprep.subr.bf16.mxu0 0
    %10148 = vmatpush1.bf16.msra.mxu0 %v10106
    %10149 = vmatprep.subr.bf16.mxu0 0
    %10150 = vmatpush1.bf16.msra.mxu0 %v10107
    %10151 = vmatprep.subr.bf16.mxu0 0
    %10152 = vmatpush1.bf16.msra.mxu0 %v10108
    %10153 = vmatprep.subr.bf16.mxu0 0
    %10154 = vmatpush1.bf16.msra.mxu0 %v10109
    %10155 = vmatprep.subr.bf16.mxu0 0
    %10156 = vmatpush1.bf16.msra.mxu0 %v10110
    %10157 = vmatprep.subr.bf16.mxu0 0
    %10158 = vmatpush1.bf16.msra.mxu0 %v10111
    %10159 = vmatprep.subr.bf16.mxu0 0
    %10160 = vmatpush1.bf16.msra.mxu0 %v10112
    %10161 = vmatprep.mubr.bf16.mxu0 %v9999
    %10162 = vmatmul.mubr.bf16.gmra.mrb[0].mxu0 %v9998
    %v10163 = vpop.f32.mrb[0].mxu0
    %v10164 = vadd.f32 0.0, %v10163
    %v10165 = vpop.f32.mrb[0].mxu0
    %v10166 = vpop.f32.mrb[0].mxu0
    %v10167 = vpop.f32.mrb[0].mxu0
    %10168 = vdwg.mxu0
    %v10169 = vadd.f32 %v9997, %v10164
    %s10170 = scalar_lea.vmem %s12, 1152
    %v10171 = vld [vmem:[%s10170] sm:$0xf]
    %v10172 = vld [vmem:[%s10170 + $0x4] sm:$0xf]
    %v10173 = vld [vmem:[%s10170 + $0x8] sm:$0xf]
    %v10174 = vld [vmem:[%s10170 + $0xc] sm:$0xf]
    %v10175 = vld [vmem:[%s10170 + $0x10] sm:$0xf]
    %v10176 = vld [vmem:[%s10170 + $0x14] sm:$0xf]
    %v10177 = vld [vmem:[%s10170 + $0x18] sm:$0xf]
    %v10178 = vld [vmem:[%s10170 + $0x1c] sm:$0xf]
    %v10179 = vld [vmem:[%s10170 + $0x20] sm:$0xf]
    %v10180 = vld [vmem:[%s10170 + $0x24] sm:$0xf]
    %v10181 = vld [vmem:[%s10170 + $0x28] sm:$0xf]
    %v10182 = vld [vmem:[%s10170 + $0x2c] sm:$0xf]
    %v10183 = vld [vmem:[%s10170 + $0x30] sm:$0xf]
    %v10184 = vld [vmem:[%s10170 + $0x34] sm:$0xf]
    %v10185 = vld [vmem:[%s10170 + $0x38] sm:$0xf]
    %v10186 = vld [vmem:[%s10170 + $0x3c] sm:$0xf]
    %v10187 = vld [vmem:[%s10170 + $0x40] sm:$0xf]
    %v10188 = vld [vmem:[%s10170 + $0x44] sm:$0xf]
    %v10189 = vld [vmem:[%s10170 + $0x48] sm:$0xf]
    %v10190 = vld [vmem:[%s10170 + $0x4c] sm:$0xf]
    %v10191 = vld [vmem:[%s10170 + $0x50] sm:$0xf]
    %v10192 = vld [vmem:[%s10170 + $0x54] sm:$0xf]
    %v10193 = vld [vmem:[%s10170 + $0x58] sm:$0xf]
    %v10194 = vld [vmem:[%s10170 + $0x5c] sm:$0xf]
    %v10195 = vld [vmem:[%s10170 + $0x60] sm:$0xf]
    %v10196 = vld [vmem:[%s10170 + $0x64] sm:$0xf]
    %v10197 = vld [vmem:[%s10170 + $0x68] sm:$0xf]
    %v10198 = vld [vmem:[%s10170 + $0x6c] sm:$0xf]
    %v10199 = vld [vmem:[%s10170 + $0x70] sm:$0xf]
    %v10200 = vld [vmem:[%s10170 + $0x74] sm:$0xf]
    %v10201 = vld [vmem:[%s10170 + $0x78] sm:$0xf]
    %v10202 = vld [vmem:[%s10170 + $0x7c] sm:$0xf]
    %v10205 = vrot.slane %v9998, 1
    %v10206 = vrot.slane %v9999, 1
    %v10241 = vunpack.c.l.b16 %v10171
    %v10242 = vunpack.c.l.b16 %v10172
    %v10243 = vunpack.c.l.b16 %v10173
    %v10244 = vunpack.c.l.b16 %v10174
    %v10245 = vunpack.c.l.b16 %v10175
    %v10246 = vunpack.c.l.b16 %v10176
    %v10247 = vunpack.c.l.b16 %v10177
    %v10248 = vunpack.c.l.b16 %v10178
    %v10249 = vunpack.c.l.b16 %v10179
    %v10250 = vunpack.c.l.b16 %v10180
    %v10251 = vunpack.c.l.b16 %v10181
    %v10252 = vunpack.c.l.b16 %v10182
    %v10253 = vunpack.c.l.b16 %v10183
    %v10254 = vunpack.c.l.b16 %v10184
    %v10255 = vunpack.c.l.b16 %v10185
    %v10256 = vunpack.c.l.b16 %v10186
    %v10257 = vunpack.c.l.b16 %v10187
    %v10258 = vunpack.c.l.b16 %v10188
    %v10259 = vunpack.c.l.b16 %v10189
    %v10260 = vunpack.c.l.b16 %v10190
    %v10261 = vunpack.c.l.b16 %v10191
    %v10262 = vunpack.c.l.b16 %v10192
    %v10263 = vunpack.c.l.b16 %v10193
    %v10264 = vunpack.c.l.b16 %v10194
    %v10265 = vunpack.c.l.b16 %v10195
    %v10266 = vunpack.c.l.b16 %v10196
    %v10267 = vunpack.c.l.b16 %v10197
    %v10268 = vunpack.c.l.b16 %v10198
    %v10269 = vunpack.c.l.b16 %v10199
    %v10270 = vunpack.c.l.b16 %v10200
    %v10271 = vunpack.c.l.b16 %v10201
    %v10272 = vunpack.c.l.b16 %v10202
    %v10273 = vpack.c.b16 %v10242, %v10241
    %v10274 = vpack.c.b16 %v10244, %v10243
    %v10275 = vpack.c.b16 %v10246, %v10245
    %v10276 = vpack.c.b16 %v10248, %v10247
    %v10277 = vpack.c.b16 %v10250, %v10249
    %v10278 = vpack.c.b16 %v10252, %v10251
    %v10279 = vpack.c.b16 %v10254, %v10253
    %v10280 = vpack.c.b16 %v10256, %v10255
    %v10281 = vpack.c.b16 %v10258, %v10257
    %v10282 = vpack.c.b16 %v10260, %v10259
    %v10283 = vpack.c.b16 %v10262, %v10261
    %v10284 = vpack.c.b16 %v10264, %v10263
    %v10285 = vpack.c.b16 %v10266, %v10265
    %v10286 = vpack.c.b16 %v10268, %v10267
    %v10287 = vpack.c.b16 %v10270, %v10269
    %v10288 = vpack.c.b16 %v10272, %v10271
    %10305 = vmatprep.subr.bf16.mxu0 0
    %10306 = vmatpush1.bf16.msra.mxu0 %v10273
    %10307 = vmatprep.subr.bf16.mxu0 0
    %10308 = vmatpush1.bf16.msra.mxu0 %v10274
    %10309 = vmatprep.subr.bf16.mxu0 0
    %10310 = vmatpush1.bf16.msra.mxu0 %v10275
    %10311 = vmatprep.subr.bf16.mxu0 0
    %10312 = vmatpush1.bf16.msra.mxu0 %v10276
    %10313 = vmatprep.subr.bf16.mxu0 0
    %10314 = vmatpush1.bf16.msra.mxu0 %v10277
    %10315 = vmatprep.subr.bf16.mxu0 0
    %10316 = vmatpush1.bf16.msra.mxu0 %v10278
    %10317 = vmatprep.subr.bf16.mxu0 0
    %10318 = vmatpush1.bf16.msra.mxu0 %v10279
    %10319 = vmatprep.subr.bf16.mxu0 0
    %10320 = vmatpush1.bf16.msra.mxu0 %v10280
    %10321 = vmatprep.subr.bf16.mxu0 0
    %10322 = vmatpush1.bf16.msra.mxu0 %v10281
    %10323 = vmatprep.subr.bf16.mxu0 0
    %10324 = vmatpush1.bf16.msra.mxu0 %v10282
    %10325 = vmatprep.subr.bf16.mxu0 0
    %10326 = vmatpush1.bf16.msra.mxu0 %v10283
    %10327 = vmatprep.subr.bf16.mxu0 0
    %10328 = vmatpush1.bf16.msra.mxu0 %v10284
    %10329 = vmatprep.subr.bf16.mxu0 0
    %10330 = vmatpush1.bf16.msra.mxu0 %v10285
    %10331 = vmatprep.subr.bf16.mxu0 0
    %10332 = vmatpush1.bf16.msra.mxu0 %v10286
    %10333 = vmatprep.subr.bf16.mxu0 0
    %10334 = vmatpush1.bf16.msra.mxu0 %v10287
    %10335 = vmatprep.subr.bf16.mxu0 0
    %10336 = vmatpush1.bf16.msra.mxu0 %v10288
    %10337 = vmatprep.mubr.bf16.mxu0 %v10206
    %10338 = vmatmul.mubr.bf16.gmra.mrb[0].mxu0 %v10205
    %v10339 = vpop.f32.mrb[0].mxu0
    %v10340 = vadd.f32 0.0, %v10339
    %v10341 = vpop.f32.mrb[0].mxu0
    %v10342 = vpop.f32.mrb[0].mxu0
    %v10343 = vpop.f32.mrb[0].mxu0
    %10344 = vdwg.mxu0
    %v10345 = vadd.f32 %v10169, %v10340
    %s10346 = scalar_lea.vmem %s12, 1280
    %v10347 = vld [vmem:[%s10346] sm:$0xf]
    %v10348 = vld [vmem:[%s10346 + $0x4] sm:$0xf]
    %v10349 = vld [vmem:[%s10346 + $0x8] sm:$0xf]
    %v10350 = vld [vmem:[%s10346 + $0xc] sm:$0xf]
    %v10351 = vld [vmem:[%s10346 + $0x10] sm:$0xf]
    %v10352 = vld [vmem:[%s10346 + $0x14] sm:$0xf]
    %v10353 = vld [vmem:[%s10346 + $0x18] sm:$0xf]
    %v10354 = vld [vmem:[%s10346 + $0x1c] sm:$0xf]
    %v10355 = vld [vmem:[%s10346 + $0x20] sm:$0xf]
    %v10356 = vld [vmem:[%s10346 + $0x24] sm:$0xf]
    %v10357 = vld [vmem:[%s10346 + $0x28] sm:$0xf]
    %v10358 = vld [vmem:[%s10346 + $0x2c] sm:$0xf]
    %v10359 = vld [vmem:[%s10346 + $0x30] sm:$0xf]
    %v10360 = vld [vmem:[%s10346 + $0x34] sm:$0xf]
    %v10361 = vld [vmem:[%s10346 + $0x38] sm:$0xf]
    %v10362 = vld [vmem:[%s10346 + $0x3c] sm:$0xf]
    %v10363 = vld [vmem:[%s10346 + $0x40] sm:$0xf]
    %v10364 = vld [vmem:[%s10346 + $0x44] sm:$0xf]
    %v10365 = vld [vmem:[%s10346 + $0x48] sm:$0xf]
    %v10366 = vld [vmem:[%s10346 + $0x4c] sm:$0xf]
    %v10367 = vld [vmem:[%s10346 + $0x50] sm:$0xf]
    %v10368 = vld [vmem:[%s10346 + $0x54] sm:$0xf]
    %v10369 = vld [vmem:[%s10346 + $0x58] sm:$0xf]
    %v10370 = vld [vmem:[%s10346 + $0x5c] sm:$0xf]
    %v10371 = vld [vmem:[%s10346 + $0x60] sm:$0xf]
    %v10372 = vld [vmem:[%s10346 + $0x64] sm:$0xf]
    %v10373 = vld [vmem:[%s10346 + $0x68] sm:$0xf]
    %v10374 = vld [vmem:[%s10346 + $0x6c] sm:$0xf]
    %v10375 = vld [vmem:[%s10346 + $0x70] sm:$0xf]
    %v10376 = vld [vmem:[%s10346 + $0x74] sm:$0xf]
    %v10377 = vld [vmem:[%s10346 + $0x78] sm:$0xf]
    %v10378 = vld [vmem:[%s10346 + $0x7c] sm:$0xf]
    %v10379 = vrot.slane %v9998, 2
    %v10380 = vrot.slane %v9999, 2
    %v10415 = vunpack.c.l.b16 %v10347
    %v10416 = vunpack.c.l.b16 %v10348
    %v10417 = vunpack.c.l.b16 %v10349
    %v10418 = vunpack.c.l.b16 %v10350
    %v10419 = vunpack.c.l.b16 %v10351
    %v10420 = vunpack.c.l.b16 %v10352
    %v10421 = vunpack.c.l.b16 %v10353
    %v10422 = vunpack.c.l.b16 %v10354
    %v10423 = vunpack.c.l.b16 %v10355
    %v10424 = vunpack.c.l.b16 %v10356
    %v10425 = vunpack.c.l.b16 %v10357
    %v10426 = vunpack.c.l.b16 %v10358
    %v10427 = vunpack.c.l.b16 %v10359
    %v10428 = vunpack.c.l.b16 %v10360
    %v10429 = vunpack.c.l.b16 %v10361
    %v10430 = vunpack.c.l.b16 %v10362
    %v10431 = vunpack.c.l.b16 %v10363
    %v10432 = vunpack.c.l.b16 %v10364
    %v10433 = vunpack.c.l.b16 %v10365
    %v10434 = vunpack.c.l.b16 %v10366
    %v10435 = vunpack.c.l.b16 %v10367
    %v10436 = vunpack.c.l.b16 %v10368
    %v10437 = vunpack.c.l.b16 %v10369
    %v10438 = vunpack.c.l.b16 %v10370
    %v10439 = vunpack.c.l.b16 %v10371
    %v10440 = vunpack.c.l.b16 %v10372
    %v10441 = vunpack.c.l.b16 %v10373
    %v10442 = vunpack.c.l.b16 %v10374
    %v10443 = vunpack.c.l.b16 %v10375
    %v10444 = vunpack.c.l.b16 %v10376
    %v10445 = vunpack.c.l.b16 %v10377
    %v10446 = vunpack.c.l.b16 %v10378
    %v10447 = vpack.c.b16 %v10416, %v10415
    %v10448 = vpack.c.b16 %v10418, %v10417
    %v10449 = vpack.c.b16 %v10420, %v10419
    %v10450 = vpack.c.b16 %v10422, %v10421
    %v10451 = vpack.c.b16 %v10424, %v10423
    %v10452 = vpack.c.b16 %v10426, %v10425
    %v10453 = vpack.c.b16 %v10428, %v10427
    %v10454 = vpack.c.b16 %v10430, %v10429
    %v10455 = vpack.c.b16 %v10432, %v10431
    %v10456 = vpack.c.b16 %v10434, %v10433
    %v10457 = vpack.c.b16 %v10436, %v10435
    %v10458 = vpack.c.b16 %v10438, %v10437
    %v10459 = vpack.c.b16 %v10440, %v10439
    %v10460 = vpack.c.b16 %v10442, %v10441
    %v10461 = vpack.c.b16 %v10444, %v10443
    %v10462 = vpack.c.b16 %v10446, %v10445
    %10479 = vmatprep.subr.bf16.mxu0 0
    %10480 = vmatpush1.bf16.msra.mxu0 %v10447
    %10481 = vmatprep.subr.bf16.mxu0 0
    %10482 = vmatpush1.bf16.msra.mxu0 %v10448
    %10483 = vmatprep.subr.bf16.mxu0 0
    %10484 = vmatpush1.bf16.msra.mxu0 %v10449
    %10485 = vmatprep.subr.bf16.mxu0 0
    %10486 = vmatpush1.bf16.msra.mxu0 %v10450
    %10487 = vmatprep.subr.bf16.mxu0 0
    %10488 = vmatpush1.bf16.msra.mxu0 %v10451
    %10489 = vmatprep.subr.bf16.mxu0 0
    %10490 = vmatpush1.bf16.msra.mxu0 %v10452
    %10491 = vmatprep.subr.bf16.mxu0 0
    %10492 = vmatpush1.bf16.msra.mxu0 %v10453
    %10493 = vmatprep.subr.bf16.mxu0 0
    %10494 = vmatpush1.bf16.msra.mxu0 %v10454
    %10495 = vmatprep.subr.bf16.mxu0 0
    %10496 = vmatpush1.bf16.msra.mxu0 %v10455
    %10497 = vmatprep.subr.bf16.mxu0 0
    %10498 = vmatpush1.bf16.msra.mxu0 %v10456
    %10499 = vmatprep.subr.bf16.mxu0 0
    %10500 = vmatpush1.bf16.msra.mxu0 %v10457
    %10501 = vmatprep.subr.bf16.mxu0 0
    %10502 = vmatpush1.bf16.msra.mxu0 %v10458
    %10503 = vmatprep.subr.bf16.mxu0 0
    %10504 = vmatpush1.bf16.msra.mxu0 %v10459
    %10505 = vmatprep.subr.bf16.mxu0 0
    %10506 = vmatpush1.bf16.msra.mxu0 %v10460
    %10507 = vmatprep.subr.bf16.mxu0 0
    %10508 = vmatpush1.bf16.msra.mxu0 %v10461
    %10509 = vmatprep.subr.bf16.mxu0 0
    %10510 = vmatpush1.bf16.msra.mxu0 %v10462
    %10511 = vmatprep.mubr.bf16.mxu0 %v10380
    %10512 = vmatmul.mubr.bf16.gmra.mrb[0].mxu0 %v10379
    %v10513 = vpop.f32.mrb[0].mxu0
    %v10514 = vadd.f32 0.0, %v10513
    %v10515 = vpop.f32.mrb[0].mxu0
    %v10516 = vpop.f32.mrb[0].mxu0
    %v10517 = vpop.f32.mrb[0].mxu0
    %10518 = vdwg.mxu0
    %v10519 = vadd.f32 %v10345, %v10514
    %s10520 = scalar_lea.vmem %s12, 1408
    %v10521 = vld [vmem:[%s10520] sm:$0xf]
    %v10522 = vld [vmem:[%s10520 + $0x4] sm:$0xf]
    %v10523 = vld [vmem:[%s10520 + $0x8] sm:$0xf]
    %v10524 = vld [vmem:[%s10520 + $0xc] sm:$0xf]
    %v10525 = vld [vmem:[%s10520 + $0x10] sm:$0xf]
    %v10526 = vld [vmem:[%s10520 + $0x14] sm:$0xf]
    %v10527 = vld [vmem:[%s10520 + $0x18] sm:$0xf]
    %v10528 = vld [vmem:[%s10520 + $0x1c] sm:$0xf]
    %v10529 = vld [vmem:[%s10520 + $0x20] sm:$0xf]
    %v10530 = vld [vmem:[%s10520 + $0x24] sm:$0xf]
    %v10531 = vld [vmem:[%s10520 + $0x28] sm:$0xf]
    %v10532 = vld [vmem:[%s10520 + $0x2c] sm:$0xf]
    %v10533 = vld [vmem:[%s10520 + $0x30] sm:$0xf]
    %v10534 = vld [vmem:[%s10520 + $0x34] sm:$0xf]
    %v10535 = vld [vmem:[%s10520 + $0x38] sm:$0xf]
    %v10536 = vld [vmem:[%s10520 + $0x3c] sm:$0xf]
    %v10537 = vld [vmem:[%s10520 + $0x40] sm:$0xf]
    %v10538 = vld [vmem:[%s10520 + $0x44] sm:$0xf]
    %v10539 = vld [vmem:[%s10520 + $0x48] sm:$0xf]
    %v10540 = vld [vmem:[%s10520 + $0x4c] sm:$0xf]
    %v10541 = vld [vmem:[%s10520 + $0x50] sm:$0xf]
    %v10542 = vld [vmem:[%s10520 + $0x54] sm:$0xf]
    %v10543 = vld [vmem:[%s10520 + $0x58] sm:$0xf]
    %v10544 = vld [vmem:[%s10520 + $0x5c] sm:$0xf]
    %v10545 = vld [vmem:[%s10520 + $0x60] sm:$0xf]
    %v10546 = vld [vmem:[%s10520 + $0x64] sm:$0xf]
    %v10547 = vld [vmem:[%s10520 + $0x68] sm:$0xf]
    %v10548 = vld [vmem:[%s10520 + $0x6c] sm:$0xf]
    %v10549 = vld [vmem:[%s10520 + $0x70] sm:$0xf]
    %v10550 = vld [vmem:[%s10520 + $0x74] sm:$0xf]
    %v10551 = vld [vmem:[%s10520 + $0x78] sm:$0xf]
    %v10552 = vld [vmem:[%s10520 + $0x7c] sm:$0xf]
    %v10553 = vrot.slane %v9998, 3
    %v10554 = vrot.slane %v9999, 3
    %v10589 = vunpack.c.l.b16 %v10521
    %v10590 = vunpack.c.l.b16 %v10522
    %v10591 = vunpack.c.l.b16 %v10523
    %v10592 = vunpack.c.l.b16 %v10524
    %v10593 = vunpack.c.l.b16 %v10525
    %v10594 = vunpack.c.l.b16 %v10526
    %v10595 = vunpack.c.l.b16 %v10527
    %v10596 = vunpack.c.l.b16 %v10528
    %v10597 = vunpack.c.l.b16 %v10529
    %v10598 = vunpack.c.l.b16 %v10530
    %v10599 = vunpack.c.l.b16 %v10531
    %v10600 = vunpack.c.l.b16 %v10532
    %v10601 = vunpack.c.l.b16 %v10533
    %v10602 = vunpack.c.l.b16 %v10534
    %v10603 = vunpack.c.l.b16 %v10535
    %v10604 = vunpack.c.l.b16 %v10536
    %v10605 = vunpack.c.l.b16 %v10537
    %v10606 = vunpack.c.l.b16 %v10538
    %v10607 = vunpack.c.l.b16 %v10539
    %v10608 = vunpack.c.l.b16 %v10540
    %v10609 = vunpack.c.l.b16 %v10541
    %v10610 = vunpack.c.l.b16 %v10542
    %v10611 = vunpack.c.l.b16 %v10543
    %v10612 = vunpack.c.l.b16 %v10544
    %v10613 = vunpack.c.l.b16 %v10545
    %v10614 = vunpack.c.l.b16 %v10546
    %v10615 = vunpack.c.l.b16 %v10547
    %v10616 = vunpack.c.l.b16 %v10548
    %v10617 = vunpack.c.l.b16 %v10549
    %v10618 = vunpack.c.l.b16 %v10550
    %v10619 = vunpack.c.l.b16 %v10551
    %v10620 = vunpack.c.l.b16 %v10552
    %v10621 = vpack.c.b16 %v10590, %v10589
    %v10622 = vpack.c.b16 %v10592, %v10591
    %v10623 = vpack.c.b16 %v10594, %v10593
    %v10624 = vpack.c.b16 %v10596, %v10595
    %v10625 = vpack.c.b16 %v10598, %v10597
    %v10626 = vpack.c.b16 %v10600, %v10599
    %v10627 = vpack.c.b16 %v10602, %v10601
    %v10628 = vpack.c.b16 %v10604, %v10603
    %v10629 = vpack.c.b16 %v10606, %v10605
    %v10630 = vpack.c.b16 %v10608, %v10607
    %v10631 = vpack.c.b16 %v10610, %v10609
    %v10632 = vpack.c.b16 %v10612, %v10611
    %v10633 = vpack.c.b16 %v10614, %v10613
    %v10634 = vpack.c.b16 %v10616, %v10615
    %v10635 = vpack.c.b16 %v10618, %v10617
    %v10636 = vpack.c.b16 %v10620, %v10619
    %10653 = vmatprep.subr.bf16.mxu0 0
    %10654 = vmatpush1.bf16.msra.mxu0 %v10621
    %10655 = vmatprep.subr.bf16.mxu0 0
    %10656 = vmatpush1.bf16.msra.mxu0 %v10622
    %10657 = vmatprep.subr.bf16.mxu0 0
    %10658 = vmatpush1.bf16.msra.mxu0 %v10623
    %10659 = vmatprep.subr.bf16.mxu0 0
    %10660 = vmatpush1.bf16.msra.mxu0 %v10624
    %10661 = vmatprep.subr.bf16.mxu0 0
    %10662 = vmatpush1.bf16.msra.mxu0 %v10625
    %10663 = vmatprep.subr.bf16.mxu0 0
    %10664 = vmatpush1.bf16.msra.mxu0 %v10626
    %10665 = vmatprep.subr.bf16.mxu0 0
    %10666 = vmatpush1.bf16.msra.mxu0 %v10627
    %10667 = vmatprep.subr.bf16.mxu0 0
    %10668 = vmatpush1.bf16.msra.mxu0 %v10628
    %10669 = vmatprep.subr.bf16.mxu0 0
    %10670 = vmatpush1.bf16.msra.mxu0 %v10629
    %10671 = vmatprep.subr.bf16.mxu0 0
    %10672 = vmatpush1.bf16.msra.mxu0 %v10630
    %10673 = vmatprep.subr.bf16.mxu0 0
    %10674 = vmatpush1.bf16.msra.mxu0 %v10631
    %10675 = vmatprep.subr.bf16.mxu0 0
    %10676 = vmatpush1.bf16.msra.mxu0 %v10632
    %10677 = vmatprep.subr.bf16.mxu0 0
    %10678 = vmatpush1.bf16.msra.mxu0 %v10633
    %10679 = vmatprep.subr.bf16.mxu0 0
    %10680 = vmatpush1.bf16.msra.mxu0 %v10634
    %10681 = vmatprep.subr.bf16.mxu0 0
    %10682 = vmatpush1.bf16.msra.mxu0 %v10635
    %10683 = vmatprep.subr.bf16.mxu0 0
    %10684 = vmatpush1.bf16.msra.mxu0 %v10636
    %10685 = vmatprep.mubr.bf16.mxu0 %v10554
    %10686 = vmatmul.mubr.bf16.gmra.mrb[0].mxu0 %v10553
    %v10687 = vpop.f32.mrb[0].mxu0
    %v10688 = vadd.f32 0.0, %v10687
    %v10689 = vpop.f32.mrb[0].mxu0
    %v10690 = vpop.f32.mrb[0].mxu0
    %v10691 = vpop.f32.mrb[0].mxu0
    %10692 = vdwg.mxu0
    %v10693 = vadd.f32 %v10519, %v10688
    %v10694 = vpack.c.bf16 %v8607, %v8607
    %v10695 = vpack.c.bf16 %v8608, %v8608
    %s10696 = scalar_lea.vmem %s12, 1536
    %v10697 = vld [vmem:[%s10696] sm:$0xf]
    %v10698 = vld [vmem:[%s10696 + $0x4] sm:$0xf]
    %v10699 = vld [vmem:[%s10696 + $0x8] sm:$0xf]
    %v10700 = vld [vmem:[%s10696 + $0xc] sm:$0xf]
    %v10701 = vld [vmem:[%s10696 + $0x10] sm:$0xf]
    %v10702 = vld [vmem:[%s10696 + $0x14] sm:$0xf]
    %v10703 = vld [vmem:[%s10696 + $0x18] sm:$0xf]
    %v10704 = vld [vmem:[%s10696 + $0x1c] sm:$0xf]
    %v10705 = vld [vmem:[%s10696 + $0x20] sm:$0xf]
    %v10706 = vld [vmem:[%s10696 + $0x24] sm:$0xf]
    %v10707 = vld [vmem:[%s10696 + $0x28] sm:$0xf]
    %v10708 = vld [vmem:[%s10696 + $0x2c] sm:$0xf]
    %v10709 = vld [vmem:[%s10696 + $0x30] sm:$0xf]
    %v10710 = vld [vmem:[%s10696 + $0x34] sm:$0xf]
    %v10711 = vld [vmem:[%s10696 + $0x38] sm:$0xf]
    %v10712 = vld [vmem:[%s10696 + $0x3c] sm:$0xf]
    %v10713 = vld [vmem:[%s10696 + $0x40] sm:$0xf]
    %v10714 = vld [vmem:[%s10696 + $0x44] sm:$0xf]
    %v10715 = vld [vmem:[%s10696 + $0x48] sm:$0xf]
    %v10716 = vld [vmem:[%s10696 + $0x4c] sm:$0xf]
    %v10717 = vld [vmem:[%s10696 + $0x50] sm:$0xf]
    %v10718 = vld [vmem:[%s10696 + $0x54] sm:$0xf]
    %v10719 = vld [vmem:[%s10696 + $0x58] sm:$0xf]
    %v10720 = vld [vmem:[%s10696 + $0x5c] sm:$0xf]
    %v10721 = vld [vmem:[%s10696 + $0x60] sm:$0xf]
    %v10722 = vld [vmem:[%s10696 + $0x64] sm:$0xf]
    %v10723 = vld [vmem:[%s10696 + $0x68] sm:$0xf]
    %v10724 = vld [vmem:[%s10696 + $0x6c] sm:$0xf]
    %v10725 = vld [vmem:[%s10696 + $0x70] sm:$0xf]
    %v10726 = vld [vmem:[%s10696 + $0x74] sm:$0xf]
    %v10727 = vld [vmem:[%s10696 + $0x78] sm:$0xf]
    %v10728 = vld [vmem:[%s10696 + $0x7c] sm:$0xf]
    %v10761 = vunpack.c.l.b16 %v10697
    %v10762 = vunpack.c.l.b16 %v10698
    %v10763 = vunpack.c.l.b16 %v10699
    %v10764 = vunpack.c.l.b16 %v10700
    %v10765 = vunpack.c.l.b16 %v10701
    %v10766 = vunpack.c.l.b16 %v10702
    %v10767 = vunpack.c.l.b16 %v10703
    %v10768 = vunpack.c.l.b16 %v10704
    %v10769 = vunpack.c.l.b16 %v10705
    %v10770 = vunpack.c.l.b16 %v10706
    %v10771 = vunpack.c.l.b16 %v10707
    %v10772 = vunpack.c.l.b16 %v10708
    %v10773 = vunpack.c.l.b16 %v10709
    %v10774 = vunpack.c.l.b16 %v10710
    %v10775 = vunpack.c.l.b16 %v10711
    %v10776 = vunpack.c.l.b16 %v10712
    %v10777 = vunpack.c.l.b16 %v10713
    %v10778 = vunpack.c.l.b16 %v10714
    %v10779 = vunpack.c.l.b16 %v10715
    %v10780 = vunpack.c.l.b16 %v10716
    %v10781 = vunpack.c.l.b16 %v10717
    %v10782 = vunpack.c.l.b16 %v10718
    %v10783 = vunpack.c.l.b16 %v10719
    %v10784 = vunpack.c.l.b16 %v10720
    %v10785 = vunpack.c.l.b16 %v10721
    %v10786 = vunpack.c.l.b16 %v10722
    %v10787 = vunpack.c.l.b16 %v10723
    %v10788 = vunpack.c.l.b16 %v10724
    %v10789 = vunpack.c.l.b16 %v10725
    %v10790 = vunpack.c.l.b16 %v10726
    %v10791 = vunpack.c.l.b16 %v10727
    %v10792 = vunpack.c.l.b16 %v10728
    %v10793 = vpack.c.b16 %v10762, %v10761
    %v10794 = vpack.c.b16 %v10764, %v10763
    %v10795 = vpack.c.b16 %v10766, %v10765
    %v10796 = vpack.c.b16 %v10768, %v10767
    %v10797 = vpack.c.b16 %v10770, %v10769
    %v10798 = vpack.c.b16 %v10772, %v10771
    %v10799 = vpack.c.b16 %v10774, %v10773
    %v10800 = vpack.c.b16 %v10776, %v10775
    %v10801 = vpack.c.b16 %v10778, %v10777
    %v10802 = vpack.c.b16 %v10780, %v10779
    %v10803 = vpack.c.b16 %v10782, %v10781
    %v10804 = vpack.c.b16 %v10784, %v10783
    %v10805 = vpack.c.b16 %v10786, %v10785
    %v10806 = vpack.c.b16 %v10788, %v10787
    %v10807 = vpack.c.b16 %v10790, %v10789
    %v10808 = vpack.c.b16 %v10792, %v10791
    %10825 = vmatprep.subr.bf16.mxu0 0
    %10826 = vmatpush1.bf16.msra.mxu0 %v10793
    %10827 = vmatprep.subr.bf16.mxu0 0
    %10828 = vmatpush1.bf16.msra.mxu0 %v10794
    %10829 = vmatprep.subr.bf16.mxu0 0
    %10830 = vmatpush1.bf16.msra.mxu0 %v10795
    %10831 = vmatprep.subr.bf16.mxu0 0
    %10832 = vmatpush1.bf16.msra.mxu0 %v10796
    %10833 = vmatprep.subr.bf16.mxu0 0
    %10834 = vmatpush1.bf16.msra.mxu0 %v10797
    %10835 = vmatprep.subr.bf16.mxu0 0
    %10836 = vmatpush1.bf16.msra.mxu0 %v10798
    %10837 = vmatprep.subr.bf16.mxu0 0
    %10838 = vmatpush1.bf16.msra.mxu0 %v10799
    %10839 = vmatprep.subr.bf16.mxu0 0
    %10840 = vmatpush1.bf16.msra.mxu0 %v10800
    %10841 = vmatprep.subr.bf16.mxu0 0
    %10842 = vmatpush1.bf16.msra.mxu0 %v10801
    %10843 = vmatprep.subr.bf16.mxu0 0
    %10844 = vmatpush1.bf16.msra.mxu0 %v10802
    %10845 = vmatprep.subr.bf16.mxu0 0
    %10846 = vmatpush1.bf16.msra.mxu0 %v10803
    %10847 = vmatprep.subr.bf16.mxu0 0
    %10848 = vmatpush1.bf16.msra.mxu0 %v10804
    %10849 = vmatprep.subr.bf16.mxu0 0
    %10850 = vmatpush1.bf16.msra.mxu0 %v10805
    %10851 = vmatprep.subr.bf16.mxu0 0
    %10852 = vmatpush1.bf16.msra.mxu0 %v10806
    %10853 = vmatprep.subr.bf16.mxu0 0
    %10854 = vmatpush1.bf16.msra.mxu0 %v10807
    %10855 = vmatprep.subr.bf16.mxu0 0
    %10856 = vmatpush1.bf16.msra.mxu0 %v10808
    %10857 = vmatprep.mubr.bf16.mxu0 %v10695
    %10858 = vmatmul.mubr.bf16.gmra.mrb[0].mxu0 %v10694
    %v10859 = vpop.f32.mrb[0].mxu0
    %v10860 = vadd.f32 0.0, %v10859
    %v10861 = vpop.f32.mrb[0].mxu0
    %v10862 = vpop.f32.mrb[0].mxu0
    %v10863 = vpop.f32.mrb[0].mxu0
    %10864 = vdwg.mxu0
    %v10865 = vadd.f32 %v10693, %v10860
    %s10866 = scalar_lea.vmem %s12, 1664
    %v10867 = vld [vmem:[%s10866] sm:$0xf]
    %v10868 = vld [vmem:[%s10866 + $0x4] sm:$0xf]
    %v10869 = vld [vmem:[%s10866 + $0x8] sm:$0xf]
    %v10870 = vld [vmem:[%s10866 + $0xc] sm:$0xf]
    %v10871 = vld [vmem:[%s10866 + $0x10] sm:$0xf]
    %v10872 = vld [vmem:[%s10866 + $0x14] sm:$0xf]
    %v10873 = vld [vmem:[%s10866 + $0x18] sm:$0xf]
    %v10874 = vld [vmem:[%s10866 + $0x1c] sm:$0xf]
    %v10875 = vld [vmem:[%s10866 + $0x20] sm:$0xf]
    %v10876 = vld [vmem:[%s10866 + $0x24] sm:$0xf]
    %v10877 = vld [vmem:[%s10866 + $0x28] sm:$0xf]
    %v10878 = vld [vmem:[%s10866 + $0x2c] sm:$0xf]
    %v10879 = vld [vmem:[%s10866 + $0x30] sm:$0xf]
    %v10880 = vld [vmem:[%s10866 + $0x34] sm:$0xf]
    %v10881 = vld [vmem:[%s10866 + $0x38] sm:$0xf]
    %v10882 = vld [vmem:[%s10866 + $0x3c] sm:$0xf]
    %v10883 = vld [vmem:[%s10866 + $0x40] sm:$0xf]
    %v10884 = vld [vmem:[%s10866 + $0x44] sm:$0xf]
    %v10885 = vld [vmem:[%s10866 + $0x48] sm:$0xf]
    %v10886 = vld [vmem:[%s10866 + $0x4c] sm:$0xf]
    %v10887 = vld [vmem:[%s10866 + $0x50] sm:$0xf]
    %v10888 = vld [vmem:[%s10866 + $0x54] sm:$0xf]
    %v10889 = vld [vmem:[%s10866 + $0x58] sm:$0xf]
    %v10890 = vld [vmem:[%s10866 + $0x5c] sm:$0xf]
    %v10891 = vld [vmem:[%s10866 + $0x60] sm:$0xf]
    %v10892 = vld [vmem:[%s10866 + $0x64] sm:$0xf]
    %v10893 = vld [vmem:[%s10866 + $0x68] sm:$0xf]
    %v10894 = vld [vmem:[%s10866 + $0x6c] sm:$0xf]
    %v10895 = vld [vmem:[%s10866 + $0x70] sm:$0xf]
    %v10896 = vld [vmem:[%s10866 + $0x74] sm:$0xf]
    %v10897 = vld [vmem:[%s10866 + $0x78] sm:$0xf]
    %v10898 = vld [vmem:[%s10866 + $0x7c] sm:$0xf]
    %v10901 = vrot.slane %v10694, 1
    %v10902 = vrot.slane %v10695, 1
    %v10937 = vunpack.c.l.b16 %v10867
    %v10938 = vunpack.c.l.b16 %v10868
    %v10939 = vunpack.c.l.b16 %v10869
    %v10940 = vunpack.c.l.b16 %v10870
    %v10941 = vunpack.c.l.b16 %v10871
    %v10942 = vunpack.c.l.b16 %v10872
    %v10943 = vunpack.c.l.b16 %v10873
    %v10944 = vunpack.c.l.b16 %v10874
    %v10945 = vunpack.c.l.b16 %v10875
    %v10946 = vunpack.c.l.b16 %v10876
    %v10947 = vunpack.c.l.b16 %v10877
    %v10948 = vunpack.c.l.b16 %v10878
    %v10949 = vunpack.c.l.b16 %v10879
    %v10950 = vunpack.c.l.b16 %v10880
    %v10951 = vunpack.c.l.b16 %v10881
    %v10952 = vunpack.c.l.b16 %v10882
    %v10953 = vunpack.c.l.b16 %v10883
    %v10954 = vunpack.c.l.b16 %v10884
    %v10955 = vunpack.c.l.b16 %v10885
    %v10956 = vunpack.c.l.b16 %v10886
    %v10957 = vunpack.c.l.b16 %v10887
    %v10958 = vunpack.c.l.b16 %v10888
    %v10959 = vunpack.c.l.b16 %v10889
    %v10960 = vunpack.c.l.b16 %v10890
    %v10961 = vunpack.c.l.b16 %v10891
    %v10962 = vunpack.c.l.b16 %v10892
    %v10963 = vunpack.c.l.b16 %v10893
    %v10964 = vunpack.c.l.b16 %v10894
    %v10965 = vunpack.c.l.b16 %v10895
    %v10966 = vunpack.c.l.b16 %v10896
    %v10967 = vunpack.c.l.b16 %v10897
    %v10968 = vunpack.c.l.b16 %v10898
    %v10969 = vpack.c.b16 %v10938, %v10937
    %v10970 = vpack.c.b16 %v10940, %v10939
    %v10971 = vpack.c.b16 %v10942, %v10941
    %v10972 = vpack.c.b16 %v10944, %v10943
    %v10973 = vpack.c.b16 %v10946, %v10945
    %v10974 = vpack.c.b16 %v10948, %v10947
    %v10975 = vpack.c.b16 %v10950, %v10949
    %v10976 = vpack.c.b16 %v10952, %v10951
    %v10977 = vpack.c.b16 %v10954, %v10953
    %v10978 = vpack.c.b16 %v10956, %v10955
    %v10979 = vpack.c.b16 %v10958, %v10957
    %v10980 = vpack.c.b16 %v10960, %v10959
    %v10981 = vpack.c.b16 %v10962, %v10961
    %v10982 = vpack.c.b16 %v10964, %v10963
    %v10983 = vpack.c.b16 %v10966, %v10965
    %v10984 = vpack.c.b16 %v10968, %v10967
    %11001 = vmatprep.subr.bf16.mxu0 0
    %11002 = vmatpush1.bf16.msra.mxu0 %v10969
    %11003 = vmatprep.subr.bf16.mxu0 0
    %11004 = vmatpush1.bf16.msra.mxu0 %v10970
    %11005 = vmatprep.subr.bf16.mxu0 0
    %11006 = vmatpush1.bf16.msra.mxu0 %v10971
    %11007 = vmatprep.subr.bf16.mxu0 0
    %11008 = vmatpush1.bf16.msra.mxu0 %v10972
    %11009 = vmatprep.subr.bf16.mxu0 0
    %11010 = vmatpush1.bf16.msra.mxu0 %v10973
    %11011 = vmatprep.subr.bf16.mxu0 0
    %11012 = vmatpush1.bf16.msra.mxu0 %v10974
    %11013 = vmatprep.subr.bf16.mxu0 0
    %11014 = vmatpush1.bf16.msra.mxu0 %v10975
    %11015 = vmatprep.subr.bf16.mxu0 0
    %11016 = vmatpush1.bf16.msra.mxu0 %v10976
    %11017 = vmatprep.subr.bf16.mxu0 0
    %11018 = vmatpush1.bf16.msra.mxu0 %v10977
    %11019 = vmatprep.subr.bf16.mxu0 0
    %11020 = vmatpush1.bf16.msra.mxu0 %v10978
    %11021 = vmatprep.subr.bf16.mxu0 0
    %11022 = vmatpush1.bf16.msra.mxu0 %v10979
    %11023 = vmatprep.subr.bf16.mxu0 0
    %11024 = vmatpush1.bf16.msra.mxu0 %v10980
    %11025 = vmatprep.subr.bf16.mxu0 0
    %11026 = vmatpush1.bf16.msra.mxu0 %v10981
    %11027 = vmatprep.subr.bf16.mxu0 0
    %11028 = vmatpush1.bf16.msra.mxu0 %v10982
    %11029 = vmatprep.subr.bf16.mxu0 0
    %11030 = vmatpush1.bf16.msra.mxu0 %v10983
    %11031 = vmatprep.subr.bf16.mxu0 0
    %11032 = vmatpush1.bf16.msra.mxu0 %v10984
    %11033 = vmatprep.mubr.bf16.mxu0 %v10902
    %11034 = vmatmul.mubr.bf16.gmra.mrb[0].mxu0 %v10901
    %v11035 = vpop.f32.mrb[0].mxu0
    %v11036 = vadd.f32 0.0, %v11035
    %v11037 = vpop.f32.mrb[0].mxu0
    %v11038 = vpop.f32.mrb[0].mxu0
    %v11039 = vpop.f32.mrb[0].mxu0
    %11040 = vdwg.mxu0
    %v11041 = vadd.f32 %v10865, %v11036
    %s11042 = scalar_lea.vmem %s12, 1792
    %v11043 = vld [vmem:[%s11042] sm:$0xf]
    %v11044 = vld [vmem:[%s11042 + $0x4] sm:$0xf]
    %v11045 = vld [vmem:[%s11042 + $0x8] sm:$0xf]
    %v11046 = vld [vmem:[%s11042 + $0xc] sm:$0xf]
    %v11047 = vld [vmem:[%s11042 + $0x10] sm:$0xf]
    %v11048 = vld [vmem:[%s11042 + $0x14] sm:$0xf]
    %v11049 = vld [vmem:[%s11042 + $0x18] sm:$0xf]
    %v11050 = vld [vmem:[%s11042 + $0x1c] sm:$0xf]
    %v11051 = vld [vmem:[%s11042 + $0x20] sm:$0xf]
    %v11052 = vld [vmem:[%s11042 + $0x24] sm:$0xf]
    %v11053 = vld [vmem:[%s11042 + $0x28] sm:$0xf]
    %v11054 = vld [vmem:[%s11042 + $0x2c] sm:$0xf]
    %v11055 = vld [vmem:[%s11042 + $0x30] sm:$0xf]
    %v11056 = vld [vmem:[%s11042 + $0x34] sm:$0xf]
    %v11057 = vld [vmem:[%s11042 + $0x38] sm:$0xf]
    %v11058 = vld [vmem:[%s11042 + $0x3c] sm:$0xf]
    %v11059 = vld [vmem:[%s11042 + $0x40] sm:$0xf]
    %v11060 = vld [vmem:[%s11042 + $0x44] sm:$0xf]
    %v11061 = vld [vmem:[%s11042 + $0x48] sm:$0xf]
    %v11062 = vld [vmem:[%s11042 + $0x4c] sm:$0xf]
    %v11063 = vld [vmem:[%s11042 + $0x50] sm:$0xf]
    %v11064 = vld [vmem:[%s11042 + $0x54] sm:$0xf]
    %v11065 = vld [vmem:[%s11042 + $0x58] sm:$0xf]
    %v11066 = vld [vmem:[%s11042 + $0x5c] sm:$0xf]
    %v11067 = vld [vmem:[%s11042 + $0x60] sm:$0xf]
    %v11068 = vld [vmem:[%s11042 + $0x64] sm:$0xf]
    %v11069 = vld [vmem:[%s11042 + $0x68] sm:$0xf]
    %v11070 = vld [vmem:[%s11042 + $0x6c] sm:$0xf]
    %v11071 = vld [vmem:[%s11042 + $0x70] sm:$0xf]
    %v11072 = vld [vmem:[%s11042 + $0x74] sm:$0xf]
    %v11073 = vld [vmem:[%s11042 + $0x78] sm:$0xf]
    %v11074 = vld [vmem:[%s11042 + $0x7c] sm:$0xf]
    %v11075 = vrot.slane %v10694, 2
    %v11076 = vrot.slane %v10695, 2
    %v11111 = vunpack.c.l.b16 %v11043
    %v11112 = vunpack.c.l.b16 %v11044
    %v11113 = vunpack.c.l.b16 %v11045
    %v11114 = vunpack.c.l.b16 %v11046
    %v11115 = vunpack.c.l.b16 %v11047
    %v11116 = vunpack.c.l.b16 %v11048
    %v11117 = vunpack.c.l.b16 %v11049
    %v11118 = vunpack.c.l.b16 %v11050
    %v11119 = vunpack.c.l.b16 %v11051
    %v11120 = vunpack.c.l.b16 %v11052
    %v11121 = vunpack.c.l.b16 %v11053
    %v11122 = vunpack.c.l.b16 %v11054
    %v11123 = vunpack.c.l.b16 %v11055
    %v11124 = vunpack.c.l.b16 %v11056
    %v11125 = vunpack.c.l.b16 %v11057
    %v11126 = vunpack.c.l.b16 %v11058
    %v11127 = vunpack.c.l.b16 %v11059
    %v11128 = vunpack.c.l.b16 %v11060
    %v11129 = vunpack.c.l.b16 %v11061
    %v11130 = vunpack.c.l.b16 %v11062
    %v11131 = vunpack.c.l.b16 %v11063
    %v11132 = vunpack.c.l.b16 %v11064
    %v11133 = vunpack.c.l.b16 %v11065
    %v11134 = vunpack.c.l.b16 %v11066
    %v11135 = vunpack.c.l.b16 %v11067
    %v11136 = vunpack.c.l.b16 %v11068
    %v11137 = vunpack.c.l.b16 %v11069
    %v11138 = vunpack.c.l.b16 %v11070
    %v11139 = vunpack.c.l.b16 %v11071
    %v11140 = vunpack.c.l.b16 %v11072
    %v11141 = vunpack.c.l.b16 %v11073
    %v11142 = vunpack.c.l.b16 %v11074
    %v11143 = vpack.c.b16 %v11112, %v11111
    %v11144 = vpack.c.b16 %v11114, %v11113
    %v11145 = vpack.c.b16 %v11116, %v11115
    %v11146 = vpack.c.b16 %v11118, %v11117
    %v11147 = vpack.c.b16 %v11120, %v11119
    %v11148 = vpack.c.b16 %v11122, %v11121
    %v11149 = vpack.c.b16 %v11124, %v11123
    %v11150 = vpack.c.b16 %v11126, %v11125
    %v11151 = vpack.c.b16 %v11128, %v11127
    %v11152 = vpack.c.b16 %v11130, %v11129
    %v11153 = vpack.c.b16 %v11132, %v11131
    %v11154 = vpack.c.b16 %v11134, %v11133
    %v11155 = vpack.c.b16 %v11136, %v11135
    %v11156 = vpack.c.b16 %v11138, %v11137
    %v11157 = vpack.c.b16 %v11140, %v11139
    %v11158 = vpack.c.b16 %v11142, %v11141
    %11175 = vmatprep.subr.bf16.mxu0 0
    %11176 = vmatpush1.bf16.msra.mxu0 %v11143
    %11177 = vmatprep.subr.bf16.mxu0 0
    %11178 = vmatpush1.bf16.msra.mxu0 %v11144
    %11179 = vmatprep.subr.bf16.mxu0 0
    %11180 = vmatpush1.bf16.msra.mxu0 %v11145
    %11181 = vmatprep.subr.bf16.mxu0 0
    %11182 = vmatpush1.bf16.msra.mxu0 %v11146
    %11183 = vmatprep.subr.bf16.mxu0 0
    %11184 = vmatpush1.bf16.msra.mxu0 %v11147
    %11185 = vmatprep.subr.bf16.mxu0 0
    %11186 = vmatpush1.bf16.msra.mxu0 %v11148
    %11187 = vmatprep.subr.bf16.mxu0 0
    %11188 = vmatpush1.bf16.msra.mxu0 %v11149
    %11189 = vmatprep.subr.bf16.mxu0 0
    %11190 = vmatpush1.bf16.msra.mxu0 %v11150
    %11191 = vmatprep.subr.bf16.mxu0 0
    %11192 = vmatpush1.bf16.msra.mxu0 %v11151
    %11193 = vmatprep.subr.bf16.mxu0 0
    %11194 = vmatpush1.bf16.msra.mxu0 %v11152
    %11195 = vmatprep.subr.bf16.mxu0 0
    %11196 = vmatpush1.bf16.msra.mxu0 %v11153
    %11197 = vmatprep.subr.bf16.mxu0 0
    %11198 = vmatpush1.bf16.msra.mxu0 %v11154
    %11199 = vmatprep.subr.bf16.mxu0 0
    %11200 = vmatpush1.bf16.msra.mxu0 %v11155
    %11201 = vmatprep.subr.bf16.mxu0 0
    %11202 = vmatpush1.bf16.msra.mxu0 %v11156
    %11203 = vmatprep.subr.bf16.mxu0 0
    %11204 = vmatpush1.bf16.msra.mxu0 %v11157
    %11205 = vmatprep.subr.bf16.mxu0 0
    %11206 = vmatpush1.bf16.msra.mxu0 %v11158
    %11207 = vmatprep.mubr.bf16.mxu0 %v11076
    %11208 = vmatmul.mubr.bf16.gmra.mrb[0].mxu0 %v11075
    %v11209 = vpop.f32.mrb[0].mxu0
    %v11210 = vadd.f32 0.0, %v11209
    %v11211 = vpop.f32.mrb[0].mxu0
    %v11212 = vpop.f32.mrb[0].mxu0
    %v11213 = vpop.f32.mrb[0].mxu0
    %11214 = vdwg.mxu0
    %v11215 = vadd.f32 %v11041, %v11210
    %s11216 = scalar_lea.vmem %s12, 1920
    %v11217 = vld [vmem:[%s11216] sm:$0xf]
    %v11218 = vld [vmem:[%s11216 + $0x4] sm:$0xf]
    %v11219 = vld [vmem:[%s11216 + $0x8] sm:$0xf]
    %v11220 = vld [vmem:[%s11216 + $0xc] sm:$0xf]
    %v11221 = vld [vmem:[%s11216 + $0x10] sm:$0xf]
    %v11222 = vld [vmem:[%s11216 + $0x14] sm:$0xf]
    %v11223 = vld [vmem:[%s11216 + $0x18] sm:$0xf]
    %v11224 = vld [vmem:[%s11216 + $0x1c] sm:$0xf]
    %v11225 = vld [vmem:[%s11216 + $0x20] sm:$0xf]
    %v11226 = vld [vmem:[%s11216 + $0x24] sm:$0xf]
    %v11227 = vld [vmem:[%s11216 + $0x28] sm:$0xf]
    %v11228 = vld [vmem:[%s11216 + $0x2c] sm:$0xf]
    %v11229 = vld [vmem:[%s11216 + $0x30] sm:$0xf]
    %v11230 = vld [vmem:[%s11216 + $0x34] sm:$0xf]
    %v11231 = vld [vmem:[%s11216 + $0x38] sm:$0xf]
    %v11232 = vld [vmem:[%s11216 + $0x3c] sm:$0xf]
    %v11233 = vld [vmem:[%s11216 + $0x40] sm:$0xf]
    %v11234 = vld [vmem:[%s11216 + $0x44] sm:$0xf]
    %v11235 = vld [vmem:[%s11216 + $0x48] sm:$0xf]
    %v11236 = vld [vmem:[%s11216 + $0x4c] sm:$0xf]
    %v11237 = vld [vmem:[%s11216 + $0x50] sm:$0xf]
    %v11238 = vld [vmem:[%s11216 + $0x54] sm:$0xf]
    %v11239 = vld [vmem:[%s11216 + $0x58] sm:$0xf]
    %v11240 = vld [vmem:[%s11216 + $0x5c] sm:$0xf]
    %v11241 = vld [vmem:[%s11216 + $0x60] sm:$0xf]
    %v11242 = vld [vmem:[%s11216 + $0x64] sm:$0xf]
    %v11243 = vld [vmem:[%s11216 + $0x68] sm:$0xf]
    %v11244 = vld [vmem:[%s11216 + $0x6c] sm:$0xf]
    %v11245 = vld [vmem:[%s11216 + $0x70] sm:$0xf]
    %v11246 = vld [vmem:[%s11216 + $0x74] sm:$0xf]
    %v11247 = vld [vmem:[%s11216 + $0x78] sm:$0xf]
    %v11248 = vld [vmem:[%s11216 + $0x7c] sm:$0xf]
    %v11249 = vrot.slane %v10694, 3
    %v11250 = vrot.slane %v10695, 3
    %v11285 = vunpack.c.l.b16 %v11217
    %v11286 = vunpack.c.l.b16 %v11218
    %v11287 = vunpack.c.l.b16 %v11219
    %v11288 = vunpack.c.l.b16 %v11220
    %v11289 = vunpack.c.l.b16 %v11221
    %v11290 = vunpack.c.l.b16 %v11222
    %v11291 = vunpack.c.l.b16 %v11223
    %v11292 = vunpack.c.l.b16 %v11224
    %v11293 = vunpack.c.l.b16 %v11225
    %v11294 = vunpack.c.l.b16 %v11226
    %v11295 = vunpack.c.l.b16 %v11227
    %v11296 = vunpack.c.l.b16 %v11228
    %v11297 = vunpack.c.l.b16 %v11229
    %v11298 = vunpack.c.l.b16 %v11230
    %v11299 = vunpack.c.l.b16 %v11231
    %v11300 = vunpack.c.l.b16 %v11232
    %v11301 = vunpack.c.l.b16 %v11233
    %v11302 = vunpack.c.l.b16 %v11234
    %v11303 = vunpack.c.l.b16 %v11235
    %v11304 = vunpack.c.l.b16 %v11236
    %v11305 = vunpack.c.l.b16 %v11237
    %v11306 = vunpack.c.l.b16 %v11238
    %v11307 = vunpack.c.l.b16 %v11239
    %v11308 = vunpack.c.l.b16 %v11240
    %v11309 = vunpack.c.l.b16 %v11241
    %v11310 = vunpack.c.l.b16 %v11242
    %v11311 = vunpack.c.l.b16 %v11243
    %v11312 = vunpack.c.l.b16 %v11244
    %v11313 = vunpack.c.l.b16 %v11245
    %v11314 = vunpack.c.l.b16 %v11246
    %v11315 = vunpack.c.l.b16 %v11247
    %v11316 = vunpack.c.l.b16 %v11248
    %v11317 = vpack.c.b16 %v11286, %v11285
    %v11318 = vpack.c.b16 %v11288, %v11287
    %v11319 = vpack.c.b16 %v11290, %v11289
    %v11320 = vpack.c.b16 %v11292, %v11291
    %v11321 = vpack.c.b16 %v11294, %v11293
    %v11322 = vpack.c.b16 %v11296, %v11295
    %v11323 = vpack.c.b16 %v11298, %v11297
    %v11324 = vpack.c.b16 %v11300, %v11299
    %v11325 = vpack.c.b16 %v11302, %v11301
    %v11326 = vpack.c.b16 %v11304, %v11303
    %v11327 = vpack.c.b16 %v11306, %v11305
    %v11328 = vpack.c.b16 %v11308, %v11307
    %v11329 = vpack.c.b16 %v11310, %v11309
    %v11330 = vpack.c.b16 %v11312, %v11311
    %v11331 = vpack.c.b16 %v11314, %v11313
    %v11332 = vpack.c.b16 %v11316, %v11315
    %11349 = vmatprep.subr.bf16.mxu0 0
    %11350 = vmatpush1.bf16.msra.mxu0 %v11317
    %11351 = vmatprep.subr.bf16.mxu0 0
    %11352 = vmatpush1.bf16.msra.mxu0 %v11318
    %11353 = vmatprep.subr.bf16.mxu0 0
    %11354 = vmatpush1.bf16.msra.mxu0 %v11319
    %11355 = vmatprep.subr.bf16.mxu0 0
    %11356 = vmatpush1.bf16.msra.mxu0 %v11320
    %11357 = vmatprep.subr.bf16.mxu0 0
    %11358 = vmatpush1.bf16.msra.mxu0 %v11321
    %11359 = vmatprep.subr.bf16.mxu0 0
    %11360 = vmatpush1.bf16.msra.mxu0 %v11322
    %11361 = vmatprep.subr.bf16.mxu0 0
    %11362 = vmatpush1.bf16.msra.mxu0 %v11323
    %11363 = vmatprep.subr.bf16.mxu0 0
    %11364 = vmatpush1.bf16.msra.mxu0 %v11324
    %11365 = vmatprep.subr.bf16.mxu0 0
    %11366 = vmatpush1.bf16.msra.mxu0 %v11325
    %11367 = vmatprep.subr.bf16.mxu0 0
    %11368 = vmatpush1.bf16.msra.mxu0 %v11326
    %11369 = vmatprep.subr.bf16.mxu0 0
    %11370 = vmatpush1.bf16.msra.mxu0 %v11327
    %11371 = vmatprep.subr.bf16.mxu0 0
    %11372 = vmatpush1.bf16.msra.mxu0 %v11328
    %11373 = vmatprep.subr.bf16.mxu0 0
    %11374 = vmatpush1.bf16.msra.mxu0 %v11329
    %11375 = vmatprep.subr.bf16.mxu0 0
    %11376 = vmatpush1.bf16.msra.mxu0 %v11330
    %11377 = vmatprep.subr.bf16.mxu0 0
    %11378 = vmatpush1.bf16.msra.mxu0 %v11331
    %11379 = vmatprep.subr.bf16.mxu0 0
    %11380 = vmatpush1.bf16.msra.mxu0 %v11332
    %11381 = vmatprep.mubr.bf16.mxu0 %v11250
    %11382 = vmatmul.mubr.bf16.gmra.mrb[0].mxu0 %v11249
    %v11383 = vpop.f32.mrb[0].mxu0
    %v11384 = vadd.f32 0.0, %v11383
    %v11385 = vpop.f32.mrb[0].mxu0
    %v11386 = vpop.f32.mrb[0].mxu0
    %v11387 = vpop.f32.mrb[0].mxu0
    %11388 = vdwg.mxu0
    %v11389 = vadd.f32 %v11215, %v11384
    %v11390 = vld [vmem:[%s13] sm:$0x1]
    %v11392 = vlaneseq
    %v11393 = vshrl.u32 %v11392, 7
    %v11394 = vsub.s32 0, %v11393
    %v11395 = vrot.slane %v11390, %v11394
    %v11397 = vadd.f32 %v11389, %v11395
    %v11398 = vtanh.pop %v11397
    %vm11399 = vcmask 254976
    %11400 = vst.msk [vmem:[#allocation2] sm:$0x3] %vm11399, %v11398
    // Predicated region
    $region58: #{discriminator_forward.1} parent=1 // pred_check
      _
    $region59: #{discriminator_forward.1} parent=1 // pred_check_branch
      %11402 = sbr.rel (0) target = $region61
    $region60: #{discriminator_forward.1} parent=1 // pred_region
      %s11404 = ssub.s32 32, 32
      %11405 = vsyncadd [#allocation3], %s11404
      %s11407 = sshll.u32 [#allocation2], 4
      %s11408 = int_to_ptr.vmem [resolvable:$true] %s11407
      %11410 = dma.vmem_to_hbm [thread:$0]  %s11408, 32, %s14, [#allocation3]
    $region61: #{discriminator_forward.1} parent=1 // pred_fallthru
      _
    // Predicated region
    $region62: #{discriminator_forward.1} parent=1 // pred_check
      _
    $region63: #{discriminator_forward.1} parent=1 // pred_check_branch
      %11412 = sbr.rel (0) target = $region65
    $region64: #{discriminator_forward.1} parent=1 // pred_region
      %11413 = dma.done [#allocation3], 32
    $region65: #{discriminator_forward.1} parent=1 // pred_fallthru
      _
    %11414 = vsyncpa [#allocation3], 1

</llo_original>
